<compile_context>
chip_gen: v7x
topology: tpu7x:2x2x1
jax: 0.10.0
libtpu: 0.0.40
codegen_flags: <defaults>
</compile_context>

<pallas_src>
import functools

import jax
import jax.numpy as jnp
from jax.experimental import pallas as pl
from jax.experimental.pallas import tpu as pltpu

LANE = 128   # FC output padded to 128 lanes -> lane-dense (unmasked) stores
LPAD = 8     # left halo offset in padded scratch (8 => sublane-aligned store)


# ------------------------- fused conv-stack kernel ----------------------------
def _conv_block(xin, p_ref, w_ref, ss_ref, h, w, cin, cout):
    """3x3 conv (stride 1, pad 1) + folded affine (BN/bias) + ReLU.

    xin:    (h, w, cin) f32 value
    p_ref:  (h+2, w+LPAD+1, cin) f32 VMEM scratch (zero halo)
    w_ref:  (3, 3, cin, cout) bf16 weight ref
    ss_ref: (2, cout) f32 -- row 0 = scale, row 1 = shift
    returns (h*w, cout) f32, rows in (h, w) row-major (i.e. HWC flatten order)
    """
    # In-kernel zero padding: zero the halo buffer, write the interior at a
    # sublane-aligned offset; no jnp.pad / HBM pass in the wrapper.
    p_ref[...] = jnp.zeros_like(p_ref)
    p_ref[1:h + 1, LPAD:LPAD + w, :] = xin
    xp = p_ref[...]
    acc = jnp.zeros((h * w, cout), jnp.float32)
    # TODO(synk): a single im2col matmul (lane-concat of the 9 shifted windows)
    # would be one MXU push instead of 9, but lane-dim concatenation of
    # cin-wide (<128) pieces is not reliably lowered by Mosaic; keep the proven
    # 9-term accumulation, with bf16 matmul inputs to cut vreg pressure.
    for kh in range(3):
        for kw in range(3):
            patch = xp[kh:kh + h, LPAD - 1 + kw:LPAD - 1 + kw + w, :]
            patch = patch.reshape(h * w, cin).astype(jnp.bfloat16)
            acc = acc + jnp.dot(patch, w_ref[kh, kw],
                                preferred_element_type=jnp.float32)
    y = acc * ss_ref[0:1, :] + ss_ref[1:2, :]   # folded BN / bias (f32)
    return jnp.maximum(y, 0.0)                  # ReLU (f32)


def _conv_stack_kernel(x_ref, w1_ref, ss1_ref, w2_ref, ss2_ref, w3_ref, ss3_ref,
                       o_ref, p1, p2, p3, *, H, W):
    Hp, Wp = H // 2, W // 2
    # conv1 + bn1 + relu1
    y1 = _conv_block(x_ref[0], p1, w1_ref, ss1_ref, H, W, 3, 12)   # (H*W, 12)
    # 2x2 max pool, stride 2 (f32 epilogue)
    y1 = y1.reshape(Hp, 2, Wp, 2, 12)
    y1 = jnp.max(jnp.max(y1, axis=3), axis=1)                      # (Hp, Wp, 12)
    # conv2 + relu2
    y2 = _conv_block(y1, p2, w2_ref, ss2_ref, Hp, Wp, 12, 20)      # (Hp*Wp, 20)
    # conv3 + bn3 + relu3
    y3 = _conv_block(y2.reshape(Hp, Wp, 20), p3, w3_ref, ss3_ref,
                     Hp, Wp, 20, 32)                               # (Hp*Wp, 32)
    # rows are (h, w) row-major, lanes are channels -> HWC flatten order
    o_ref[0] = y3.astype(o_ref.dtype)


# ------------------------------- fc kernel ------------------------------------
def _fc_kernel(x_ref, w_ref, b_ref, o_ref):
    o_ref[...] = (jnp.dot(x_ref[...], w_ref[...],
                          preferred_element_type=jnp.float32) + b_ref[...])


# ------------------------------ forward ---------------------------------------
def convnet_forward(params, x_nchw, num_classes=6):
    N, _, H, W = x_nchw.shape
    Hp, Wp = H // 2, W // 2
    fc_in = Hp * Wp * 32

    # NCHW -> NHWC so channels sit on the lane axis inside the kernel.
    x = jnp.transpose(x_nchw, (0, 2, 3, 1))

    kern = functools.partial(_conv_stack_kernel, H=H, W=W)
    feats = pl.pallas_call(
        kern,
        out_shape=jax.ShapeDtypeStruct((N, Hp * Wp, 32), jnp.bfloat16),
        grid=(N,),
        in_specs=[
            pl.BlockSpec((1, H, W, 3), lambda n: (n, 0, 0, 0)),
            pl.BlockSpec((3, 3, 3, 12), lambda n: (0, 0, 0, 0)),
            pl.BlockSpec((2, 12), lambda n: (0, 0)),
            pl.BlockSpec((3, 3, 12, 20), lambda n: (0, 0, 0, 0)),
            pl.BlockSpec((2, 20), lambda n: (0, 0)),
            pl.BlockSpec((3, 3, 20, 32), lambda n: (0, 0, 0, 0)),
            pl.BlockSpec((2, 32), lambda n: (0, 0)),
        ],
        out_specs=pl.BlockSpec((1, Hp * Wp, 32), lambda n: (n, 0, 0)),
        scratch_shapes=[
            pltpu.VMEM((H + 2, W + LPAD + 1, 3), jnp.float32),
            pltpu.VMEM((Hp + 2, Wp + LPAD + 1, 12), jnp.float32),
            pltpu.VMEM((Hp + 2, Wp + LPAD + 1, 20), jnp.float32),
        ],
        compiler_params=pltpu.CompilerParams(
            dimension_semantics=("parallel",)),
    )(x, params["w1"], params["ss1"], params["w2"], params["ss2"],
      params["w3"], params["ss3"])

    # HWC flatten: fc weight rows were permuted CHW->HWC at init, so this is a
    # plain contiguous reshape (no transpose).
    feats = feats.reshape(N, fc_in)

    out = pl.pallas_call(
        _fc_kernel,
        out_shape=jax.ShapeDtypeStruct((N, LANE), jnp.float32),
        grid=(1,),
        in_specs=[
            pl.BlockSpec((N, fc_in), lambda i: (0, 0)),
            pl.BlockSpec((fc_in, LANE), lambda i: (0, 0)),
            pl.BlockSpec((1, LANE), lambda i: (0, 0)),
        ],
        out_specs=pl.BlockSpec((N, LANE), lambda i: (0, 0)),
        compiler_params=pltpu.CompilerParams(
            dimension_semantics=("arbitrary",)),
    )(feats, params["fc_w"], params["fc_b"])
    return out[:, :num_classes]


# ----------------------------- parameters -------------------------------------
def init_params(key, num_classes=6, h=16, w=16):
    eps = 1e-5
    ks = jax.random.split(key, 10)

    def conv_w(k, cin, cout):
        fan_in = 9 * cin
        return jax.random.normal(k, (3, 3, cin, cout), jnp.float32) / jnp.sqrt(
            jnp.float32(fan_in))

    def bias(k, c):
        return 0.05 * jax.random.normal(k, (c,), jnp.float32)

    def bn_stats(k, c):
        kg, kb, km, kv = jax.random.split(k, 4)
        gamma = 1.0 + 0.1 * jax.random.normal(kg, (c,), jnp.float32)
        beta = 0.1 * jax.random.normal(kb, (c,), jnp.float32)
        mean = 0.1 * jax.random.normal(km, (c,), jnp.float32)
        var = 1.0 + 0.1 * jax.random.uniform(kv, (c,), jnp.float32)
        return gamma, beta, mean, var

    def pack(scale, shift):                     # (2, cout): row0 scale, row1 shift
        return jnp.stack([scale, shift], axis=0).astype(jnp.float32)

    # conv1 (3 -> 12) + bn1 folded
    w1, b1 = conv_w(ks[0], 3, 12), bias(ks[1], 12)
    g1, be1, m1, v1 = bn_stats(ks[2], 12)
    s1 = g1 / jnp.sqrt(v1 + eps)
    ss1 = pack(s1, be1 + s1 * (b1 - m1))

    # conv2 (12 -> 20): plain bias, no BN
    w2, b2 = conv_w(ks[3], 12, 20), bias(ks[4], 20)
    ss2 = pack(jnp.ones((20,), jnp.float32), b2)

    # conv3 (20 -> 32) + bn3 folded
    w3, b3 = conv_w(ks[5], 20, 32), bias(ks[6], 32)
    g3, be3, m3, v3 = bn_stats(ks[7], 32)
    s3 = g3 / jnp.sqrt(v3 + eps)
    ss3 = pack(s3, be3 + s3 * (b3 - m3))

    # fc: in_features = 32 * (h//2) * (w//2)   (analogue of 32*75*75)
    hp, wp = h // 2, w // 2
    fc_in = 32 * hp * wp
    fc_w_chw = jax.random.normal(ks[8], (fc_in, num_classes), jnp.float32) / jnp.sqrt(
        jnp.float32(fc_in))                      # rows in PyTorch (C,H,W) order
    fc_b = 0.05 * jax.random.normal(ks[9], (num_classes,), jnp.float32)
    # Permute rows CHW -> HWC once (replaces the runtime flatten transpose) and
    # pad the output dim to 128 lanes (lane-dense FC store).
    fc_w_hwc = fc_w_chw.reshape(32, hp, wp, num_classes).transpose(1, 2, 0, 3)
    fc_w_hwc = fc_w_hwc.reshape(fc_in, num_classes)
    fc_w_pad = jnp.zeros((fc_in, LANE), jnp.float32).at[:, :num_classes].set(fc_w_hwc)
    fc_b_pad = jnp.zeros((1, LANE), jnp.float32).at[0, :num_classes].set(fc_b)

    bf16 = jnp.bfloat16
    return dict(w1=w1.astype(bf16), ss1=ss1,
                w2=w2.astype(bf16), ss2=ss2,
                w3=w3.astype(bf16), ss3=ss3,
                fc_w=fc_w_pad.astype(bf16), fc_b=fc_b_pad)


if __name__ == "__main__":
    key = jax.random.PRNGKey(0)
    pkey, xkey = jax.random.split(key)
    params = init_params(pkey, num_classes=6, h=16, w=16)
    x = jax.random.normal(xkey, (2, 3, 16, 16), jnp.float32)   # NCHW like PyTorch
    fwd = jax.jit(convnet_forward, static_argnums=(2,))
    out = fwd(params, x, 6)
    jax.block_until_ready(out)
    assert out.shape == (2, 6), out.shape
    print("KERNEL_OK")
</pallas_src>

<mosaic_0001>
module attributes {stable_mosaic.version = 11 : i64} {
  func.func @_fc_kernel(%arg0: i32, %arg1: memref<2x2048xbf16, #tpu.memory_space<vmem>>, %arg2: memref<2048x128xbf16, #tpu.memory_space<vmem>>, %arg3: memref<1x128xf32, #tpu.memory_space<vmem>>, %arg4: memref<2x128xf32, #tpu.memory_space<vmem>>) attributes {dimension_semantics = [#tpu.dimension_semantics<arbitrary>], iteration_bounds = array<i64: 1>, scalar_prefetch = 0 : i64, scratch_operands = 0 : i64, tpu.core_type = #tpu.core_type<tc>, window_params = [{pipeline_mode = #tpu.pipeline_mode<synchronous>, transform_indices = @transform_0, window_bounds = array<i64: 2, 2048>}, {pipeline_mode = #tpu.pipeline_mode<synchronous>, transform_indices = @transform_1, window_bounds = array<i64: 2048, 128>}, {pipeline_mode = #tpu.pipeline_mode<synchronous>, transform_indices = @transform_2, window_bounds = array<i64: 1, 128>}, {pipeline_mode = #tpu.pipeline_mode<synchronous>, transform_indices = @transform_3, window_bounds = array<i64: 2, 128>}]} {
    %c0 = arith.constant 0 : index
    %c0_0 = arith.constant 0 : index
    %0 = vector.load %arg1[%c0, %c0_0] : memref<2x2048xbf16, #tpu.memory_space<vmem>>, vector<2x2048xbf16>
    %c0_1 = arith.constant 0 : index
    %c0_2 = arith.constant 0 : index
    %1 = vector.load %arg2[%c0_1, %c0_2] : memref<2048x128xbf16, #tpu.memory_space<vmem>>, vector<2048x128xbf16>
    %cst = arith.constant dense<0.000000e+00> : vector<2x128xf32>
    %2 = tpu.matmul %0, %1, %cst {dimension_numbers = #tpu.dot_dimension_numbers<[1], [0], [0], [1], [0, 0, 1, 1], [], []>} : vector<2x2048xbf16>, vector<2048x128xbf16>, vector<2x128xf32> -> vector<2x128xf32>
    %c0_3 = arith.constant 0 : index
    %c0_4 = arith.constant 0 : index
    %3 = vector.load %arg3[%c0_3, %c0_4] : memref<1x128xf32, #tpu.memory_space<vmem>>, vector<1x128xf32>
    %4 = vector.broadcast %3 : vector<1x128xf32> to vector<2x128xf32>
    %5 = arith.addf %2, %4 : vector<2x128xf32>
    %c0_5 = arith.constant 0 : index
    %c0_6 = arith.constant 0 : index
    %6 = vector.load %arg4[%c0_5, %c0_6] : memref<2x128xf32, #tpu.memory_space<vmem>>, vector<2x128xf32>
    tpu.vector_store %arg4[%c0_5, %c0_6], %5 {strides = array<i32>} : memref<2x128xf32, #tpu.memory_space<vmem>>, vector<2x128xf32>,
    return
  }
  func.func @transform_0(%arg0: i32) -> (i32, i32) {
    %c0_i32 = arith.constant 0 : i32
    %c0_i32_0 = arith.constant 0 : i32
    %c0_i32_1 = arith.constant 0 : i32
    return %c0_i32, %c0_i32_0 : i32, i32
  }
  func.func @transform_1(%arg0: i32) -> (i32, i32) {
    %c0_i32 = arith.constant 0 : i32
    %c0_i32_0 = arith.constant 0 : i32
    %c0_i32_1 = arith.constant 0 : i32
    return %c0_i32, %c0_i32_0 : i32, i32
  }
  func.func @transform_2(%arg0: i32) -> (i32, i32) {
    %c0_i32 = arith.constant 0 : i32
    %c0_i32_0 = arith.constant 0 : i32
    %c0_i32_1 = arith.constant 0 : i32
    return %c0_i32, %c0_i32_0 : i32, i32
  }
  func.func @transform_3(%arg0: i32) -> (i32, i32) {
    %c0_i32 = arith.constant 0 : i32
    %c0_i32_0 = arith.constant 0 : i32
    %c0_i32_1 = arith.constant 0 : i32
    return %c0_i32, %c0_i32_0 : i32, i32
  }
}

module attributes {stable_mosaic.version = 11 : i64} {
  func.func @_conv_stack_kernel(%arg0: i32, %arg1: memref<1x16x16x3xf32, #tpu.memory_space<vmem>>, %arg2: memref<3x3x3x12xbf16, #tpu.memory_space<vmem>>, %arg3: memref<2x12xf32, #tpu.memory_space<vmem>>, %arg4: memref<3x3x12x20xbf16, #tpu.memory_space<vmem>>, %arg5: memref<2x20xf32, #tpu.memory_space<vmem>>, %arg6: memref<3x3x20x32xbf16, #tpu.memory_space<vmem>>, %arg7: memref<2x32xf32, #tpu.memory_space<vmem>>, %arg8: memref<1x64x32xbf16, #tpu.memory_space<vmem>>, %arg9: memref<18x25x3xf32, #tpu.memory_space<vmem>>, %arg10: memref<10x17x12xf32, #tpu.memory_space<vmem>>, %arg11: memref<10x17x20xf32, #tpu.memory_space<vmem>>) attributes {dimension_semantics = [#tpu.dimension_semantics<parallel>], iteration_bounds = array<i64: 2>, scalar_prefetch = 0 : i64, scratch_operands = 3 : i64, tpu.core_type = #tpu.core_type<tc>, window_params = [{transform_indices = @transform_0, window_bounds = array<i64: 1, 16, 16, 3>}, {pipeline_mode = #tpu.pipeline_mode<synchronous>, transform_indices = @transform_1, window_bounds = array<i64: 3, 3, 3, 12>}, {pipeline_mode = #tpu.pipeline_mode<synchronous>, transform_indices = @transform_2, window_bounds = array<i64: 2, 12>}, {pipeline_mode = #tpu.pipeline_mode<synchronous>, transform_indices = @transform_3, window_bounds = array<i64: 3, 3, 12, 20>}, {pipeline_mode = #tpu.pipeline_mode<synchronous>, transform_indices = @transform_4, window_bounds = array<i64: 2, 20>}, {pipeline_mode = #tpu.pipeline_mode<synchronous>, transform_indices = @transform_5, window_bounds = array<i64: 3, 3, 20, 32>}, {pipeline_mode = #tpu.pipeline_mode<synchronous>, transform_indices = @transform_6, window_bounds = array<i64: 2, 32>}, {transform_indices = @transform_7, window_bounds = array<i64: 1, 64, 32>}]} {
    %c0 = arith.constant 0 : index
    %c0_0 = arith.constant 0 : index
    %c0_1 = arith.constant 0 : index
    %c0_2 = arith.constant 0 : index
    %0 = vector.load %arg1[%c0, %c0_0, %c0_1, %c0_2] : memref<1x16x16x3xf32, #tpu.memory_space<vmem>>, vector<1x16x16x3xf32>
    %1 = vector.shape_cast %0 : vector<1x16x16x3xf32> to vector<16x16x3xf32>
    %cst = arith.constant 0.000000e+00 : f32
    %2 = vector.broadcast %cst : f32 to vector<18x25x3xf32>
    %c0_3 = arith.constant 0 : index
    %c0_4 = arith.constant 0 : index
    %c0_5 = arith.constant 0 : index
    %3 = vector.load %arg9[%c0_3, %c0_4, %c0_5] : memref<18x25x3xf32, #tpu.memory_space<vmem>>, vector<18x25x3xf32>
    tpu.vector_store %arg9[%c0_3, %c0_4, %c0_5], %2 {strides = array<i32>} : memref<18x25x3xf32, #tpu.memory_space<vmem>>, vector<18x25x3xf32>,
    %c1 = arith.constant 1 : index
    %c8 = arith.constant 8 : index
    %c0_6 = arith.constant 0 : index
    %4 = vector.load %arg9[%c1, %c8, %c0_6] : memref<18x25x3xf32, #tpu.memory_space<vmem>>, vector<16x16x3xf32>
    tpu.vector_store %arg9[%c1, %c8, %c0_6], %1 {strides = array<i32>} : memref<18x25x3xf32, #tpu.memory_space<vmem>>, vector<16x16x3xf32>,
    %c0_7 = arith.constant 0 : index
    %c0_8 = arith.constant 0 : index
    %c0_9 = arith.constant 0 : index
    %5 = vector.load %arg9[%c0_7, %c0_8, %c0_9] : memref<18x25x3xf32, #tpu.memory_space<vmem>>, vector<18x25x3xf32>
    %cst_10 = arith.constant 0.000000e+00 : f32
    %6 = vector.broadcast %cst_10 : f32 to vector<256x12xf32>
    %7 = vector.extract_strided_slice %5 {offsets = [0, 7, 0], sizes = [16, 16, 3], strides = [1, 1, 1]} : vector<18x25x3xf32> to vector<16x16x3xf32>
    %8 = vector.shape_cast %7 : vector<16x16x3xf32> to vector<256x3xf32>
    %9 = arith.truncf %8 : vector<256x3xf32> to vector<256x3xbf16>
    %c0_11 = arith.constant 0 : index
    %c0_12 = arith.constant 0 : index
    %c0_13 = arith.constant 0 : index
    %c0_14 = arith.constant 0 : index
    %10 = vector.load %arg2[%c0_11, %c0_12, %c0_13, %c0_14] : memref<3x3x3x12xbf16, #tpu.memory_space<vmem>>, vector<1x1x3x12xbf16>
    %11 = vector.shape_cast %10 : vector<1x1x3x12xbf16> to vector<3x12xbf16>
    %cst_15 = arith.constant dense<0.000000e+00> : vector<256x12xf32>
    %12 = tpu.matmul %9, %11, %cst_15 {dimension_numbers = #tpu.dot_dimension_numbers<[1], [0], [0], [1], [0, 0, 1, 1], [], []>} : vector<256x3xbf16>, vector<3x12xbf16>, vector<256x12xf32> -> vector<256x12xf32>
    %13 = arith.addf %6, %12 : vector<256x12xf32>
    %14 = vector.extract_strided_slice %5 {offsets = [0, 8, 0], sizes = [16, 16, 3], strides = [1, 1, 1]} : vector<18x25x3xf32> to vector<16x16x3xf32>
    %15 = vector.shape_cast %14 : vector<16x16x3xf32> to vector<256x3xf32>
    %16 = arith.truncf %15 : vector<256x3xf32> to vector<256x3xbf16>
    %c0_16 = arith.constant 0 : index
    %c1_17 = arith.constant 1 : index
    %c0_18 = arith.constant 0 : index
    %c0_19 = arith.constant 0 : index
    %17 = vector.load %arg2[%c0_16, %c1_17, %c0_18, %c0_19] : memref<3x3x3x12xbf16, #tpu.memory_space<vmem>>, vector<1x1x3x12xbf16>
    %18 = vector.shape_cast %17 : vector<1x1x3x12xbf16> to vector<3x12xbf16>
    %cst_20 = arith.constant dense<0.000000e+00> : vector<256x12xf32>
    %19 = tpu.matmul %16, %18, %cst_20 {dimension_numbers = #tpu.dot_dimension_numbers<[1], [0], [0], [1], [0, 0, 1, 1], [], []>} : vector<256x3xbf16>, vector<3x12xbf16>, vector<256x12xf32> -> vector<256x12xf32>
    %20 = arith.addf %13, %19 : vector<256x12xf32>
    %21 = vector.extract_strided_slice %5 {offsets = [0, 9, 0], sizes = [16, 16, 3], strides = [1, 1, 1]} : vector<18x25x3xf32> to vector<16x16x3xf32>
    %22 = vector.shape_cast %21 : vector<16x16x3xf32> to vector<256x3xf32>
    %23 = arith.truncf %22 : vector<256x3xf32> to vector<256x3xbf16>
    %c0_21 = arith.constant 0 : index
    %c2 = arith.constant 2 : index
    %c0_22 = arith.constant 0 : index
    %c0_23 = arith.constant 0 : index
    %24 = vector.load %arg2[%c0_21, %c2, %c0_22, %c0_23] : memref<3x3x3x12xbf16, #tpu.memory_space<vmem>>, vector<1x1x3x12xbf16>
    %25 = vector.shape_cast %24 : vector<1x1x3x12xbf16> to vector<3x12xbf16>
    %cst_24 = arith.constant dense<0.000000e+00> : vector<256x12xf32>
    %26 = tpu.matmul %23, %25, %cst_24 {dimension_numbers = #tpu.dot_dimension_numbers<[1], [0], [0], [1], [0, 0, 1, 1], [], []>} : vector<256x3xbf16>, vector<3x12xbf16>, vector<256x12xf32> -> vector<256x12xf32>
    %27 = arith.addf %20, %26 : vector<256x12xf32>
    %28 = vector.extract_strided_slice %5 {offsets = [1, 7, 0], sizes = [16, 16, 3], strides = [1, 1, 1]} : vector<18x25x3xf32> to vector<16x16x3xf32>
    %29 = vector.shape_cast %28 : vector<16x16x3xf32> to vector<256x3xf32>
    %30 = arith.truncf %29 : vector<256x3xf32> to vector<256x3xbf16>
    %c1_25 = arith.constant 1 : index
    %c0_26 = arith.constant 0 : index
    %c0_27 = arith.constant 0 : index
    %c0_28 = arith.constant 0 : index
    %31 = vector.load %arg2[%c1_25, %c0_26, %c0_27, %c0_28] : memref<3x3x3x12xbf16, #tpu.memory_space<vmem>>, vector<1x1x3x12xbf16>
    %32 = vector.shape_cast %31 : vector<1x1x3x12xbf16> to vector<3x12xbf16>
    %cst_29 = arith.constant dense<0.000000e+00> : vector<256x12xf32>
    %33 = tpu.matmul %30, %32, %cst_29 {dimension_numbers = #tpu.dot_dimension_numbers<[1], [0], [0], [1], [0, 0, 1, 1], [], []>} : vector<256x3xbf16>, vector<3x12xbf16>, vector<256x12xf32> -> vector<256x12xf32>
    %34 = arith.addf %27, %33 : vector<256x12xf32>
    %35 = vector.extract_strided_slice %5 {offsets = [1, 8, 0], sizes = [16, 16, 3], strides = [1, 1, 1]} : vector<18x25x3xf32> to vector<16x16x3xf32>
    %36 = vector.shape_cast %35 : vector<16x16x3xf32> to vector<256x3xf32>
    %37 = arith.truncf %36 : vector<256x3xf32> to vector<256x3xbf16>
    %c1_30 = arith.constant 1 : index
    %c1_31 = arith.constant 1 : index
    %c0_32 = arith.constant 0 : index
    %c0_33 = arith.constant 0 : index
    %38 = vector.load %arg2[%c1_30, %c1_31, %c0_32, %c0_33] : memref<3x3x3x12xbf16, #tpu.memory_space<vmem>>, vector<1x1x3x12xbf16>
    %39 = vector.shape_cast %38 : vector<1x1x3x12xbf16> to vector<3x12xbf16>
    %cst_34 = arith.constant dense<0.000000e+00> : vector<256x12xf32>
    %40 = tpu.matmul %37, %39, %cst_34 {dimension_numbers = #tpu.dot_dimension_numbers<[1], [0], [0], [1], [0, 0, 1, 1], [], []>} : vector<256x3xbf16>, vector<3x12xbf16>, vector<256x12xf32> -> vector<256x12xf32>
    %41 = arith.addf %34, %40 : vector<256x12xf32>
    %42 = vector.extract_strided_slice %5 {offsets = [1, 9, 0], sizes = [16, 16, 3], strides = [1, 1, 1]} : vector<18x25x3xf32> to vector<16x16x3xf32>
    %43 = vector.shape_cast %42 : vector<16x16x3xf32> to vector<256x3xf32>
    %44 = arith.truncf %43 : vector<256x3xf32> to vector<256x3xbf16>
    %c1_35 = arith.constant 1 : index
    %c2_36 = arith.constant 2 : index
    %c0_37 = arith.constant 0 : index
    %c0_38 = arith.constant 0 : index
    %45 = vector.load %arg2[%c1_35, %c2_36, %c0_37, %c0_38] : memref<3x3x3x12xbf16, #tpu.memory_space<vmem>>, vector<1x1x3x12xbf16>
    %46 = vector.shape_cast %45 : vector<1x1x3x12xbf16> to vector<3x12xbf16>
    %cst_39 = arith.constant dense<0.000000e+00> : vector<256x12xf32>
    %47 = tpu.matmul %44, %46, %cst_39 {dimension_numbers = #tpu.dot_dimension_numbers<[1], [0], [0], [1], [0, 0, 1, 1], [], []>} : vector<256x3xbf16>, vector<3x12xbf16>, vector<256x12xf32> -> vector<256x12xf32>
    %48 = arith.addf %41, %47 : vector<256x12xf32>
    %49 = vector.extract_strided_slice %5 {offsets = [2, 7, 0], sizes = [16, 16, 3], strides = [1, 1, 1]} : vector<18x25x3xf32> to vector<16x16x3xf32>
    %50 = vector.shape_cast %49 : vector<16x16x3xf32> to vector<256x3xf32>
    %51 = arith.truncf %50 : vector<256x3xf32> to vector<256x3xbf16>
    %c2_40 = arith.constant 2 : index
    %c0_41 = arith.constant 0 : index
    %c0_42 = arith.constant 0 : index
    %c0_43 = arith.constant 0 : index
    %52 = vector.load %arg2[%c2_40, %c0_41, %c0_42, %c0_43] : memref<3x3x3x12xbf16, #tpu.memory_space<vmem>>, vector<1x1x3x12xbf16>
    %53 = vector.shape_cast %52 : vector<1x1x3x12xbf16> to vector<3x12xbf16>
    %cst_44 = arith.constant dense<0.000000e+00> : vector<256x12xf32>
    %54 = tpu.matmul %51, %53, %cst_44 {dimension_numbers = #tpu.dot_dimension_numbers<[1], [0], [0], [1], [0, 0, 1, 1], [], []>} : vector<256x3xbf16>, vector<3x12xbf16>, vector<256x12xf32> -> vector<256x12xf32>
    %55 = arith.addf %48, %54 : vector<256x12xf32>
    %56 = vector.extract_strided_slice %5 {offsets = [2, 8, 0], sizes = [16, 16, 3], strides = [1, 1, 1]} : vector<18x25x3xf32> to vector<16x16x3xf32>
    %57 = vector.shape_cast %56 : vector<16x16x3xf32> to vector<256x3xf32>
    %58 = arith.truncf %57 : vector<256x3xf32> to vector<256x3xbf16>
    %c2_45 = arith.constant 2 : index
    %c1_46 = arith.constant 1 : index
    %c0_47 = arith.constant 0 : index
    %c0_48 = arith.constant 0 : index
    %59 = vector.load %arg2[%c2_45, %c1_46, %c0_47, %c0_48] : memref<3x3x3x12xbf16, #tpu.memory_space<vmem>>, vector<1x1x3x12xbf16>
    %60 = vector.shape_cast %59 : vector<1x1x3x12xbf16> to vector<3x12xbf16>
    %cst_49 = arith.constant dense<0.000000e+00> : vector<256x12xf32>
    %61 = tpu.matmul %58, %60, %cst_49 {dimension_numbers = #tpu.dot_dimension_numbers<[1], [0], [0], [1], [0, 0, 1, 1], [], []>} : vector<256x3xbf16>, vector<3x12xbf16>, vector<256x12xf32> -> vector<256x12xf32>
    %62 = arith.addf %55, %61 : vector<256x12xf32>
    %63 = vector.extract_strided_slice %5 {offsets = [2, 9, 0], sizes = [16, 16, 3], strides = [1, 1, 1]} : vector<18x25x3xf32> to vector<16x16x3xf32>
    %64 = vector.shape_cast %63 : vector<16x16x3xf32> to vector<256x3xf32>
    %65 = arith.truncf %64 : vector<256x3xf32> to vector<256x3xbf16>
    %c2_50 = arith.constant 2 : index
    %c2_51 = arith.constant 2 : index
    %c0_52 = arith.constant 0 : index
    %c0_53 = arith.constant 0 : index
    %66 = vector.load %arg2[%c2_50, %c2_51, %c0_52, %c0_53] : memref<3x3x3x12xbf16, #tpu.memory_space<vmem>>, vector<1x1x3x12xbf16>
    %67 = vector.shape_cast %66 : vector<1x1x3x12xbf16> to vector<3x12xbf16>
    %cst_54 = arith.constant dense<0.000000e+00> : vector<256x12xf32>
    %68 = tpu.matmul %65, %67, %cst_54 {dimension_numbers = #tpu.dot_dimension_numbers<[1], [0], [0], [1], [0, 0, 1, 1], [], []>} : vector<256x3xbf16>, vector<3x12xbf16>, vector<256x12xf32> -> vector<256x12xf32>
    %69 = arith.addf %62, %68 : vector<256x12xf32>
    %c0_55 = arith.constant 0 : index
    %c0_56 = arith.constant 0 : index
    %70 = vector.load %arg3[%c0_55, %c0_56] : memref<2x12xf32, #tpu.memory_space<vmem>>, vector<1x12xf32>
    %71 = vector.broadcast %70 : vector<1x12xf32> to vector<256x12xf32>
    %72 = arith.mulf %69, %71 : vector<256x12xf32>
    %c1_57 = arith.constant 1 : index
    %c0_58 = arith.constant 0 : index
    %73 = vector.load %arg3[%c1_57, %c0_58] : memref<2x12xf32, #tpu.memory_space<vmem>>, vector<1x12xf32>
    %74 = vector.broadcast %73 : vector<1x12xf32> to vector<256x12xf32>
    %75 = arith.addf %72, %74 : vector<256x12xf32>
    %cst_59 = arith.constant 0.000000e+00 : f32
    %76 = vector.broadcast %cst_59 : f32 to vector<256x12xf32>
    %77 = arith.maximumf %75, %76 : vector<256x12xf32>
    %78 = vector.shape_cast %77 : vector<256x12xf32> to vector<8x2x8x2x12xf32>
    %cst_60 = arith.constant dense<0xFF800000> : vector<8x2x8x12xf32>
    %79 = vector.multi_reduction <maximumf>, %78, %cst_60 [3] : vector<8x2x8x2x12xf32> to vector<8x2x8x12xf32>
    %cst_61 = arith.constant dense<0xFF800000> : vector<8x8x12xf32>
    %80 = vector.multi_reduction <maximumf>, %79, %cst_61 [1] : vector<8x2x8x12xf32> to vector<8x8x12xf32>
    %cst_62 = arith.constant 0.000000e+00 : f32
    %81 = vector.broadcast %cst_62 : f32 to vector<10x17x12xf32>
    %c0_63 = arith.constant 0 : index
    %c0_64 = arith.constant 0 : index
    %c0_65 = arith.constant 0 : index
    %82 = vector.load %arg10[%c0_63, %c0_64, %c0_65] : memref<10x17x12xf32, #tpu.memory_space<vmem>>, vector<10x17x12xf32>
    tpu.vector_store %arg10[%c0_63, %c0_64, %c0_65], %81 {strides = array<i32>} : memref<10x17x12xf32, #tpu.memory_space<vmem>>, vector<10x17x12xf32>,
    %c1_66 = arith.constant 1 : index
    %c8_67 = arith.constant 8 : index
    %c0_68 = arith.constant 0 : index
    %83 = vector.load %arg10[%c1_66, %c8_67, %c0_68] : memref<10x17x12xf32, #tpu.memory_space<vmem>>, vector<8x8x12xf32>
    tpu.vector_store %arg10[%c1_66, %c8_67, %c0_68], %80 {strides = array<i32>} : memref<10x17x12xf32, #tpu.memory_space<vmem>>, vector<8x8x12xf32>,
    %c0_69 = arith.constant 0 : index
    %c0_70 = arith.constant 0 : index
    %c0_71 = arith.constant 0 : index
    %84 = vector.load %arg10[%c0_69, %c0_70, %c0_71] : memref<10x17x12xf32, #tpu.memory_space<vmem>>, vector<10x17x12xf32>
    %cst_72 = arith.constant 0.000000e+00 : f32
    %85 = vector.broadcast %cst_72 : f32 to vector<64x20xf32>
    %86 = vector.extract_strided_slice %84 {offsets = [0, 7, 0], sizes = [8, 8, 12], strides = [1, 1, 1]} : vector<10x17x12xf32> to vector<8x8x12xf32>
    %87 = vector.shape_cast %86 : vector<8x8x12xf32> to vector<64x12xf32>
    %88 = arith.truncf %87 : vector<64x12xf32> to vector<64x12xbf16>
    %c0_73 = arith.constant 0 : index
    %c0_74 = arith.constant 0 : index
    %c0_75 = arith.constant 0 : index
    %c0_76 = arith.constant 0 : index
    %89 = vector.load %arg4[%c0_73, %c0_74, %c0_75, %c0_76] : memref<3x3x12x20xbf16, #tpu.memory_space<vmem>>, vector<1x1x12x20xbf16>
    %90 = vector.shape_cast %89 : vector<1x1x12x20xbf16> to vector<12x20xbf16>
    %cst_77 = arith.constant dense<0.000000e+00> : vector<64x20xf32>
    %91 = tpu.matmul %88, %90, %cst_77 {dimension_numbers = #tpu.dot_dimension_numbers<[1], [0], [0], [1], [0, 0, 1, 1], [], []>} : vector<64x12xbf16>, vector<12x20xbf16>, vector<64x20xf32> -> vector<64x20xf32>
    %92 = arith.addf %85, %91 : vector<64x20xf32>
    %93 = vector.extract_strided_slice %84 {offsets = [0, 8, 0], sizes = [8, 8, 12], strides = [1, 1, 1]} : vector<10x17x12xf32> to vector<8x8x12xf32>
    %94 = vector.shape_cast %93 : vector<8x8x12xf32> to vector<64x12xf32>
    %95 = arith.truncf %94 : vector<64x12xf32> to vector<64x12xbf16>
    %c0_78 = arith.constant 0 : index
    %c1_79 = arith.constant 1 : index
    %c0_80 = arith.constant 0 : index
    %c0_81 = arith.constant 0 : index
    %96 = vector.load %arg4[%c0_78, %c1_79, %c0_80, %c0_81] : memref<3x3x12x20xbf16, #tpu.memory_space<vmem>>, vector<1x1x12x20xbf16>
    %97 = vector.shape_cast %96 : vector<1x1x12x20xbf16> to vector<12x20xbf16>
    %cst_82 = arith.constant dense<0.000000e+00> : vector<64x20xf32>
    %98 = tpu.matmul %95, %97, %cst_82 {dimension_numbers = #tpu.dot_dimension_numbers<[1], [0], [0], [1], [0, 0, 1, 1], [], []>} : vector<64x12xbf16>, vector<12x20xbf16>, vector<64x20xf32> -> vector<64x20xf32>
    %99 = arith.addf %92, %98 : vector<64x20xf32>
    %100 = vector.extract_strided_slice %84 {offsets = [0, 9, 0], sizes = [8, 8, 12], strides = [1, 1, 1]} : vector<10x17x12xf32> to vector<8x8x12xf32>
    %101 = vector.shape_cast %100 : vector<8x8x12xf32> to vector<64x12xf32>
    %102 = arith.truncf %101 : vector<64x12xf32> to vector<64x12xbf16>
    %c0_83 = arith.constant 0 : index
    %c2_84 = arith.constant 2 : index
    %c0_85 = arith.constant 0 : index
    %c0_86 = arith.constant 0 : index
    %103 = vector.load %arg4[%c0_83, %c2_84, %c0_85, %c0_86] : memref<3x3x12x20xbf16, #tpu.memory_space<vmem>>, vector<1x1x12x20xbf16>
    %104 = vector.shape_cast %103 : vector<1x1x12x20xbf16> to vector<12x20xbf16>
    %cst_87 = arith.constant dense<0.000000e+00> : vector<64x20xf32>
    %105 = tpu.matmul %102, %104, %cst_87 {dimension_numbers = #tpu.dot_dimension_numbers<[1], [0], [0], [1], [0, 0, 1, 1], [], []>} : vector<64x12xbf16>, vector<12x20xbf16>, vector<64x20xf32> -> vector<64x20xf32>
    %106 = arith.addf %99, %105 : vector<64x20xf32>
    %107 = vector.extract_strided_slice %84 {offsets = [1, 7, 0], sizes = [8, 8, 12], strides = [1, 1, 1]} : vector<10x17x12xf32> to vector<8x8x12xf32>
    %108 = vector.shape_cast %107 : vector<8x8x12xf32> to vector<64x12xf32>
    %109 = arith.truncf %108 : vector<64x12xf32> to vector<64x12xbf16>
    %c1_88 = arith.constant 1 : index
    %c0_89 = arith.constant 0 : index
    %c0_90 = arith.constant 0 : index
    %c0_91 = arith.constant 0 : index
    %110 = vector.load %arg4[%c1_88, %c0_89, %c0_90, %c0_91] : memref<3x3x12x20xbf16, #tpu.memory_space<vmem>>, vector<1x1x12x20xbf16>
    %111 = vector.shape_cast %110 : vector<1x1x12x20xbf16> to vector<12x20xbf16>
    %cst_92 = arith.constant dense<0.000000e+00> : vector<64x20xf32>
    %112 = tpu.matmul %109, %111, %cst_92 {dimension_numbers = #tpu.dot_dimension_numbers<[1], [0], [0], [1], [0, 0, 1, 1], [], []>} : vector<64x12xbf16>, vector<12x20xbf16>, vector<64x20xf32> -> vector<64x20xf32>
    %113 = arith.addf %106, %112 : vector<64x20xf32>
    %114 = vector.extract_strided_slice %84 {offsets = [1, 8, 0], sizes = [8, 8, 12], strides = [1, 1, 1]} : vector<10x17x12xf32> to vector<8x8x12xf32>
    %115 = vector.shape_cast %114 : vector<8x8x12xf32> to vector<64x12xf32>
    %116 = arith.truncf %115 : vector<64x12xf32> to vector<64x12xbf16>
    %c1_93 = arith.constant 1 : index
    %c1_94 = arith.constant 1 : index
    %c0_95 = arith.constant 0 : index
    %c0_96 = arith.constant 0 : index
    %117 = vector.load %arg4[%c1_93, %c1_94, %c0_95, %c0_96] : memref<3x3x12x20xbf16, #tpu.memory_space<vmem>>, vector<1x1x12x20xbf16>
    %118 = vector.shape_cast %117 : vector<1x1x12x20xbf16> to vector<12x20xbf16>
    %cst_97 = arith.constant dense<0.000000e+00> : vector<64x20xf32>
    %119 = tpu.matmul %116, %118, %cst_97 {dimension_numbers = #tpu.dot_dimension_numbers<[1], [0], [0], [1], [0, 0, 1, 1], [], []>} : vector<64x12xbf16>, vector<12x20xbf16>, vector<64x20xf32> -> vector<64x20xf32>
    %120 = arith.addf %113, %119 : vector<64x20xf32>
    %121 = vector.extract_strided_slice %84 {offsets = [1, 9, 0], sizes = [8, 8, 12], strides = [1, 1, 1]} : vector<10x17x12xf32> to vector<8x8x12xf32>
    %122 = vector.shape_cast %121 : vector<8x8x12xf32> to vector<64x12xf32>
    %123 = arith.truncf %122 : vector<64x12xf32> to vector<64x12xbf16>
    %c1_98 = arith.constant 1 : index
    %c2_99 = arith.constant 2 : index
    %c0_100 = arith.constant 0 : index
    %c0_101 = arith.constant 0 : index
    %124 = vector.load %arg4[%c1_98, %c2_99, %c0_100, %c0_101] : memref<3x3x12x20xbf16, #tpu.memory_space<vmem>>, vector<1x1x12x20xbf16>
    %125 = vector.shape_cast %124 : vector<1x1x12x20xbf16> to vector<12x20xbf16>
    %cst_102 = arith.constant dense<0.000000e+00> : vector<64x20xf32>
    %126 = tpu.matmul %123, %125, %cst_102 {dimension_numbers = #tpu.dot_dimension_numbers<[1], [0], [0], [1], [0, 0, 1, 1], [], []>} : vector<64x12xbf16>, vector<12x20xbf16>, vector<64x20xf32> -> vector<64x20xf32>
    %127 = arith.addf %120, %126 : vector<64x20xf32>
    %128 = vector.extract_strided_slice %84 {offsets = [2, 7, 0], sizes = [8, 8, 12], strides = [1, 1, 1]} : vector<10x17x12xf32> to vector<8x8x12xf32>
    %129 = vector.shape_cast %128 : vector<8x8x12xf32> to vector<64x12xf32>
    %130 = arith.truncf %129 : vector<64x12xf32> to vector<64x12xbf16>
    %c2_103 = arith.constant 2 : index
    %c0_104 = arith.constant 0 : index
    %c0_105 = arith.constant 0 : index
    %c0_106 = arith.constant 0 : index
    %131 = vector.load %arg4[%c2_103, %c0_104, %c0_105, %c0_106] : memref<3x3x12x20xbf16, #tpu.memory_space<vmem>>, vector<1x1x12x20xbf16>
    %132 = vector.shape_cast %131 : vector<1x1x12x20xbf16> to vector<12x20xbf16>
    %cst_107 = arith.constant dense<0.000000e+00> : vector<64x20xf32>
    %133 = tpu.matmul %130, %132, %cst_107 {dimension_numbers = #tpu.dot_dimension_numbers<[1], [0], [0], [1], [0, 0, 1, 1], [], []>} : vector<64x12xbf16>, vector<12x20xbf16>, vector<64x20xf32> -> vector<64x20xf32>
    %134 = arith.addf %127, %133 : vector<64x20xf32>
    %135 = vector.extract_strided_slice %84 {offsets = [2, 8, 0], sizes = [8, 8, 12], strides = [1, 1, 1]} : vector<10x17x12xf32> to vector<8x8x12xf32>
    %136 = vector.shape_cast %135 : vector<8x8x12xf32> to vector<64x12xf32>
    %137 = arith.truncf %136 : vector<64x12xf32> to vector<64x12xbf16>
    %c2_108 = arith.constant 2 : index
    %c1_109 = arith.constant 1 : index
    %c0_110 = arith.constant 0 : index
    %c0_111 = arith.constant 0 : index
    %138 = vector.load %arg4[%c2_108, %c1_109, %c0_110, %c0_111] : memref<3x3x12x20xbf16, #tpu.memory_space<vmem>>, vector<1x1x12x20xbf16>
    %139 = vector.shape_cast %138 : vector<1x1x12x20xbf16> to vector<12x20xbf16>
    %cst_112 = arith.constant dense<0.000000e+00> : vector<64x20xf32>
    %140 = tpu.matmul %137, %139, %cst_112 {dimension_numbers = #tpu.dot_dimension_numbers<[1], [0], [0], [1], [0, 0, 1, 1], [], []>} : vector<64x12xbf16>, vector<12x20xbf16>, vector<64x20xf32> -> vector<64x20xf32>
    %141 = arith.addf %134, %140 : vector<64x20xf32>
    %142 = vector.extract_strided_slice %84 {offsets = [2, 9, 0], sizes = [8, 8, 12], strides = [1, 1, 1]} : vector<10x17x12xf32> to vector<8x8x12xf32>
    %143 = vector.shape_cast %142 : vector<8x8x12xf32> to vector<64x12xf32>
    %144 = arith.truncf %143 : vector<64x12xf32> to vector<64x12xbf16>
    %c2_113 = arith.constant 2 : index
    %c2_114 = arith.constant 2 : index
    %c0_115 = arith.constant 0 : index
    %c0_116 = arith.constant 0 : index
    %145 = vector.load %arg4[%c2_113, %c2_114, %c0_115, %c0_116] : memref<3x3x12x20xbf16, #tpu.memory_space<vmem>>, vector<1x1x12x20xbf16>
    %146 = vector.shape_cast %145 : vector<1x1x12x20xbf16> to vector<12x20xbf16>
    %cst_117 = arith.constant dense<0.000000e+00> : vector<64x20xf32>
    %147 = tpu.matmul %144, %146, %cst_117 {dimension_numbers = #tpu.dot_dimension_numbers<[1], [0], [0], [1], [0, 0, 1, 1], [], []>} : vector<64x12xbf16>, vector<12x20xbf16>, vector<64x20xf32> -> vector<64x20xf32>
    %148 = arith.addf %141, %147 : vector<64x20xf32>
    %c0_118 = arith.constant 0 : index
    %c0_119 = arith.constant 0 : index
    %149 = vector.load %arg5[%c0_118, %c0_119] : memref<2x20xf32, #tpu.memory_space<vmem>>, vector<1x20xf32>
    %150 = vector.broadcast %149 : vector<1x20xf32> to vector<64x20xf32>
    %151 = arith.mulf %148, %150 : vector<64x20xf32>
    %c1_120 = arith.constant 1 : index
    %c0_121 = arith.constant 0 : index
    %152 = vector.load %arg5[%c1_120, %c0_121] : memref<2x20xf32, #tpu.memory_space<vmem>>, vector<1x20xf32>
    %153 = vector.broadcast %152 : vector<1x20xf32> to vector<64x20xf32>
    %154 = arith.addf %151, %153 : vector<64x20xf32>
    %cst_122 = arith.constant 0.000000e+00 : f32
    %155 = vector.broadcast %cst_122 : f32 to vector<64x20xf32>
    %156 = arith.maximumf %154, %155 : vector<64x20xf32>
    %157 = vector.shape_cast %156 : vector<64x20xf32> to vector<8x8x20xf32>
    %cst_123 = arith.constant 0.000000e+00 : f32
    %158 = vector.broadcast %cst_123 : f32 to vector<10x17x20xf32>
    %c0_124 = arith.constant 0 : index
    %c0_125 = arith.constant 0 : index
    %c0_126 = arith.constant 0 : index
    %159 = vector.load %arg11[%c0_124, %c0_125, %c0_126] : memref<10x17x20xf32, #tpu.memory_space<vmem>>, vector<10x17x20xf32>
    tpu.vector_store %arg11[%c0_124, %c0_125, %c0_126], %158 {strides = array<i32>} : memref<10x17x20xf32, #tpu.memory_space<vmem>>, vector<10x17x20xf32>,
    %c1_127 = arith.constant 1 : index
    %c8_128 = arith.constant 8 : index
    %c0_129 = arith.constant 0 : index
    %160 = vector.load %arg11[%c1_127, %c8_128, %c0_129] : memref<10x17x20xf32, #tpu.memory_space<vmem>>, vector<8x8x20xf32>
    tpu.vector_store %arg11[%c1_127, %c8_128, %c0_129], %157 {strides = array<i32>} : memref<10x17x20xf32, #tpu.memory_space<vmem>>, vector<8x8x20xf32>,
    %c0_130 = arith.constant 0 : index
    %c0_131 = arith.constant 0 : index
    %c0_132 = arith.constant 0 : index
    %161 = vector.load %arg11[%c0_130, %c0_131, %c0_132] : memref<10x17x20xf32, #tpu.memory_space<vmem>>, vector<10x17x20xf32>
    %cst_133 = arith.constant 0.000000e+00 : f32
    %162 = vector.broadcast %cst_133 : f32 to vector<64x32xf32>
    %163 = vector.extract_strided_slice %161 {offsets = [0, 7, 0], sizes = [8, 8, 20], strides = [1, 1, 1]} : vector<10x17x20xf32> to vector<8x8x20xf32>
    %164 = vector.shape_cast %163 : vector<8x8x20xf32> to vector<64x20xf32>
    %165 = arith.truncf %164 : vector<64x20xf32> to vector<64x20xbf16>
    %c0_134 = arith.constant 0 : index
    %c0_135 = arith.constant 0 : index
    %c0_136 = arith.constant 0 : index
    %c0_137 = arith.constant 0 : index
    %166 = vector.load %arg6[%c0_134, %c0_135, %c0_136, %c0_137] : memref<3x3x20x32xbf16, #tpu.memory_space<vmem>>, vector<1x1x20x32xbf16>
    %167 = vector.shape_cast %166 : vector<1x1x20x32xbf16> to vector<20x32xbf16>
    %cst_138 = arith.constant dense<0.000000e+00> : vector<64x32xf32>
    %168 = tpu.matmul %165, %167, %cst_138 {dimension_numbers = #tpu.dot_dimension_numbers<[1], [0], [0], [1], [0, 0, 1, 1], [], []>} : vector<64x20xbf16>, vector<20x32xbf16>, vector<64x32xf32> -> vector<64x32xf32>
    %169 = arith.addf %162, %168 : vector<64x32xf32>
    %170 = vector.extract_strided_slice %161 {offsets = [0, 8, 0], sizes = [8, 8, 20], strides = [1, 1, 1]} : vector<10x17x20xf32> to vector<8x8x20xf32>
    %171 = vector.shape_cast %170 : vector<8x8x20xf32> to vector<64x20xf32>
    %172 = arith.truncf %171 : vector<64x20xf32> to vector<64x20xbf16>
    %c0_139 = arith.constant 0 : index
    %c1_140 = arith.constant 1 : index
    %c0_141 = arith.constant 0 : index
    %c0_142 = arith.constant 0 : index
    %173 = vector.load %arg6[%c0_139, %c1_140, %c0_141, %c0_142] : memref<3x3x20x32xbf16, #tpu.memory_space<vmem>>, vector<1x1x20x32xbf16>
    %174 = vector.shape_cast %173 : vector<1x1x20x32xbf16> to vector<20x32xbf16>
    %cst_143 = arith.constant dense<0.000000e+00> : vector<64x32xf32>
    %175 = tpu.matmul %172, %174, %cst_143 {dimension_numbers = #tpu.dot_dimension_numbers<[1], [0], [0], [1], [0, 0, 1, 1], [], []>} : vector<64x20xbf16>, vector<20x32xbf16>, vector<64x32xf32> -> vector<64x32xf32>
    %176 = arith.addf %169, %175 : vector<64x32xf32>
    %177 = vector.extract_strided_slice %161 {offsets = [0, 9, 0], sizes = [8, 8, 20], strides = [1, 1, 1]} : vector<10x17x20xf32> to vector<8x8x20xf32>
    %178 = vector.shape_cast %177 : vector<8x8x20xf32> to vector<64x20xf32>
    %179 = arith.truncf %178 : vector<64x20xf32> to vector<64x20xbf16>
    %c0_144 = arith.constant 0 : index
    %c2_145 = arith.constant 2 : index
    %c0_146 = arith.constant 0 : index
    %c0_147 = arith.constant 0 : index
    %180 = vector.load %arg6[%c0_144, %c2_145, %c0_146, %c0_147] : memref<3x3x20x32xbf16, #tpu.memory_space<vmem>>, vector<1x1x20x32xbf16>
    %181 = vector.shape_cast %180 : vector<1x1x20x32xbf16> to vector<20x32xbf16>
    %cst_148 = arith.constant dense<0.000000e+00> : vector<64x32xf32>
    %182 = tpu.matmul %179, %181, %cst_148 {dimension_numbers = #tpu.dot_dimension_numbers<[1], [0], [0], [1], [0, 0, 1, 1], [], []>} : vector<64x20xbf16>, vector<20x32xbf16>, vector<64x32xf32> -> vector<64x32xf32>
    %183 = arith.addf %176, %182 : vector<64x32xf32>
    %184 = vector.extract_strided_slice %161 {offsets = [1, 7, 0], sizes = [8, 8, 20], strides = [1, 1, 1]} : vector<10x17x20xf32> to vector<8x8x20xf32>
    %185 = vector.shape_cast %184 : vector<8x8x20xf32> to vector<64x20xf32>
    %186 = arith.truncf %185 : vector<64x20xf32> to vector<64x20xbf16>
    %c1_149 = arith.constant 1 : index
    %c0_150 = arith.constant 0 : index
    %c0_151 = arith.constant 0 : index
    %c0_152 = arith.constant 0 : index
    %187 = vector.load %arg6[%c1_149, %c0_150, %c0_151, %c0_152] : memref<3x3x20x32xbf16, #tpu.memory_space<vmem>>, vector<1x1x20x32xbf16>
    %188 = vector.shape_cast %187 : vector<1x1x20x32xbf16> to vector<20x32xbf16>
    %cst_153 = arith.constant dense<0.000000e+00> : vector<64x32xf32>
    %189 = tpu.matmul %186, %188, %cst_153 {dimension_numbers = #tpu.dot_dimension_numbers<[1], [0], [0], [1], [0, 0, 1, 1], [], []>} : vector<64x20xbf16>, vector<20x32xbf16>, vector<64x32xf32> -> vector<64x32xf32>
    %190 = arith.addf %183, %189 : vector<64x32xf32>
    %191 = vector.extract_strided_slice %161 {offsets = [1, 8, 0], sizes = [8, 8, 20], strides = [1, 1, 1]} : vector<10x17x20xf32> to vector<8x8x20xf32>
    %192 = vector.shape_cast %191 : vector<8x8x20xf32> to vector<64x20xf32>
    %193 = arith.truncf %192 : vector<64x20xf32> to vector<64x20xbf16>
    %c1_154 = arith.constant 1 : index
    %c1_155 = arith.constant 1 : index
    %c0_156 = arith.constant 0 : index
    %c0_157 = arith.constant 0 : index
    %194 = vector.load %arg6[%c1_154, %c1_155, %c0_156, %c0_157] : memref<3x3x20x32xbf16, #tpu.memory_space<vmem>>, vector<1x1x20x32xbf16>
    %195 = vector.shape_cast %194 : vector<1x1x20x32xbf16> to vector<20x32xbf16>
    %cst_158 = arith.constant dense<0.000000e+00> : vector<64x32xf32>
    %196 = tpu.matmul %193, %195, %cst_158 {dimension_numbers = #tpu.dot_dimension_numbers<[1], [0], [0], [1], [0, 0, 1, 1], [], []>} : vector<64x20xbf16>, vector<20x32xbf16>, vector<64x32xf32> -> vector<64x32xf32>
    %197 = arith.addf %190, %196 : vector<64x32xf32>
    %198 = vector.extract_strided_slice %161 {offsets = [1, 9, 0], sizes = [8, 8, 20], strides = [1, 1, 1]} : vector<10x17x20xf32> to vector<8x8x20xf32>
    %199 = vector.shape_cast %198 : vector<8x8x20xf32> to vector<64x20xf32>
    %200 = arith.truncf %199 : vector<64x20xf32> to vector<64x20xbf16>
    %c1_159 = arith.constant 1 : index
    %c2_160 = arith.constant 2 : index
    %c0_161 = arith.constant 0 : index
    %c0_162 = arith.constant 0 : index
    %201 = vector.load %arg6[%c1_159, %c2_160, %c0_161, %c0_162] : memref<3x3x20x32xbf16, #tpu.memory_space<vmem>>, vector<1x1x20x32xbf16>
    %202 = vector.shape_cast %201 : vector<1x1x20x32xbf16> to vector<20x32xbf16>
    %cst_163 = arith.constant dense<0.000000e+00> : vector<64x32xf32>
    %203 = tpu.matmul %200, %202, %cst_163 {dimension_numbers = #tpu.dot_dimension_numbers<[1], [0], [0], [1], [0, 0, 1, 1], [], []>} : vector<64x20xbf16>, vector<20x32xbf16>, vector<64x32xf32> -> vector<64x32xf32>
    %204 = arith.addf %197, %203 : vector<64x32xf32>
    %205 = vector.extract_strided_slice %161 {offsets = [2, 7, 0], sizes = [8, 8, 20], strides = [1, 1, 1]} : vector<10x17x20xf32> to vector<8x8x20xf32>
    %206 = vector.shape_cast %205 : vector<8x8x20xf32> to vector<64x20xf32>
    %207 = arith.truncf %206 : vector<64x20xf32> to vector<64x20xbf16>
    %c2_164 = arith.constant 2 : index
    %c0_165 = arith.constant 0 : index
    %c0_166 = arith.constant 0 : index
    %c0_167 = arith.constant 0 : index
    %208 = vector.load %arg6[%c2_164, %c0_165, %c0_166, %c0_167] : memref<3x3x20x32xbf16, #tpu.memory_space<vmem>>, vector<1x1x20x32xbf16>
    %209 = vector.shape_cast %208 : vector<1x1x20x32xbf16> to vector<20x32xbf16>
    %cst_168 = arith.constant dense<0.000000e+00> : vector<64x32xf32>
    %210 = tpu.matmul %207, %209, %cst_168 {dimension_numbers = #tpu.dot_dimension_numbers<[1], [0], [0], [1], [0, 0, 1, 1], [], []>} : vector<64x20xbf16>, vector<20x32xbf16>, vector<64x32xf32> -> vector<64x32xf32>
    %211 = arith.addf %204, %210 : vector<64x32xf32>
    %212 = vector.extract_strided_slice %161 {offsets = [2, 8, 0], sizes = [8, 8, 20], strides = [1, 1, 1]} : vector<10x17x20xf32> to vector<8x8x20xf32>
    %213 = vector.shape_cast %212 : vector<8x8x20xf32> to vector<64x20xf32>
    %214 = arith.truncf %213 : vector<64x20xf32> to vector<64x20xbf16>
    %c2_169 = arith.constant 2 : index
    %c1_170 = arith.constant 1 : index
    %c0_171 = arith.constant 0 : index
    %c0_172 = arith.constant 0 : index
    %215 = vector.load %arg6[%c2_169, %c1_170, %c0_171, %c0_172] : memref<3x3x20x32xbf16, #tpu.memory_space<vmem>>, vector<1x1x20x32xbf16>
    %216 = vector.shape_cast %215 : vector<1x1x20x32xbf16> to vector<20x32xbf16>
    %cst_173 = arith.constant dense<0.000000e+00> : vector<64x32xf32>
    %217 = tpu.matmul %214, %216, %cst_173 {dimension_numbers = #tpu.dot_dimension_numbers<[1], [0], [0], [1], [0, 0, 1, 1], [], []>} : vector<64x20xbf16>, vector<20x32xbf16>, vector<64x32xf32> -> vector<64x32xf32>
    %218 = arith.addf %211, %217 : vector<64x32xf32>
    %219 = vector.extract_strided_slice %161 {offsets = [2, 9, 0], sizes = [8, 8, 20], strides = [1, 1, 1]} : vector<10x17x20xf32> to vector<8x8x20xf32>
    %220 = vector.shape_cast %219 : vector<8x8x20xf32> to vector<64x20xf32>
    %221 = arith.truncf %220 : vector<64x20xf32> to vector<64x20xbf16>
    %c2_174 = arith.constant 2 : index
    %c2_175 = arith.constant 2 : index
    %c0_176 = arith.constant 0 : index
    %c0_177 = arith.constant 0 : index
    %222 = vector.load %arg6[%c2_174, %c2_175, %c0_176, %c0_177] : memref<3x3x20x32xbf16, #tpu.memory_space<vmem>>, vector<1x1x20x32xbf16>
    %223 = vector.shape_cast %222 : vector<1x1x20x32xbf16> to vector<20x32xbf16>
    %cst_178 = arith.constant dense<0.000000e+00> : vector<64x32xf32>
    %224 = tpu.matmul %221, %223, %cst_178 {dimension_numbers = #tpu.dot_dimension_numbers<[1], [0], [0], [1], [0, 0, 1, 1], [], []>} : vector<64x20xbf16>, vector<20x32xbf16>, vector<64x32xf32> -> vector<64x32xf32>
    %225 = arith.addf %218, %224 : vector<64x32xf32>
    %c0_179 = arith.constant 0 : index
    %c0_180 = arith.constant 0 : index
    %226 = vector.load %arg7[%c0_179, %c0_180] : memref<2x32xf32, #tpu.memory_space<vmem>>, vector<1x32xf32>
    %227 = vector.broadcast %226 : vector<1x32xf32> to vector<64x32xf32>
    %228 = arith.mulf %225, %227 : vector<64x32xf32>
    %c1_181 = arith.constant 1 : index
    %c0_182 = arith.constant 0 : index
    %229 = vector.load %arg7[%c1_181, %c0_182] : memref<2x32xf32, #tpu.memory_space<vmem>>, vector<1x32xf32>
    %230 = vector.broadcast %229 : vector<1x32xf32> to vector<64x32xf32>
    %231 = arith.addf %228, %230 : vector<64x32xf32>
    %cst_183 = arith.constant 0.000000e+00 : f32
    %232 = vector.broadcast %cst_183 : f32 to vector<64x32xf32>
    %233 = arith.maximumf %231, %232 : vector<64x32xf32>
    %234 = arith.truncf %233 : vector<64x32xf32> to vector<64x32xbf16>
    %c0_184 = arith.constant 0 : index
    %c0_185 = arith.constant 0 : index
    %c0_186 = arith.constant 0 : index
    %235 = vector.load %arg8[%c0_184, %c0_185, %c0_186] : memref<1x64x32xbf16, #tpu.memory_space<vmem>>, vector<1x64x32xbf16>
    %236 = vector.shape_cast %235 : vector<1x64x32xbf16> to vector<64x32xbf16>
    %237 = vector.shape_cast %234 : vector<64x32xbf16> to vector<1x64x32xbf16>
    tpu.vector_store %arg8[%c0_184, %c0_185, %c0_186], %237 {strides = array<i32>} : memref<1x64x32xbf16, #tpu.memory_space<vmem>>, vector<1x64x32xbf16>,
    return
  }
  func.func @transform_0(%arg0: i32) -> (i32, i32, i32, i32) {
    %c0_i32 = arith.constant 0 : i32
    %c0_i32_0 = arith.constant 0 : i32
    %c0_i32_1 = arith.constant 0 : i32
    %c0_i32_2 = arith.constant 0 : i32
    return %arg0, %c0_i32, %c0_i32_0, %c0_i32_1 : i32, i32, i32, i32
  }
  func.func @transform_1(%arg0: i32) -> (i32, i32, i32, i32) {
    %c0_i32 = arith.constant 0 : i32
    %c0_i32_0 = arith.constant 0 : i32
    %c0_i32_1 = arith.constant 0 : i32
    %c0_i32_2 = arith.constant 0 : i32
    %c0_i32_3 = arith.constant 0 : i32
    return %c0_i32, %c0_i32_0, %c0_i32_1, %c0_i32_2 : i32, i32, i32, i32
  }
  func.func @transform_2(%arg0: i32) -> (i32, i32) {
    %c0_i32 = arith.constant 0 : i32
    %c0_i32_0 = arith.constant 0 : i32
    %c0_i32_1 = arith.constant 0 : i32
    return %c0_i32, %c0_i32_0 : i32, i32
  }
  func.func @transform_3(%arg0: i32) -> (i32, i32, i32, i32) {
    %c0_i32 = arith.constant 0 : i32
    %c0_i32_0 = arith.constant 0 : i32
    %c0_i32_1 = arith.constant 0 : i32
    %c0_i32_2 = arith.constant 0 : i32
    %c0_i32_3 = arith.constant 0 : i32
    return %c0_i32, %c0_i32_0, %c0_i32_1, %c0_i32_2 : i32, i32, i32, i32
  }
  func.func @transform_4(%arg0: i32) -> (i32, i32) {
    %c0_i32 = arith.constant 0 : i32
    %c0_i32_0 = arith.constant 0 : i32
    %c0_i32_1 = arith.constant 0 : i32
    return %c0_i32, %c0_i32_0 : i32, i32
  }
  func.func @transform_5(%arg0: i32) -> (i32, i32, i32, i32) {
    %c0_i32 = arith.constant 0 : i32
    %c0_i32_0 = arith.constant 0 : i32
    %c0_i32_1 = arith.constant 0 : i32
    %c0_i32_2 = arith.constant 0 : i32
    %c0_i32_3 = arith.constant 0 : i32
    return %c0_i32, %c0_i32_0, %c0_i32_1, %c0_i32_2 : i32, i32, i32, i32
  }
  func.func @transform_6(%arg0: i32) -> (i32, i32) {
    %c0_i32 = arith.constant 0 : i32
    %c0_i32_0 = arith.constant 0 : i32
    %c0_i32_1 = arith.constant 0 : i32
    return %c0_i32, %c0_i32_0 : i32, i32
  }
  func.func @transform_7(%arg0: i32) -> (i32, i32, i32) {
    %c0_i32 = arith.constant 0 : i32
    %c0_i32_0 = arith.constant 0 : i32
    %c0_i32_1 = arith.constant 0 : i32
    return %arg0, %c0_i32, %c0_i32_0 : i32, i32, i32
  }
}

</mosaic_0001>

<llo_original>
// kernel: convnet_forward.3
$region0: #{convnet_forward.3}
  #allocation0 [shape = 'u32[]', space=smem, size = 0x4, offset = 0x4, fixed_abs, tag = 'smem constant byte address 0x4 - core index']
  #allocation1 [shape = 'u32[144,128]{1,0:T(1,128)}', space=vmem, size = 0x12000, scoped, tag = 'internal scratch']
  %s0 = inlined_call_operand.vmem [shape: bf16[2,2048], index: 0, kind: input, shape index: {}]
  %s1 = inlined_call_operand.vmem [shape: bf16[2048,128], index: 1, kind: input, shape index: {}]
  %s2 = inlined_call_operand.vmem [shape: f32[1,128], index: 2, kind: input, shape index: {}]
  %s3 = inlined_call_operand.hbm [shape: f32[2,128], index: 3, kind: output, shape index: {}]
  %s4 = sld [smem:[#allocation0]]
  $region22: #{convnet_forward.3} parent=0
    _
  %s6 = ssub.s32 1, %s4
  %s7 = scalar_select 0, %s6, %s4
  $region1: #{convnet_forward.3} parent=0
    #allocation2 [shape = 'u8[1024]{0}', space=vmem, size = 0x400, scoped, tag = 'output window, operand 0, single buffered']
    #allocation3 [shape = 's32[1]{0}', space=sflag, size = 0x4, scoped, tag = 'scoped memory for convnet_forward.3']
    %8 = vsyncpa [#allocation3], 0
    // Predicated region
    $region2: #{convnet_forward.3} parent=1 // pred_check
      _
    $region3: #{convnet_forward.3} parent=1 // pred_check_branch
      %10 = sbr.rel (0) target = $region5
    $region4: #{convnet_forward.3} parent=1 // pred_region
      _
    $region5: #{convnet_forward.3} parent=1 // pred_fallthru
      _
    // Predicated region
    $region6: #{convnet_forward.3} parent=1 // pred_check
      _
    $region7: #{convnet_forward.3} parent=1 // pred_check_branch
      %12 = sbr.rel (0) target = $region9
    $region8: #{convnet_forward.3} parent=1 // pred_region
      _
    $region9: #{convnet_forward.3} parent=1 // pred_fallthru
      _
    // Predicated region
    $region10: #{convnet_forward.3} parent=1 // pred_check
      _
    $region11: #{convnet_forward.3} parent=1 // pred_check_branch
      %14 = sbr.rel (0) target = $region13
    $region12: #{convnet_forward.3} parent=1 // pred_region
      _
    $region13: #{convnet_forward.3} parent=1 // pred_fallthru
      _
    %v16 = vld [vmem:[%s0] sm:$0xff]
    %v17 = vld [vmem:[%s0 + $0x8] sm:$0xff]
    %v18 = vld [vmem:[%s1] sm:$0xf]
    %v19 = vld [vmem:[%s1 + $0x4] sm:$0xf]
    %v20 = vld [vmem:[%s1 + $0x8] sm:$0xf]
    %v21 = vld [vmem:[%s1 + $0xc] sm:$0xf]
    %v22 = vld [vmem:[%s1 + $0x10] sm:$0xf]
    %v23 = vld [vmem:[%s1 + $0x14] sm:$0xf]
    %v24 = vld [vmem:[%s1 + $0x18] sm:$0xf]
    %v25 = vld [vmem:[%s1 + $0x1c] sm:$0xf]
    %v26 = vld [vmem:[%s1 + $0x20] sm:$0xf]
    %v27 = vld [vmem:[%s1 + $0x24] sm:$0xf]
    %v28 = vld [vmem:[%s1 + $0x28] sm:$0xf]
    %v29 = vld [vmem:[%s1 + $0x2c] sm:$0xf]
    %v30 = vld [vmem:[%s1 + $0x30] sm:$0xf]
    %v31 = vld [vmem:[%s1 + $0x34] sm:$0xf]
    %v32 = vld [vmem:[%s1 + $0x38] sm:$0xf]
    %v33 = vld [vmem:[%s1 + $0x3c] sm:$0xf]
    %v34 = vld [vmem:[%s1 + $0x40] sm:$0xf]
    %v35 = vld [vmem:[%s1 + $0x44] sm:$0xf]
    %v36 = vld [vmem:[%s1 + $0x48] sm:$0xf]
    %v37 = vld [vmem:[%s1 + $0x4c] sm:$0xf]
    %v38 = vld [vmem:[%s1 + $0x50] sm:$0xf]
    %v39 = vld [vmem:[%s1 + $0x54] sm:$0xf]
    %v40 = vld [vmem:[%s1 + $0x58] sm:$0xf]
    %v41 = vld [vmem:[%s1 + $0x5c] sm:$0xf]
    %v42 = vld [vmem:[%s1 + $0x60] sm:$0xf]
    %v43 = vld [vmem:[%s1 + $0x64] sm:$0xf]
    %v44 = vld [vmem:[%s1 + $0x68] sm:$0xf]
    %v45 = vld [vmem:[%s1 + $0x6c] sm:$0xf]
    %v46 = vld [vmem:[%s1 + $0x70] sm:$0xf]
    %v47 = vld [vmem:[%s1 + $0x74] sm:$0xf]
    %v48 = vld [vmem:[%s1 + $0x78] sm:$0xf]
    %v49 = vld [vmem:[%s1 + $0x7c] sm:$0xf]
    %v50 = vld [vmem:[%s1 + $0x80] sm:$0xf]
    %v51 = vld [vmem:[%s1 + $0x84] sm:$0xf]
    %v52 = vld [vmem:[%s1 + $0x88] sm:$0xf]
    %v53 = vld [vmem:[%s1 + $0x8c] sm:$0xf]
    %v54 = vld [vmem:[%s1 + $0x90] sm:$0xf]
    %v55 = vld [vmem:[%s1 + $0x94] sm:$0xf]
    %v56 = vld [vmem:[%s1 + $0x98] sm:$0xf]
    %v57 = vld [vmem:[%s1 + $0x9c] sm:$0xf]
    %v58 = vld [vmem:[%s1 + $0xa0] sm:$0xf]
    %v59 = vld [vmem:[%s1 + $0xa4] sm:$0xf]
    %v60 = vld [vmem:[%s1 + $0xa8] sm:$0xf]
    %v61 = vld [vmem:[%s1 + $0xac] sm:$0xf]
    %v62 = vld [vmem:[%s1 + $0xb0] sm:$0xf]
    %v63 = vld [vmem:[%s1 + $0xb4] sm:$0xf]
    %v64 = vld [vmem:[%s1 + $0xb8] sm:$0xf]
    %v65 = vld [vmem:[%s1 + $0xbc] sm:$0xf]
    %v66 = vld [vmem:[%s1 + $0xc0] sm:$0xf]
    %v67 = vld [vmem:[%s1 + $0xc4] sm:$0xf]
    %v68 = vld [vmem:[%s1 + $0xc8] sm:$0xf]
    %v69 = vld [vmem:[%s1 + $0xcc] sm:$0xf]
    %v70 = vld [vmem:[%s1 + $0xd0] sm:$0xf]
    %v71 = vld [vmem:[%s1 + $0xd4] sm:$0xf]
    %v72 = vld [vmem:[%s1 + $0xd8] sm:$0xf]
    %v73 = vld [vmem:[%s1 + $0xdc] sm:$0xf]
    %v74 = vld [vmem:[%s1 + $0xe0] sm:$0xf]
    %v75 = vld [vmem:[%s1 + $0xe4] sm:$0xf]
    %v76 = vld [vmem:[%s1 + $0xe8] sm:$0xf]
    %v77 = vld [vmem:[%s1 + $0xec] sm:$0xf]
    %v78 = vld [vmem:[%s1 + $0xf0] sm:$0xf]
    %v79 = vld [vmem:[%s1 + $0xf4] sm:$0xf]
    %v80 = vld [vmem:[%s1 + $0xf8] sm:$0xf]
    %v81 = vld [vmem:[%s1 + $0xfc] sm:$0xf]
    %v82 = vld [vmem:[%s1 + $0x100] sm:$0xf]
    %v83 = vld [vmem:[%s1 + $0x104] sm:$0xf]
    %v84 = vld [vmem:[%s1 + $0x108] sm:$0xf]
    %v85 = vld [vmem:[%s1 + $0x10c] sm:$0xf]
    %v86 = vld [vmem:[%s1 + $0x110] sm:$0xf]
    %v87 = vld [vmem:[%s1 + $0x114] sm:$0xf]
    %v88 = vld [vmem:[%s1 + $0x118] sm:$0xf]
    %v89 = vld [vmem:[%s1 + $0x11c] sm:$0xf]
    %v90 = vld [vmem:[%s1 + $0x120] sm:$0xf]
    %v91 = vld [vmem:[%s1 + $0x124] sm:$0xf]
    %v92 = vld [vmem:[%s1 + $0x128] sm:$0xf]
    %v93 = vld [vmem:[%s1 + $0x12c] sm:$0xf]
    %v94 = vld [vmem:[%s1 + $0x130] sm:$0xf]
    %v95 = vld [vmem:[%s1 + $0x134] sm:$0xf]
    %v96 = vld [vmem:[%s1 + $0x138] sm:$0xf]
    %v97 = vld [vmem:[%s1 + $0x13c] sm:$0xf]
    %v98 = vld [vmem:[%s1 + $0x140] sm:$0xf]
    %v99 = vld [vmem:[%s1 + $0x144] sm:$0xf]
    %v100 = vld [vmem:[%s1 + $0x148] sm:$0xf]
    %v101 = vld [vmem:[%s1 + $0x14c] sm:$0xf]
    %v102 = vld [vmem:[%s1 + $0x150] sm:$0xf]
    %v103 = vld [vmem:[%s1 + $0x154] sm:$0xf]
    %v104 = vld [vmem:[%s1 + $0x158] sm:$0xf]
    %v105 = vld [vmem:[%s1 + $0x15c] sm:$0xf]
    %v106 = vld [vmem:[%s1 + $0x160] sm:$0xf]
    %v107 = vld [vmem:[%s1 + $0x164] sm:$0xf]
    %v108 = vld [vmem:[%s1 + $0x168] sm:$0xf]
    %v109 = vld [vmem:[%s1 + $0x16c] sm:$0xf]
    %v110 = vld [vmem:[%s1 + $0x170] sm:$0xf]
    %v111 = vld [vmem:[%s1 + $0x174] sm:$0xf]
    %v112 = vld [vmem:[%s1 + $0x178] sm:$0xf]
    %v113 = vld [vmem:[%s1 + $0x17c] sm:$0xf]
    %v114 = vld [vmem:[%s1 + $0x180] sm:$0xf]
    %v115 = vld [vmem:[%s1 + $0x184] sm:$0xf]
    %v116 = vld [vmem:[%s1 + $0x188] sm:$0xf]
    %v117 = vld [vmem:[%s1 + $0x18c] sm:$0xf]
    %v118 = vld [vmem:[%s1 + $0x190] sm:$0xf]
    %v119 = vld [vmem:[%s1 + $0x194] sm:$0xf]
    %v120 = vld [vmem:[%s1 + $0x198] sm:$0xf]
    %v121 = vld [vmem:[%s1 + $0x19c] sm:$0xf]
    %v122 = vld [vmem:[%s1 + $0x1a0] sm:$0xf]
    %v123 = vld [vmem:[%s1 + $0x1a4] sm:$0xf]
    %v124 = vld [vmem:[%s1 + $0x1a8] sm:$0xf]
    %v125 = vld [vmem:[%s1 + $0x1ac] sm:$0xf]
    %v126 = vld [vmem:[%s1 + $0x1b0] sm:$0xf]
    %v127 = vld [vmem:[%s1 + $0x1b4] sm:$0xf]
    %v128 = vld [vmem:[%s1 + $0x1b8] sm:$0xf]
    %v129 = vld [vmem:[%s1 + $0x1bc] sm:$0xf]
    %v130 = vld [vmem:[%s1 + $0x1c0] sm:$0xf]
    %v131 = vld [vmem:[%s1 + $0x1c4] sm:$0xf]
    %v132 = vld [vmem:[%s1 + $0x1c8] sm:$0xf]
    %v133 = vld [vmem:[%s1 + $0x1cc] sm:$0xf]
    %v134 = vld [vmem:[%s1 + $0x1d0] sm:$0xf]
    %v135 = vld [vmem:[%s1 + $0x1d4] sm:$0xf]
    %v136 = vld [vmem:[%s1 + $0x1d8] sm:$0xf]
    %v137 = vld [vmem:[%s1 + $0x1dc] sm:$0xf]
    %v138 = vld [vmem:[%s1 + $0x1e0] sm:$0xf]
    %v139 = vld [vmem:[%s1 + $0x1e4] sm:$0xf]
    %v140 = vld [vmem:[%s1 + $0x1e8] sm:$0xf]
    %v141 = vld [vmem:[%s1 + $0x1ec] sm:$0xf]
    %v142 = vld [vmem:[%s1 + $0x1f0] sm:$0xf]
    %v143 = vld [vmem:[%s1 + $0x1f4] sm:$0xf]
    %v144 = vld [vmem:[%s1 + $0x1f8] sm:$0xf]
    %v145 = vld [vmem:[%s1 + $0x1fc] sm:$0xf]
    %v146 = vld [vmem:[%s1 + $0x200] sm:$0xf]
    %v147 = vld [vmem:[%s1 + $0x204] sm:$0xf]
    %v148 = vld [vmem:[%s1 + $0x208] sm:$0xf]
    %v149 = vld [vmem:[%s1 + $0x20c] sm:$0xf]
    %v150 = vld [vmem:[%s1 + $0x210] sm:$0xf]
    %v151 = vld [vmem:[%s1 + $0x214] sm:$0xf]
    %v152 = vld [vmem:[%s1 + $0x218] sm:$0xf]
    %v153 = vld [vmem:[%s1 + $0x21c] sm:$0xf]
    %v154 = vld [vmem:[%s1 + $0x220] sm:$0xf]
    %v155 = vld [vmem:[%s1 + $0x224] sm:$0xf]
    %v156 = vld [vmem:[%s1 + $0x228] sm:$0xf]
    %v157 = vld [vmem:[%s1 + $0x22c] sm:$0xf]
    %v158 = vld [vmem:[%s1 + $0x230] sm:$0xf]
    %v159 = vld [vmem:[%s1 + $0x234] sm:$0xf]
    %v160 = vld [vmem:[%s1 + $0x238] sm:$0xf]
    %v161 = vld [vmem:[%s1 + $0x23c] sm:$0xf]
    %v162 = vld [vmem:[%s1 + $0x240] sm:$0xf]
    %v163 = vld [vmem:[%s1 + $0x244] sm:$0xf]
    %v164 = vld [vmem:[%s1 + $0x248] sm:$0xf]
    %v165 = vld [vmem:[%s1 + $0x24c] sm:$0xf]
    %v166 = vld [vmem:[%s1 + $0x250] sm:$0xf]
    %v167 = vld [vmem:[%s1 + $0x254] sm:$0xf]
    %v168 = vld [vmem:[%s1 + $0x258] sm:$0xf]
    %v169 = vld [vmem:[%s1 + $0x25c] sm:$0xf]
    %v170 = vld [vmem:[%s1 + $0x260] sm:$0xf]
    %v171 = vld [vmem:[%s1 + $0x264] sm:$0xf]
    %v172 = vld [vmem:[%s1 + $0x268] sm:$0xf]
    %v173 = vld [vmem:[%s1 + $0x26c] sm:$0xf]
    %v174 = vld [vmem:[%s1 + $0x270] sm:$0xf]
    %v175 = vld [vmem:[%s1 + $0x274] sm:$0xf]
    %v176 = vld [vmem:[%s1 + $0x278] sm:$0xf]
    %v177 = vld [vmem:[%s1 + $0x27c] sm:$0xf]
    %v178 = vld [vmem:[%s1 + $0x280] sm:$0xf]
    %v179 = vld [vmem:[%s1 + $0x284] sm:$0xf]
    %v180 = vld [vmem:[%s1 + $0x288] sm:$0xf]
    %v181 = vld [vmem:[%s1 + $0x28c] sm:$0xf]
    %v182 = vld [vmem:[%s1 + $0x290] sm:$0xf]
    %v183 = vld [vmem:[%s1 + $0x294] sm:$0xf]
    %v184 = vld [vmem:[%s1 + $0x298] sm:$0xf]
    %v185 = vld [vmem:[%s1 + $0x29c] sm:$0xf]
    %v186 = vld [vmem:[%s1 + $0x2a0] sm:$0xf]
    %v187 = vld [vmem:[%s1 + $0x2a4] sm:$0xf]
    %v188 = vld [vmem:[%s1 + $0x2a8] sm:$0xf]
    %v189 = vld [vmem:[%s1 + $0x2ac] sm:$0xf]
    %v190 = vld [vmem:[%s1 + $0x2b0] sm:$0xf]
    %v191 = vld [vmem:[%s1 + $0x2b4] sm:$0xf]
    %v192 = vld [vmem:[%s1 + $0x2b8] sm:$0xf]
    %v193 = vld [vmem:[%s1 + $0x2bc] sm:$0xf]
    %v194 = vld [vmem:[%s1 + $0x2c0] sm:$0xf]
    %v195 = vld [vmem:[%s1 + $0x2c4] sm:$0xf]
    %v196 = vld [vmem:[%s1 + $0x2c8] sm:$0xf]
    %v197 = vld [vmem:[%s1 + $0x2cc] sm:$0xf]
    %v198 = vld [vmem:[%s1 + $0x2d0] sm:$0xf]
    %v199 = vld [vmem:[%s1 + $0x2d4] sm:$0xf]
    %v200 = vld [vmem:[%s1 + $0x2d8] sm:$0xf]
    %v201 = vld [vmem:[%s1 + $0x2dc] sm:$0xf]
    %v202 = vld [vmem:[%s1 + $0x2e0] sm:$0xf]
    %v203 = vld [vmem:[%s1 + $0x2e4] sm:$0xf]
    %v204 = vld [vmem:[%s1 + $0x2e8] sm:$0xf]
    %v205 = vld [vmem:[%s1 + $0x2ec] sm:$0xf]
    %v206 = vld [vmem:[%s1 + $0x2f0] sm:$0xf]
    %v207 = vld [vmem:[%s1 + $0x2f4] sm:$0xf]
    %v208 = vld [vmem:[%s1 + $0x2f8] sm:$0xf]
    %v209 = vld [vmem:[%s1 + $0x2fc] sm:$0xf]
    %v210 = vld [vmem:[%s1 + $0x300] sm:$0xf]
    %v211 = vld [vmem:[%s1 + $0x304] sm:$0xf]
    %v212 = vld [vmem:[%s1 + $0x308] sm:$0xf]
    %v213 = vld [vmem:[%s1 + $0x30c] sm:$0xf]
    %v214 = vld [vmem:[%s1 + $0x310] sm:$0xf]
    %v215 = vld [vmem:[%s1 + $0x314] sm:$0xf]
    %v216 = vld [vmem:[%s1 + $0x318] sm:$0xf]
    %v217 = vld [vmem:[%s1 + $0x31c] sm:$0xf]
    %v218 = vld [vmem:[%s1 + $0x320] sm:$0xf]
    %v219 = vld [vmem:[%s1 + $0x324] sm:$0xf]
    %v220 = vld [vmem:[%s1 + $0x328] sm:$0xf]
    %v221 = vld [vmem:[%s1 + $0x32c] sm:$0xf]
    %v222 = vld [vmem:[%s1 + $0x330] sm:$0xf]
    %v223 = vld [vmem:[%s1 + $0x334] sm:$0xf]
    %v224 = vld [vmem:[%s1 + $0x338] sm:$0xf]
    %v225 = vld [vmem:[%s1 + $0x33c] sm:$0xf]
    %v226 = vld [vmem:[%s1 + $0x340] sm:$0xf]
    %v227 = vld [vmem:[%s1 + $0x344] sm:$0xf]
    %v228 = vld [vmem:[%s1 + $0x348] sm:$0xf]
    %v229 = vld [vmem:[%s1 + $0x34c] sm:$0xf]
    %v230 = vld [vmem:[%s1 + $0x350] sm:$0xf]
    %v231 = vld [vmem:[%s1 + $0x354] sm:$0xf]
    %v232 = vld [vmem:[%s1 + $0x358] sm:$0xf]
    %v233 = vld [vmem:[%s1 + $0x35c] sm:$0xf]
    %v234 = vld [vmem:[%s1 + $0x360] sm:$0xf]
    %v235 = vld [vmem:[%s1 + $0x364] sm:$0xf]
    %v236 = vld [vmem:[%s1 + $0x368] sm:$0xf]
    %v237 = vld [vmem:[%s1 + $0x36c] sm:$0xf]
    %v238 = vld [vmem:[%s1 + $0x370] sm:$0xf]
    %v239 = vld [vmem:[%s1 + $0x374] sm:$0xf]
    %v240 = vld [vmem:[%s1 + $0x378] sm:$0xf]
    %v241 = vld [vmem:[%s1 + $0x37c] sm:$0xf]
    %v242 = vld [vmem:[%s1 + $0x380] sm:$0xf]
    %v243 = vld [vmem:[%s1 + $0x384] sm:$0xf]
    %v244 = vld [vmem:[%s1 + $0x388] sm:$0xf]
    %v245 = vld [vmem:[%s1 + $0x38c] sm:$0xf]
    %v246 = vld [vmem:[%s1 + $0x390] sm:$0xf]
    %v247 = vld [vmem:[%s1 + $0x394] sm:$0xf]
    %v248 = vld [vmem:[%s1 + $0x398] sm:$0xf]
    %v249 = vld [vmem:[%s1 + $0x39c] sm:$0xf]
    %v250 = vld [vmem:[%s1 + $0x3a0] sm:$0xf]
    %v251 = vld [vmem:[%s1 + $0x3a4] sm:$0xf]
    %v252 = vld [vmem:[%s1 + $0x3a8] sm:$0xf]
    %v253 = vld [vmem:[%s1 + $0x3ac] sm:$0xf]
    %v254 = vld [vmem:[%s1 + $0x3b0] sm:$0xf]
    %v255 = vld [vmem:[%s1 + $0x3b4] sm:$0xf]
    %v256 = vld [vmem:[%s1 + $0x3b8] sm:$0xf]
    %v257 = vld [vmem:[%s1 + $0x3bc] sm:$0xf]
    %v258 = vld [vmem:[%s1 + $0x3c0] sm:$0xf]
    %v259 = vld [vmem:[%s1 + $0x3c4] sm:$0xf]
    %v260 = vld [vmem:[%s1 + $0x3c8] sm:$0xf]
    %v261 = vld [vmem:[%s1 + $0x3cc] sm:$0xf]
    %v262 = vld [vmem:[%s1 + $0x3d0] sm:$0xf]
    %v263 = vld [vmem:[%s1 + $0x3d4] sm:$0xf]
    %v264 = vld [vmem:[%s1 + $0x3d8] sm:$0xf]
    %v265 = vld [vmem:[%s1 + $0x3dc] sm:$0xf]
    %v266 = vld [vmem:[%s1 + $0x3e0] sm:$0xf]
    %v267 = vld [vmem:[%s1 + $0x3e4] sm:$0xf]
    %v268 = vld [vmem:[%s1 + $0x3e8] sm:$0xf]
    %v269 = vld [vmem:[%s1 + $0x3ec] sm:$0xf]
    %v270 = vld [vmem:[%s1 + $0x3f0] sm:$0xf]
    %v271 = vld [vmem:[%s1 + $0x3f4] sm:$0xf]
    %v272 = vld [vmem:[%s1 + $0x3f8] sm:$0xf]
    %v273 = vld [vmem:[%s1 + $0x3fc] sm:$0xf]
    %v274 = vld [vmem:[%s2] sm:$0x1]
    %v276 = vlaneseq
    %v277 = vshrl.u32 %v276, 7
    %v278 = vsub.s32 0, %v277
    %v279 = vrot.slane %v274, %v278
    %v283 = vcombine.high %v16, %v16
    %v285 = vunpack.c.l.s4 1966171168
    %v286 = vunpack.c.0.s8 %v285
    %v287 = vlaneseq
    %v288 = vshrl.u32 %v287, 7
    %v289 = vsub.s32 %v286, %v288
    %v290 = vrot.slane %v16, %v289
    %v292 = vunpack.c.l.s4 1966171168
    %v293 = vunpack.c.0.s8 %v292
    %v294 = vlaneseq
    %v295 = vshrl.u32 %v294, 7
    %v296 = vsub.s32 %v293, %v295
    %v297 = vrot.slane %v283, %v296
    %v298 = vcombine.high %v290, %v290
    %v299 = vcombine.high %v297, %v297
    %v301 = vunpack.c.l.s4 1966171168
    %v302 = vunpack.c.0.s8 %v301
    %v303 = vlaneseq
    %v304 = vshrl.u32 %v303, 7
    %v305 = vsub.s32 %v302, %v304
    %v306 = vrot.slane %v290, %v305
    %v308 = vunpack.c.l.s4 1966171168
    %v309 = vunpack.c.0.s8 %v308
    %v310 = vlaneseq
    %v311 = vshrl.u32 %v310, 7
    %v312 = vsub.s32 %v309, %v311
    %v313 = vrot.slane %v297, %v312
    %v315 = vunpack.c.l.s4 1966171168
    %v316 = vunpack.c.0.s8 %v315
    %v317 = vlaneseq
    %v318 = vshrl.u32 %v317, 7
    %v319 = vsub.s32 %v316, %v318
    %v320 = vrot.slane %v298, %v319
    %v322 = vunpack.c.l.s4 1966171168
    %v323 = vunpack.c.0.s8 %v322
    %v324 = vlaneseq
    %v325 = vshrl.u32 %v324, 7
    %v326 = vsub.s32 %v323, %v325
    %v327 = vrot.slane %v299, %v326
    %v328 = vcombine.high %v306, %v306
    %v329 = vcombine.high %v313, %v313
    %v330 = vcombine.high %v320, %v320
    %v331 = vcombine.high %v327, %v327
    %v332 = vcombine.high %v17, %v17
    %v334 = vunpack.c.l.s4 1966171168
    %v335 = vunpack.c.0.s8 %v334
    %v336 = vlaneseq
    %v337 = vshrl.u32 %v336, 7
    %v338 = vsub.s32 %v335, %v337
    %v339 = vrot.slane %v17, %v338
    %v341 = vunpack.c.l.s4 1966171168
    %v342 = vunpack.c.0.s8 %v341
    %v343 = vlaneseq
    %v344 = vshrl.u32 %v343, 7
    %v345 = vsub.s32 %v342, %v344
    %v346 = vrot.slane %v332, %v345
    %v347 = vcombine.high %v339, %v339
    %v348 = vcombine.high %v346, %v346
    %v350 = vunpack.c.l.s4 1966171168
    %v351 = vunpack.c.0.s8 %v350
    %v352 = vlaneseq
    %v353 = vshrl.u32 %v352, 7
    %v354 = vsub.s32 %v351, %v353
    %v355 = vrot.slane %v339, %v354
    %v357 = vunpack.c.l.s4 1966171168
    %v358 = vunpack.c.0.s8 %v357
    %v359 = vlaneseq
    %v360 = vshrl.u32 %v359, 7
    %v361 = vsub.s32 %v358, %v360
    %v362 = vrot.slane %v346, %v361
    %v364 = vunpack.c.l.s4 1966171168
    %v365 = vunpack.c.0.s8 %v364
    %v366 = vlaneseq
    %v367 = vshrl.u32 %v366, 7
    %v368 = vsub.s32 %v365, %v367
    %v369 = vrot.slane %v347, %v368
    %v371 = vunpack.c.l.s4 1966171168
    %v372 = vunpack.c.0.s8 %v371
    %v373 = vlaneseq
    %v374 = vshrl.u32 %v373, 7
    %v375 = vsub.s32 %v372, %v374
    %v376 = vrot.slane %v348, %v375
    %v377 = vcombine.high %v355, %v355
    %v378 = vcombine.high %v362, %v362
    %v379 = vcombine.high %v369, %v369
    %v380 = vcombine.high %v376, %v376
    %v653 = vunpack.c.l.b16 %v18
    %v654 = vunpack.c.l.b16 %v19
    %v655 = vunpack.c.l.b16 %v20
    %v656 = vunpack.c.l.b16 %v21
    %v657 = vunpack.c.l.b16 %v22
    %v658 = vunpack.c.l.b16 %v23
    %v659 = vunpack.c.l.b16 %v24
    %v660 = vunpack.c.l.b16 %v25
    %v661 = vunpack.c.l.b16 %v26
    %v662 = vunpack.c.l.b16 %v27
    %v663 = vunpack.c.l.b16 %v28
    %v664 = vunpack.c.l.b16 %v29
    %v665 = vunpack.c.l.b16 %v30
    %v666 = vunpack.c.l.b16 %v31
    %v667 = vunpack.c.l.b16 %v32
    %v668 = vunpack.c.l.b16 %v33
    %v669 = vunpack.c.l.b16 %v34
    %v670 = vunpack.c.l.b16 %v35
    %v671 = vunpack.c.l.b16 %v36
    %v672 = vunpack.c.l.b16 %v37
    %v673 = vunpack.c.l.b16 %v38
    %v674 = vunpack.c.l.b16 %v39
    %v675 = vunpack.c.l.b16 %v40
    %v676 = vunpack.c.l.b16 %v41
    %v677 = vunpack.c.l.b16 %v42
    %v678 = vunpack.c.l.b16 %v43
    %v679 = vunpack.c.l.b16 %v44
    %v680 = vunpack.c.l.b16 %v45
    %v681 = vunpack.c.l.b16 %v46
    %v682 = vunpack.c.l.b16 %v47
    %v683 = vunpack.c.l.b16 %v48
    %v684 = vunpack.c.l.b16 %v49
    %v685 = vunpack.c.l.b16 %v50
    %v686 = vunpack.c.l.b16 %v51
    %v687 = vunpack.c.l.b16 %v52
    %v688 = vunpack.c.l.b16 %v53
    %v689 = vunpack.c.l.b16 %v54
    %v690 = vunpack.c.l.b16 %v55
    %v691 = vunpack.c.l.b16 %v56
    %v692 = vunpack.c.l.b16 %v57
    %v693 = vunpack.c.l.b16 %v58
    %v694 = vunpack.c.l.b16 %v59
    %v695 = vunpack.c.l.b16 %v60
    %v696 = vunpack.c.l.b16 %v61
    %v697 = vunpack.c.l.b16 %v62
    %v698 = vunpack.c.l.b16 %v63
    %v699 = vunpack.c.l.b16 %v64
    %v700 = vunpack.c.l.b16 %v65
    %v701 = vunpack.c.l.b16 %v66
    %v702 = vunpack.c.l.b16 %v67
    %v703 = vunpack.c.l.b16 %v68
    %v704 = vunpack.c.l.b16 %v69
    %v705 = vunpack.c.l.b16 %v70
    %v706 = vunpack.c.l.b16 %v71
    %v707 = vunpack.c.l.b16 %v72
    %v708 = vunpack.c.l.b16 %v73
    %v709 = vunpack.c.l.b16 %v74
    %v710 = vunpack.c.l.b16 %v75
    %v711 = vunpack.c.l.b16 %v76
    %v712 = vunpack.c.l.b16 %v77
    %v713 = vunpack.c.l.b16 %v78
    %v714 = vunpack.c.l.b16 %v79
    %v715 = vunpack.c.l.b16 %v80
    %v716 = vunpack.c.l.b16 %v81
    %v717 = vunpack.c.l.b16 %v82
    %v718 = vunpack.c.l.b16 %v83
    %v719 = vunpack.c.l.b16 %v84
    %v720 = vunpack.c.l.b16 %v85
    %v721 = vunpack.c.l.b16 %v86
    %v722 = vunpack.c.l.b16 %v87
    %v723 = vunpack.c.l.b16 %v88
    %v724 = vunpack.c.l.b16 %v89
    %v725 = vunpack.c.l.b16 %v90
    %v726 = vunpack.c.l.b16 %v91
    %v727 = vunpack.c.l.b16 %v92
    %v728 = vunpack.c.l.b16 %v93
    %v729 = vunpack.c.l.b16 %v94
    %v730 = vunpack.c.l.b16 %v95
    %v731 = vunpack.c.l.b16 %v96
    %v732 = vunpack.c.l.b16 %v97
    %v733 = vunpack.c.l.b16 %v98
    %v734 = vunpack.c.l.b16 %v99
    %v735 = vunpack.c.l.b16 %v100
    %v736 = vunpack.c.l.b16 %v101
    %v737 = vunpack.c.l.b16 %v102
    %v738 = vunpack.c.l.b16 %v103
    %v739 = vunpack.c.l.b16 %v104
    %v740 = vunpack.c.l.b16 %v105
    %v741 = vunpack.c.l.b16 %v106
    %v742 = vunpack.c.l.b16 %v107
    %v743 = vunpack.c.l.b16 %v108
    %v744 = vunpack.c.l.b16 %v109
    %v745 = vunpack.c.l.b16 %v110
    %v746 = vunpack.c.l.b16 %v111
    %v747 = vunpack.c.l.b16 %v112
    %v748 = vunpack.c.l.b16 %v113
    %v749 = vunpack.c.l.b16 %v114
    %v750 = vunpack.c.l.b16 %v115
    %v751 = vunpack.c.l.b16 %v116
    %v752 = vunpack.c.l.b16 %v117
    %v753 = vunpack.c.l.b16 %v118
    %v754 = vunpack.c.l.b16 %v119
    %v755 = vunpack.c.l.b16 %v120
    %v756 = vunpack.c.l.b16 %v121
    %v757 = vunpack.c.l.b16 %v122
    %v758 = vunpack.c.l.b16 %v123
    %v759 = vunpack.c.l.b16 %v124
    %v760 = vunpack.c.l.b16 %v125
    %v761 = vunpack.c.l.b16 %v126
    %v762 = vunpack.c.l.b16 %v127
    %v763 = vunpack.c.l.b16 %v128
    %v764 = vunpack.c.l.b16 %v129
    %v765 = vunpack.c.l.b16 %v130
    %v766 = vunpack.c.l.b16 %v131
    %v767 = vunpack.c.l.b16 %v132
    %v768 = vunpack.c.l.b16 %v133
    %v769 = vunpack.c.l.b16 %v134
    %v770 = vunpack.c.l.b16 %v135
    %v771 = vunpack.c.l.b16 %v136
    %v772 = vunpack.c.l.b16 %v137
    %v773 = vunpack.c.l.b16 %v138
    %v774 = vunpack.c.l.b16 %v139
    %v775 = vunpack.c.l.b16 %v140
    %v776 = vunpack.c.l.b16 %v141
    %v777 = vunpack.c.l.b16 %v142
    %v778 = vunpack.c.l.b16 %v143
    %v779 = vunpack.c.l.b16 %v144
    %v780 = vunpack.c.l.b16 %v145
    %v781 = vunpack.c.l.b16 %v146
    %v782 = vunpack.c.l.b16 %v147
    %v783 = vunpack.c.l.b16 %v148
    %v784 = vunpack.c.l.b16 %v149
    %v785 = vunpack.c.l.b16 %v150
    %v786 = vunpack.c.l.b16 %v151
    %v787 = vunpack.c.l.b16 %v152
    %v788 = vunpack.c.l.b16 %v153
    %v789 = vunpack.c.l.b16 %v154
    %v790 = vunpack.c.l.b16 %v155
    %v791 = vunpack.c.l.b16 %v156
    %v792 = vunpack.c.l.b16 %v157
    %v793 = vunpack.c.l.b16 %v158
    %v794 = vunpack.c.l.b16 %v159
    %v795 = vunpack.c.l.b16 %v160
    %v796 = vunpack.c.l.b16 %v161
    %v797 = vunpack.c.l.b16 %v162
    %v798 = vunpack.c.l.b16 %v163
    %v799 = vunpack.c.l.b16 %v164
    %v800 = vunpack.c.l.b16 %v165
    %v801 = vunpack.c.l.b16 %v166
    %v802 = vunpack.c.l.b16 %v167
    %v803 = vunpack.c.l.b16 %v168
    %v804 = vunpack.c.l.b16 %v169
    %v805 = vunpack.c.l.b16 %v170
    %v806 = vunpack.c.l.b16 %v171
    %v807 = vunpack.c.l.b16 %v172
    %v808 = vunpack.c.l.b16 %v173
    %v809 = vunpack.c.l.b16 %v174
    %v810 = vunpack.c.l.b16 %v175
    %v811 = vunpack.c.l.b16 %v176
    %v812 = vunpack.c.l.b16 %v177
    %v813 = vunpack.c.l.b16 %v178
    %v814 = vunpack.c.l.b16 %v179
    %v815 = vunpack.c.l.b16 %v180
    %v816 = vunpack.c.l.b16 %v181
    %v817 = vunpack.c.l.b16 %v182
    %v818 = vunpack.c.l.b16 %v183
    %v819 = vunpack.c.l.b16 %v184
    %v820 = vunpack.c.l.b16 %v185
    %v821 = vunpack.c.l.b16 %v186
    %v822 = vunpack.c.l.b16 %v187
    %v823 = vunpack.c.l.b16 %v188
    %v824 = vunpack.c.l.b16 %v189
    %v825 = vunpack.c.l.b16 %v190
    %v826 = vunpack.c.l.b16 %v191
    %v827 = vunpack.c.l.b16 %v192
    %v828 = vunpack.c.l.b16 %v193
    %v829 = vunpack.c.l.b16 %v194
    %v830 = vunpack.c.l.b16 %v195
    %v831 = vunpack.c.l.b16 %v196
    %v832 = vunpack.c.l.b16 %v197
    %v833 = vunpack.c.l.b16 %v198
    %v834 = vunpack.c.l.b16 %v199
    %v835 = vunpack.c.l.b16 %v200
    %v836 = vunpack.c.l.b16 %v201
    %v837 = vunpack.c.l.b16 %v202
    %v838 = vunpack.c.l.b16 %v203
    %v839 = vunpack.c.l.b16 %v204
    %v840 = vunpack.c.l.b16 %v205
    %v841 = vunpack.c.l.b16 %v206
    %v842 = vunpack.c.l.b16 %v207
    %v843 = vunpack.c.l.b16 %v208
    %v844 = vunpack.c.l.b16 %v209
    %v845 = vunpack.c.l.b16 %v210
    %v846 = vunpack.c.l.b16 %v211
    %v847 = vunpack.c.l.b16 %v212
    %v848 = vunpack.c.l.b16 %v213
    %v849 = vunpack.c.l.b16 %v214
    %v850 = vunpack.c.l.b16 %v215
    %v851 = vunpack.c.l.b16 %v216
    %v852 = vunpack.c.l.b16 %v217
    %v853 = vunpack.c.l.b16 %v218
    %v854 = vunpack.c.l.b16 %v219
    %v855 = vunpack.c.l.b16 %v220
    %v856 = vunpack.c.l.b16 %v221
    %v857 = vunpack.c.l.b16 %v222
    %v858 = vunpack.c.l.b16 %v223
    %v859 = vunpack.c.l.b16 %v224
    %v860 = vunpack.c.l.b16 %v225
    %v861 = vunpack.c.l.b16 %v226
    %v862 = vunpack.c.l.b16 %v227
    %v863 = vunpack.c.l.b16 %v228
    %v864 = vunpack.c.l.b16 %v229
    %v865 = vunpack.c.l.b16 %v230
    %v866 = vunpack.c.l.b16 %v231
    %v867 = vunpack.c.l.b16 %v232
    %v868 = vunpack.c.l.b16 %v233
    %v869 = vunpack.c.l.b16 %v234
    %v870 = vunpack.c.l.b16 %v235
    %v871 = vunpack.c.l.b16 %v236
    %v872 = vunpack.c.l.b16 %v237
    %v873 = vunpack.c.l.b16 %v238
    %v874 = vunpack.c.l.b16 %v239
    %v875 = vunpack.c.l.b16 %v240
    %v876 = vunpack.c.l.b16 %v241
    %v877 = vunpack.c.l.b16 %v242
    %v878 = vunpack.c.l.b16 %v243
    %v879 = vunpack.c.l.b16 %v244
    %v880 = vunpack.c.l.b16 %v245
    %v881 = vunpack.c.l.b16 %v246
    %v882 = vunpack.c.l.b16 %v247
    %v883 = vunpack.c.l.b16 %v248
    %v884 = vunpack.c.l.b16 %v249
    %v885 = vunpack.c.l.b16 %v250
    %v886 = vunpack.c.l.b16 %v251
    %v887 = vunpack.c.l.b16 %v252
    %v888 = vunpack.c.l.b16 %v253
    %v889 = vunpack.c.l.b16 %v254
    %v890 = vunpack.c.l.b16 %v255
    %v891 = vunpack.c.l.b16 %v256
    %v892 = vunpack.c.l.b16 %v257
    %v893 = vunpack.c.l.b16 %v258
    %v894 = vunpack.c.l.b16 %v259
    %v895 = vunpack.c.l.b16 %v260
    %v896 = vunpack.c.l.b16 %v261
    %v897 = vunpack.c.l.b16 %v262
    %v898 = vunpack.c.l.b16 %v263
    %v899 = vunpack.c.l.b16 %v264
    %v900 = vunpack.c.l.b16 %v265
    %v901 = vunpack.c.l.b16 %v266
    %v902 = vunpack.c.l.b16 %v267
    %v903 = vunpack.c.l.b16 %v268
    %v904 = vunpack.c.l.b16 %v269
    %v905 = vunpack.c.l.b16 %v270
    %v906 = vunpack.c.l.b16 %v271
    %v907 = vunpack.c.l.b16 %v272
    %v908 = vunpack.c.l.b16 %v273
    %v909 = vpack.c.b16 %v654, %v653
    %v910 = vpack.c.b16 %v656, %v655
    %v911 = vpack.c.b16 %v658, %v657
    %v912 = vpack.c.b16 %v660, %v659
    %v913 = vpack.c.b16 %v662, %v661
    %v914 = vpack.c.b16 %v664, %v663
    %v915 = vpack.c.b16 %v666, %v665
    %v916 = vpack.c.b16 %v668, %v667
    %v917 = vpack.c.b16 %v670, %v669
    %v918 = vpack.c.b16 %v672, %v671
    %v919 = vpack.c.b16 %v674, %v673
    %v920 = vpack.c.b16 %v676, %v675
    %v921 = vpack.c.b16 %v678, %v677
    %v922 = vpack.c.b16 %v680, %v679
    %v923 = vpack.c.b16 %v682, %v681
    %v924 = vpack.c.b16 %v684, %v683
    %v925 = vpack.c.b16 %v686, %v685
    %v926 = vpack.c.b16 %v688, %v687
    %v927 = vpack.c.b16 %v690, %v689
    %v928 = vpack.c.b16 %v692, %v691
    %v929 = vpack.c.b16 %v694, %v693
    %v930 = vpack.c.b16 %v696, %v695
    %v931 = vpack.c.b16 %v698, %v697
    %v932 = vpack.c.b16 %v700, %v699
    %v933 = vpack.c.b16 %v702, %v701
    %v934 = vpack.c.b16 %v704, %v703
    %v935 = vpack.c.b16 %v706, %v705
    %v936 = vpack.c.b16 %v708, %v707
    %v937 = vpack.c.b16 %v710, %v709
    %v938 = vpack.c.b16 %v712, %v711
    %v939 = vpack.c.b16 %v714, %v713
    %v940 = vpack.c.b16 %v716, %v715
    %v941 = vpack.c.b16 %v718, %v717
    %v942 = vpack.c.b16 %v720, %v719
    %v943 = vpack.c.b16 %v722, %v721
    %v944 = vpack.c.b16 %v724, %v723
    %v945 = vpack.c.b16 %v726, %v725
    %v946 = vpack.c.b16 %v728, %v727
    %v947 = vpack.c.b16 %v730, %v729
    %v948 = vpack.c.b16 %v732, %v731
    %v949 = vpack.c.b16 %v734, %v733
    %v950 = vpack.c.b16 %v736, %v735
    %v951 = vpack.c.b16 %v738, %v737
    %v952 = vpack.c.b16 %v740, %v739
    %v953 = vpack.c.b16 %v742, %v741
    %v954 = vpack.c.b16 %v744, %v743
    %v955 = vpack.c.b16 %v746, %v745
    %v956 = vpack.c.b16 %v748, %v747
    %v957 = vpack.c.b16 %v750, %v749
    %v958 = vpack.c.b16 %v752, %v751
    %v959 = vpack.c.b16 %v754, %v753
    %v960 = vpack.c.b16 %v756, %v755
    %v961 = vpack.c.b16 %v758, %v757
    %v962 = vpack.c.b16 %v760, %v759
    %v963 = vpack.c.b16 %v762, %v761
    %v964 = vpack.c.b16 %v764, %v763
    %v965 = vpack.c.b16 %v766, %v765
    %v966 = vpack.c.b16 %v768, %v767
    %v967 = vpack.c.b16 %v770, %v769
    %v968 = vpack.c.b16 %v772, %v771
    %v969 = vpack.c.b16 %v774, %v773
    %v970 = vpack.c.b16 %v776, %v775
    %v971 = vpack.c.b16 %v778, %v777
    %v972 = vpack.c.b16 %v780, %v779
    %v973 = vpack.c.b16 %v782, %v781
    %v974 = vpack.c.b16 %v784, %v783
    %v975 = vpack.c.b16 %v786, %v785
    %v976 = vpack.c.b16 %v788, %v787
    %v977 = vpack.c.b16 %v790, %v789
    %v978 = vpack.c.b16 %v792, %v791
    %v979 = vpack.c.b16 %v794, %v793
    %v980 = vpack.c.b16 %v796, %v795
    %v981 = vpack.c.b16 %v798, %v797
    %v982 = vpack.c.b16 %v800, %v799
    %v983 = vpack.c.b16 %v802, %v801
    %v984 = vpack.c.b16 %v804, %v803
    %v985 = vpack.c.b16 %v806, %v805
    %v986 = vpack.c.b16 %v808, %v807
    %v987 = vpack.c.b16 %v810, %v809
    %v988 = vpack.c.b16 %v812, %v811
    %v989 = vpack.c.b16 %v814, %v813
    %v990 = vpack.c.b16 %v816, %v815
    %v991 = vpack.c.b16 %v818, %v817
    %v992 = vpack.c.b16 %v820, %v819
    %v993 = vpack.c.b16 %v822, %v821
    %v994 = vpack.c.b16 %v824, %v823
    %v995 = vpack.c.b16 %v826, %v825
    %v996 = vpack.c.b16 %v828, %v827
    %v997 = vpack.c.b16 %v830, %v829
    %v998 = vpack.c.b16 %v832, %v831
    %v999 = vpack.c.b16 %v834, %v833
    %v1000 = vpack.c.b16 %v836, %v835
    %v1001 = vpack.c.b16 %v838, %v837
    %v1002 = vpack.c.b16 %v840, %v839
    %v1003 = vpack.c.b16 %v842, %v841
    %v1004 = vpack.c.b16 %v844, %v843
    %v1005 = vpack.c.b16 %v846, %v845
    %v1006 = vpack.c.b16 %v848, %v847
    %v1007 = vpack.c.b16 %v850, %v849
    %v1008 = vpack.c.b16 %v852, %v851
    %v1009 = vpack.c.b16 %v854, %v853
    %v1010 = vpack.c.b16 %v856, %v855
    %v1011 = vpack.c.b16 %v858, %v857
    %v1012 = vpack.c.b16 %v860, %v859
    %v1013 = vpack.c.b16 %v862, %v861
    %v1014 = vpack.c.b16 %v864, %v863
    %v1015 = vpack.c.b16 %v866, %v865
    %v1016 = vpack.c.b16 %v868, %v867
    %v1017 = vpack.c.b16 %v870, %v869
    %v1018 = vpack.c.b16 %v872, %v871
    %v1019 = vpack.c.b16 %v874, %v873
    %v1020 = vpack.c.b16 %v876, %v875
    %v1021 = vpack.c.b16 %v878, %v877
    %v1022 = vpack.c.b16 %v880, %v879
    %v1023 = vpack.c.b16 %v882, %v881
    %v1024 = vpack.c.b16 %v884, %v883
    %v1025 = vpack.c.b16 %v886, %v885
    %v1026 = vpack.c.b16 %v888, %v887
    %v1027 = vpack.c.b16 %v890, %v889
    %v1028 = vpack.c.b16 %v892, %v891
    %v1029 = vpack.c.b16 %v894, %v893
    %v1030 = vpack.c.b16 %v896, %v895
    %v1031 = vpack.c.b16 %v898, %v897
    %v1032 = vpack.c.b16 %v900, %v899
    %v1033 = vpack.c.b16 %v902, %v901
    %v1034 = vpack.c.b16 %v904, %v903
    %v1035 = vpack.c.b16 %v906, %v905
    %v1036 = vpack.c.b16 %v908, %v907
    %1165 = vmatprep.subr.bf16.mxu0 0
    %1166 = vmatpush1.bf16.msra.mxu0 %v909
    %1167 = vmatprep.subr.bf16.mxu0 0
    %1168 = vmatpush1.bf16.msra.mxu0 %v910
    %1169 = vmatprep.subr.bf16.mxu0 0
    %1170 = vmatpush1.bf16.msra.mxu0 %v911
    %1171 = vmatprep.subr.bf16.mxu0 0
    %1172 = vmatpush1.bf16.msra.mxu0 %v912
    %1173 = vmatprep.subr.bf16.mxu0 0
    %1174 = vmatpush1.bf16.msra.mxu0 %v913
    %1175 = vmatprep.subr.bf16.mxu0 0
    %1176 = vmatpush1.bf16.msra.mxu0 %v914
    %1177 = vmatprep.subr.bf16.mxu0 0
    %1178 = vmatpush1.bf16.msra.mxu0 %v915
    %1179 = vmatprep.subr.bf16.mxu0 0
    %1180 = vmatpush1.bf16.msra.mxu0 %v916
    %1181 = vmatprep.subr.bf16.mxu0 0
    %1182 = vmatpush1.bf16.msra.mxu0 %v917
    %1183 = vmatprep.subr.bf16.mxu0 0
    %1184 = vmatpush1.bf16.msra.mxu0 %v918
    %1185 = vmatprep.subr.bf16.mxu0 0
    %1186 = vmatpush1.bf16.msra.mxu0 %v919
    %1187 = vmatprep.subr.bf16.mxu0 0
    %1188 = vmatpush1.bf16.msra.mxu0 %v920
    %1189 = vmatprep.subr.bf16.mxu0 0
    %1190 = vmatpush1.bf16.msra.mxu0 %v921
    %1191 = vmatprep.subr.bf16.mxu0 0
    %1192 = vmatpush1.bf16.msra.mxu0 %v922
    %1193 = vmatprep.subr.bf16.mxu0 0
    %1194 = vmatpush1.bf16.msra.mxu0 %v923
    %1195 = vmatprep.subr.bf16.mxu0 0
    %1196 = vmatpush1.bf16.msra.mxu0 %v924
    %1197 = vmatprep.mubr.bf16.mxu0 %v320
    %1198 = vmatmul.mubr.bf16.gmra.mrb[0].mxu0 %v306
    %v1199 = vpop.f32.mrb[0].mxu0
    %v1200 = vadd.f32 %v279, %v1199
    %v1201 = vpop.f32.mrb[0].mxu0
    %v1202 = vpop.f32.mrb[0].mxu0
    %v1203 = vpop.f32.mrb[0].mxu0
    %1204 = vdwg.mxu0
    %1205 = vmatprep.subr.bf16.mxu0 0
    %1206 = vmatpush1.bf16.msra.mxu0 %v925
    %1207 = vmatprep.subr.bf16.mxu0 0
    %1208 = vmatpush1.bf16.msra.mxu0 %v926
    %1209 = vmatprep.subr.bf16.mxu0 0
    %1210 = vmatpush1.bf16.msra.mxu0 %v927
    %1211 = vmatprep.subr.bf16.mxu0 0
    %1212 = vmatpush1.bf16.msra.mxu0 %v928
    %1213 = vmatprep.subr.bf16.mxu0 0
    %1214 = vmatpush1.bf16.msra.mxu0 %v929
    %1215 = vmatprep.subr.bf16.mxu0 0
    %1216 = vmatpush1.bf16.msra.mxu0 %v930
    %1217 = vmatprep.subr.bf16.mxu0 0
    %1218 = vmatpush1.bf16.msra.mxu0 %v931
    %1219 = vmatprep.subr.bf16.mxu0 0
    %1220 = vmatpush1.bf16.msra.mxu0 %v932
    %1221 = vmatprep.subr.bf16.mxu0 0
    %1222 = vmatpush1.bf16.msra.mxu0 %v933
    %1223 = vmatprep.subr.bf16.mxu0 0
    %1224 = vmatpush1.bf16.msra.mxu0 %v934
    %1225 = vmatprep.subr.bf16.mxu0 0
    %1226 = vmatpush1.bf16.msra.mxu0 %v935
    %1227 = vmatprep.subr.bf16.mxu0 0
    %1228 = vmatpush1.bf16.msra.mxu0 %v936
    %1229 = vmatprep.subr.bf16.mxu0 0
    %1230 = vmatpush1.bf16.msra.mxu0 %v937
    %1231 = vmatprep.subr.bf16.mxu0 0
    %1232 = vmatpush1.bf16.msra.mxu0 %v938
    %1233 = vmatprep.subr.bf16.mxu0 0
    %1234 = vmatpush1.bf16.msra.mxu0 %v939
    %1235 = vmatprep.subr.bf16.mxu0 0
    %1236 = vmatpush1.bf16.msra.mxu0 %v940
    %1237 = vmatprep.mubr.bf16.mxu0 %v330
    %1238 = vmatmul.mubr.bf16.gmra.mrb[0].mxu0 %v328
    %v1239 = vpop.f32.mrb[0].mxu0
    %v1240 = vadd.f32 %v1200, %v1239
    %v1241 = vpop.f32.mrb[0].mxu0
    %v1242 = vpop.f32.mrb[0].mxu0
    %v1243 = vpop.f32.mrb[0].mxu0
    %1244 = vdwg.mxu0
    %1245 = vmatprep.subr.bf16.mxu0 0
    %1246 = vmatpush1.bf16.msra.mxu0 %v941
    %1247 = vmatprep.subr.bf16.mxu0 0
    %1248 = vmatpush1.bf16.msra.mxu0 %v942
    %1249 = vmatprep.subr.bf16.mxu0 0
    %1250 = vmatpush1.bf16.msra.mxu0 %v943
    %1251 = vmatprep.subr.bf16.mxu0 0
    %1252 = vmatpush1.bf16.msra.mxu0 %v944
    %1253 = vmatprep.subr.bf16.mxu0 0
    %1254 = vmatpush1.bf16.msra.mxu0 %v945
    %1255 = vmatprep.subr.bf16.mxu0 0
    %1256 = vmatpush1.bf16.msra.mxu0 %v946
    %1257 = vmatprep.subr.bf16.mxu0 0
    %1258 = vmatpush1.bf16.msra.mxu0 %v947
    %1259 = vmatprep.subr.bf16.mxu0 0
    %1260 = vmatpush1.bf16.msra.mxu0 %v948
    %1261 = vmatprep.subr.bf16.mxu0 0
    %1262 = vmatpush1.bf16.msra.mxu0 %v949
    %1263 = vmatprep.subr.bf16.mxu0 0
    %1264 = vmatpush1.bf16.msra.mxu0 %v950
    %1265 = vmatprep.subr.bf16.mxu0 0
    %1266 = vmatpush1.bf16.msra.mxu0 %v951
    %1267 = vmatprep.subr.bf16.mxu0 0
    %1268 = vmatpush1.bf16.msra.mxu0 %v952
    %1269 = vmatprep.subr.bf16.mxu0 0
    %1270 = vmatpush1.bf16.msra.mxu0 %v953
    %1271 = vmatprep.subr.bf16.mxu0 0
    %1272 = vmatpush1.bf16.msra.mxu0 %v954
    %1273 = vmatprep.subr.bf16.mxu0 0
    %1274 = vmatpush1.bf16.msra.mxu0 %v955
    %1275 = vmatprep.subr.bf16.mxu0 0
    %1276 = vmatpush1.bf16.msra.mxu0 %v956
    %1277 = vmatprep.mubr.bf16.mxu0 %v327
    %1278 = vmatmul.mubr.bf16.gmra.mrb[0].mxu0 %v313
    %v1279 = vpop.f32.mrb[0].mxu0
    %v1280 = vadd.f32 %v1240, %v1279
    %v1281 = vpop.f32.mrb[0].mxu0
    %v1282 = vpop.f32.mrb[0].mxu0
    %v1283 = vpop.f32.mrb[0].mxu0
    %1284 = vdwg.mxu0
    %1285 = vmatprep.subr.bf16.mxu0 0
    %1286 = vmatpush1.bf16.msra.mxu0 %v957
    %1287 = vmatprep.subr.bf16.mxu0 0
    %1288 = vmatpush1.bf16.msra.mxu0 %v958
    %1289 = vmatprep.subr.bf16.mxu0 0
    %1290 = vmatpush1.bf16.msra.mxu0 %v959
    %1291 = vmatprep.subr.bf16.mxu0 0
    %1292 = vmatpush1.bf16.msra.mxu0 %v960
    %1293 = vmatprep.subr.bf16.mxu0 0
    %1294 = vmatpush1.bf16.msra.mxu0 %v961
    %1295 = vmatprep.subr.bf16.mxu0 0
    %1296 = vmatpush1.bf16.msra.mxu0 %v962
    %1297 = vmatprep.subr.bf16.mxu0 0
    %1298 = vmatpush1.bf16.msra.mxu0 %v963
    %1299 = vmatprep.subr.bf16.mxu0 0
    %1300 = vmatpush1.bf16.msra.mxu0 %v964
    %1301 = vmatprep.subr.bf16.mxu0 0
    %1302 = vmatpush1.bf16.msra.mxu0 %v965
    %1303 = vmatprep.subr.bf16.mxu0 0
    %1304 = vmatpush1.bf16.msra.mxu0 %v966
    %1305 = vmatprep.subr.bf16.mxu0 0
    %1306 = vmatpush1.bf16.msra.mxu0 %v967
    %1307 = vmatprep.subr.bf16.mxu0 0
    %1308 = vmatpush1.bf16.msra.mxu0 %v968
    %1309 = vmatprep.subr.bf16.mxu0 0
    %1310 = vmatpush1.bf16.msra.mxu0 %v969
    %1311 = vmatprep.subr.bf16.mxu0 0
    %1312 = vmatpush1.bf16.msra.mxu0 %v970
    %1313 = vmatprep.subr.bf16.mxu0 0
    %1314 = vmatpush1.bf16.msra.mxu0 %v971
    %1315 = vmatprep.subr.bf16.mxu0 0
    %1316 = vmatpush1.bf16.msra.mxu0 %v972
    %1317 = vmatprep.mubr.bf16.mxu0 %v331
    %1318 = vmatmul.mubr.bf16.gmra.mrb[0].mxu0 %v329
    %v1319 = vpop.f32.mrb[0].mxu0
    %v1320 = vadd.f32 %v1280, %v1319
    %v1321 = vpop.f32.mrb[0].mxu0
    %v1322 = vpop.f32.mrb[0].mxu0
    %v1323 = vpop.f32.mrb[0].mxu0
    %1324 = vdwg.mxu0
    %1325 = vmatprep.subr.bf16.mxu0 0
    %1326 = vmatpush1.bf16.msra.mxu0 %v973
    %1327 = vmatprep.subr.bf16.mxu0 0
    %1328 = vmatpush1.bf16.msra.mxu0 %v974
    %1329 = vmatprep.subr.bf16.mxu0 0
    %1330 = vmatpush1.bf16.msra.mxu0 %v975
    %1331 = vmatprep.subr.bf16.mxu0 0
    %1332 = vmatpush1.bf16.msra.mxu0 %v976
    %1333 = vmatprep.subr.bf16.mxu0 0
    %1334 = vmatpush1.bf16.msra.mxu0 %v977
    %1335 = vmatprep.subr.bf16.mxu0 0
    %1336 = vmatpush1.bf16.msra.mxu0 %v978
    %1337 = vmatprep.subr.bf16.mxu0 0
    %1338 = vmatpush1.bf16.msra.mxu0 %v979
    %1339 = vmatprep.subr.bf16.mxu0 0
    %1340 = vmatpush1.bf16.msra.mxu0 %v980
    %1341 = vmatprep.subr.bf16.mxu0 0
    %1342 = vmatpush1.bf16.msra.mxu0 %v981
    %1343 = vmatprep.subr.bf16.mxu0 0
    %1344 = vmatpush1.bf16.msra.mxu0 %v982
    %1345 = vmatprep.subr.bf16.mxu0 0
    %1346 = vmatpush1.bf16.msra.mxu0 %v983
    %1347 = vmatprep.subr.bf16.mxu0 0
    %1348 = vmatpush1.bf16.msra.mxu0 %v984
    %1349 = vmatprep.subr.bf16.mxu0 0
    %1350 = vmatpush1.bf16.msra.mxu0 %v985
    %1351 = vmatprep.subr.bf16.mxu0 0
    %1352 = vmatpush1.bf16.msra.mxu0 %v986
    %1353 = vmatprep.subr.bf16.mxu0 0
    %1354 = vmatpush1.bf16.msra.mxu0 %v987
    %1355 = vmatprep.subr.bf16.mxu0 0
    %1356 = vmatpush1.bf16.msra.mxu0 %v988
    %1357 = vmatprep.mubr.bf16.mxu0 %v369
    %1358 = vmatmul.mubr.bf16.gmra.mrb[0].mxu0 %v355
    %v1359 = vpop.f32.mrb[0].mxu0
    %v1360 = vadd.f32 %v1320, %v1359
    %v1361 = vpop.f32.mrb[0].mxu0
    %v1362 = vpop.f32.mrb[0].mxu0
    %v1363 = vpop.f32.mrb[0].mxu0
    %1364 = vdwg.mxu0
    %1365 = vmatprep.subr.bf16.mxu0 0
    %1366 = vmatpush1.bf16.msra.mxu0 %v989
    %1367 = vmatprep.subr.bf16.mxu0 0
    %1368 = vmatpush1.bf16.msra.mxu0 %v990
    %1369 = vmatprep.subr.bf16.mxu0 0
    %1370 = vmatpush1.bf16.msra.mxu0 %v991
    %1371 = vmatprep.subr.bf16.mxu0 0
    %1372 = vmatpush1.bf16.msra.mxu0 %v992
    %1373 = vmatprep.subr.bf16.mxu0 0
    %1374 = vmatpush1.bf16.msra.mxu0 %v993
    %1375 = vmatprep.subr.bf16.mxu0 0
    %1376 = vmatpush1.bf16.msra.mxu0 %v994
    %1377 = vmatprep.subr.bf16.mxu0 0
    %1378 = vmatpush1.bf16.msra.mxu0 %v995
    %1379 = vmatprep.subr.bf16.mxu0 0
    %1380 = vmatpush1.bf16.msra.mxu0 %v996
    %1381 = vmatprep.subr.bf16.mxu0 0
    %1382 = vmatpush1.bf16.msra.mxu0 %v997
    %1383 = vmatprep.subr.bf16.mxu0 0
    %1384 = vmatpush1.bf16.msra.mxu0 %v998
    %1385 = vmatprep.subr.bf16.mxu0 0
    %1386 = vmatpush1.bf16.msra.mxu0 %v999
    %1387 = vmatprep.subr.bf16.mxu0 0
    %1388 = vmatpush1.bf16.msra.mxu0 %v1000
    %1389 = vmatprep.subr.bf16.mxu0 0
    %1390 = vmatpush1.bf16.msra.mxu0 %v1001
    %1391 = vmatprep.subr.bf16.mxu0 0
    %1392 = vmatpush1.bf16.msra.mxu0 %v1002
    %1393 = vmatprep.subr.bf16.mxu0 0
    %1394 = vmatpush1.bf16.msra.mxu0 %v1003
    %1395 = vmatprep.subr.bf16.mxu0 0
    %1396 = vmatpush1.bf16.msra.mxu0 %v1004
    %1397 = vmatprep.mubr.bf16.mxu0 %v379
    %1398 = vmatmul.mubr.bf16.gmra.mrb[0].mxu0 %v377
    %v1399 = vpop.f32.mrb[0].mxu0
    %v1400 = vadd.f32 %v1360, %v1399
    %v1401 = vpop.f32.mrb[0].mxu0
    %v1402 = vpop.f32.mrb[0].mxu0
    %v1403 = vpop.f32.mrb[0].mxu0
    %1404 = vdwg.mxu0
    %1405 = vmatprep.subr.bf16.mxu0 0
    %1406 = vmatpush1.bf16.msra.mxu0 %v1005
    %1407 = vmatprep.subr.bf16.mxu0 0
    %1408 = vmatpush1.bf16.msra.mxu0 %v1006
    %1409 = vmatprep.subr.bf16.mxu0 0
    %1410 = vmatpush1.bf16.msra.mxu0 %v1007
    %1411 = vmatprep.subr.bf16.mxu0 0
    %1412 = vmatpush1.bf16.msra.mxu0 %v1008
    %1413 = vmatprep.subr.bf16.mxu0 0
    %1414 = vmatpush1.bf16.msra.mxu0 %v1009
    %1415 = vmatprep.subr.bf16.mxu0 0
    %1416 = vmatpush1.bf16.msra.mxu0 %v1010
    %1417 = vmatprep.subr.bf16.mxu0 0
    %1418 = vmatpush1.bf16.msra.mxu0 %v1011
    %1419 = vmatprep.subr.bf16.mxu0 0
    %1420 = vmatpush1.bf16.msra.mxu0 %v1012
    %1421 = vmatprep.subr.bf16.mxu0 0
    %1422 = vmatpush1.bf16.msra.mxu0 %v1013
    %1423 = vmatprep.subr.bf16.mxu0 0
    %1424 = vmatpush1.bf16.msra.mxu0 %v1014
    %1425 = vmatprep.subr.bf16.mxu0 0
    %1426 = vmatpush1.bf16.msra.mxu0 %v1015
    %1427 = vmatprep.subr.bf16.mxu0 0
    %1428 = vmatpush1.bf16.msra.mxu0 %v1016
    %1429 = vmatprep.subr.bf16.mxu0 0
    %1430 = vmatpush1.bf16.msra.mxu0 %v1017
    %1431 = vmatprep.subr.bf16.mxu0 0
    %1432 = vmatpush1.bf16.msra.mxu0 %v1018
    %1433 = vmatprep.subr.bf16.mxu0 0
    %1434 = vmatpush1.bf16.msra.mxu0 %v1019
    %1435 = vmatprep.subr.bf16.mxu0 0
    %1436 = vmatpush1.bf16.msra.mxu0 %v1020
    %1437 = vmatprep.mubr.bf16.mxu0 %v376
    %1438 = vmatmul.mubr.bf16.gmra.mrb[0].mxu0 %v362
    %v1439 = vpop.f32.mrb[0].mxu0
    %v1440 = vadd.f32 %v1400, %v1439
    %v1441 = vpop.f32.mrb[0].mxu0
    %v1442 = vpop.f32.mrb[0].mxu0
    %v1443 = vpop.f32.mrb[0].mxu0
    %1444 = vdwg.mxu0
    %1445 = vmatprep.subr.bf16.mxu0 0
    %1446 = vmatpush1.bf16.msra.mxu0 %v1021
    %1447 = vmatprep.subr.bf16.mxu0 0
    %1448 = vmatpush1.bf16.msra.mxu0 %v1022
    %1449 = vmatprep.subr.bf16.mxu0 0
    %1450 = vmatpush1.bf16.msra.mxu0 %v1023
    %1451 = vmatprep.subr.bf16.mxu0 0
    %1452 = vmatpush1.bf16.msra.mxu0 %v1024
    %1453 = vmatprep.subr.bf16.mxu0 0
    %1454 = vmatpush1.bf16.msra.mxu0 %v1025
    %1455 = vmatprep.subr.bf16.mxu0 0
    %1456 = vmatpush1.bf16.msra.mxu0 %v1026
    %1457 = vmatprep.subr.bf16.mxu0 0
    %1458 = vmatpush1.bf16.msra.mxu0 %v1027
    %1459 = vmatprep.subr.bf16.mxu0 0
    %1460 = vmatpush1.bf16.msra.mxu0 %v1028
    %1461 = vmatprep.subr.bf16.mxu0 0
    %1462 = vmatpush1.bf16.msra.mxu0 %v1029
    %1463 = vmatprep.subr.bf16.mxu0 0
    %1464 = vmatpush1.bf16.msra.mxu0 %v1030
    %1465 = vmatprep.subr.bf16.mxu0 0
    %1466 = vmatpush1.bf16.msra.mxu0 %v1031
    %1467 = vmatprep.subr.bf16.mxu0 0
    %1468 = vmatpush1.bf16.msra.mxu0 %v1032
    %1469 = vmatprep.subr.bf16.mxu0 0
    %1470 = vmatpush1.bf16.msra.mxu0 %v1033
    %1471 = vmatprep.subr.bf16.mxu0 0
    %1472 = vmatpush1.bf16.msra.mxu0 %v1034
    %1473 = vmatprep.subr.bf16.mxu0 0
    %1474 = vmatpush1.bf16.msra.mxu0 %v1035
    %1475 = vmatprep.subr.bf16.mxu0 0
    %1476 = vmatpush1.bf16.msra.mxu0 %v1036
    %1477 = vmatprep.mubr.bf16.mxu0 %v380
    %1478 = vmatmul.mubr.bf16.gmra.mrb[0].mxu0 %v378
    %v1479 = vpop.f32.mrb[0].mxu0
    %v1480 = vadd.f32 %v1440, %v1479
    %v1481 = vpop.f32.mrb[0].mxu0
    %v1482 = vpop.f32.mrb[0].mxu0
    %v1483 = vpop.f32.mrb[0].mxu0
    %1484 = vdwg.mxu0
    %1485 = vst [vmem:[#allocation2] sm:$0x3] %v1480
    // Predicated region
    $region14: #{convnet_forward.3} parent=1 // pred_check
      _
    $region15: #{convnet_forward.3} parent=1 // pred_check_branch
      %1487 = sbr.rel (0) target = $region17
    $region16: #{convnet_forward.3} parent=1 // pred_region
      %s1489 = ssub.s32 32, 32
      %1490 = vsyncadd [#allocation3], %s1489
      %s1492 = sshll.u32 [#allocation2], 4
      %s1493 = int_to_ptr.vmem [resolvable:$true] %s1492
      %1495 = dma.vmem_to_hbm [thread:$0]  %s1493, 32, %s3, [#allocation3]
    $region17: #{convnet_forward.3} parent=1 // pred_fallthru
      _
    // Predicated region
    $region18: #{convnet_forward.3} parent=1 // pred_check
      _
    $region19: #{convnet_forward.3} parent=1 // pred_check_branch
      %1497 = sbr.rel (0) target = $region21
    $region20: #{convnet_forward.3} parent=1 // pred_region
      %1498 = dma.done [#allocation3], 32
    $region21: #{convnet_forward.3} parent=1 // pred_fallthru
      _
    %1499 = vsyncpa [#allocation3], 1

// kernel: convnet_forward.2
$region0: #{convnet_forward.2}
  #allocation0 [shape = 'u32[]', space=smem, size = 0x4, offset = 0x4, fixed_abs, tag = 'smem constant byte address 0x4 - core index']
  #allocation1 [shape = 'u32[144,128]{1,0:T(1,128)}', space=vmem, size = 0x12000, scoped, tag = 'internal scratch']
  #allocation2 [shape = 'f32[18,25,3]{2,1,0:T(8,128)}', space=vmem, size = 0x48000, scoped, tag = 'scratch operand']
  #allocation3 [shape = 'f32[10,17,12]{2,1,0:T(8,128)}', space=vmem, size = 0x1e000, scoped, tag = 'scratch operand']
  #allocation4 [shape = 'f32[10,17,20]{2,1,0:T(8,128)}', space=vmem, size = 0x1e000, scoped, tag = 'scratch operand']
  %s0 = inlined_call_operand.vmem [shape: f32[2,16,16,3], index: 0, kind: input, shape index: {}]
  %s1 = inlined_call_operand.vmem [shape: bf16[3,3,3,12], index: 1, kind: input, shape index: {}]
  %s2 = inlined_call_operand.vmem [shape: f32[2,12], index: 2, kind: input, shape index: {}]
  %s3 = inlined_call_operand.vmem [shape: bf16[3,3,12,20], index: 3, kind: input, shape index: {}]
  %s4 = inlined_call_operand.vmem [shape: f32[2,20], index: 4, kind: input, shape index: {}]
  %s5 = inlined_call_operand.vmem [shape: bf16[3,3,20,32], index: 5, kind: input, shape index: {}]
  %s6 = inlined_call_operand.vmem [shape: f32[2,32], index: 6, kind: input, shape index: {}]
  %s7 = inlined_call_operand.vmem [shape: bf16[2,64,32], index: 7, kind: output, shape index: {}]
  %s8 = sld [smem:[#allocation0]]
  $region61: #{convnet_forward.2} parent=0
    _
  %s10 = ssub.s32 1, %s8
  %s11 = scalar_select 0, %s10, %s8
  loop: start=0, step=1, limit=4
  $region2: #{convnet_forward.2} parent=0 // loop_pre_header
    _
  $region3: #{convnet_forward.2} parent=0 // loop_header
    %s13 = sphi 0, %s17
    %p14 = scmp.ge.s32.totalorder %s13, 4
    %s23 = sphi 0, %s25
    %s26 = sphi 0, %s23
    %s27 = sphi 0, %s26
    %s43 = sphi 0, %s27
    %s47 = sphi 0, %s47
    %s49 = sphi 0, %s47
    %s50 = sphi 0, %s49
    %s64 = sphi 0, %s50
    %s68 = sphi 0, %s68
    %s70 = sphi 0, %s68
    %s71 = sphi 0, %s70
    %s85 = sphi 0, %s71
    %s89 = sphi 0, %s89
    %s91 = sphi 0, %s89
    %s92 = sphi 0, %s91
    %s106 = sphi 0, %s92
    %s110 = sphi 0, %s110
    %s112 = sphi 0, %s110
    %s113 = sphi 0, %s112
    %s127 = sphi 0, %s113
    %s131 = sphi 0, %s131
    %s133 = sphi 0, %s131
    %s134 = sphi 0, %s133
    %s148 = sphi 0, %s134
    %s152 = sphi 0, %s152
    %s154 = sphi 0, %s152
    %s155 = sphi 0, %s154
    %s169 = sphi 0, %s155
    %s175 = sphi 0, %s177
    %s178 = sphi 0, %s175
    %s179 = sphi 0, %s178
    %s195 = sphi 0, %s179
  $region4: #{convnet_forward.2} parent=0 // loop_header_branch
    %16 = sbr.rel (%p14) target = $region8
  $region5: #{convnet_forward.2} parent=0 // loop_body
    %s18 = ssub.s32 %s13, 1
    %s19 = ssub.s32 %s13, 2
    %s20 = sadd.s32 %s13, 1
    %s21 = ssub.s32 %s13, %s20
    %p22 = scmp.eq.s32.totalorder %s21, 0
    %s24 = sadd.s32 %s23, 1
    %s25 = scalar_select %p22, %s23, %s24
    %p28 = pneg %p22
    %p29 = scmp.eq.s32.totalorder %s13, 1
    %p30 = por %p28, %p29
    %p31 = scmp.ne.s32.totalorder %s23, %s26
    %p32 = scmp.eq.s32.totalorder %s13, 0
    %p33 = por %p31, %p32
    %p34 = scmp.ne.s32.totalorder %s23, %s26
    %p35 = scmp.eq.s32.totalorder %s18, 1
    %p36 = por %p34, %p35
    %p37 = scmp.ne.s32.totalorder %s26, %s27
    %p38 = scmp.eq.s32.totalorder %s18, 0
    %p39 = por %p37, %p38
    %p40 = scmp.ne.s32.totalorder %s26, %s27
    %p41 = scmp.eq.s32.totalorder %s19, 1
    %p42 = por %p40, %p41
    %p44 = scmp.ne.s32.totalorder %s27, %s43
    %p45 = scmp.eq.s32.totalorder %s19, 0
    %p46 = por %p44, %p45
    %s48 = sadd.s32 %s47, 1
    %p51 = scmp.eq.s32.totalorder %s13, 1
    %p52 = scmp.ne.s32.totalorder %s47, %s49
    %p53 = scmp.eq.s32.totalorder %s13, 0
    %p54 = por %p52, %p53
    %p55 = scmp.ne.s32.totalorder %s47, %s49
    %p56 = scmp.eq.s32.totalorder %s18, 1
    %p57 = por %p55, %p56
    %p58 = scmp.ne.s32.totalorder %s49, %s50
    %p59 = scmp.eq.s32.totalorder %s18, 0
    %p60 = por %p58, %p59
    %p61 = scmp.ne.s32.totalorder %s49, %s50
    %p62 = scmp.eq.s32.totalorder %s19, 1
    %p63 = por %p61, %p62
    %p65 = scmp.ne.s32.totalorder %s50, %s64
    %p66 = scmp.eq.s32.totalorder %s19, 0
    %p67 = por %p65, %p66
    %s69 = sadd.s32 %s68, 1
    %p72 = scmp.eq.s32.totalorder %s13, 1
    %p73 = scmp.ne.s32.totalorder %s68, %s70
    %p74 = scmp.eq.s32.totalorder %s13, 0
    %p75 = por %p73, %p74
    %p76 = scmp.ne.s32.totalorder %s68, %s70
    %p77 = scmp.eq.s32.totalorder %s18, 1
    %p78 = por %p76, %p77
    %p79 = scmp.ne.s32.totalorder %s70, %s71
    %p80 = scmp.eq.s32.totalorder %s18, 0
    %p81 = por %p79, %p80
    %p82 = scmp.ne.s32.totalorder %s70, %s71
    %p83 = scmp.eq.s32.totalorder %s19, 1
    %p84 = por %p82, %p83
    %p86 = scmp.ne.s32.totalorder %s71, %s85
    %p87 = scmp.eq.s32.totalorder %s19, 0
    %p88 = por %p86, %p87
    %s90 = sadd.s32 %s89, 1
    %p93 = scmp.eq.s32.totalorder %s13, 1
    %p94 = scmp.ne.s32.totalorder %s89, %s91
    %p95 = scmp.eq.s32.totalorder %s13, 0
    %p96 = por %p94, %p95
    %p97 = scmp.ne.s32.totalorder %s89, %s91
    %p98 = scmp.eq.s32.totalorder %s18, 1
    %p99 = por %p97, %p98
    %p100 = scmp.ne.s32.totalorder %s91, %s92
    %p101 = scmp.eq.s32.totalorder %s18, 0
    %p102 = por %p100, %p101
    %p103 = scmp.ne.s32.totalorder %s91, %s92
    %p104 = scmp.eq.s32.totalorder %s19, 1
    %p105 = por %p103, %p104
    %p107 = scmp.ne.s32.totalorder %s92, %s106
    %p108 = scmp.eq.s32.totalorder %s19, 0
    %p109 = por %p107, %p108
    %s111 = sadd.s32 %s110, 1
    %p114 = scmp.eq.s32.totalorder %s13, 1
    %p115 = scmp.ne.s32.totalorder %s110, %s112
    %p116 = scmp.eq.s32.totalorder %s13, 0
    %p117 = por %p115, %p116
    %p118 = scmp.ne.s32.totalorder %s110, %s112
    %p119 = scmp.eq.s32.totalorder %s18, 1
    %p120 = por %p118, %p119
    %p121 = scmp.ne.s32.totalorder %s112, %s113
    %p122 = scmp.eq.s32.totalorder %s18, 0
    %p123 = por %p121, %p122
    %p124 = scmp.ne.s32.totalorder %s112, %s113
    %p125 = scmp.eq.s32.totalorder %s19, 1
    %p126 = por %p124, %p125
    %p128 = scmp.ne.s32.totalorder %s113, %s127
    %p129 = scmp.eq.s32.totalorder %s19, 0
    %p130 = por %p128, %p129
    %s132 = sadd.s32 %s131, 1
    %p135 = scmp.eq.s32.totalorder %s13, 1
    %p136 = scmp.ne.s32.totalorder %s131, %s133
    %p137 = scmp.eq.s32.totalorder %s13, 0
    %p138 = por %p136, %p137
    %p139 = scmp.ne.s32.totalorder %s131, %s133
    %p140 = scmp.eq.s32.totalorder %s18, 1
    %p141 = por %p139, %p140
    %p142 = scmp.ne.s32.totalorder %s133, %s134
    %p143 = scmp.eq.s32.totalorder %s18, 0
    %p144 = por %p142, %p143
    %p145 = scmp.ne.s32.totalorder %s133, %s134
    %p146 = scmp.eq.s32.totalorder %s19, 1
    %p147 = por %p145, %p146
    %p149 = scmp.ne.s32.totalorder %s134, %s148
    %p150 = scmp.eq.s32.totalorder %s19, 0
    %p151 = por %p149, %p150
    %s153 = sadd.s32 %s152, 1
    %p156 = scmp.eq.s32.totalorder %s13, 1
    %p157 = scmp.ne.s32.totalorder %s152, %s154
    %p158 = scmp.eq.s32.totalorder %s13, 0
    %p159 = por %p157, %p158
    %p160 = scmp.ne.s32.totalorder %s152, %s154
    %p161 = scmp.eq.s32.totalorder %s18, 1
    %p162 = por %p160, %p161
    %p163 = scmp.ne.s32.totalorder %s154, %s155
    %p164 = scmp.eq.s32.totalorder %s18, 0
    %p165 = por %p163, %p164
    %p166 = scmp.ne.s32.totalorder %s154, %s155
    %p167 = scmp.eq.s32.totalorder %s19, 1
    %p168 = por %p166, %p167
    %p170 = scmp.ne.s32.totalorder %s155, %s169
    %p171 = scmp.eq.s32.totalorder %s19, 0
    %p172 = por %p170, %p171
    %s173 = ssub.s32 %s13, %s20
    %p174 = scmp.eq.s32.totalorder %s173, 0
    %s176 = sadd.s32 %s175, 1
    %s177 = scalar_select %p174, %s175, %s176
    %p180 = pneg %p174
    %p181 = scmp.eq.s32.totalorder %s13, 1
    %p182 = por %p180, %p181
    %p183 = scmp.ne.s32.totalorder %s175, %s178
    %p184 = scmp.eq.s32.totalorder %s13, 0
    %p185 = por %p183, %p184
    %p186 = scmp.ne.s32.totalorder %s175, %s178
    %p187 = scmp.eq.s32.totalorder %s18, 1
    %p188 = por %p186, %p187
    %p189 = scmp.ne.s32.totalorder %s178, %s179
    %p190 = scmp.eq.s32.totalorder %s18, 0
    %p191 = por %p189, %p190
    %p192 = scmp.ne.s32.totalorder %s178, %s179
    %p193 = scmp.eq.s32.totalorder %s19, 1
    %p194 = por %p192, %p193
    %p196 = scmp.ne.s32.totalorder %s179, %s195
    %p197 = scmp.eq.s32.totalorder %s19, 0
    %p198 = por %p196, %p197
    %p199 = scmp.le.s32.totalorder 1, %s13
    %p200 = scmp.lt.s32.totalorder %s13, 3
    %p201 = pnand %p199, %p200
    %p202 = pneg %p201
    // Predicated region
    $region9: #{convnet_forward.2} parent=5 // pred_check
      _
    $region10: #{convnet_forward.2} parent=5 // pred_check_branch
      %204 = sbr.rel (%p201) target = $region12
    $region11: #{convnet_forward.2} parent=5 // pred_region
      %s205 = ssub.s32 %s13, 1
      // Predicated region
      $region13: #{convnet_forward.2} parent=11 // pred_check
        %p206 = pneg %p60
      $region14: #{convnet_forward.2} parent=11 // pred_check_branch
        %208 = sbr.rel (%p206) target = $region16
      $region15: #{convnet_forward.2} parent=11 // pred_region
        _
      $region16: #{convnet_forward.2} parent=11 // pred_fallthru
        _
      // Predicated region
      $region17: #{convnet_forward.2} parent=11 // pred_check
        %p209 = pneg %p81
      $region18: #{convnet_forward.2} parent=11 // pred_check_branch
        %211 = sbr.rel (%p209) target = $region20
      $region19: #{convnet_forward.2} parent=11 // pred_region
        _
      $region20: #{convnet_forward.2} parent=11 // pred_fallthru
        _
      // Predicated region
      $region21: #{convnet_forward.2} parent=11 // pred_check
        %p212 = pneg %p102
      $region22: #{convnet_forward.2} parent=11 // pred_check_branch
        %214 = sbr.rel (%p212) target = $region24
      $region23: #{convnet_forward.2} parent=11 // pred_region
        _
      $region24: #{convnet_forward.2} parent=11 // pred_fallthru
        _
      // Predicated region
      $region25: #{convnet_forward.2} parent=11 // pred_check
        %p215 = pneg %p123
      $region26: #{convnet_forward.2} parent=11 // pred_check_branch
        %217 = sbr.rel (%p215) target = $region28
      $region27: #{convnet_forward.2} parent=11 // pred_region
        _
      $region28: #{convnet_forward.2} parent=11 // pred_fallthru
        _
      // Predicated region
      $region29: #{convnet_forward.2} parent=11 // pred_check
        %p218 = pneg %p144
      $region30: #{convnet_forward.2} parent=11 // pred_check_branch
        %220 = sbr.rel (%p218) target = $region32
      $region31: #{convnet_forward.2} parent=11 // pred_region
        _
      $region32: #{convnet_forward.2} parent=11 // pred_fallthru
        _
      // Predicated region
      $region33: #{convnet_forward.2} parent=11 // pred_check
        %p221 = pneg %p165
      $region34: #{convnet_forward.2} parent=11 // pred_check_branch
        %223 = sbr.rel (%p221) target = $region36
      $region35: #{convnet_forward.2} parent=11 // pred_region
        _
      $region36: #{convnet_forward.2} parent=11 // pred_fallthru
        _
    $region12: #{convnet_forward.2} parent=5 // pred_fallthru
      _
    %p224 = scmp.lt.s32.totalorder %s13, 2
    // Predicated region
    $region37: #{convnet_forward.2} parent=5 // pred_check
      %p225 = pneg %p224
    $region38: #{convnet_forward.2} parent=5 // pred_check_branch
      %227 = sbr.rel (%p225) target = $region40
    $region39: #{convnet_forward.2} parent=5 // pred_region
      // Predicated region
      $region41: #{convnet_forward.2} parent=39 // pred_check
        %p228 = pneg %p33
      $region42: #{convnet_forward.2} parent=39 // pred_check_branch
        %230 = sbr.rel (%p228) target = $region44
      $region43: #{convnet_forward.2} parent=39 // pred_region
        %p231 = scmp.lt.s32.totalorder %s13, 1
        %s232 = scalar_select %p231, %s13, 1
        %s233 = smul.addr %s232, 32
        %s234 = smul.addr %s233, 8
        %s235 = scalar_lea.vmem %s0, %s234
      $region44: #{convnet_forward.2} parent=39 // pred_fallthru
        _
    $region40: #{convnet_forward.2} parent=5 // pred_fallthru
      _
    %p236 = scmp.le.s32.totalorder 1, %s13
    %p237 = scmp.lt.s32.totalorder %s13, 3
    %p238 = pnand %p236, %p237
    %p239 = pneg %p238
    // Predicated region
    $region45: #{convnet_forward.2} parent=5 // pred_check
      _
    $region46: #{convnet_forward.2} parent=5 // pred_check_branch
      %241 = sbr.rel (%p238) target = $region48
    $region47: #{convnet_forward.2} parent=5 // pred_region
      %s242 = ssub.s32 %s13, 1
      %p243 = scmp.lt.s32.totalorder %s18, 1
      %s244 = scalar_select %p243, %s18, 1
      %s245 = smul.addr %s244, 32
      %s246 = smul.addr %s245, 8
      %s247 = scalar_lea.vmem %s0, %s246
      %p248 = pneg %p39
      %p249 = pneg %p36
      %p250 = pneg %p60
      %p251 = pneg %p57
      %p252 = pneg %p81
      %p253 = pneg %p78
      %p254 = pneg %p102
      %p255 = pneg %p99
      %p256 = pneg %p123
      %p257 = pneg %p120
      %p258 = pneg %p144
      %p259 = pneg %p141
      %p260 = pneg %p165
      %p261 = pneg %p162
      %p262 = pneg %p191
      %p263 = pneg %p188
      %p264 = scmp.lt.s32.totalorder %s18, 1
      %s265 = scalar_select %p264, %s18, 1
      %s266 = smul.addr %s265, 8
      %s267 = smul.addr %s266, 4
      %s268 = scalar_lea.vmem %s7, %s267
      %p269 = scmp.lt.s32.totalorder %s18, 1
      %s270 = scalar_select %p269, %s18, 1
      %s271 = smul.addr %s270, 32
      %s272 = smul.addr %s271, 8
      %s273 = scalar_lea.vmem %s0, %s272
      %p274 = scmp.lt.s32.totalorder %s18, 1
      %s275 = scalar_select %p274, %s18, 1
      %s276 = smul.addr %s275, 8
      %s277 = smul.addr %s276, 4
      %s278 = scalar_lea.vmem %s7, %s277
      %v280 = vld [vmem:[%s273] sm:$0xff]
      %v281 = vld [vmem:[%s273 + $0x8] sm:$0xff]
      %v282 = vld [vmem:[%s273 + $0x10] sm:$0xff]
      %v283 = vld [vmem:[%s273 + $0x18] sm:$0xff]
      %v284 = vld [vmem:[%s273 + $0x20] sm:$0xff]
      %v285 = vld [vmem:[%s273 + $0x28] sm:$0xff]
      %v286 = vld [vmem:[%s273 + $0x30] sm:$0xff]
      %v287 = vld [vmem:[%s273 + $0x38] sm:$0xff]
      %v288 = vld [vmem:[%s273 + $0x40] sm:$0xff]
      %v289 = vld [vmem:[%s273 + $0x48] sm:$0xff]
      %v290 = vld [vmem:[%s273 + $0x50] sm:$0xff]
      %v291 = vld [vmem:[%s273 + $0x58] sm:$0xff]
      %v292 = vld [vmem:[%s273 + $0x60] sm:$0xff]
      %v293 = vld [vmem:[%s273 + $0x68] sm:$0xff]
      %v294 = vld [vmem:[%s273 + $0x70] sm:$0xff]
      %v295 = vld [vmem:[%s273 + $0x78] sm:$0xff]
      %v296 = vld [vmem:[%s273 + $0x80] sm:$0xff]
      %v297 = vld [vmem:[%s273 + $0x88] sm:$0xff]
      %v298 = vld [vmem:[%s273 + $0x90] sm:$0xff]
      %v299 = vld [vmem:[%s273 + $0x98] sm:$0xff]
      %v300 = vld [vmem:[%s273 + $0xa0] sm:$0xff]
      %v301 = vld [vmem:[%s273 + $0xa8] sm:$0xff]
      %v302 = vld [vmem:[%s273 + $0xb0] sm:$0xff]
      %v303 = vld [vmem:[%s273 + $0xb8] sm:$0xff]
      %v304 = vld [vmem:[%s273 + $0xc0] sm:$0xff]
      %v305 = vld [vmem:[%s273 + $0xc8] sm:$0xff]
      %v306 = vld [vmem:[%s273 + $0xd0] sm:$0xff]
      %v307 = vld [vmem:[%s273 + $0xd8] sm:$0xff]
      %v308 = vld [vmem:[%s273 + $0xe0] sm:$0xff]
      %v309 = vld [vmem:[%s273 + $0xe8] sm:$0xff]
      %v310 = vld [vmem:[%s273 + $0xf0] sm:$0xff]
      %v311 = vld [vmem:[%s273 + $0xf8] sm:$0xff]
      %vm312 = vcmask 23552
      %313 = vst.msk [vmem:[#allocation2] sm:$0xff] %vm312, 0.0
      %314 = vst.msk [vmem:[#allocation2 + $0x8] sm:$0xff] %vm312, 0.0
      %315 = vst.msk [vmem:[#allocation2 + $0x10] sm:$0xff] %vm312, 0.0
      %vm316 = vcmask 16384
      %317 = vst.msk [vmem:[#allocation2 + $0x18] sm:$0x1] %vm316, 0.0
      %318 = vst.msk [vmem:[#allocation2 + $0x20] sm:$0xff] %vm312, 0.0
      %319 = vst.msk [vmem:[#allocation2 + $0x28] sm:$0xff] %vm312, 0.0
      %320 = vst.msk [vmem:[#allocation2 + $0x30] sm:$0xff] %vm312, 0.0
      %321 = vst.msk [vmem:[#allocation2 + $0x38] sm:$0x1] %vm316, 0.0
      %322 = vst.msk [vmem:[#allocation2 + $0x40] sm:$0xff] %vm312, 0.0
      %323 = vst.msk [vmem:[#allocation2 + $0x48] sm:$0xff] %vm312, 0.0
      %324 = vst.msk [vmem:[#allocation2 + $0x50] sm:$0xff] %vm312, 0.0
      %325 = vst.msk [vmem:[#allocation2 + $0x58] sm:$0x1] %vm316, 0.0
      %326 = vst.msk [vmem:[#allocation2 + $0x60] sm:$0xff] %vm312, 0.0
      %327 = vst.msk [vmem:[#allocation2 + $0x68] sm:$0xff] %vm312, 0.0
      %328 = vst.msk [vmem:[#allocation2 + $0x70] sm:$0xff] %vm312, 0.0
      %329 = vst.msk [vmem:[#allocation2 + $0x78] sm:$0x1] %vm316, 0.0
      %330 = vst.msk [vmem:[#allocation2 + $0x80] sm:$0xff] %vm312, 0.0
      %331 = vst.msk [vmem:[#allocation2 + $0x88] sm:$0xff] %vm312, 0.0
      %332 = vst.msk [vmem:[#allocation2 + $0x90] sm:$0xff] %vm312, 0.0
      %333 = vst.msk [vmem:[#allocation2 + $0x98] sm:$0x1] %vm316, 0.0
      %334 = vst.msk [vmem:[#allocation2 + $0xa0] sm:$0xff] %vm312, 0.0
      %335 = vst.msk [vmem:[#allocation2 + $0xa8] sm:$0xff] %vm312, 0.0
      %336 = vst.msk [vmem:[#allocation2 + $0xb0] sm:$0xff] %vm312, 0.0
      %337 = vst.msk [vmem:[#allocation2 + $0xb8] sm:$0x1] %vm316, 0.0
      %338 = vst.msk [vmem:[#allocation2 + $0xc0] sm:$0xff] %vm312, 0.0
      %339 = vst.msk [vmem:[#allocation2 + $0xc8] sm:$0xff] %vm312, 0.0
      %340 = vst.msk [vmem:[#allocation2 + $0xd0] sm:$0xff] %vm312, 0.0
      %341 = vst.msk [vmem:[#allocation2 + $0xd8] sm:$0x1] %vm316, 0.0
      %342 = vst.msk [vmem:[#allocation2 + $0xe0] sm:$0xff] %vm312, 0.0
      %343 = vst.msk [vmem:[#allocation2 + $0xe8] sm:$0xff] %vm312, 0.0
      %344 = vst.msk [vmem:[#allocation2 + $0xf0] sm:$0xff] %vm312, 0.0
      %345 = vst.msk [vmem:[#allocation2 + $0xf8] sm:$0x1] %vm316, 0.0
      %346 = vst.msk [vmem:[#allocation2 + $0x100] sm:$0xff] %vm312, 0.0
      %347 = vst.msk [vmem:[#allocation2 + $0x108] sm:$0xff] %vm312, 0.0
      %348 = vst.msk [vmem:[#allocation2 + $0x110] sm:$0xff] %vm312, 0.0
      %349 = vst.msk [vmem:[#allocation2 + $0x118] sm:$0x1] %vm316, 0.0
      %350 = vst.msk [vmem:[#allocation2 + $0x120] sm:$0xff] %vm312, 0.0
      %351 = vst.msk [vmem:[#allocation2 + $0x128] sm:$0xff] %vm312, 0.0
      %352 = vst.msk [vmem:[#allocation2 + $0x130] sm:$0xff] %vm312, 0.0
      %353 = vst.msk [vmem:[#allocation2 + $0x138] sm:$0x1] %vm316, 0.0
      %354 = vst.msk [vmem:[#allocation2 + $0x140] sm:$0xff] %vm312, 0.0
      %355 = vst.msk [vmem:[#allocation2 + $0x148] sm:$0xff] %vm312, 0.0
      %356 = vst.msk [vmem:[#allocation2 + $0x150] sm:$0xff] %vm312, 0.0
      %357 = vst.msk [vmem:[#allocation2 + $0x158] sm:$0x1] %vm316, 0.0
      %358 = vst.msk [vmem:[#allocation2 + $0x160] sm:$0xff] %vm312, 0.0
      %359 = vst.msk [vmem:[#allocation2 + $0x168] sm:$0xff] %vm312, 0.0
      %360 = vst.msk [vmem:[#allocation2 + $0x170] sm:$0xff] %vm312, 0.0
      %361 = vst.msk [vmem:[#allocation2 + $0x178] sm:$0x1] %vm316, 0.0
      %362 = vst.msk [vmem:[#allocation2 + $0x180] sm:$0xff] %vm312, 0.0
      %363 = vst.msk [vmem:[#allocation2 + $0x188] sm:$0xff] %vm312, 0.0
      %364 = vst.msk [vmem:[#allocation2 + $0x190] sm:$0xff] %vm312, 0.0
      %365 = vst.msk [vmem:[#allocation2 + $0x198] sm:$0x1] %vm316, 0.0
      %366 = vst.msk [vmem:[#allocation2 + $0x1a0] sm:$0xff] %vm312, 0.0
      %367 = vst.msk [vmem:[#allocation2 + $0x1a8] sm:$0xff] %vm312, 0.0
      %368 = vst.msk [vmem:[#allocation2 + $0x1b0] sm:$0xff] %vm312, 0.0
      %369 = vst.msk [vmem:[#allocation2 + $0x1b8] sm:$0x1] %vm316, 0.0
      %370 = vst.msk [vmem:[#allocation2 + $0x1c0] sm:$0xff] %vm312, 0.0
      %371 = vst.msk [vmem:[#allocation2 + $0x1c8] sm:$0xff] %vm312, 0.0
      %372 = vst.msk [vmem:[#allocation2 + $0x1d0] sm:$0xff] %vm312, 0.0
      %373 = vst.msk [vmem:[#allocation2 + $0x1d8] sm:$0x1] %vm316, 0.0
      %374 = vst.msk [vmem:[#allocation2 + $0x1e0] sm:$0xff] %vm312, 0.0
      %375 = vst.msk [vmem:[#allocation2 + $0x1e8] sm:$0xff] %vm312, 0.0
      %376 = vst.msk [vmem:[#allocation2 + $0x1f0] sm:$0xff] %vm312, 0.0
      %377 = vst.msk [vmem:[#allocation2 + $0x1f8] sm:$0x1] %vm316, 0.0
      %378 = vst.msk [vmem:[#allocation2 + $0x200] sm:$0xff] %vm312, 0.0
      %379 = vst.msk [vmem:[#allocation2 + $0x208] sm:$0xff] %vm312, 0.0
      %380 = vst.msk [vmem:[#allocation2 + $0x210] sm:$0xff] %vm312, 0.0
      %381 = vst.msk [vmem:[#allocation2 + $0x218] sm:$0x1] %vm316, 0.0
      %382 = vst.msk [vmem:[#allocation2 + $0x220] sm:$0xff] %vm312, 0.0
      %383 = vst.msk [vmem:[#allocation2 + $0x228] sm:$0xff] %vm312, 0.0
      %384 = vst.msk [vmem:[#allocation2 + $0x230] sm:$0xff] %vm312, 0.0
      %385 = vst.msk [vmem:[#allocation2 + $0x238] sm:$0x1] %vm316, 0.0
      %s386 = scalar_lea.vmem [#allocation2], 32
      %387 = vst.msk [vmem:[%s386 + $0x8] sm:$0xff] %vm312, %v280
      %388 = vst.msk [vmem:[%s386 + $0x10] sm:$0xff] %vm312, %v281
      %389 = vst.msk [vmem:[%s386 + $0x28] sm:$0xff] %vm312, %v282
      %390 = vst.msk [vmem:[%s386 + $0x30] sm:$0xff] %vm312, %v283
      %391 = vst.msk [vmem:[%s386 + $0x48] sm:$0xff] %vm312, %v284
      %392 = vst.msk [vmem:[%s386 + $0x50] sm:$0xff] %vm312, %v285
      %393 = vst.msk [vmem:[%s386 + $0x68] sm:$0xff] %vm312, %v286
      %394 = vst.msk [vmem:[%s386 + $0x70] sm:$0xff] %vm312, %v287
      %395 = vst.msk [vmem:[%s386 + $0x88] sm:$0xff] %vm312, %v288
      %396 = vst.msk [vmem:[%s386 + $0x90] sm:$0xff] %vm312, %v289
      %397 = vst.msk [vmem:[%s386 + $0xa8] sm:$0xff] %vm312, %v290
      %398 = vst.msk [vmem:[%s386 + $0xb0] sm:$0xff] %vm312, %v291
      %399 = vst.msk [vmem:[%s386 + $0xc8] sm:$0xff] %vm312, %v292
      %400 = vst.msk [vmem:[%s386 + $0xd0] sm:$0xff] %vm312, %v293
      %401 = vst.msk [vmem:[%s386 + $0xe8] sm:$0xff] %vm312, %v294
      %402 = vst.msk [vmem:[%s386 + $0xf0] sm:$0xff] %vm312, %v295
      %403 = vst.msk [vmem:[%s386 + $0x108] sm:$0xff] %vm312, %v296
      %404 = vst.msk [vmem:[%s386 + $0x110] sm:$0xff] %vm312, %v297
      %405 = vst.msk [vmem:[%s386 + $0x128] sm:$0xff] %vm312, %v298
      %406 = vst.msk [vmem:[%s386 + $0x130] sm:$0xff] %vm312, %v299
      %407 = vst.msk [vmem:[%s386 + $0x148] sm:$0xff] %vm312, %v300
      %408 = vst.msk [vmem:[%s386 + $0x150] sm:$0xff] %vm312, %v301
      %409 = vst.msk [vmem:[%s386 + $0x168] sm:$0xff] %vm312, %v302
      %410 = vst.msk [vmem:[%s386 + $0x170] sm:$0xff] %vm312, %v303
      %411 = vst.msk [vmem:[%s386 + $0x188] sm:$0xff] %vm312, %v304
      %412 = vst.msk [vmem:[%s386 + $0x190] sm:$0xff] %vm312, %v305
      %413 = vst.msk [vmem:[%s386 + $0x1a8] sm:$0xff] %vm312, %v306
      %414 = vst.msk [vmem:[%s386 + $0x1b0] sm:$0xff] %vm312, %v307
      %415 = vst.msk [vmem:[%s386 + $0x1c8] sm:$0xff] %vm312, %v308
      %416 = vst.msk [vmem:[%s386 + $0x1d0] sm:$0xff] %vm312, %v309
      %417 = vst.msk [vmem:[%s386 + $0x1e8] sm:$0xff] %vm312, %v310
      %418 = vst.msk [vmem:[%s386 + $0x1f0] sm:$0xff] %vm312, %v311
      %v419 = vld [vmem:[#allocation2] sm:$0xff]
      %v420 = vld [vmem:[#allocation2 + $0x8] sm:$0xff]
      %v421 = vld [vmem:[#allocation2 + $0x10] sm:$0xff]
      %v422 = vld [vmem:[#allocation2 + $0x18] sm:$0x1]
      %v423 = vld [vmem:[#allocation2 + $0x20] sm:$0xff]
      %v424 = vld [vmem:[#allocation2 + $0x28] sm:$0xff]
      %v425 = vld [vmem:[#allocation2 + $0x30] sm:$0xff]
      %v426 = vld [vmem:[#allocation2 + $0x38] sm:$0x1]
      %v427 = vld [vmem:[#allocation2 + $0x40] sm:$0xff]
      %v428 = vld [vmem:[#allocation2 + $0x48] sm:$0xff]
      %v429 = vld [vmem:[#allocation2 + $0x50] sm:$0xff]
      %v430 = vld [vmem:[#allocation2 + $0x58] sm:$0x1]
      %v431 = vld [vmem:[#allocation2 + $0x60] sm:$0xff]
      %v432 = vld [vmem:[#allocation2 + $0x68] sm:$0xff]
      %v433 = vld [vmem:[#allocation2 + $0x70] sm:$0xff]
      %v434 = vld [vmem:[#allocation2 + $0x78] sm:$0x1]
      %v435 = vld [vmem:[#allocation2 + $0x80] sm:$0xff]
      %v436 = vld [vmem:[#allocation2 + $0x88] sm:$0xff]
      %v437 = vld [vmem:[#allocation2 + $0x90] sm:$0xff]
      %v438 = vld [vmem:[#allocation2 + $0x98] sm:$0x1]
      %v439 = vld [vmem:[#allocation2 + $0xa0] sm:$0xff]
      %v440 = vld [vmem:[#allocation2 + $0xa8] sm:$0xff]
      %v441 = vld [vmem:[#allocation2 + $0xb0] sm:$0xff]
      %v442 = vld [vmem:[#allocation2 + $0xb8] sm:$0x1]
      %v443 = vld [vmem:[#allocation2 + $0xc0] sm:$0xff]
      %v444 = vld [vmem:[#allocation2 + $0xc8] sm:$0xff]
      %v445 = vld [vmem:[#allocation2 + $0xd0] sm:$0xff]
      %v446 = vld [vmem:[#allocation2 + $0xd8] sm:$0x1]
      %v447 = vld [vmem:[#allocation2 + $0xe0] sm:$0xff]
      %v448 = vld [vmem:[#allocation2 + $0xe8] sm:$0xff]
      %v449 = vld [vmem:[#allocation2 + $0xf0] sm:$0xff]
      %v450 = vld [vmem:[#allocation2 + $0xf8] sm:$0x1]
      %v451 = vld [vmem:[#allocation2 + $0x100] sm:$0xff]
      %v452 = vld [vmem:[#allocation2 + $0x108] sm:$0xff]
      %v453 = vld [vmem:[#allocation2 + $0x110] sm:$0xff]
      %v454 = vld [vmem:[#allocation2 + $0x118] sm:$0x1]
      %v455 = vld [vmem:[#allocation2 + $0x120] sm:$0xff]
      %v456 = vld [vmem:[#allocation2 + $0x128] sm:$0xff]
      %v457 = vld [vmem:[#allocation2 + $0x130] sm:$0xff]
      %v458 = vld [vmem:[#allocation2 + $0x138] sm:$0x1]
      %v459 = vld [vmem:[#allocation2 + $0x140] sm:$0xff]
      %v460 = vld [vmem:[#allocation2 + $0x148] sm:$0xff]
      %v461 = vld [vmem:[#allocation2 + $0x150] sm:$0xff]
      %v462 = vld [vmem:[#allocation2 + $0x158] sm:$0x1]
      %v463 = vld [vmem:[#allocation2 + $0x160] sm:$0xff]
      %v464 = vld [vmem:[#allocation2 + $0x168] sm:$0xff]
      %v465 = vld [vmem:[#allocation2 + $0x170] sm:$0xff]
      %v466 = vld [vmem:[#allocation2 + $0x178] sm:$0x1]
      %v467 = vld [vmem:[#allocation2 + $0x180] sm:$0xff]
      %v468 = vld [vmem:[#allocation2 + $0x188] sm:$0xff]
      %v469 = vld [vmem:[#allocation2 + $0x190] sm:$0xff]
      %v470 = vld [vmem:[#allocation2 + $0x198] sm:$0x1]
      %v471 = vld [vmem:[#allocation2 + $0x1a0] sm:$0xff]
      %v472 = vld [vmem:[#allocation2 + $0x1a8] sm:$0xff]
      %v473 = vld [vmem:[#allocation2 + $0x1b0] sm:$0xff]
      %v474 = vld [vmem:[#allocation2 + $0x1b8] sm:$0x1]
      %v475 = vld [vmem:[#allocation2 + $0x1c0] sm:$0xff]
      %v476 = vld [vmem:[#allocation2 + $0x1c8] sm:$0xff]
      %v477 = vld [vmem:[#allocation2 + $0x1d0] sm:$0xff]
      %v478 = vld [vmem:[#allocation2 + $0x1d8] sm:$0x1]
      %v479 = vld [vmem:[#allocation2 + $0x1e0] sm:$0xff]
      %v480 = vld [vmem:[#allocation2 + $0x1e8] sm:$0xff]
      %v481 = vld [vmem:[#allocation2 + $0x1f0] sm:$0xff]
      %v482 = vld [vmem:[#allocation2 + $0x1f8] sm:$0x1]
      %v483 = vld [vmem:[#allocation2 + $0x200] sm:$0xff]
      %v484 = vld [vmem:[#allocation2 + $0x208] sm:$0xff]
      %v485 = vld [vmem:[#allocation2 + $0x210] sm:$0xff]
      %v486 = vld [vmem:[#allocation2 + $0x218] sm:$0x1]
      %v487 = vld [vmem:[#allocation2 + $0x220] sm:$0xff]
      %v488 = vld [vmem:[#allocation2 + $0x228] sm:$0xff]
      %v489 = vld [vmem:[#allocation2 + $0x230] sm:$0xff]
      %v490 = vld [vmem:[#allocation2 + $0x238] sm:$0x1]
      %vm539 = vcmask 1040384
      %v540 = vrot.slane %v419, 7
      %v541 = vrot.slane %v420, 7
      %v542 = vsel %vm539, %v540, %v541
      %v543 = vrot.slane %v421, 7
      %v544 = vsel %vm539, %v541, %v543
      %v545 = vrot.slane %v423, 7
      %v546 = vrot.slane %v424, 7
      %v547 = vsel %vm539, %v545, %v546
      %v548 = vrot.slane %v425, 7
      %v549 = vsel %vm539, %v546, %v548
      %v550 = vrot.slane %v427, 7
      %v551 = vrot.slane %v428, 7
      %v552 = vsel %vm539, %v550, %v551
      %v553 = vrot.slane %v429, 7
      %v554 = vsel %vm539, %v551, %v553
      %v555 = vrot.slane %v431, 7
      %v556 = vrot.slane %v432, 7
      %v557 = vsel %vm539, %v555, %v556
      %v558 = vrot.slane %v433, 7
      %v559 = vsel %vm539, %v556, %v558
      %v560 = vrot.slane %v435, 7
      %v561 = vrot.slane %v436, 7
      %v562 = vsel %vm539, %v560, %v561
      %v563 = vrot.slane %v437, 7
      %v564 = vsel %vm539, %v561, %v563
      %v565 = vrot.slane %v439, 7
      %v566 = vrot.slane %v440, 7
      %v567 = vsel %vm539, %v565, %v566
      %v568 = vrot.slane %v441, 7
      %v569 = vsel %vm539, %v566, %v568
      %v570 = vrot.slane %v443, 7
      %v571 = vrot.slane %v444, 7
      %v572 = vsel %vm539, %v570, %v571
      %v573 = vrot.slane %v445, 7
      %v574 = vsel %vm539, %v571, %v573
      %v575 = vrot.slane %v447, 7
      %v576 = vrot.slane %v448, 7
      %v577 = vsel %vm539, %v575, %v576
      %v578 = vrot.slane %v449, 7
      %v579 = vsel %vm539, %v576, %v578
      %v580 = vrot.slane %v451, 7
      %v581 = vrot.slane %v452, 7
      %v582 = vsel %vm539, %v580, %v581
      %v583 = vrot.slane %v453, 7
      %v584 = vsel %vm539, %v581, %v583
      %v585 = vrot.slane %v455, 7
      %v586 = vrot.slane %v456, 7
      %v587 = vsel %vm539, %v585, %v586
      %v588 = vrot.slane %v457, 7
      %v589 = vsel %vm539, %v586, %v588
      %v590 = vrot.slane %v459, 7
      %v591 = vrot.slane %v460, 7
      %v592 = vsel %vm539, %v590, %v591
      %v593 = vrot.slane %v461, 7
      %v594 = vsel %vm539, %v591, %v593
      %v595 = vrot.slane %v463, 7
      %v596 = vrot.slane %v464, 7
      %v597 = vsel %vm539, %v595, %v596
      %v598 = vrot.slane %v465, 7
      %v599 = vsel %vm539, %v596, %v598
      %v600 = vrot.slane %v467, 7
      %v601 = vrot.slane %v468, 7
      %v602 = vsel %vm539, %v600, %v601
      %v603 = vrot.slane %v469, 7
      %v604 = vsel %vm539, %v601, %v603
      %v605 = vrot.slane %v471, 7
      %v606 = vrot.slane %v472, 7
      %v607 = vsel %vm539, %v605, %v606
      %v608 = vrot.slane %v473, 7
      %v609 = vsel %vm539, %v606, %v608
      %v610 = vrot.slane %v475, 7
      %v611 = vrot.slane %v476, 7
      %v612 = vsel %vm539, %v610, %v611
      %v613 = vrot.slane %v477, 7
      %v614 = vsel %vm539, %v611, %v613
      %v615 = vrot.slane %v479, 7
      %v616 = vrot.slane %v480, 7
      %v617 = vsel %vm539, %v615, %v616
      %v618 = vrot.slane %v481, 7
      %v619 = vsel %vm539, %v616, %v618
      %v652 = vpack.c.bf16 %v544, %v542
      %v653 = vpack.c.bf16 %v549, %v547
      %v654 = vpack.c.bf16 %v554, %v552
      %v655 = vpack.c.bf16 %v559, %v557
      %v656 = vpack.c.bf16 %v564, %v562
      %v657 = vpack.c.bf16 %v569, %v567
      %v658 = vpack.c.bf16 %v574, %v572
      %v659 = vpack.c.bf16 %v579, %v577
      %v660 = vpack.c.bf16 %v584, %v582
      %v661 = vpack.c.bf16 %v589, %v587
      %v662 = vpack.c.bf16 %v594, %v592
      %v663 = vpack.c.bf16 %v599, %v597
      %v664 = vpack.c.bf16 %v604, %v602
      %v665 = vpack.c.bf16 %v609, %v607
      %v666 = vpack.c.bf16 %v614, %v612
      %v667 = vpack.c.bf16 %v619, %v617
      %v668 = vld [vmem:[%s1] sm:$0x3]
      %v669 = vpack.c.bf16 %v421, %v420
      %v670 = vpack.c.bf16 %v425, %v424
      %v671 = vpack.c.bf16 %v429, %v428
      %v672 = vpack.c.bf16 %v433, %v432
      %v673 = vpack.c.bf16 %v437, %v436
      %v674 = vpack.c.bf16 %v441, %v440
      %v675 = vpack.c.bf16 %v445, %v444
      %v676 = vpack.c.bf16 %v449, %v448
      %v677 = vpack.c.bf16 %v453, %v452
      %v678 = vpack.c.bf16 %v457, %v456
      %v679 = vpack.c.bf16 %v461, %v460
      %v680 = vpack.c.bf16 %v465, %v464
      %v681 = vpack.c.bf16 %v469, %v468
      %v682 = vpack.c.bf16 %v473, %v472
      %v683 = vpack.c.bf16 %v477, %v476
      %v684 = vpack.c.bf16 %v481, %v480
      %s685 = scalar_lea.vmem %s1, 2
      %v686 = vld [vmem:[%s685] sm:$0x3]
      %v688 = vsel %vm312, %v669, 0
      %v691 = vsel %vm312, %v670, 0
      %v694 = vsel %vm312, %v671, 0
      %v697 = vsel %vm312, %v672, 0
      %v700 = vsel %vm312, %v673, 0
      %v703 = vsel %vm312, %v674, 0
      %v706 = vsel %vm312, %v675, 0
      %v709 = vsel %vm312, %v676, 0
      %v712 = vsel %vm312, %v677, 0
      %v715 = vsel %vm312, %v678, 0
      %v718 = vsel %vm312, %v679, 0
      %v721 = vsel %vm312, %v680, 0
      %v724 = vsel %vm312, %v681, 0
      %v727 = vsel %vm312, %v682, 0
      %v730 = vsel %vm312, %v683, 0
      %v733 = vsel %vm312, %v684, 0
      %vm735 = vcmask 1041408
      %v736 = vsel %vm539, 4294967295, 65535
      %v737 = vsel %vm735, %v736, 0
      %v739 = vand.u32 %v686, %v737
      %741 = vmatprep.subr.bf16.mxu0 0
      %742 = vmatpush1.bf16.msra.mxu0 %v739
      %743 = vmatprep.subr.bf16.mxu0 0
      %744 = vmatpush1.bf16.msra.mxu0 0
      %745 = vmatprep.subr.bf16.mxu0 0
      %746 = vmatpush1.bf16.msra.mxu0 0
      %747 = vmatprep.subr.bf16.mxu0 0
      %748 = vmatpush1.bf16.msra.mxu0 0
      %749 = vmatprep.subr.bf16.mxu0 0
      %750 = vmatpush1.bf16.msra.mxu0 0
      %751 = vmatprep.subr.bf16.mxu0 0
      %752 = vmatpush1.bf16.msra.mxu0 0
      %753 = vmatprep.subr.bf16.mxu0 0
      %754 = vmatpush1.bf16.msra.mxu0 0
      %755 = vmatprep.subr.bf16.mxu0 0
      %756 = vmatpush1.bf16.msra.mxu0 0
      %757 = vmatprep.subr.bf16.mxu0 0
      %758 = vmatpush1.bf16.msra.mxu0 0
      %759 = vmatprep.subr.bf16.mxu0 0
      %760 = vmatpush1.bf16.msra.mxu0 0
      %761 = vmatprep.subr.bf16.mxu0 0
      %762 = vmatpush1.bf16.msra.mxu0 0
      %763 = vmatprep.subr.bf16.mxu0 0
      %764 = vmatpush1.bf16.msra.mxu0 0
      %765 = vmatprep.subr.bf16.mxu0 0
      %766 = vmatpush1.bf16.msra.mxu0 0
      %767 = vmatprep.subr.bf16.mxu0 0
      %768 = vmatpush1.bf16.msra.mxu0 0
      %769 = vmatprep.subr.bf16.mxu0 0
      %770 = vmatpush1.bf16.msra.mxu0 0
      %771 = vmatprep.subr.bf16.mxu0 0
      %772 = vmatpush1.bf16.msra.mxu0 0
      %773 = vmatprep.mubr.bf16.mxu0 0
      %774 = vmatmul.mubr.bf16.gmra.mrb[0].mxu0 %v688
      %v775 = vpop.f32.mrb[0].mxu0
      %v776 = vadd.f32 0.0, %v775
      %v777 = vpop.f32.mrb[0].mxu0
      %v778 = vpop.f32.mrb[0].mxu0
      %v779 = vadd.f32 0.0, %v778
      %v780 = vpop.f32.mrb[0].mxu0
      %781 = vmatprep.mubr.bf16.mxu0 0
      %782 = vmatmul.mubr.bf16.gmra.mrb[0].mxu0 %v691
      %v783 = vpop.f32.mrb[0].mxu0
      %v784 = vadd.f32 0.0, %v783
      %v785 = vpop.f32.mrb[0].mxu0
      %v786 = vpop.f32.mrb[0].mxu0
      %v787 = vadd.f32 0.0, %v786
      %v788 = vpop.f32.mrb[0].mxu0
      %789 = vmatprep.mubr.bf16.mxu0 0
      %790 = vmatmul.mubr.bf16.gmra.mrb[0].mxu0 %v694
      %v791 = vpop.f32.mrb[0].mxu0
      %v792 = vadd.f32 0.0, %v791
      %v793 = vpop.f32.mrb[0].mxu0
      %v794 = vpop.f32.mrb[0].mxu0
      %v795 = vadd.f32 0.0, %v794
      %v796 = vpop.f32.mrb[0].mxu0
      %797 = vmatprep.mubr.bf16.mxu0 0
      %798 = vmatmul.mubr.bf16.gmra.mrb[0].mxu0 %v697
      %v799 = vpop.f32.mrb[0].mxu0
      %v800 = vadd.f32 0.0, %v799
      %v801 = vpop.f32.mrb[0].mxu0
      %v802 = vpop.f32.mrb[0].mxu0
      %v803 = vadd.f32 0.0, %v802
      %v804 = vpop.f32.mrb[0].mxu0
      %805 = vmatprep.mubr.bf16.mxu0 0
      %806 = vmatmul.mubr.bf16.gmra.mrb[0].mxu0 %v700
      %v807 = vpop.f32.mrb[0].mxu0
      %v808 = vadd.f32 0.0, %v807
      %v809 = vpop.f32.mrb[0].mxu0
      %v810 = vpop.f32.mrb[0].mxu0
      %v811 = vadd.f32 0.0, %v810
      %v812 = vpop.f32.mrb[0].mxu0
      %813 = vmatprep.mubr.bf16.mxu0 0
      %814 = vmatmul.mubr.bf16.gmra.mrb[0].mxu0 %v703
      %v815 = vpop.f32.mrb[0].mxu0
      %v816 = vadd.f32 0.0, %v815
      %v817 = vpop.f32.mrb[0].mxu0
      %v818 = vpop.f32.mrb[0].mxu0
      %v819 = vadd.f32 0.0, %v818
      %v820 = vpop.f32.mrb[0].mxu0
      %821 = vmatprep.mubr.bf16.mxu0 0
      %822 = vmatmul.mubr.bf16.gmra.mrb[0].mxu0 %v706
      %v823 = vpop.f32.mrb[0].mxu0
      %v824 = vadd.f32 0.0, %v823
      %v825 = vpop.f32.mrb[0].mxu0
      %v826 = vpop.f32.mrb[0].mxu0
      %v827 = vadd.f32 0.0, %v826
      %v828 = vpop.f32.mrb[0].mxu0
      %829 = vmatprep.mubr.bf16.mxu0 0
      %830 = vmatmul.mubr.bf16.gmra.mrb[0].mxu0 %v709
      %v831 = vpop.f32.mrb[0].mxu0
      %v832 = vadd.f32 0.0, %v831
      %v833 = vpop.f32.mrb[0].mxu0
      %v834 = vpop.f32.mrb[0].mxu0
      %v835 = vadd.f32 0.0, %v834
      %v836 = vpop.f32.mrb[0].mxu0
      %837 = vmatprep.mubr.bf16.mxu0 0
      %838 = vmatmul.mubr.bf16.gmra.mrb[0].mxu0 %v712
      %v839 = vpop.f32.mrb[0].mxu0
      %v840 = vadd.f32 0.0, %v839
      %v841 = vpop.f32.mrb[0].mxu0
      %v842 = vpop.f32.mrb[0].mxu0
      %v843 = vadd.f32 0.0, %v842
      %v844 = vpop.f32.mrb[0].mxu0
      %845 = vmatprep.mubr.bf16.mxu0 0
      %846 = vmatmul.mubr.bf16.gmra.mrb[0].mxu0 %v715
      %v847 = vpop.f32.mrb[0].mxu0
      %v848 = vadd.f32 0.0, %v847
      %v849 = vpop.f32.mrb[0].mxu0
      %v850 = vpop.f32.mrb[0].mxu0
      %v851 = vadd.f32 0.0, %v850
      %v852 = vpop.f32.mrb[0].mxu0
      %853 = vmatprep.mubr.bf16.mxu0 0
      %854 = vmatmul.mubr.bf16.gmra.mrb[0].mxu0 %v718
      %v855 = vpop.f32.mrb[0].mxu0
      %v856 = vadd.f32 0.0, %v855
      %v857 = vpop.f32.mrb[0].mxu0
      %v858 = vpop.f32.mrb[0].mxu0
      %v859 = vadd.f32 0.0, %v858
      %v860 = vpop.f32.mrb[0].mxu0
      %861 = vmatprep.mubr.bf16.mxu0 0
      %862 = vmatmul.mubr.bf16.gmra.mrb[0].mxu0 %v721
      %v863 = vpop.f32.mrb[0].mxu0
      %v864 = vadd.f32 0.0, %v863
      %v865 = vpop.f32.mrb[0].mxu0
      %v866 = vpop.f32.mrb[0].mxu0
      %v867 = vadd.f32 0.0, %v866
      %v868 = vpop.f32.mrb[0].mxu0
      %869 = vmatprep.mubr.bf16.mxu0 0
      %870 = vmatmul.mubr.bf16.gmra.mrb[0].mxu0 %v724
      %v871 = vpop.f32.mrb[0].mxu0
      %v872 = vadd.f32 0.0, %v871
      %v873 = vpop.f32.mrb[0].mxu0
      %v874 = vpop.f32.mrb[0].mxu0
      %v875 = vadd.f32 0.0, %v874
      %v876 = vpop.f32.mrb[0].mxu0
      %877 = vmatprep.mubr.bf16.mxu0 0
      %878 = vmatmul.mubr.bf16.gmra.mrb[0].mxu0 %v727
      %v879 = vpop.f32.mrb[0].mxu0
      %v880 = vadd.f32 0.0, %v879
      %v881 = vpop.f32.mrb[0].mxu0
      %v882 = vpop.f32.mrb[0].mxu0
      %v883 = vadd.f32 0.0, %v882
      %v884 = vpop.f32.mrb[0].mxu0
      %885 = vmatprep.mubr.bf16.mxu0 0
      %886 = vmatmul.mubr.bf16.gmra.mrb[0].mxu0 %v730
      %v887 = vpop.f32.mrb[0].mxu0
      %v888 = vadd.f32 0.0, %v887
      %v889 = vpop.f32.mrb[0].mxu0
      %v890 = vpop.f32.mrb[0].mxu0
      %v891 = vadd.f32 0.0, %v890
      %v892 = vpop.f32.mrb[0].mxu0
      %893 = vmatprep.mubr.bf16.mxu0 0
      %894 = vmatmul.mubr.bf16.gmra.mrb[0].mxu0 %v733
      %v895 = vpop.f32.mrb[0].mxu0
      %v896 = vadd.f32 0.0, %v895
      %v897 = vpop.f32.mrb[0].mxu0
      %v898 = vpop.f32.mrb[0].mxu0
      %v899 = vadd.f32 0.0, %v898
      %v900 = vpop.f32.mrb[0].mxu0
      %901 = vdwg.mxu0
      %v903 = vsel %vm312, %v652, 0
      %v906 = vsel %vm312, %v653, 0
      %v909 = vsel %vm312, %v654, 0
      %v912 = vsel %vm312, %v655, 0
      %v915 = vsel %vm312, %v656, 0
      %v918 = vsel %vm312, %v657, 0
      %v921 = vsel %vm312, %v658, 0
      %v924 = vsel %vm312, %v659, 0
      %v927 = vsel %vm312, %v660, 0
      %v930 = vsel %vm312, %v661, 0
      %v933 = vsel %vm312, %v662, 0
      %v936 = vsel %vm312, %v663, 0
      %v939 = vsel %vm312, %v664, 0
      %v942 = vsel %vm312, %v665, 0
      %v945 = vsel %vm312, %v666, 0
      %v948 = vsel %vm312, %v667, 0
      %v951 = vand.u32 %v668, %v737
      %953 = vmatprep.subr.bf16.mxu0 0
      %954 = vmatpush1.bf16.msra.mxu0 %v951
      %955 = vmatprep.subr.bf16.mxu0 0
      %956 = vmatpush1.bf16.msra.mxu0 0
      %957 = vmatprep.subr.bf16.mxu0 0
      %958 = vmatpush1.bf16.msra.mxu0 0
      %959 = vmatprep.subr.bf16.mxu0 0
      %960 = vmatpush1.bf16.msra.mxu0 0
      %961 = vmatprep.subr.bf16.mxu0 0
      %962 = vmatpush1.bf16.msra.mxu0 0
      %963 = vmatprep.subr.bf16.mxu0 0
      %964 = vmatpush1.bf16.msra.mxu0 0
      %965 = vmatprep.subr.bf16.mxu0 0
      %966 = vmatpush1.bf16.msra.mxu0 0
      %967 = vmatprep.subr.bf16.mxu0 0
      %968 = vmatpush1.bf16.msra.mxu0 0
      %969 = vmatprep.subr.bf16.mxu0 0
      %970 = vmatpush1.bf16.msra.mxu0 0
      %971 = vmatprep.subr.bf16.mxu0 0
      %972 = vmatpush1.bf16.msra.mxu0 0
      %973 = vmatprep.subr.bf16.mxu0 0
      %974 = vmatpush1.bf16.msra.mxu0 0
      %975 = vmatprep.subr.bf16.mxu0 0
      %976 = vmatpush1.bf16.msra.mxu0 0
      %977 = vmatprep.subr.bf16.mxu0 0
      %978 = vmatpush1.bf16.msra.mxu0 0
      %979 = vmatprep.subr.bf16.mxu0 0
      %980 = vmatpush1.bf16.msra.mxu0 0
      %981 = vmatprep.subr.bf16.mxu0 0
      %982 = vmatpush1.bf16.msra.mxu0 0
      %983 = vmatprep.subr.bf16.mxu0 0
      %984 = vmatpush1.bf16.msra.mxu0 0
      %985 = vmatprep.mubr.bf16.mxu0 0
      %986 = vmatmul.mubr.bf16.gmra.mrb[0].mxu0 %v903
      %v987 = vpop.f32.mrb[0].mxu0
      %v988 = vadd.f32 %v776, %v987
      %v989 = vpop.f32.mrb[0].mxu0
      %v990 = vpop.f32.mrb[0].mxu0
      %v991 = vadd.f32 %v779, %v990
      %v992 = vpop.f32.mrb[0].mxu0
      %993 = vmatprep.mubr.bf16.mxu0 0
      %994 = vmatmul.mubr.bf16.gmra.mrb[0].mxu0 %v906
      %v995 = vpop.f32.mrb[0].mxu0
      %v996 = vadd.f32 %v784, %v995
      %v997 = vpop.f32.mrb[0].mxu0
      %v998 = vpop.f32.mrb[0].mxu0
      %v999 = vadd.f32 %v787, %v998
      %v1000 = vpop.f32.mrb[0].mxu0
      %1001 = vmatprep.mubr.bf16.mxu0 0
      %1002 = vmatmul.mubr.bf16.gmra.mrb[0].mxu0 %v909
      %v1003 = vpop.f32.mrb[0].mxu0
      %v1004 = vadd.f32 %v792, %v1003
      %v1005 = vpop.f32.mrb[0].mxu0
      %v1006 = vpop.f32.mrb[0].mxu0
      %v1007 = vadd.f32 %v795, %v1006
      %v1008 = vpop.f32.mrb[0].mxu0
      %1009 = vmatprep.mubr.bf16.mxu0 0
      %1010 = vmatmul.mubr.bf16.gmra.mrb[0].mxu0 %v912
      %v1011 = vpop.f32.mrb[0].mxu0
      %v1012 = vadd.f32 %v800, %v1011
      %v1013 = vpop.f32.mrb[0].mxu0
      %v1014 = vpop.f32.mrb[0].mxu0
      %v1015 = vadd.f32 %v803, %v1014
      %v1016 = vpop.f32.mrb[0].mxu0
      %1017 = vmatprep.mubr.bf16.mxu0 0
      %1018 = vmatmul.mubr.bf16.gmra.mrb[0].mxu0 %v915
      %v1019 = vpop.f32.mrb[0].mxu0
      %v1020 = vadd.f32 %v808, %v1019
      %v1021 = vpop.f32.mrb[0].mxu0
      %v1022 = vpop.f32.mrb[0].mxu0
      %v1023 = vadd.f32 %v811, %v1022
      %v1024 = vpop.f32.mrb[0].mxu0
      %1025 = vmatprep.mubr.bf16.mxu0 0
      %1026 = vmatmul.mubr.bf16.gmra.mrb[0].mxu0 %v918
      %v1027 = vpop.f32.mrb[0].mxu0
      %v1028 = vadd.f32 %v816, %v1027
      %v1029 = vpop.f32.mrb[0].mxu0
      %v1030 = vpop.f32.mrb[0].mxu0
      %v1031 = vadd.f32 %v819, %v1030
      %v1032 = vpop.f32.mrb[0].mxu0
      %1033 = vmatprep.mubr.bf16.mxu0 0
      %1034 = vmatmul.mubr.bf16.gmra.mrb[0].mxu0 %v921
      %v1035 = vpop.f32.mrb[0].mxu0
      %v1036 = vadd.f32 %v824, %v1035
      %v1037 = vpop.f32.mrb[0].mxu0
      %v1038 = vpop.f32.mrb[0].mxu0
      %v1039 = vadd.f32 %v827, %v1038
      %v1040 = vpop.f32.mrb[0].mxu0
      %1041 = vmatprep.mubr.bf16.mxu0 0
      %1042 = vmatmul.mubr.bf16.gmra.mrb[0].mxu0 %v924
      %v1043 = vpop.f32.mrb[0].mxu0
      %v1044 = vadd.f32 %v832, %v1043
      %v1045 = vpop.f32.mrb[0].mxu0
      %v1046 = vpop.f32.mrb[0].mxu0
      %v1047 = vadd.f32 %v835, %v1046
      %v1048 = vpop.f32.mrb[0].mxu0
      %1049 = vmatprep.mubr.bf16.mxu0 0
      %1050 = vmatmul.mubr.bf16.gmra.mrb[0].mxu0 %v927
      %v1051 = vpop.f32.mrb[0].mxu0
      %v1052 = vadd.f32 %v840, %v1051
      %v1053 = vpop.f32.mrb[0].mxu0
      %v1054 = vpop.f32.mrb[0].mxu0
      %v1055 = vadd.f32 %v843, %v1054
      %v1056 = vpop.f32.mrb[0].mxu0
      %1057 = vmatprep.mubr.bf16.mxu0 0
      %1058 = vmatmul.mubr.bf16.gmra.mrb[0].mxu0 %v930
      %v1059 = vpop.f32.mrb[0].mxu0
      %v1060 = vadd.f32 %v848, %v1059
      %v1061 = vpop.f32.mrb[0].mxu0
      %v1062 = vpop.f32.mrb[0].mxu0
      %v1063 = vadd.f32 %v851, %v1062
      %v1064 = vpop.f32.mrb[0].mxu0
      %1065 = vmatprep.mubr.bf16.mxu0 0
      %1066 = vmatmul.mubr.bf16.gmra.mrb[0].mxu0 %v933
      %v1067 = vpop.f32.mrb[0].mxu0
      %v1068 = vadd.f32 %v856, %v1067
      %v1069 = vpop.f32.mrb[0].mxu0
      %v1070 = vpop.f32.mrb[0].mxu0
      %v1071 = vadd.f32 %v859, %v1070
      %v1072 = vpop.f32.mrb[0].mxu0
      %1073 = vmatprep.mubr.bf16.mxu0 0
      %1074 = vmatmul.mubr.bf16.gmra.mrb[0].mxu0 %v936
      %v1075 = vpop.f32.mrb[0].mxu0
      %v1076 = vadd.f32 %v864, %v1075
      %v1077 = vpop.f32.mrb[0].mxu0
      %v1078 = vpop.f32.mrb[0].mxu0
      %v1079 = vadd.f32 %v867, %v1078
      %v1080 = vpop.f32.mrb[0].mxu0
      %1081 = vmatprep.mubr.bf16.mxu0 0
      %1082 = vmatmul.mubr.bf16.gmra.mrb[0].mxu0 %v939
      %v1083 = vpop.f32.mrb[0].mxu0
      %v1084 = vadd.f32 %v872, %v1083
      %v1085 = vpop.f32.mrb[0].mxu0
      %v1086 = vpop.f32.mrb[0].mxu0
      %v1087 = vadd.f32 %v875, %v1086
      %v1088 = vpop.f32.mrb[0].mxu0
      %1089 = vmatprep.mubr.bf16.mxu0 0
      %1090 = vmatmul.mubr.bf16.gmra.mrb[0].mxu0 %v942
      %v1091 = vpop.f32.mrb[0].mxu0
      %v1092 = vadd.f32 %v880, %v1091
      %v1093 = vpop.f32.mrb[0].mxu0
      %v1094 = vpop.f32.mrb[0].mxu0
      %v1095 = vadd.f32 %v883, %v1094
      %v1096 = vpop.f32.mrb[0].mxu0
      %1097 = vmatprep.mubr.bf16.mxu0 0
      %1098 = vmatmul.mubr.bf16.gmra.mrb[0].mxu0 %v945
      %v1099 = vpop.f32.mrb[0].mxu0
      %v1100 = vadd.f32 %v888, %v1099
      %v1101 = vpop.f32.mrb[0].mxu0
      %v1102 = vpop.f32.mrb[0].mxu0
      %v1103 = vadd.f32 %v891, %v1102
      %v1104 = vpop.f32.mrb[0].mxu0
      %1105 = vmatprep.mubr.bf16.mxu0 0
      %1106 = vmatmul.mubr.bf16.gmra.mrb[0].mxu0 %v948
      %v1107 = vpop.f32.mrb[0].mxu0
      %v1108 = vadd.f32 %v896, %v1107
      %v1109 = vpop.f32.mrb[0].mxu0
      %v1110 = vpop.f32.mrb[0].mxu0
      %v1111 = vadd.f32 %v899, %v1110
      %v1112 = vpop.f32.mrb[0].mxu0
      %1113 = vdwg.mxu0
      %vm1130 = vcmask 1046528
      %v1131 = vrot.slane %v420, 1
      %v1132 = vrot.slane %v421, 1
      %v1133 = vsel %vm1130, %v1131, %v1132
      %v1134 = vrot.slane %v422, 1
      %v1135 = vsel %vm1130, %v1132, %v1134
      %v1136 = vrot.slane %v424, 1
      %v1137 = vrot.slane %v425, 1
      %v1138 = vsel %vm1130, %v1136, %v1137
      %v1139 = vrot.slane %v426, 1
      %v1140 = vsel %vm1130, %v1137, %v1139
      %v1141 = vrot.slane %v428, 1
      %v1142 = vrot.slane %v429, 1
      %v1143 = vsel %vm1130, %v1141, %v1142
      %v1144 = vrot.slane %v430, 1
      %v1145 = vsel %vm1130, %v1142, %v1144
      %v1146 = vrot.slane %v432, 1
      %v1147 = vrot.slane %v433, 1
      %v1148 = vsel %vm1130, %v1146, %v1147
      %v1149 = vrot.slane %v434, 1
      %v1150 = vsel %vm1130, %v1147, %v1149
      %v1151 = vrot.slane %v436, 1
      %v1152 = vrot.slane %v437, 1
      %v1153 = vsel %vm1130, %v1151, %v1152
      %v1154 = vrot.slane %v438, 1
      %v1155 = vsel %vm1130, %v1152, %v1154
      %v1156 = vrot.slane %v440, 1
      %v1157 = vrot.slane %v441, 1
      %v1158 = vsel %vm1130, %v1156, %v1157
      %v1159 = vrot.slane %v442, 1
      %v1160 = vsel %vm1130, %v1157, %v1159
      %v1161 = vrot.slane %v444, 1
      %v1162 = vrot.slane %v445, 1
      %v1163 = vsel %vm1130, %v1161, %v1162
      %v1164 = vrot.slane %v446, 1
      %v1165 = vsel %vm1130, %v1162, %v1164
      %v1166 = vrot.slane %v448, 1
      %v1167 = vrot.slane %v449, 1
      %v1168 = vsel %vm1130, %v1166, %v1167
      %v1169 = vrot.slane %v450, 1
      %v1170 = vsel %vm1130, %v1167, %v1169
      %v1171 = vrot.slane %v452, 1
      %v1172 = vrot.slane %v453, 1
      %v1173 = vsel %vm1130, %v1171, %v1172
      %v1174 = vrot.slane %v454, 1
      %v1175 = vsel %vm1130, %v1172, %v1174
      %v1176 = vrot.slane %v456, 1
      %v1177 = vrot.slane %v457, 1
      %v1178 = vsel %vm1130, %v1176, %v1177
      %v1179 = vrot.slane %v458, 1
      %v1180 = vsel %vm1130, %v1177, %v1179
      %v1181 = vrot.slane %v460, 1
      %v1182 = vrot.slane %v461, 1
      %v1183 = vsel %vm1130, %v1181, %v1182
      %v1184 = vrot.slane %v462, 1
      %v1185 = vsel %vm1130, %v1182, %v1184
      %v1186 = vrot.slane %v464, 1
      %v1187 = vrot.slane %v465, 1
      %v1188 = vsel %vm1130, %v1186, %v1187
      %v1189 = vrot.slane %v466, 1
      %v1190 = vsel %vm1130, %v1187, %v1189
      %v1191 = vrot.slane %v468, 1
      %v1192 = vrot.slane %v469, 1
      %v1193 = vsel %vm1130, %v1191, %v1192
      %v1194 = vrot.slane %v470, 1
      %v1195 = vsel %vm1130, %v1192, %v1194
      %v1196 = vrot.slane %v472, 1
      %v1197 = vrot.slane %v473, 1
      %v1198 = vsel %vm1130, %v1196, %v1197
      %v1199 = vrot.slane %v474, 1
      %v1200 = vsel %vm1130, %v1197, %v1199
      %v1201 = vrot.slane %v476, 1
      %v1202 = vrot.slane %v477, 1
      %v1203 = vsel %vm1130, %v1201, %v1202
      %v1204 = vrot.slane %v478, 1
      %v1205 = vsel %vm1130, %v1202, %v1204
      %v1206 = vrot.slane %v480, 1
      %v1207 = vrot.slane %v481, 1
      %v1208 = vsel %vm1130, %v1206, %v1207
      %v1209 = vrot.slane %v482, 1
      %v1210 = vsel %vm1130, %v1207, %v1209
      %v1243 = vpack.c.bf16 %v1135, %v1133
      %v1244 = vpack.c.bf16 %v1140, %v1138
      %v1245 = vpack.c.bf16 %v1145, %v1143
      %v1246 = vpack.c.bf16 %v1150, %v1148
      %v1247 = vpack.c.bf16 %v1155, %v1153
      %v1248 = vpack.c.bf16 %v1160, %v1158
      %v1249 = vpack.c.bf16 %v1165, %v1163
      %v1250 = vpack.c.bf16 %v1170, %v1168
      %v1251 = vpack.c.bf16 %v1175, %v1173
      %v1252 = vpack.c.bf16 %v1180, %v1178
      %v1253 = vpack.c.bf16 %v1185, %v1183
      %v1254 = vpack.c.bf16 %v1190, %v1188
      %v1255 = vpack.c.bf16 %v1195, %v1193
      %v1256 = vpack.c.bf16 %v1200, %v1198
      %v1257 = vpack.c.bf16 %v1205, %v1203
      %v1258 = vpack.c.bf16 %v1210, %v1208
      %s1259 = scalar_lea.vmem %s1, 4
      %v1260 = vld [vmem:[%s1259] sm:$0x3]
      %v1262 = vsel %vm312, %v1243, 0
      %v1265 = vsel %vm312, %v1244, 0
      %v1268 = vsel %vm312, %v1245, 0
      %v1271 = vsel %vm312, %v1246, 0
      %v1274 = vsel %vm312, %v1247, 0
      %v1277 = vsel %vm312, %v1248, 0
      %v1280 = vsel %vm312, %v1249, 0
      %v1283 = vsel %vm312, %v1250, 0
      %v1286 = vsel %vm312, %v1251, 0
      %v1289 = vsel %vm312, %v1252, 0
      %v1292 = vsel %vm312, %v1253, 0
      %v1295 = vsel %vm312, %v1254, 0
      %v1298 = vsel %vm312, %v1255, 0
      %v1301 = vsel %vm312, %v1256, 0
      %v1304 = vsel %vm312, %v1257, 0
      %v1307 = vsel %vm312, %v1258, 0
      %v1310 = vand.u32 %v1260, %v737
      %1312 = vmatprep.subr.bf16.mxu0 0
      %1313 = vmatpush1.bf16.msra.mxu0 %v1310
      %1314 = vmatprep.subr.bf16.mxu0 0
      %1315 = vmatpush1.bf16.msra.mxu0 0
      %1316 = vmatprep.subr.bf16.mxu0 0
      %1317 = vmatpush1.bf16.msra.mxu0 0
      %1318 = vmatprep.subr.bf16.mxu0 0
      %1319 = vmatpush1.bf16.msra.mxu0 0
      %1320 = vmatprep.subr.bf16.mxu0 0
      %1321 = vmatpush1.bf16.msra.mxu0 0
      %1322 = vmatprep.subr.bf16.mxu0 0
      %1323 = vmatpush1.bf16.msra.mxu0 0
      %1324 = vmatprep.subr.bf16.mxu0 0
      %1325 = vmatpush1.bf16.msra.mxu0 0
      %1326 = vmatprep.subr.bf16.mxu0 0
      %1327 = vmatpush1.bf16.msra.mxu0 0
      %1328 = vmatprep.subr.bf16.mxu0 0
      %1329 = vmatpush1.bf16.msra.mxu0 0
      %1330 = vmatprep.subr.bf16.mxu0 0
      %1331 = vmatpush1.bf16.msra.mxu0 0
      %1332 = vmatprep.subr.bf16.mxu0 0
      %1333 = vmatpush1.bf16.msra.mxu0 0
      %1334 = vmatprep.subr.bf16.mxu0 0
      %1335 = vmatpush1.bf16.msra.mxu0 0
      %1336 = vmatprep.subr.bf16.mxu0 0
      %1337 = vmatpush1.bf16.msra.mxu0 0
      %1338 = vmatprep.subr.bf16.mxu0 0
      %1339 = vmatpush1.bf16.msra.mxu0 0
      %1340 = vmatprep.subr.bf16.mxu0 0
      %1341 = vmatpush1.bf16.msra.mxu0 0
      %1342 = vmatprep.subr.bf16.mxu0 0
      %1343 = vmatpush1.bf16.msra.mxu0 0
      %1344 = vmatprep.mubr.bf16.mxu0 0
      %1345 = vmatmul.mubr.bf16.gmra.mrb[0].mxu0 %v1262
      %v1346 = vpop.f32.mrb[0].mxu0
      %v1347 = vadd.f32 0.0, %v1346
      %v1348 = vpop.f32.mrb[0].mxu0
      %v1349 = vpop.f32.mrb[0].mxu0
      %v1350 = vadd.f32 0.0, %v1349
      %v1351 = vpop.f32.mrb[0].mxu0
      %1352 = vmatprep.mubr.bf16.mxu0 0
      %1353 = vmatmul.mubr.bf16.gmra.mrb[0].mxu0 %v1265
      %v1354 = vpop.f32.mrb[0].mxu0
      %v1355 = vadd.f32 0.0, %v1354
      %v1356 = vpop.f32.mrb[0].mxu0
      %v1357 = vpop.f32.mrb[0].mxu0
      %v1358 = vadd.f32 0.0, %v1357
      %v1359 = vpop.f32.mrb[0].mxu0
      %1360 = vmatprep.mubr.bf16.mxu0 0
      %1361 = vmatmul.mubr.bf16.gmra.mrb[0].mxu0 %v1268
      %v1362 = vpop.f32.mrb[0].mxu0
      %v1363 = vadd.f32 0.0, %v1362
      %v1364 = vpop.f32.mrb[0].mxu0
      %v1365 = vpop.f32.mrb[0].mxu0
      %v1366 = vadd.f32 0.0, %v1365
      %v1367 = vpop.f32.mrb[0].mxu0
      %1368 = vmatprep.mubr.bf16.mxu0 0
      %1369 = vmatmul.mubr.bf16.gmra.mrb[0].mxu0 %v1271
      %v1370 = vpop.f32.mrb[0].mxu0
      %v1371 = vadd.f32 0.0, %v1370
      %v1372 = vpop.f32.mrb[0].mxu0
      %v1373 = vpop.f32.mrb[0].mxu0
      %v1374 = vadd.f32 0.0, %v1373
      %v1375 = vpop.f32.mrb[0].mxu0
      %1376 = vmatprep.mubr.bf16.mxu0 0
      %1377 = vmatmul.mubr.bf16.gmra.mrb[0].mxu0 %v1274
      %v1378 = vpop.f32.mrb[0].mxu0
      %v1379 = vadd.f32 0.0, %v1378
      %v1380 = vpop.f32.mrb[0].mxu0
      %v1381 = vpop.f32.mrb[0].mxu0
      %v1382 = vadd.f32 0.0, %v1381
      %v1383 = vpop.f32.mrb[0].mxu0
      %1384 = vmatprep.mubr.bf16.mxu0 0
      %1385 = vmatmul.mubr.bf16.gmra.mrb[0].mxu0 %v1277
      %v1386 = vpop.f32.mrb[0].mxu0
      %v1387 = vadd.f32 0.0, %v1386
      %v1388 = vpop.f32.mrb[0].mxu0
      %v1389 = vpop.f32.mrb[0].mxu0
      %v1390 = vadd.f32 0.0, %v1389
      %v1391 = vpop.f32.mrb[0].mxu0
      %1392 = vmatprep.mubr.bf16.mxu0 0
      %1393 = vmatmul.mubr.bf16.gmra.mrb[0].mxu0 %v1280
      %v1394 = vpop.f32.mrb[0].mxu0
      %v1395 = vadd.f32 0.0, %v1394
      %v1396 = vpop.f32.mrb[0].mxu0
      %v1397 = vpop.f32.mrb[0].mxu0
      %v1398 = vadd.f32 0.0, %v1397
      %v1399 = vpop.f32.mrb[0].mxu0
      %1400 = vmatprep.mubr.bf16.mxu0 0
      %1401 = vmatmul.mubr.bf16.gmra.mrb[0].mxu0 %v1283
      %v1402 = vpop.f32.mrb[0].mxu0
      %v1403 = vadd.f32 0.0, %v1402
      %v1404 = vpop.f32.mrb[0].mxu0
      %v1405 = vpop.f32.mrb[0].mxu0
      %v1406 = vadd.f32 0.0, %v1405
      %v1407 = vpop.f32.mrb[0].mxu0
      %1408 = vmatprep.mubr.bf16.mxu0 0
      %1409 = vmatmul.mubr.bf16.gmra.mrb[0].mxu0 %v1286
      %v1410 = vpop.f32.mrb[0].mxu0
      %v1411 = vadd.f32 0.0, %v1410
      %v1412 = vpop.f32.mrb[0].mxu0
      %v1413 = vpop.f32.mrb[0].mxu0
      %v1414 = vadd.f32 0.0, %v1413
      %v1415 = vpop.f32.mrb[0].mxu0
      %1416 = vmatprep.mubr.bf16.mxu0 0
      %1417 = vmatmul.mubr.bf16.gmra.mrb[0].mxu0 %v1289
      %v1418 = vpop.f32.mrb[0].mxu0
      %v1419 = vadd.f32 0.0, %v1418
      %v1420 = vpop.f32.mrb[0].mxu0
      %v1421 = vpop.f32.mrb[0].mxu0
      %v1422 = vadd.f32 0.0, %v1421
      %v1423 = vpop.f32.mrb[0].mxu0
      %1424 = vmatprep.mubr.bf16.mxu0 0
      %1425 = vmatmul.mubr.bf16.gmra.mrb[0].mxu0 %v1292
      %v1426 = vpop.f32.mrb[0].mxu0
      %v1427 = vadd.f32 0.0, %v1426
      %v1428 = vpop.f32.mrb[0].mxu0
      %v1429 = vpop.f32.mrb[0].mxu0
      %v1430 = vadd.f32 0.0, %v1429
      %v1431 = vpop.f32.mrb[0].mxu0
      %1432 = vmatprep.mubr.bf16.mxu0 0
      %1433 = vmatmul.mubr.bf16.gmra.mrb[0].mxu0 %v1295
      %v1434 = vpop.f32.mrb[0].mxu0
      %v1435 = vadd.f32 0.0, %v1434
      %v1436 = vpop.f32.mrb[0].mxu0
      %v1437 = vpop.f32.mrb[0].mxu0
      %v1438 = vadd.f32 0.0, %v1437
      %v1439 = vpop.f32.mrb[0].mxu0
      %1440 = vmatprep.mubr.bf16.mxu0 0
      %1441 = vmatmul.mubr.bf16.gmra.mrb[0].mxu0 %v1298
      %v1442 = vpop.f32.mrb[0].mxu0
      %v1443 = vadd.f32 0.0, %v1442
      %v1444 = vpop.f32.mrb[0].mxu0
      %v1445 = vpop.f32.mrb[0].mxu0
      %v1446 = vadd.f32 0.0, %v1445
      %v1447 = vpop.f32.mrb[0].mxu0
      %1448 = vmatprep.mubr.bf16.mxu0 0
      %1449 = vmatmul.mubr.bf16.gmra.mrb[0].mxu0 %v1301
      %v1450 = vpop.f32.mrb[0].mxu0
      %v1451 = vadd.f32 0.0, %v1450
      %v1452 = vpop.f32.mrb[0].mxu0
      %v1453 = vpop.f32.mrb[0].mxu0
      %v1454 = vadd.f32 0.0, %v1453
      %v1455 = vpop.f32.mrb[0].mxu0
      %1456 = vmatprep.mubr.bf16.mxu0 0
      %1457 = vmatmul.mubr.bf16.gmra.mrb[0].mxu0 %v1304
      %v1458 = vpop.f32.mrb[0].mxu0
      %v1459 = vadd.f32 0.0, %v1458
      %v1460 = vpop.f32.mrb[0].mxu0
      %v1461 = vpop.f32.mrb[0].mxu0
      %v1462 = vadd.f32 0.0, %v1461
      %v1463 = vpop.f32.mrb[0].mxu0
      %1464 = vmatprep.mubr.bf16.mxu0 0
      %1465 = vmatmul.mubr.bf16.gmra.mrb[0].mxu0 %v1307
      %v1466 = vpop.f32.mrb[0].mxu0
      %v1467 = vadd.f32 0.0, %v1466
      %v1468 = vpop.f32.mrb[0].mxu0
      %v1469 = vpop.f32.mrb[0].mxu0
      %v1470 = vadd.f32 0.0, %v1469
      %v1471 = vpop.f32.mrb[0].mxu0
      %1472 = vdwg.mxu0
      %v1473 = vadd.f32 %v988, %v1347
      %v1474 = vadd.f32 %v991, %v1350
      %v1475 = vadd.f32 %v996, %v1355
      %v1476 = vadd.f32 %v999, %v1358
      %v1477 = vadd.f32 %v1004, %v1363
      %v1478 = vadd.f32 %v1007, %v1366
      %v1479 = vadd.f32 %v1012, %v1371
      %v1480 = vadd.f32 %v1015, %v1374
      %v1481 = vadd.f32 %v1020, %v1379
      %v1482 = vadd.f32 %v1023, %v1382
      %v1483 = vadd.f32 %v1028, %v1387
      %v1484 = vadd.f32 %v1031, %v1390
      %v1485 = vadd.f32 %v1036, %v1395
      %v1486 = vadd.f32 %v1039, %v1398
      %v1487 = vadd.f32 %v1044, %v1403
      %v1488 = vadd.f32 %v1047, %v1406
      %v1489 = vadd.f32 %v1052, %v1411
      %v1490 = vadd.f32 %v1055, %v1414
      %v1491 = vadd.f32 %v1060, %v1419
      %v1492 = vadd.f32 %v1063, %v1422
      %v1493 = vadd.f32 %v1068, %v1427
      %v1494 = vadd.f32 %v1071, %v1430
      %v1495 = vadd.f32 %v1076, %v1435
      %v1496 = vadd.f32 %v1079, %v1438
      %v1497 = vadd.f32 %v1084, %v1443
      %v1498 = vadd.f32 %v1087, %v1446
      %v1499 = vadd.f32 %v1092, %v1451
      %v1500 = vadd.f32 %v1095, %v1454
      %v1501 = vadd.f32 %v1100, %v1459
      %v1502 = vadd.f32 %v1103, %v1462
      %v1503 = vadd.f32 %v1108, %v1467
      %v1504 = vadd.f32 %v1111, %v1470
      %v1508 = vrot.slane %v483, 7
      %v1509 = vrot.slane %v484, 7
      %v1510 = vsel %vm539, %v1508, %v1509
      %v1511 = vrot.slane %v485, 7
      %v1512 = vsel %vm539, %v1509, %v1511
      %v1515 = vpack.c.bf16 %v1512, %v1510
      %s1516 = scalar_lea.vmem %s1, 6
      %v1517 = vld [vmem:[%s1516] sm:$0x3]
      %v1519 = vsel %vm312, %v1515, 0
      %v1522 = vand.u32 %v1517, %v737
      %1524 = vmatprep.subr.bf16.mxu0 0
      %1525 = vmatpush1.bf16.msra.mxu0 %v1522
      %1526 = vmatprep.subr.bf16.mxu0 0
      %1527 = vmatpush1.bf16.msra.mxu0 0
      %1528 = vmatprep.subr.bf16.mxu0 0
      %1529 = vmatpush1.bf16.msra.mxu0 0
      %1530 = vmatprep.subr.bf16.mxu0 0
      %1531 = vmatpush1.bf16.msra.mxu0 0
      %1532 = vmatprep.subr.bf16.mxu0 0
      %1533 = vmatpush1.bf16.msra.mxu0 0
      %1534 = vmatprep.subr.bf16.mxu0 0
      %1535 = vmatpush1.bf16.msra.mxu0 0
      %1536 = vmatprep.subr.bf16.mxu0 0
      %1537 = vmatpush1.bf16.msra.mxu0 0
      %1538 = vmatprep.subr.bf16.mxu0 0
      %1539 = vmatpush1.bf16.msra.mxu0 0
      %1540 = vmatprep.subr.bf16.mxu0 0
      %1541 = vmatpush1.bf16.msra.mxu0 0
      %1542 = vmatprep.subr.bf16.mxu0 0
      %1543 = vmatpush1.bf16.msra.mxu0 0
      %1544 = vmatprep.subr.bf16.mxu0 0
      %1545 = vmatpush1.bf16.msra.mxu0 0
      %1546 = vmatprep.subr.bf16.mxu0 0
      %1547 = vmatpush1.bf16.msra.mxu0 0
      %1548 = vmatprep.subr.bf16.mxu0 0
      %1549 = vmatpush1.bf16.msra.mxu0 0
      %1550 = vmatprep.subr.bf16.mxu0 0
      %1551 = vmatpush1.bf16.msra.mxu0 0
      %1552 = vmatprep.subr.bf16.mxu0 0
      %1553 = vmatpush1.bf16.msra.mxu0 0
      %1554 = vmatprep.subr.bf16.mxu0 0
      %1555 = vmatpush1.bf16.msra.mxu0 0
      %1556 = vmatprep.mubr.bf16.mxu0 0
      %1557 = vmatmul.mubr.bf16.gmra.mrb[0].mxu0 %v906
      %v1558 = vpop.f32.mrb[0].mxu0
      %v1559 = vadd.f32 0.0, %v1558
      %v1560 = vpop.f32.mrb[0].mxu0
      %v1561 = vpop.f32.mrb[0].mxu0
      %v1562 = vadd.f32 0.0, %v1561
      %v1563 = vpop.f32.mrb[0].mxu0
      %1564 = vmatprep.mubr.bf16.mxu0 0
      %1565 = vmatmul.mubr.bf16.gmra.mrb[0].mxu0 %v909
      %v1566 = vpop.f32.mrb[0].mxu0
      %v1567 = vadd.f32 0.0, %v1566
      %v1568 = vpop.f32.mrb[0].mxu0
      %v1569 = vpop.f32.mrb[0].mxu0
      %v1570 = vadd.f32 0.0, %v1569
      %v1571 = vpop.f32.mrb[0].mxu0
      %1572 = vmatprep.mubr.bf16.mxu0 0
      %1573 = vmatmul.mubr.bf16.gmra.mrb[0].mxu0 %v912
      %v1574 = vpop.f32.mrb[0].mxu0
      %v1575 = vadd.f32 0.0, %v1574
      %v1576 = vpop.f32.mrb[0].mxu0
      %v1577 = vpop.f32.mrb[0].mxu0
      %v1578 = vadd.f32 0.0, %v1577
      %v1579 = vpop.f32.mrb[0].mxu0
      %1580 = vmatprep.mubr.bf16.mxu0 0
      %1581 = vmatmul.mubr.bf16.gmra.mrb[0].mxu0 %v915
      %v1582 = vpop.f32.mrb[0].mxu0
      %v1583 = vadd.f32 0.0, %v1582
      %v1584 = vpop.f32.mrb[0].mxu0
      %v1585 = vpop.f32.mrb[0].mxu0
      %v1586 = vadd.f32 0.0, %v1585
      %v1587 = vpop.f32.mrb[0].mxu0
      %1588 = vmatprep.mubr.bf16.mxu0 0
      %1589 = vmatmul.mubr.bf16.gmra.mrb[0].mxu0 %v918
      %v1590 = vpop.f32.mrb[0].mxu0
      %v1591 = vadd.f32 0.0, %v1590
      %v1592 = vpop.f32.mrb[0].mxu0
      %v1593 = vpop.f32.mrb[0].mxu0
      %v1594 = vadd.f32 0.0, %v1593
      %v1595 = vpop.f32.mrb[0].mxu0
      %1596 = vmatprep.mubr.bf16.mxu0 0
      %1597 = vmatmul.mubr.bf16.gmra.mrb[0].mxu0 %v921
      %v1598 = vpop.f32.mrb[0].mxu0
      %v1599 = vadd.f32 0.0, %v1598
      %v1600 = vpop.f32.mrb[0].mxu0
      %v1601 = vpop.f32.mrb[0].mxu0
      %v1602 = vadd.f32 0.0, %v1601
      %v1603 = vpop.f32.mrb[0].mxu0
      %1604 = vmatprep.mubr.bf16.mxu0 0
      %1605 = vmatmul.mubr.bf16.gmra.mrb[0].mxu0 %v924
      %v1606 = vpop.f32.mrb[0].mxu0
      %v1607 = vadd.f32 0.0, %v1606
      %v1608 = vpop.f32.mrb[0].mxu0
      %v1609 = vpop.f32.mrb[0].mxu0
      %v1610 = vadd.f32 0.0, %v1609
      %v1611 = vpop.f32.mrb[0].mxu0
      %1612 = vmatprep.mubr.bf16.mxu0 0
      %1613 = vmatmul.mubr.bf16.gmra.mrb[0].mxu0 %v927
      %v1614 = vpop.f32.mrb[0].mxu0
      %v1615 = vadd.f32 0.0, %v1614
      %v1616 = vpop.f32.mrb[0].mxu0
      %v1617 = vpop.f32.mrb[0].mxu0
      %v1618 = vadd.f32 0.0, %v1617
      %v1619 = vpop.f32.mrb[0].mxu0
      %1620 = vmatprep.mubr.bf16.mxu0 0
      %1621 = vmatmul.mubr.bf16.gmra.mrb[0].mxu0 %v930
      %v1622 = vpop.f32.mrb[0].mxu0
      %v1623 = vadd.f32 0.0, %v1622
      %v1624 = vpop.f32.mrb[0].mxu0
      %v1625 = vpop.f32.mrb[0].mxu0
      %v1626 = vadd.f32 0.0, %v1625
      %v1627 = vpop.f32.mrb[0].mxu0
      %1628 = vmatprep.mubr.bf16.mxu0 0
      %1629 = vmatmul.mubr.bf16.gmra.mrb[0].mxu0 %v933
      %v1630 = vpop.f32.mrb[0].mxu0
      %v1631 = vadd.f32 0.0, %v1630
      %v1632 = vpop.f32.mrb[0].mxu0
      %v1633 = vpop.f32.mrb[0].mxu0
      %v1634 = vadd.f32 0.0, %v1633
      %v1635 = vpop.f32.mrb[0].mxu0
      %1636 = vmatprep.mubr.bf16.mxu0 0
      %1637 = vmatmul.mubr.bf16.gmra.mrb[0].mxu0 %v936
      %v1638 = vpop.f32.mrb[0].mxu0
      %v1639 = vadd.f32 0.0, %v1638
      %v1640 = vpop.f32.mrb[0].mxu0
      %v1641 = vpop.f32.mrb[0].mxu0
      %v1642 = vadd.f32 0.0, %v1641
      %v1643 = vpop.f32.mrb[0].mxu0
      %1644 = vmatprep.mubr.bf16.mxu0 0
      %1645 = vmatmul.mubr.bf16.gmra.mrb[0].mxu0 %v939
      %v1646 = vpop.f32.mrb[0].mxu0
      %v1647 = vadd.f32 0.0, %v1646
      %v1648 = vpop.f32.mrb[0].mxu0
      %v1649 = vpop.f32.mrb[0].mxu0
      %v1650 = vadd.f32 0.0, %v1649
      %v1651 = vpop.f32.mrb[0].mxu0
      %1652 = vmatprep.mubr.bf16.mxu0 0
      %1653 = vmatmul.mubr.bf16.gmra.mrb[0].mxu0 %v942
      %v1654 = vpop.f32.mrb[0].mxu0
      %v1655 = vadd.f32 0.0, %v1654
      %v1656 = vpop.f32.mrb[0].mxu0
      %v1657 = vpop.f32.mrb[0].mxu0
      %v1658 = vadd.f32 0.0, %v1657
      %v1659 = vpop.f32.mrb[0].mxu0
      %1660 = vmatprep.mubr.bf16.mxu0 0
      %1661 = vmatmul.mubr.bf16.gmra.mrb[0].mxu0 %v945
      %v1662 = vpop.f32.mrb[0].mxu0
      %v1663 = vadd.f32 0.0, %v1662
      %v1664 = vpop.f32.mrb[0].mxu0
      %v1665 = vpop.f32.mrb[0].mxu0
      %v1666 = vadd.f32 0.0, %v1665
      %v1667 = vpop.f32.mrb[0].mxu0
      %1668 = vmatprep.mubr.bf16.mxu0 0
      %1669 = vmatmul.mubr.bf16.gmra.mrb[0].mxu0 %v948
      %v1670 = vpop.f32.mrb[0].mxu0
      %v1671 = vadd.f32 0.0, %v1670
      %v1672 = vpop.f32.mrb[0].mxu0
      %v1673 = vpop.f32.mrb[0].mxu0
      %v1674 = vadd.f32 0.0, %v1673
      %v1675 = vpop.f32.mrb[0].mxu0
      %1676 = vmatprep.mubr.bf16.mxu0 0
      %1677 = vmatmul.mubr.bf16.gmra.mrb[0].mxu0 %v1519
      %v1678 = vpop.f32.mrb[0].mxu0
      %v1679 = vadd.f32 0.0, %v1678
      %v1680 = vpop.f32.mrb[0].mxu0
      %v1681 = vpop.f32.mrb[0].mxu0
      %v1682 = vadd.f32 0.0, %v1681
      %v1683 = vpop.f32.mrb[0].mxu0
      %1684 = vdwg.mxu0
      %v1685 = vadd.f32 %v1473, %v1559
      %v1686 = vadd.f32 %v1474, %v1562
      %v1687 = vadd.f32 %v1475, %v1567
      %v1688 = vadd.f32 %v1476, %v1570
      %v1689 = vadd.f32 %v1477, %v1575
      %v1690 = vadd.f32 %v1478, %v1578
      %v1691 = vadd.f32 %v1479, %v1583
      %v1692 = vadd.f32 %v1480, %v1586
      %v1693 = vadd.f32 %v1481, %v1591
      %v1694 = vadd.f32 %v1482, %v1594
      %v1695 = vadd.f32 %v1483, %v1599
      %v1696 = vadd.f32 %v1484, %v1602
      %v1697 = vadd.f32 %v1485, %v1607
      %v1698 = vadd.f32 %v1486, %v1610
      %v1699 = vadd.f32 %v1487, %v1615
      %v1700 = vadd.f32 %v1488, %v1618
      %v1701 = vadd.f32 %v1489, %v1623
      %v1702 = vadd.f32 %v1490, %v1626
      %v1703 = vadd.f32 %v1491, %v1631
      %v1704 = vadd.f32 %v1492, %v1634
      %v1705 = vadd.f32 %v1493, %v1639
      %v1706 = vadd.f32 %v1494, %v1642
      %v1707 = vadd.f32 %v1495, %v1647
      %v1708 = vadd.f32 %v1496, %v1650
      %v1709 = vadd.f32 %v1497, %v1655
      %v1710 = vadd.f32 %v1498, %v1658
      %v1711 = vadd.f32 %v1499, %v1663
      %v1712 = vadd.f32 %v1500, %v1666
      %v1713 = vadd.f32 %v1501, %v1671
      %v1714 = vadd.f32 %v1502, %v1674
      %v1715 = vadd.f32 %v1503, %v1679
      %v1716 = vadd.f32 %v1504, %v1682
      %v1717 = vpack.c.bf16 %v485, %v484
      %s1718 = scalar_lea.vmem %s1, 8
      %v1719 = vld [vmem:[%s1718] sm:$0x3]
      %v1721 = vsel %vm312, %v1717, 0
      %v1724 = vand.u32 %v1719, %v737
      %1726 = vmatprep.subr.bf16.mxu0 0
      %1727 = vmatpush1.bf16.msra.mxu0 %v1724
      %1728 = vmatprep.subr.bf16.mxu0 0
      %1729 = vmatpush1.bf16.msra.mxu0 0
      %1730 = vmatprep.subr.bf16.mxu0 0
      %1731 = vmatpush1.bf16.msra.mxu0 0
      %1732 = vmatprep.subr.bf16.mxu0 0
      %1733 = vmatpush1.bf16.msra.mxu0 0
      %1734 = vmatprep.subr.bf16.mxu0 0
      %1735 = vmatpush1.bf16.msra.mxu0 0
      %1736 = vmatprep.subr.bf16.mxu0 0
      %1737 = vmatpush1.bf16.msra.mxu0 0
      %1738 = vmatprep.subr.bf16.mxu0 0
      %1739 = vmatpush1.bf16.msra.mxu0 0
      %1740 = vmatprep.subr.bf16.mxu0 0
      %1741 = vmatpush1.bf16.msra.mxu0 0
      %1742 = vmatprep.subr.bf16.mxu0 0
      %1743 = vmatpush1.bf16.msra.mxu0 0
      %1744 = vmatprep.subr.bf16.mxu0 0
      %1745 = vmatpush1.bf16.msra.mxu0 0
      %1746 = vmatprep.subr.bf16.mxu0 0
      %1747 = vmatpush1.bf16.msra.mxu0 0
      %1748 = vmatprep.subr.bf16.mxu0 0
      %1749 = vmatpush1.bf16.msra.mxu0 0
      %1750 = vmatprep.subr.bf16.mxu0 0
      %1751 = vmatpush1.bf16.msra.mxu0 0
      %1752 = vmatprep.subr.bf16.mxu0 0
      %1753 = vmatpush1.bf16.msra.mxu0 0
      %1754 = vmatprep.subr.bf16.mxu0 0
      %1755 = vmatpush1.bf16.msra.mxu0 0
      %1756 = vmatprep.subr.bf16.mxu0 0
      %1757 = vmatpush1.bf16.msra.mxu0 0
      %1758 = vmatprep.mubr.bf16.mxu0 0
      %1759 = vmatmul.mubr.bf16.gmra.mrb[0].mxu0 %v691
      %v1760 = vpop.f32.mrb[0].mxu0
      %v1761 = vadd.f32 0.0, %v1760
      %v1762 = vpop.f32.mrb[0].mxu0
      %v1763 = vpop.f32.mrb[0].mxu0
      %v1764 = vadd.f32 0.0, %v1763
      %v1765 = vpop.f32.mrb[0].mxu0
      %1766 = vmatprep.mubr.bf16.mxu0 0
      %1767 = vmatmul.mubr.bf16.gmra.mrb[0].mxu0 %v694
      %v1768 = vpop.f32.mrb[0].mxu0
      %v1769 = vadd.f32 0.0, %v1768
      %v1770 = vpop.f32.mrb[0].mxu0
      %v1771 = vpop.f32.mrb[0].mxu0
      %v1772 = vadd.f32 0.0, %v1771
      %v1773 = vpop.f32.mrb[0].mxu0
      %1774 = vmatprep.mubr.bf16.mxu0 0
      %1775 = vmatmul.mubr.bf16.gmra.mrb[0].mxu0 %v697
      %v1776 = vpop.f32.mrb[0].mxu0
      %v1777 = vadd.f32 0.0, %v1776
      %v1778 = vpop.f32.mrb[0].mxu0
      %v1779 = vpop.f32.mrb[0].mxu0
      %v1780 = vadd.f32 0.0, %v1779
      %v1781 = vpop.f32.mrb[0].mxu0
      %1782 = vmatprep.mubr.bf16.mxu0 0
      %1783 = vmatmul.mubr.bf16.gmra.mrb[0].mxu0 %v700
      %v1784 = vpop.f32.mrb[0].mxu0
      %v1785 = vadd.f32 0.0, %v1784
      %v1786 = vpop.f32.mrb[0].mxu0
      %v1787 = vpop.f32.mrb[0].mxu0
      %v1788 = vadd.f32 0.0, %v1787
      %v1789 = vpop.f32.mrb[0].mxu0
      %1790 = vmatprep.mubr.bf16.mxu0 0
      %1791 = vmatmul.mubr.bf16.gmra.mrb[0].mxu0 %v703
      %v1792 = vpop.f32.mrb[0].mxu0
      %v1793 = vadd.f32 0.0, %v1792
      %v1794 = vpop.f32.mrb[0].mxu0
      %v1795 = vpop.f32.mrb[0].mxu0
      %v1796 = vadd.f32 0.0, %v1795
      %v1797 = vpop.f32.mrb[0].mxu0
      %1798 = vmatprep.mubr.bf16.mxu0 0
      %1799 = vmatmul.mubr.bf16.gmra.mrb[0].mxu0 %v706
      %v1800 = vpop.f32.mrb[0].mxu0
      %v1801 = vadd.f32 0.0, %v1800
      %v1802 = vpop.f32.mrb[0].mxu0
      %v1803 = vpop.f32.mrb[0].mxu0
      %v1804 = vadd.f32 0.0, %v1803
      %v1805 = vpop.f32.mrb[0].mxu0
      %1806 = vmatprep.mubr.bf16.mxu0 0
      %1807 = vmatmul.mubr.bf16.gmra.mrb[0].mxu0 %v709
      %v1808 = vpop.f32.mrb[0].mxu0
      %v1809 = vadd.f32 0.0, %v1808
      %v1810 = vpop.f32.mrb[0].mxu0
      %v1811 = vpop.f32.mrb[0].mxu0
      %v1812 = vadd.f32 0.0, %v1811
      %v1813 = vpop.f32.mrb[0].mxu0
      %1814 = vmatprep.mubr.bf16.mxu0 0
      %1815 = vmatmul.mubr.bf16.gmra.mrb[0].mxu0 %v712
      %v1816 = vpop.f32.mrb[0].mxu0
      %v1817 = vadd.f32 0.0, %v1816
      %v1818 = vpop.f32.mrb[0].mxu0
      %v1819 = vpop.f32.mrb[0].mxu0
      %v1820 = vadd.f32 0.0, %v1819
      %v1821 = vpop.f32.mrb[0].mxu0
      %1822 = vmatprep.mubr.bf16.mxu0 0
      %1823 = vmatmul.mubr.bf16.gmra.mrb[0].mxu0 %v715
      %v1824 = vpop.f32.mrb[0].mxu0
      %v1825 = vadd.f32 0.0, %v1824
      %v1826 = vpop.f32.mrb[0].mxu0
      %v1827 = vpop.f32.mrb[0].mxu0
      %v1828 = vadd.f32 0.0, %v1827
      %v1829 = vpop.f32.mrb[0].mxu0
      %1830 = vmatprep.mubr.bf16.mxu0 0
      %1831 = vmatmul.mubr.bf16.gmra.mrb[0].mxu0 %v718
      %v1832 = vpop.f32.mrb[0].mxu0
      %v1833 = vadd.f32 0.0, %v1832
      %v1834 = vpop.f32.mrb[0].mxu0
      %v1835 = vpop.f32.mrb[0].mxu0
      %v1836 = vadd.f32 0.0, %v1835
      %v1837 = vpop.f32.mrb[0].mxu0
      %1838 = vmatprep.mubr.bf16.mxu0 0
      %1839 = vmatmul.mubr.bf16.gmra.mrb[0].mxu0 %v721
      %v1840 = vpop.f32.mrb[0].mxu0
      %v1841 = vadd.f32 0.0, %v1840
      %v1842 = vpop.f32.mrb[0].mxu0
      %v1843 = vpop.f32.mrb[0].mxu0
      %v1844 = vadd.f32 0.0, %v1843
      %v1845 = vpop.f32.mrb[0].mxu0
      %1846 = vmatprep.mubr.bf16.mxu0 0
      %1847 = vmatmul.mubr.bf16.gmra.mrb[0].mxu0 %v724
      %v1848 = vpop.f32.mrb[0].mxu0
      %v1849 = vadd.f32 0.0, %v1848
      %v1850 = vpop.f32.mrb[0].mxu0
      %v1851 = vpop.f32.mrb[0].mxu0
      %v1852 = vadd.f32 0.0, %v1851
      %v1853 = vpop.f32.mrb[0].mxu0
      %1854 = vmatprep.mubr.bf16.mxu0 0
      %1855 = vmatmul.mubr.bf16.gmra.mrb[0].mxu0 %v727
      %v1856 = vpop.f32.mrb[0].mxu0
      %v1857 = vadd.f32 0.0, %v1856
      %v1858 = vpop.f32.mrb[0].mxu0
      %v1859 = vpop.f32.mrb[0].mxu0
      %v1860 = vadd.f32 0.0, %v1859
      %v1861 = vpop.f32.mrb[0].mxu0
      %1862 = vmatprep.mubr.bf16.mxu0 0
      %1863 = vmatmul.mubr.bf16.gmra.mrb[0].mxu0 %v730
      %v1864 = vpop.f32.mrb[0].mxu0
      %v1865 = vadd.f32 0.0, %v1864
      %v1866 = vpop.f32.mrb[0].mxu0
      %v1867 = vpop.f32.mrb[0].mxu0
      %v1868 = vadd.f32 0.0, %v1867
      %v1869 = vpop.f32.mrb[0].mxu0
      %1870 = vmatprep.mubr.bf16.mxu0 0
      %1871 = vmatmul.mubr.bf16.gmra.mrb[0].mxu0 %v733
      %v1872 = vpop.f32.mrb[0].mxu0
      %v1873 = vadd.f32 0.0, %v1872
      %v1874 = vpop.f32.mrb[0].mxu0
      %v1875 = vpop.f32.mrb[0].mxu0
      %v1876 = vadd.f32 0.0, %v1875
      %v1877 = vpop.f32.mrb[0].mxu0
      %1878 = vmatprep.mubr.bf16.mxu0 0
      %1879 = vmatmul.mubr.bf16.gmra.mrb[0].mxu0 %v1721
      %v1880 = vpop.f32.mrb[0].mxu0
      %v1881 = vadd.f32 0.0, %v1880
      %v1882 = vpop.f32.mrb[0].mxu0
      %v1883 = vpop.f32.mrb[0].mxu0
      %v1884 = vadd.f32 0.0, %v1883
      %v1885 = vpop.f32.mrb[0].mxu0
      %1886 = vdwg.mxu0
      %v1887 = vadd.f32 %v1685, %v1761
      %v1888 = vadd.f32 %v1686, %v1764
      %v1889 = vadd.f32 %v1687, %v1769
      %v1890 = vadd.f32 %v1688, %v1772
      %v1891 = vadd.f32 %v1689, %v1777
      %v1892 = vadd.f32 %v1690, %v1780
      %v1893 = vadd.f32 %v1691, %v1785
      %v1894 = vadd.f32 %v1692, %v1788
      %v1895 = vadd.f32 %v1693, %v1793
      %v1896 = vadd.f32 %v1694, %v1796
      %v1897 = vadd.f32 %v1695, %v1801
      %v1898 = vadd.f32 %v1696, %v1804
      %v1899 = vadd.f32 %v1697, %v1809
      %v1900 = vadd.f32 %v1698, %v1812
      %v1901 = vadd.f32 %v1699, %v1817
      %v1902 = vadd.f32 %v1700, %v1820
      %v1903 = vadd.f32 %v1701, %v1825
      %v1904 = vadd.f32 %v1702, %v1828
      %v1905 = vadd.f32 %v1703, %v1833
      %v1906 = vadd.f32 %v1704, %v1836
      %v1907 = vadd.f32 %v1705, %v1841
      %v1908 = vadd.f32 %v1706, %v1844
      %v1909 = vadd.f32 %v1707, %v1849
      %v1910 = vadd.f32 %v1708, %v1852
      %v1911 = vadd.f32 %v1709, %v1857
      %v1912 = vadd.f32 %v1710, %v1860
      %v1913 = vadd.f32 %v1711, %v1865
      %v1914 = vadd.f32 %v1712, %v1868
      %v1915 = vadd.f32 %v1713, %v1873
      %v1916 = vadd.f32 %v1714, %v1876
      %v1917 = vadd.f32 %v1715, %v1881
      %v1918 = vadd.f32 %v1716, %v1884
      %v1920 = vrot.slane %v484, 1
      %v1921 = vrot.slane %v485, 1
      %v1922 = vsel %vm1130, %v1920, %v1921
      %v1923 = vrot.slane %v486, 1
      %v1924 = vsel %vm1130, %v1921, %v1923
      %v1927 = vpack.c.bf16 %v1924, %v1922
      %s1928 = scalar_lea.vmem %s1, 10
      %v1929 = vld [vmem:[%s1928] sm:$0x3]
      %v1931 = vsel %vm312, %v1927, 0
      %v1934 = vand.u32 %v1929, %v737
      %1936 = vmatprep.subr.bf16.mxu0 0
      %1937 = vmatpush1.bf16.msra.mxu0 %v1934
      %1938 = vmatprep.subr.bf16.mxu0 0
      %1939 = vmatpush1.bf16.msra.mxu0 0
      %1940 = vmatprep.subr.bf16.mxu0 0
      %1941 = vmatpush1.bf16.msra.mxu0 0
      %1942 = vmatprep.subr.bf16.mxu0 0
      %1943 = vmatpush1.bf16.msra.mxu0 0
      %1944 = vmatprep.subr.bf16.mxu0 0
      %1945 = vmatpush1.bf16.msra.mxu0 0
      %1946 = vmatprep.subr.bf16.mxu0 0
      %1947 = vmatpush1.bf16.msra.mxu0 0
      %1948 = vmatprep.subr.bf16.mxu0 0
      %1949 = vmatpush1.bf16.msra.mxu0 0
      %1950 = vmatprep.subr.bf16.mxu0 0
      %1951 = vmatpush1.bf16.msra.mxu0 0
      %1952 = vmatprep.subr.bf16.mxu0 0
      %1953 = vmatpush1.bf16.msra.mxu0 0
      %1954 = vmatprep.subr.bf16.mxu0 0
      %1955 = vmatpush1.bf16.msra.mxu0 0
      %1956 = vmatprep.subr.bf16.mxu0 0
      %1957 = vmatpush1.bf16.msra.mxu0 0
      %1958 = vmatprep.subr.bf16.mxu0 0
      %1959 = vmatpush1.bf16.msra.mxu0 0
      %1960 = vmatprep.subr.bf16.mxu0 0
      %1961 = vmatpush1.bf16.msra.mxu0 0
      %1962 = vmatprep.subr.bf16.mxu0 0
      %1963 = vmatpush1.bf16.msra.mxu0 0
      %1964 = vmatprep.subr.bf16.mxu0 0
      %1965 = vmatpush1.bf16.msra.mxu0 0
      %1966 = vmatprep.subr.bf16.mxu0 0
      %1967 = vmatpush1.bf16.msra.mxu0 0
      %1968 = vmatprep.mubr.bf16.mxu0 0
      %1969 = vmatmul.mubr.bf16.gmra.mrb[0].mxu0 %v1265
      %v1970 = vpop.f32.mrb[0].mxu0
      %v1971 = vadd.f32 0.0, %v1970
      %v1972 = vpop.f32.mrb[0].mxu0
      %v1973 = vpop.f32.mrb[0].mxu0
      %v1974 = vadd.f32 0.0, %v1973
      %v1975 = vpop.f32.mrb[0].mxu0
      %1976 = vmatprep.mubr.bf16.mxu0 0
      %1977 = vmatmul.mubr.bf16.gmra.mrb[0].mxu0 %v1268
      %v1978 = vpop.f32.mrb[0].mxu0
      %v1979 = vadd.f32 0.0, %v1978
      %v1980 = vpop.f32.mrb[0].mxu0
      %v1981 = vpop.f32.mrb[0].mxu0
      %v1982 = vadd.f32 0.0, %v1981
      %v1983 = vpop.f32.mrb[0].mxu0
      %1984 = vmatprep.mubr.bf16.mxu0 0
      %1985 = vmatmul.mubr.bf16.gmra.mrb[0].mxu0 %v1271
      %v1986 = vpop.f32.mrb[0].mxu0
      %v1987 = vadd.f32 0.0, %v1986
      %v1988 = vpop.f32.mrb[0].mxu0
      %v1989 = vpop.f32.mrb[0].mxu0
      %v1990 = vadd.f32 0.0, %v1989
      %v1991 = vpop.f32.mrb[0].mxu0
      %1992 = vmatprep.mubr.bf16.mxu0 0
      %1993 = vmatmul.mubr.bf16.gmra.mrb[0].mxu0 %v1274
      %v1994 = vpop.f32.mrb[0].mxu0
      %v1995 = vadd.f32 0.0, %v1994
      %v1996 = vpop.f32.mrb[0].mxu0
      %v1997 = vpop.f32.mrb[0].mxu0
      %v1998 = vadd.f32 0.0, %v1997
      %v1999 = vpop.f32.mrb[0].mxu0
      %2000 = vmatprep.mubr.bf16.mxu0 0
      %2001 = vmatmul.mubr.bf16.gmra.mrb[0].mxu0 %v1277
      %v2002 = vpop.f32.mrb[0].mxu0
      %v2003 = vadd.f32 0.0, %v2002
      %v2004 = vpop.f32.mrb[0].mxu0
      %v2005 = vpop.f32.mrb[0].mxu0
      %v2006 = vadd.f32 0.0, %v2005
      %v2007 = vpop.f32.mrb[0].mxu0
      %2008 = vmatprep.mubr.bf16.mxu0 0
      %2009 = vmatmul.mubr.bf16.gmra.mrb[0].mxu0 %v1280
      %v2010 = vpop.f32.mrb[0].mxu0
      %v2011 = vadd.f32 0.0, %v2010
      %v2012 = vpop.f32.mrb[0].mxu0
      %v2013 = vpop.f32.mrb[0].mxu0
      %v2014 = vadd.f32 0.0, %v2013
      %v2015 = vpop.f32.mrb[0].mxu0
      %2016 = vmatprep.mubr.bf16.mxu0 0
      %2017 = vmatmul.mubr.bf16.gmra.mrb[0].mxu0 %v1283
      %v2018 = vpop.f32.mrb[0].mxu0
      %v2019 = vadd.f32 0.0, %v2018
      %v2020 = vpop.f32.mrb[0].mxu0
      %v2021 = vpop.f32.mrb[0].mxu0
      %v2022 = vadd.f32 0.0, %v2021
      %v2023 = vpop.f32.mrb[0].mxu0
      %2024 = vmatprep.mubr.bf16.mxu0 0
      %2025 = vmatmul.mubr.bf16.gmra.mrb[0].mxu0 %v1286
      %v2026 = vpop.f32.mrb[0].mxu0
      %v2027 = vadd.f32 0.0, %v2026
      %v2028 = vpop.f32.mrb[0].mxu0
      %v2029 = vpop.f32.mrb[0].mxu0
      %v2030 = vadd.f32 0.0, %v2029
      %v2031 = vpop.f32.mrb[0].mxu0
      %2032 = vmatprep.mubr.bf16.mxu0 0
      %2033 = vmatmul.mubr.bf16.gmra.mrb[0].mxu0 %v1289
      %v2034 = vpop.f32.mrb[0].mxu0
      %v2035 = vadd.f32 0.0, %v2034
      %v2036 = vpop.f32.mrb[0].mxu0
      %v2037 = vpop.f32.mrb[0].mxu0
      %v2038 = vadd.f32 0.0, %v2037
      %v2039 = vpop.f32.mrb[0].mxu0
      %2040 = vmatprep.mubr.bf16.mxu0 0
      %2041 = vmatmul.mubr.bf16.gmra.mrb[0].mxu0 %v1292
      %v2042 = vpop.f32.mrb[0].mxu0
      %v2043 = vadd.f32 0.0, %v2042
      %v2044 = vpop.f32.mrb[0].mxu0
      %v2045 = vpop.f32.mrb[0].mxu0
      %v2046 = vadd.f32 0.0, %v2045
      %v2047 = vpop.f32.mrb[0].mxu0
      %2048 = vmatprep.mubr.bf16.mxu0 0
      %2049 = vmatmul.mubr.bf16.gmra.mrb[0].mxu0 %v1295
      %v2050 = vpop.f32.mrb[0].mxu0
      %v2051 = vadd.f32 0.0, %v2050
      %v2052 = vpop.f32.mrb[0].mxu0
      %v2053 = vpop.f32.mrb[0].mxu0
      %v2054 = vadd.f32 0.0, %v2053
      %v2055 = vpop.f32.mrb[0].mxu0
      %2056 = vmatprep.mubr.bf16.mxu0 0
      %2057 = vmatmul.mubr.bf16.gmra.mrb[0].mxu0 %v1298
      %v2058 = vpop.f32.mrb[0].mxu0
      %v2059 = vadd.f32 0.0, %v2058
      %v2060 = vpop.f32.mrb[0].mxu0
      %v2061 = vpop.f32.mrb[0].mxu0
      %v2062 = vadd.f32 0.0, %v2061
      %v2063 = vpop.f32.mrb[0].mxu0
      %2064 = vmatprep.mubr.bf16.mxu0 0
      %2065 = vmatmul.mubr.bf16.gmra.mrb[0].mxu0 %v1301
      %v2066 = vpop.f32.mrb[0].mxu0
      %v2067 = vadd.f32 0.0, %v2066
      %v2068 = vpop.f32.mrb[0].mxu0
      %v2069 = vpop.f32.mrb[0].mxu0
      %v2070 = vadd.f32 0.0, %v2069
      %v2071 = vpop.f32.mrb[0].mxu0
      %2072 = vmatprep.mubr.bf16.mxu0 0
      %2073 = vmatmul.mubr.bf16.gmra.mrb[0].mxu0 %v1304
      %v2074 = vpop.f32.mrb[0].mxu0
      %v2075 = vadd.f32 0.0, %v2074
      %v2076 = vpop.f32.mrb[0].mxu0
      %v2077 = vpop.f32.mrb[0].mxu0
      %v2078 = vadd.f32 0.0, %v2077
      %v2079 = vpop.f32.mrb[0].mxu0
      %2080 = vmatprep.mubr.bf16.mxu0 0
      %2081 = vmatmul.mubr.bf16.gmra.mrb[0].mxu0 %v1307
      %v2082 = vpop.f32.mrb[0].mxu0
      %v2083 = vadd.f32 0.0, %v2082
      %v2084 = vpop.f32.mrb[0].mxu0
      %v2085 = vpop.f32.mrb[0].mxu0
      %v2086 = vadd.f32 0.0, %v2085
      %v2087 = vpop.f32.mrb[0].mxu0
      %2088 = vmatprep.mubr.bf16.mxu0 0
      %2089 = vmatmul.mubr.bf16.gmra.mrb[0].mxu0 %v1931
      %v2090 = vpop.f32.mrb[0].mxu0
      %v2091 = vadd.f32 0.0, %v2090
      %v2092 = vpop.f32.mrb[0].mxu0
      %v2093 = vpop.f32.mrb[0].mxu0
      %v2094 = vadd.f32 0.0, %v2093
      %v2095 = vpop.f32.mrb[0].mxu0
      %2096 = vdwg.mxu0
      %v2097 = vadd.f32 %v1887, %v1971
      %v2098 = vadd.f32 %v1888, %v1974
      %v2099 = vadd.f32 %v1889, %v1979
      %v2100 = vadd.f32 %v1890, %v1982
      %v2101 = vadd.f32 %v1891, %v1987
      %v2102 = vadd.f32 %v1892, %v1990
      %v2103 = vadd.f32 %v1893, %v1995
      %v2104 = vadd.f32 %v1894, %v1998
      %v2105 = vadd.f32 %v1895, %v2003
      %v2106 = vadd.f32 %v1896, %v2006
      %v2107 = vadd.f32 %v1897, %v2011
      %v2108 = vadd.f32 %v1898, %v2014
      %v2109 = vadd.f32 %v1899, %v2019
      %v2110 = vadd.f32 %v1900, %v2022
      %v2111 = vadd.f32 %v1901, %v2027
      %v2112 = vadd.f32 %v1902, %v2030
      %v2113 = vadd.f32 %v1903, %v2035
      %v2114 = vadd.f32 %v1904, %v2038
      %v2115 = vadd.f32 %v1905, %v2043
      %v2116 = vadd.f32 %v1906, %v2046
      %v2117 = vadd.f32 %v1907, %v2051
      %v2118 = vadd.f32 %v1908, %v2054
      %v2119 = vadd.f32 %v1909, %v2059
      %v2120 = vadd.f32 %v1910, %v2062
      %v2121 = vadd.f32 %v1911, %v2067
      %v2122 = vadd.f32 %v1912, %v2070
      %v2123 = vadd.f32 %v1913, %v2075
      %v2124 = vadd.f32 %v1914, %v2078
      %v2125 = vadd.f32 %v1915, %v2083
      %v2126 = vadd.f32 %v1916, %v2086
      %v2127 = vadd.f32 %v1917, %v2091
      %v2128 = vadd.f32 %v1918, %v2094
      %v2132 = vrot.slane %v487, 7
      %v2133 = vrot.slane %v488, 7
      %v2134 = vsel %vm539, %v2132, %v2133
      %v2135 = vrot.slane %v489, 7
      %v2136 = vsel %vm539, %v2133, %v2135
      %v2139 = vpack.c.bf16 %v2136, %v2134
      %s2140 = scalar_lea.vmem %s1, 12
      %v2141 = vld [vmem:[%s2140] sm:$0x3]
      %v2143 = vsel %vm312, %v2139, 0
      %v2146 = vand.u32 %v2141, %v737
      %2148 = vmatprep.subr.bf16.mxu0 0
      %2149 = vmatpush1.bf16.msra.mxu0 %v2146
      %2150 = vmatprep.subr.bf16.mxu0 0
      %2151 = vmatpush1.bf16.msra.mxu0 0
      %2152 = vmatprep.subr.bf16.mxu0 0
      %2153 = vmatpush1.bf16.msra.mxu0 0
      %2154 = vmatprep.subr.bf16.mxu0 0
      %2155 = vmatpush1.bf16.msra.mxu0 0
      %2156 = vmatprep.subr.bf16.mxu0 0
      %2157 = vmatpush1.bf16.msra.mxu0 0
      %2158 = vmatprep.subr.bf16.mxu0 0
      %2159 = vmatpush1.bf16.msra.mxu0 0
      %2160 = vmatprep.subr.bf16.mxu0 0
      %2161 = vmatpush1.bf16.msra.mxu0 0
      %2162 = vmatprep.subr.bf16.mxu0 0
      %2163 = vmatpush1.bf16.msra.mxu0 0
      %2164 = vmatprep.subr.bf16.mxu0 0
      %2165 = vmatpush1.bf16.msra.mxu0 0
      %2166 = vmatprep.subr.bf16.mxu0 0
      %2167 = vmatpush1.bf16.msra.mxu0 0
      %2168 = vmatprep.subr.bf16.mxu0 0
      %2169 = vmatpush1.bf16.msra.mxu0 0
      %2170 = vmatprep.subr.bf16.mxu0 0
      %2171 = vmatpush1.bf16.msra.mxu0 0
      %2172 = vmatprep.subr.bf16.mxu0 0
      %2173 = vmatpush1.bf16.msra.mxu0 0
      %2174 = vmatprep.subr.bf16.mxu0 0
      %2175 = vmatpush1.bf16.msra.mxu0 0
      %2176 = vmatprep.subr.bf16.mxu0 0
      %2177 = vmatpush1.bf16.msra.mxu0 0
      %2178 = vmatprep.subr.bf16.mxu0 0
      %2179 = vmatpush1.bf16.msra.mxu0 0
      %2180 = vmatprep.mubr.bf16.mxu0 0
      %2181 = vmatmul.mubr.bf16.gmra.mrb[0].mxu0 %v909
      %v2182 = vpop.f32.mrb[0].mxu0
      %v2183 = vadd.f32 0.0, %v2182
      %v2184 = vpop.f32.mrb[0].mxu0
      %v2185 = vpop.f32.mrb[0].mxu0
      %v2186 = vadd.f32 0.0, %v2185
      %v2187 = vpop.f32.mrb[0].mxu0
      %2188 = vmatprep.mubr.bf16.mxu0 0
      %2189 = vmatmul.mubr.bf16.gmra.mrb[0].mxu0 %v912
      %v2190 = vpop.f32.mrb[0].mxu0
      %v2191 = vadd.f32 0.0, %v2190
      %v2192 = vpop.f32.mrb[0].mxu0
      %v2193 = vpop.f32.mrb[0].mxu0
      %v2194 = vadd.f32 0.0, %v2193
      %v2195 = vpop.f32.mrb[0].mxu0
      %2196 = vmatprep.mubr.bf16.mxu0 0
      %2197 = vmatmul.mubr.bf16.gmra.mrb[0].mxu0 %v915
      %v2198 = vpop.f32.mrb[0].mxu0
      %v2199 = vadd.f32 0.0, %v2198
      %v2200 = vpop.f32.mrb[0].mxu0
      %v2201 = vpop.f32.mrb[0].mxu0
      %v2202 = vadd.f32 0.0, %v2201
      %v2203 = vpop.f32.mrb[0].mxu0
      %2204 = vmatprep.mubr.bf16.mxu0 0
      %2205 = vmatmul.mubr.bf16.gmra.mrb[0].mxu0 %v918
      %v2206 = vpop.f32.mrb[0].mxu0
      %v2207 = vadd.f32 0.0, %v2206
      %v2208 = vpop.f32.mrb[0].mxu0
      %v2209 = vpop.f32.mrb[0].mxu0
      %v2210 = vadd.f32 0.0, %v2209
      %v2211 = vpop.f32.mrb[0].mxu0
      %2212 = vmatprep.mubr.bf16.mxu0 0
      %2213 = vmatmul.mubr.bf16.gmra.mrb[0].mxu0 %v921
      %v2214 = vpop.f32.mrb[0].mxu0
      %v2215 = vadd.f32 0.0, %v2214
      %v2216 = vpop.f32.mrb[0].mxu0
      %v2217 = vpop.f32.mrb[0].mxu0
      %v2218 = vadd.f32 0.0, %v2217
      %v2219 = vpop.f32.mrb[0].mxu0
      %2220 = vmatprep.mubr.bf16.mxu0 0
      %2221 = vmatmul.mubr.bf16.gmra.mrb[0].mxu0 %v924
      %v2222 = vpop.f32.mrb[0].mxu0
      %v2223 = vadd.f32 0.0, %v2222
      %v2224 = vpop.f32.mrb[0].mxu0
      %v2225 = vpop.f32.mrb[0].mxu0
      %v2226 = vadd.f32 0.0, %v2225
      %v2227 = vpop.f32.mrb[0].mxu0
      %2228 = vmatprep.mubr.bf16.mxu0 0
      %2229 = vmatmul.mubr.bf16.gmra.mrb[0].mxu0 %v927
      %v2230 = vpop.f32.mrb[0].mxu0
      %v2231 = vadd.f32 0.0, %v2230
      %v2232 = vpop.f32.mrb[0].mxu0
      %v2233 = vpop.f32.mrb[0].mxu0
      %v2234 = vadd.f32 0.0, %v2233
      %v2235 = vpop.f32.mrb[0].mxu0
      %2236 = vmatprep.mubr.bf16.mxu0 0
      %2237 = vmatmul.mubr.bf16.gmra.mrb[0].mxu0 %v930
      %v2238 = vpop.f32.mrb[0].mxu0
      %v2239 = vadd.f32 0.0, %v2238
      %v2240 = vpop.f32.mrb[0].mxu0
      %v2241 = vpop.f32.mrb[0].mxu0
      %v2242 = vadd.f32 0.0, %v2241
      %v2243 = vpop.f32.mrb[0].mxu0
      %2244 = vmatprep.mubr.bf16.mxu0 0
      %2245 = vmatmul.mubr.bf16.gmra.mrb[0].mxu0 %v933
      %v2246 = vpop.f32.mrb[0].mxu0
      %v2247 = vadd.f32 0.0, %v2246
      %v2248 = vpop.f32.mrb[0].mxu0
      %v2249 = vpop.f32.mrb[0].mxu0
      %v2250 = vadd.f32 0.0, %v2249
      %v2251 = vpop.f32.mrb[0].mxu0
      %2252 = vmatprep.mubr.bf16.mxu0 0
      %2253 = vmatmul.mubr.bf16.gmra.mrb[0].mxu0 %v936
      %v2254 = vpop.f32.mrb[0].mxu0
      %v2255 = vadd.f32 0.0, %v2254
      %v2256 = vpop.f32.mrb[0].mxu0
      %v2257 = vpop.f32.mrb[0].mxu0
      %v2258 = vadd.f32 0.0, %v2257
      %v2259 = vpop.f32.mrb[0].mxu0
      %2260 = vmatprep.mubr.bf16.mxu0 0
      %2261 = vmatmul.mubr.bf16.gmra.mrb[0].mxu0 %v939
      %v2262 = vpop.f32.mrb[0].mxu0
      %v2263 = vadd.f32 0.0, %v2262
      %v2264 = vpop.f32.mrb[0].mxu0
      %v2265 = vpop.f32.mrb[0].mxu0
      %v2266 = vadd.f32 0.0, %v2265
      %v2267 = vpop.f32.mrb[0].mxu0
      %2268 = vmatprep.mubr.bf16.mxu0 0
      %2269 = vmatmul.mubr.bf16.gmra.mrb[0].mxu0 %v942
      %v2270 = vpop.f32.mrb[0].mxu0
      %v2271 = vadd.f32 0.0, %v2270
      %v2272 = vpop.f32.mrb[0].mxu0
      %v2273 = vpop.f32.mrb[0].mxu0
      %v2274 = vadd.f32 0.0, %v2273
      %v2275 = vpop.f32.mrb[0].mxu0
      %2276 = vmatprep.mubr.bf16.mxu0 0
      %2277 = vmatmul.mubr.bf16.gmra.mrb[0].mxu0 %v945
      %v2278 = vpop.f32.mrb[0].mxu0
      %v2279 = vadd.f32 0.0, %v2278
      %v2280 = vpop.f32.mrb[0].mxu0
      %v2281 = vpop.f32.mrb[0].mxu0
      %v2282 = vadd.f32 0.0, %v2281
      %v2283 = vpop.f32.mrb[0].mxu0
      %2284 = vmatprep.mubr.bf16.mxu0 0
      %2285 = vmatmul.mubr.bf16.gmra.mrb[0].mxu0 %v948
      %v2286 = vpop.f32.mrb[0].mxu0
      %v2287 = vadd.f32 0.0, %v2286
      %v2288 = vpop.f32.mrb[0].mxu0
      %v2289 = vpop.f32.mrb[0].mxu0
      %v2290 = vadd.f32 0.0, %v2289
      %v2291 = vpop.f32.mrb[0].mxu0
      %2292 = vmatprep.mubr.bf16.mxu0 0
      %2293 = vmatmul.mubr.bf16.gmra.mrb[0].mxu0 %v1519
      %v2294 = vpop.f32.mrb[0].mxu0
      %v2295 = vadd.f32 0.0, %v2294
      %v2296 = vpop.f32.mrb[0].mxu0
      %v2297 = vpop.f32.mrb[0].mxu0
      %v2298 = vadd.f32 0.0, %v2297
      %v2299 = vpop.f32.mrb[0].mxu0
      %2300 = vmatprep.mubr.bf16.mxu0 0
      %2301 = vmatmul.mubr.bf16.gmra.mrb[0].mxu0 %v2143
      %v2302 = vpop.f32.mrb[0].mxu0
      %v2303 = vadd.f32 0.0, %v2302
      %v2304 = vpop.f32.mrb[0].mxu0
      %v2305 = vpop.f32.mrb[0].mxu0
      %v2306 = vadd.f32 0.0, %v2305
      %v2307 = vpop.f32.mrb[0].mxu0
      %2308 = vdwg.mxu0
      %v2309 = vadd.f32 %v2097, %v2183
      %v2310 = vadd.f32 %v2098, %v2186
      %v2311 = vadd.f32 %v2099, %v2191
      %v2312 = vadd.f32 %v2100, %v2194
      %v2313 = vadd.f32 %v2101, %v2199
      %v2314 = vadd.f32 %v2102, %v2202
      %v2315 = vadd.f32 %v2103, %v2207
      %v2316 = vadd.f32 %v2104, %v2210
      %v2317 = vadd.f32 %v2105, %v2215
      %v2318 = vadd.f32 %v2106, %v2218
      %v2319 = vadd.f32 %v2107, %v2223
      %v2320 = vadd.f32 %v2108, %v2226
      %v2321 = vadd.f32 %v2109, %v2231
      %v2322 = vadd.f32 %v2110, %v2234
      %v2323 = vadd.f32 %v2111, %v2239
      %v2324 = vadd.f32 %v2112, %v2242
      %v2325 = vadd.f32 %v2113, %v2247
      %v2326 = vadd.f32 %v2114, %v2250
      %v2327 = vadd.f32 %v2115, %v2255
      %v2328 = vadd.f32 %v2116, %v2258
      %v2329 = vadd.f32 %v2117, %v2263
      %v2330 = vadd.f32 %v2118, %v2266
      %v2331 = vadd.f32 %v2119, %v2271
      %v2332 = vadd.f32 %v2120, %v2274
      %v2333 = vadd.f32 %v2121, %v2279
      %v2334 = vadd.f32 %v2122, %v2282
      %v2335 = vadd.f32 %v2123, %v2287
      %v2336 = vadd.f32 %v2124, %v2290
      %v2337 = vadd.f32 %v2125, %v2295
      %v2338 = vadd.f32 %v2126, %v2298
      %v2339 = vadd.f32 %v2127, %v2303
      %v2340 = vadd.f32 %v2128, %v2306
      %v2341 = vpack.c.bf16 %v489, %v488
      %s2342 = scalar_lea.vmem %s1, 14
      %v2343 = vld [vmem:[%s2342] sm:$0x3]
      %v2345 = vsel %vm312, %v2341, 0
      %v2348 = vand.u32 %v2343, %v737
      %2350 = vmatprep.subr.bf16.mxu0 0
      %2351 = vmatpush1.bf16.msra.mxu0 %v2348
      %2352 = vmatprep.subr.bf16.mxu0 0
      %2353 = vmatpush1.bf16.msra.mxu0 0
      %2354 = vmatprep.subr.bf16.mxu0 0
      %2355 = vmatpush1.bf16.msra.mxu0 0
      %2356 = vmatprep.subr.bf16.mxu0 0
      %2357 = vmatpush1.bf16.msra.mxu0 0
      %2358 = vmatprep.subr.bf16.mxu0 0
      %2359 = vmatpush1.bf16.msra.mxu0 0
      %2360 = vmatprep.subr.bf16.mxu0 0
      %2361 = vmatpush1.bf16.msra.mxu0 0
      %2362 = vmatprep.subr.bf16.mxu0 0
      %2363 = vmatpush1.bf16.msra.mxu0 0
      %2364 = vmatprep.subr.bf16.mxu0 0
      %2365 = vmatpush1.bf16.msra.mxu0 0
      %2366 = vmatprep.subr.bf16.mxu0 0
      %2367 = vmatpush1.bf16.msra.mxu0 0
      %2368 = vmatprep.subr.bf16.mxu0 0
      %2369 = vmatpush1.bf16.msra.mxu0 0
      %2370 = vmatprep.subr.bf16.mxu0 0
      %2371 = vmatpush1.bf16.msra.mxu0 0
      %2372 = vmatprep.subr.bf16.mxu0 0
      %2373 = vmatpush1.bf16.msra.mxu0 0
      %2374 = vmatprep.subr.bf16.mxu0 0
      %2375 = vmatpush1.bf16.msra.mxu0 0
      %2376 = vmatprep.subr.bf16.mxu0 0
      %2377 = vmatpush1.bf16.msra.mxu0 0
      %2378 = vmatprep.subr.bf16.mxu0 0
      %2379 = vmatpush1.bf16.msra.mxu0 0
      %2380 = vmatprep.subr.bf16.mxu0 0
      %2381 = vmatpush1.bf16.msra.mxu0 0
      %2382 = vmatprep.mubr.bf16.mxu0 0
      %2383 = vmatmul.mubr.bf16.gmra.mrb[0].mxu0 %v694
      %v2384 = vpop.f32.mrb[0].mxu0
      %v2385 = vadd.f32 0.0, %v2384
      %v2386 = vpop.f32.mrb[0].mxu0
      %v2387 = vpop.f32.mrb[0].mxu0
      %v2388 = vadd.f32 0.0, %v2387
      %v2389 = vpop.f32.mrb[0].mxu0
      %2390 = vmatprep.mubr.bf16.mxu0 0
      %2391 = vmatmul.mubr.bf16.gmra.mrb[0].mxu0 %v697
      %v2392 = vpop.f32.mrb[0].mxu0
      %v2393 = vadd.f32 0.0, %v2392
      %v2394 = vpop.f32.mrb[0].mxu0
      %v2395 = vpop.f32.mrb[0].mxu0
      %v2396 = vadd.f32 0.0, %v2395
      %v2397 = vpop.f32.mrb[0].mxu0
      %2398 = vmatprep.mubr.bf16.mxu0 0
      %2399 = vmatmul.mubr.bf16.gmra.mrb[0].mxu0 %v700
      %v2400 = vpop.f32.mrb[0].mxu0
      %v2401 = vadd.f32 0.0, %v2400
      %v2402 = vpop.f32.mrb[0].mxu0
      %v2403 = vpop.f32.mrb[0].mxu0
      %v2404 = vadd.f32 0.0, %v2403
      %v2405 = vpop.f32.mrb[0].mxu0
      %2406 = vmatprep.mubr.bf16.mxu0 0
      %2407 = vmatmul.mubr.bf16.gmra.mrb[0].mxu0 %v703
      %v2408 = vpop.f32.mrb[0].mxu0
      %v2409 = vadd.f32 0.0, %v2408
      %v2410 = vpop.f32.mrb[0].mxu0
      %v2411 = vpop.f32.mrb[0].mxu0
      %v2412 = vadd.f32 0.0, %v2411
      %v2413 = vpop.f32.mrb[0].mxu0
      %2414 = vmatprep.mubr.bf16.mxu0 0
      %2415 = vmatmul.mubr.bf16.gmra.mrb[0].mxu0 %v706
      %v2416 = vpop.f32.mrb[0].mxu0
      %v2417 = vadd.f32 0.0, %v2416
      %v2418 = vpop.f32.mrb[0].mxu0
      %v2419 = vpop.f32.mrb[0].mxu0
      %v2420 = vadd.f32 0.0, %v2419
      %v2421 = vpop.f32.mrb[0].mxu0
      %2422 = vmatprep.mubr.bf16.mxu0 0
      %2423 = vmatmul.mubr.bf16.gmra.mrb[0].mxu0 %v709
      %v2424 = vpop.f32.mrb[0].mxu0
      %v2425 = vadd.f32 0.0, %v2424
      %v2426 = vpop.f32.mrb[0].mxu0
      %v2427 = vpop.f32.mrb[0].mxu0
      %v2428 = vadd.f32 0.0, %v2427
      %v2429 = vpop.f32.mrb[0].mxu0
      %2430 = vmatprep.mubr.bf16.mxu0 0
      %2431 = vmatmul.mubr.bf16.gmra.mrb[0].mxu0 %v712
      %v2432 = vpop.f32.mrb[0].mxu0
      %v2433 = vadd.f32 0.0, %v2432
      %v2434 = vpop.f32.mrb[0].mxu0
      %v2435 = vpop.f32.mrb[0].mxu0
      %v2436 = vadd.f32 0.0, %v2435
      %v2437 = vpop.f32.mrb[0].mxu0
      %2438 = vmatprep.mubr.bf16.mxu0 0
      %2439 = vmatmul.mubr.bf16.gmra.mrb[0].mxu0 %v715
      %v2440 = vpop.f32.mrb[0].mxu0
      %v2441 = vadd.f32 0.0, %v2440
      %v2442 = vpop.f32.mrb[0].mxu0
      %v2443 = vpop.f32.mrb[0].mxu0
      %v2444 = vadd.f32 0.0, %v2443
      %v2445 = vpop.f32.mrb[0].mxu0
      %2446 = vmatprep.mubr.bf16.mxu0 0
      %2447 = vmatmul.mubr.bf16.gmra.mrb[0].mxu0 %v718
      %v2448 = vpop.f32.mrb[0].mxu0
      %v2449 = vadd.f32 0.0, %v2448
      %v2450 = vpop.f32.mrb[0].mxu0
      %v2451 = vpop.f32.mrb[0].mxu0
      %v2452 = vadd.f32 0.0, %v2451
      %v2453 = vpop.f32.mrb[0].mxu0
      %2454 = vmatprep.mubr.bf16.mxu0 0
      %2455 = vmatmul.mubr.bf16.gmra.mrb[0].mxu0 %v721
      %v2456 = vpop.f32.mrb[0].mxu0
      %v2457 = vadd.f32 0.0, %v2456
      %v2458 = vpop.f32.mrb[0].mxu0
      %v2459 = vpop.f32.mrb[0].mxu0
      %v2460 = vadd.f32 0.0, %v2459
      %v2461 = vpop.f32.mrb[0].mxu0
      %2462 = vmatprep.mubr.bf16.mxu0 0
      %2463 = vmatmul.mubr.bf16.gmra.mrb[0].mxu0 %v724
      %v2464 = vpop.f32.mrb[0].mxu0
      %v2465 = vadd.f32 0.0, %v2464
      %v2466 = vpop.f32.mrb[0].mxu0
      %v2467 = vpop.f32.mrb[0].mxu0
      %v2468 = vadd.f32 0.0, %v2467
      %v2469 = vpop.f32.mrb[0].mxu0
      %2470 = vmatprep.mubr.bf16.mxu0 0
      %2471 = vmatmul.mubr.bf16.gmra.mrb[0].mxu0 %v727
      %v2472 = vpop.f32.mrb[0].mxu0
      %v2473 = vadd.f32 0.0, %v2472
      %v2474 = vpop.f32.mrb[0].mxu0
      %v2475 = vpop.f32.mrb[0].mxu0
      %v2476 = vadd.f32 0.0, %v2475
      %v2477 = vpop.f32.mrb[0].mxu0
      %2478 = vmatprep.mubr.bf16.mxu0 0
      %2479 = vmatmul.mubr.bf16.gmra.mrb[0].mxu0 %v730
      %v2480 = vpop.f32.mrb[0].mxu0
      %v2481 = vadd.f32 0.0, %v2480
      %v2482 = vpop.f32.mrb[0].mxu0
      %v2483 = vpop.f32.mrb[0].mxu0
      %v2484 = vadd.f32 0.0, %v2483
      %v2485 = vpop.f32.mrb[0].mxu0
      %2486 = vmatprep.mubr.bf16.mxu0 0
      %2487 = vmatmul.mubr.bf16.gmra.mrb[0].mxu0 %v733
      %v2488 = vpop.f32.mrb[0].mxu0
      %v2489 = vadd.f32 0.0, %v2488
      %v2490 = vpop.f32.mrb[0].mxu0
      %v2491 = vpop.f32.mrb[0].mxu0
      %v2492 = vadd.f32 0.0, %v2491
      %v2493 = vpop.f32.mrb[0].mxu0
      %2494 = vmatprep.mubr.bf16.mxu0 0
      %2495 = vmatmul.mubr.bf16.gmra.mrb[0].mxu0 %v1721
      %v2496 = vpop.f32.mrb[0].mxu0
      %v2497 = vadd.f32 0.0, %v2496
      %v2498 = vpop.f32.mrb[0].mxu0
      %v2499 = vpop.f32.mrb[0].mxu0
      %v2500 = vadd.f32 0.0, %v2499
      %v2501 = vpop.f32.mrb[0].mxu0
      %2502 = vmatprep.mubr.bf16.mxu0 0
      %2503 = vmatmul.mubr.bf16.gmra.mrb[0].mxu0 %v2345
      %v2504 = vpop.f32.mrb[0].mxu0
      %v2505 = vadd.f32 0.0, %v2504
      %v2506 = vpop.f32.mrb[0].mxu0
      %v2507 = vpop.f32.mrb[0].mxu0
      %v2508 = vadd.f32 0.0, %v2507
      %v2509 = vpop.f32.mrb[0].mxu0
      %2510 = vdwg.mxu0
      %v2511 = vadd.f32 %v2309, %v2385
      %v2512 = vadd.f32 %v2310, %v2388
      %v2513 = vadd.f32 %v2311, %v2393
      %v2514 = vadd.f32 %v2312, %v2396
      %v2515 = vadd.f32 %v2313, %v2401
      %v2516 = vadd.f32 %v2314, %v2404
      %v2517 = vadd.f32 %v2315, %v2409
      %v2518 = vadd.f32 %v2316, %v2412
      %v2519 = vadd.f32 %v2317, %v2417
      %v2520 = vadd.f32 %v2318, %v2420
      %v2521 = vadd.f32 %v2319, %v2425
      %v2522 = vadd.f32 %v2320, %v2428
      %v2523 = vadd.f32 %v2321, %v2433
      %v2524 = vadd.f32 %v2322, %v2436
      %v2525 = vadd.f32 %v2323, %v2441
      %v2526 = vadd.f32 %v2324, %v2444
      %v2527 = vadd.f32 %v2325, %v2449
      %v2528 = vadd.f32 %v2326, %v2452
      %v2529 = vadd.f32 %v2327, %v2457
      %v2530 = vadd.f32 %v2328, %v2460
      %v2531 = vadd.f32 %v2329, %v2465
      %v2532 = vadd.f32 %v2330, %v2468
      %v2533 = vadd.f32 %v2331, %v2473
      %v2534 = vadd.f32 %v2332, %v2476
      %v2535 = vadd.f32 %v2333, %v2481
      %v2536 = vadd.f32 %v2334, %v2484
      %v2537 = vadd.f32 %v2335, %v2489
      %v2538 = vadd.f32 %v2336, %v2492
      %v2539 = vadd.f32 %v2337, %v2497
      %v2540 = vadd.f32 %v2338, %v2500
      %v2541 = vadd.f32 %v2339, %v2505
      %v2542 = vadd.f32 %v2340, %v2508
      %v2544 = vrot.slane %v488, 1
      %v2545 = vrot.slane %v489, 1
      %v2546 = vsel %vm1130, %v2544, %v2545
      %v2547 = vrot.slane %v490, 1
      %v2548 = vsel %vm1130, %v2545, %v2547
      %v2551 = vpack.c.bf16 %v2548, %v2546
      %s2552 = scalar_lea.vmem %s1, 16
      %v2553 = vld [vmem:[%s2552] sm:$0x3]
      %v2555 = vsel %vm312, %v2551, 0
      %v2558 = vand.u32 %v2553, %v737
      %2560 = vmatprep.subr.bf16.mxu0 0
      %2561 = vmatpush1.bf16.msra.mxu0 %v2558
      %2562 = vmatprep.subr.bf16.mxu0 0
      %2563 = vmatpush1.bf16.msra.mxu0 0
      %2564 = vmatprep.subr.bf16.mxu0 0
      %2565 = vmatpush1.bf16.msra.mxu0 0
      %2566 = vmatprep.subr.bf16.mxu0 0
      %2567 = vmatpush1.bf16.msra.mxu0 0
      %2568 = vmatprep.subr.bf16.mxu0 0
      %2569 = vmatpush1.bf16.msra.mxu0 0
      %2570 = vmatprep.subr.bf16.mxu0 0
      %2571 = vmatpush1.bf16.msra.mxu0 0
      %2572 = vmatprep.subr.bf16.mxu0 0
      %2573 = vmatpush1.bf16.msra.mxu0 0
      %2574 = vmatprep.subr.bf16.mxu0 0
      %2575 = vmatpush1.bf16.msra.mxu0 0
      %2576 = vmatprep.subr.bf16.mxu0 0
      %2577 = vmatpush1.bf16.msra.mxu0 0
      %2578 = vmatprep.subr.bf16.mxu0 0
      %2579 = vmatpush1.bf16.msra.mxu0 0
      %2580 = vmatprep.subr.bf16.mxu0 0
      %2581 = vmatpush1.bf16.msra.mxu0 0
      %2582 = vmatprep.subr.bf16.mxu0 0
      %2583 = vmatpush1.bf16.msra.mxu0 0
      %2584 = vmatprep.subr.bf16.mxu0 0
      %2585 = vmatpush1.bf16.msra.mxu0 0
      %2586 = vmatprep.subr.bf16.mxu0 0
      %2587 = vmatpush1.bf16.msra.mxu0 0
      %2588 = vmatprep.subr.bf16.mxu0 0
      %2589 = vmatpush1.bf16.msra.mxu0 0
      %2590 = vmatprep.subr.bf16.mxu0 0
      %2591 = vmatpush1.bf16.msra.mxu0 0
      %2592 = vmatprep.mubr.bf16.mxu0 0
      %2593 = vmatmul.mubr.bf16.gmra.mrb[0].mxu0 %v1268
      %v2594 = vpop.f32.mrb[0].mxu0
      %v2595 = vadd.f32 0.0, %v2594
      %v2596 = vpop.f32.mrb[0].mxu0
      %v2597 = vpop.f32.mrb[0].mxu0
      %v2598 = vadd.f32 0.0, %v2597
      %v2599 = vpop.f32.mrb[0].mxu0
      %2600 = vmatprep.mubr.bf16.mxu0 0
      %2601 = vmatmul.mubr.bf16.gmra.mrb[0].mxu0 %v1271
      %v2602 = vpop.f32.mrb[0].mxu0
      %v2603 = vadd.f32 0.0, %v2602
      %v2604 = vpop.f32.mrb[0].mxu0
      %v2605 = vpop.f32.mrb[0].mxu0
      %v2606 = vadd.f32 0.0, %v2605
      %v2607 = vpop.f32.mrb[0].mxu0
      %2608 = vmatprep.mubr.bf16.mxu0 0
      %2609 = vmatmul.mubr.bf16.gmra.mrb[0].mxu0 %v1274
      %v2610 = vpop.f32.mrb[0].mxu0
      %v2611 = vadd.f32 0.0, %v2610
      %v2612 = vpop.f32.mrb[0].mxu0
      %v2613 = vpop.f32.mrb[0].mxu0
      %v2614 = vadd.f32 0.0, %v2613
      %v2615 = vpop.f32.mrb[0].mxu0
      %2616 = vmatprep.mubr.bf16.mxu0 0
      %2617 = vmatmul.mubr.bf16.gmra.mrb[0].mxu0 %v1277
      %v2618 = vpop.f32.mrb[0].mxu0
      %v2619 = vadd.f32 0.0, %v2618
      %v2620 = vpop.f32.mrb[0].mxu0
      %v2621 = vpop.f32.mrb[0].mxu0
      %v2622 = vadd.f32 0.0, %v2621
      %v2623 = vpop.f32.mrb[0].mxu0
      %2624 = vmatprep.mubr.bf16.mxu0 0
      %2625 = vmatmul.mubr.bf16.gmra.mrb[0].mxu0 %v1280
      %v2626 = vpop.f32.mrb[0].mxu0
      %v2627 = vadd.f32 0.0, %v2626
      %v2628 = vpop.f32.mrb[0].mxu0
      %v2629 = vpop.f32.mrb[0].mxu0
      %v2630 = vadd.f32 0.0, %v2629
      %v2631 = vpop.f32.mrb[0].mxu0
      %2632 = vmatprep.mubr.bf16.mxu0 0
      %2633 = vmatmul.mubr.bf16.gmra.mrb[0].mxu0 %v1283
      %v2634 = vpop.f32.mrb[0].mxu0
      %v2635 = vadd.f32 0.0, %v2634
      %v2636 = vpop.f32.mrb[0].mxu0
      %v2637 = vpop.f32.mrb[0].mxu0
      %v2638 = vadd.f32 0.0, %v2637
      %v2639 = vpop.f32.mrb[0].mxu0
      %2640 = vmatprep.mubr.bf16.mxu0 0
      %2641 = vmatmul.mubr.bf16.gmra.mrb[0].mxu0 %v1286
      %v2642 = vpop.f32.mrb[0].mxu0
      %v2643 = vadd.f32 0.0, %v2642
      %v2644 = vpop.f32.mrb[0].mxu0
      %v2645 = vpop.f32.mrb[0].mxu0
      %v2646 = vadd.f32 0.0, %v2645
      %v2647 = vpop.f32.mrb[0].mxu0
      %2648 = vmatprep.mubr.bf16.mxu0 0
      %2649 = vmatmul.mubr.bf16.gmra.mrb[0].mxu0 %v1289
      %v2650 = vpop.f32.mrb[0].mxu0
      %v2651 = vadd.f32 0.0, %v2650
      %v2652 = vpop.f32.mrb[0].mxu0
      %v2653 = vpop.f32.mrb[0].mxu0
      %v2654 = vadd.f32 0.0, %v2653
      %v2655 = vpop.f32.mrb[0].mxu0
      %2656 = vmatprep.mubr.bf16.mxu0 0
      %2657 = vmatmul.mubr.bf16.gmra.mrb[0].mxu0 %v1292
      %v2658 = vpop.f32.mrb[0].mxu0
      %v2659 = vadd.f32 0.0, %v2658
      %v2660 = vpop.f32.mrb[0].mxu0
      %v2661 = vpop.f32.mrb[0].mxu0
      %v2662 = vadd.f32 0.0, %v2661
      %v2663 = vpop.f32.mrb[0].mxu0
      %2664 = vmatprep.mubr.bf16.mxu0 0
      %2665 = vmatmul.mubr.bf16.gmra.mrb[0].mxu0 %v1295
      %v2666 = vpop.f32.mrb[0].mxu0
      %v2667 = vadd.f32 0.0, %v2666
      %v2668 = vpop.f32.mrb[0].mxu0
      %v2669 = vpop.f32.mrb[0].mxu0
      %v2670 = vadd.f32 0.0, %v2669
      %v2671 = vpop.f32.mrb[0].mxu0
      %2672 = vmatprep.mubr.bf16.mxu0 0
      %2673 = vmatmul.mubr.bf16.gmra.mrb[0].mxu0 %v1298
      %v2674 = vpop.f32.mrb[0].mxu0
      %v2675 = vadd.f32 0.0, %v2674
      %v2676 = vpop.f32.mrb[0].mxu0
      %v2677 = vpop.f32.mrb[0].mxu0
      %v2678 = vadd.f32 0.0, %v2677
      %v2679 = vpop.f32.mrb[0].mxu0
      %2680 = vmatprep.mubr.bf16.mxu0 0
      %2681 = vmatmul.mubr.bf16.gmra.mrb[0].mxu0 %v1301
      %v2682 = vpop.f32.mrb[0].mxu0
      %v2683 = vadd.f32 0.0, %v2682
      %v2684 = vpop.f32.mrb[0].mxu0
      %v2685 = vpop.f32.mrb[0].mxu0
      %v2686 = vadd.f32 0.0, %v2685
      %v2687 = vpop.f32.mrb[0].mxu0
      %2688 = vmatprep.mubr.bf16.mxu0 0
      %2689 = vmatmul.mubr.bf16.gmra.mrb[0].mxu0 %v1304
      %v2690 = vpop.f32.mrb[0].mxu0
      %v2691 = vadd.f32 0.0, %v2690
      %v2692 = vpop.f32.mrb[0].mxu0
      %v2693 = vpop.f32.mrb[0].mxu0
      %v2694 = vadd.f32 0.0, %v2693
      %v2695 = vpop.f32.mrb[0].mxu0
      %2696 = vmatprep.mubr.bf16.mxu0 0
      %2697 = vmatmul.mubr.bf16.gmra.mrb[0].mxu0 %v1307
      %v2698 = vpop.f32.mrb[0].mxu0
      %v2699 = vadd.f32 0.0, %v2698
      %v2700 = vpop.f32.mrb[0].mxu0
      %v2701 = vpop.f32.mrb[0].mxu0
      %v2702 = vadd.f32 0.0, %v2701
      %v2703 = vpop.f32.mrb[0].mxu0
      %2704 = vmatprep.mubr.bf16.mxu0 0
      %2705 = vmatmul.mubr.bf16.gmra.mrb[0].mxu0 %v1931
      %v2706 = vpop.f32.mrb[0].mxu0
      %v2707 = vadd.f32 0.0, %v2706
      %v2708 = vpop.f32.mrb[0].mxu0
      %v2709 = vpop.f32.mrb[0].mxu0
      %v2710 = vadd.f32 0.0, %v2709
      %v2711 = vpop.f32.mrb[0].mxu0
      %2712 = vmatprep.mubr.bf16.mxu0 0
      %2713 = vmatmul.mubr.bf16.gmra.mrb[0].mxu0 %v2555
      %v2714 = vpop.f32.mrb[0].mxu0
      %v2715 = vadd.f32 0.0, %v2714
      %v2716 = vpop.f32.mrb[0].mxu0
      %v2717 = vpop.f32.mrb[0].mxu0
      %v2718 = vadd.f32 0.0, %v2717
      %v2719 = vpop.f32.mrb[0].mxu0
      %2720 = vdwg.mxu0
      %v2721 = vadd.f32 %v2511, %v2595
      %v2722 = vadd.f32 %v2512, %v2598
      %v2723 = vadd.f32 %v2513, %v2603
      %v2724 = vadd.f32 %v2514, %v2606
      %v2725 = vadd.f32 %v2515, %v2611
      %v2726 = vadd.f32 %v2516, %v2614
      %v2727 = vadd.f32 %v2517, %v2619
      %v2728 = vadd.f32 %v2518, %v2622
      %v2729 = vadd.f32 %v2519, %v2627
      %v2730 = vadd.f32 %v2520, %v2630
      %v2731 = vadd.f32 %v2521, %v2635
      %v2732 = vadd.f32 %v2522, %v2638
      %v2733 = vadd.f32 %v2523, %v2643
      %v2734 = vadd.f32 %v2524, %v2646
      %v2735 = vadd.f32 %v2525, %v2651
      %v2736 = vadd.f32 %v2526, %v2654
      %v2737 = vadd.f32 %v2527, %v2659
      %v2738 = vadd.f32 %v2528, %v2662
      %v2739 = vadd.f32 %v2529, %v2667
      %v2740 = vadd.f32 %v2530, %v2670
      %v2741 = vadd.f32 %v2531, %v2675
      %v2742 = vadd.f32 %v2532, %v2678
      %v2743 = vadd.f32 %v2533, %v2683
      %v2744 = vadd.f32 %v2534, %v2686
      %v2745 = vadd.f32 %v2535, %v2691
      %v2746 = vadd.f32 %v2536, %v2694
      %v2747 = vadd.f32 %v2537, %v2699
      %v2748 = vadd.f32 %v2538, %v2702
      %v2749 = vadd.f32 %v2539, %v2707
      %v2750 = vadd.f32 %v2540, %v2710
      %v2751 = vadd.f32 %v2541, %v2715
      %v2752 = vadd.f32 %v2542, %v2718
      %v2753 = vld [vmem:[%s2] sm:$0x1]
      %v2754 = vlaneseq
      %v2755 = vshrl.u32 %v2754, 7
      %v2756 = vsub.s32 0, %v2755
      %v2757 = vrot.slane %v2753, %v2756
      %v2758 = vmul.f32 %v2721, %v2757
      %v2759 = vmul.f32 %v2722, %v2757
      %v2760 = vmul.f32 %v2723, %v2757
      %v2761 = vmul.f32 %v2724, %v2757
      %v2762 = vmul.f32 %v2725, %v2757
      %v2763 = vmul.f32 %v2726, %v2757
      %v2764 = vmul.f32 %v2727, %v2757
      %v2765 = vmul.f32 %v2728, %v2757
      %v2766 = vmul.f32 %v2729, %v2757
      %v2767 = vmul.f32 %v2730, %v2757
      %v2768 = vmul.f32 %v2731, %v2757
      %v2769 = vmul.f32 %v2732, %v2757
      %v2770 = vmul.f32 %v2733, %v2757
      %v2771 = vmul.f32 %v2734, %v2757
      %v2772 = vmul.f32 %v2735, %v2757
      %v2773 = vmul.f32 %v2736, %v2757
      %v2774 = vmul.f32 %v2737, %v2757
      %v2775 = vmul.f32 %v2738, %v2757
      %v2776 = vmul.f32 %v2739, %v2757
      %v2777 = vmul.f32 %v2740, %v2757
      %v2778 = vmul.f32 %v2741, %v2757
      %v2779 = vmul.f32 %v2742, %v2757
      %v2780 = vmul.f32 %v2743, %v2757
      %v2781 = vmul.f32 %v2744, %v2757
      %v2782 = vmul.f32 %v2745, %v2757
      %v2783 = vmul.f32 %v2746, %v2757
      %v2784 = vmul.f32 %v2747, %v2757
      %v2785 = vmul.f32 %v2748, %v2757
      %v2786 = vmul.f32 %v2749, %v2757
      %v2787 = vmul.f32 %v2750, %v2757
      %v2788 = vmul.f32 %v2751, %v2757
      %v2789 = vmul.f32 %v2752, %v2757
      %v2790 = vld [vmem:[%s2 + $0x1] sm:$0x1]
      %v2791 = vlaneseq
      %v2792 = vshrl.u32 %v2791, 7
      %v2793 = vsub.s32 0, %v2792
      %v2794 = vrot.slane %v2790, %v2793
      %v2795 = vadd.f32 %v2758, %v2794
      %v2796 = vadd.f32 %v2759, %v2794
      %v2797 = vadd.f32 %v2760, %v2794
      %v2798 = vadd.f32 %v2761, %v2794
      %v2799 = vadd.f32 %v2762, %v2794
      %v2800 = vadd.f32 %v2763, %v2794
      %v2801 = vadd.f32 %v2764, %v2794
      %v2802 = vadd.f32 %v2765, %v2794
      %v2803 = vadd.f32 %v2766, %v2794
      %v2804 = vadd.f32 %v2767, %v2794
      %v2805 = vadd.f32 %v2768, %v2794
      %v2806 = vadd.f32 %v2769, %v2794
      %v2807 = vadd.f32 %v2770, %v2794
      %v2808 = vadd.f32 %v2771, %v2794
      %v2809 = vadd.f32 %v2772, %v2794
      %v2810 = vadd.f32 %v2773, %v2794
      %v2811 = vadd.f32 %v2774, %v2794
      %v2812 = vadd.f32 %v2775, %v2794
      %v2813 = vadd.f32 %v2776, %v2794
      %v2814 = vadd.f32 %v2777, %v2794
      %v2815 = vadd.f32 %v2778, %v2794
      %v2816 = vadd.f32 %v2779, %v2794
      %v2817 = vadd.f32 %v2780, %v2794
      %v2818 = vadd.f32 %v2781, %v2794
      %v2819 = vadd.f32 %v2782, %v2794
      %v2820 = vadd.f32 %v2783, %v2794
      %v2821 = vadd.f32 %v2784, %v2794
      %v2822 = vadd.f32 %v2785, %v2794
      %v2823 = vadd.f32 %v2786, %v2794
      %v2824 = vadd.f32 %v2787, %v2794
      %v2825 = vadd.f32 %v2788, %v2794
      %v2826 = vadd.f32 %v2789, %v2794
      %v2827 = vmax.f32 %v2795, 0.0
      %v2828 = vmax.f32 %v2796, 0.0
      %v2829 = vmax.f32 %v2797, 0.0
      %v2830 = vmax.f32 %v2798, 0.0
      %v2831 = vmax.f32 %v2799, 0.0
      %v2832 = vmax.f32 %v2800, 0.0
      %v2833 = vmax.f32 %v2801, 0.0
      %v2834 = vmax.f32 %v2802, 0.0
      %v2835 = vmax.f32 %v2803, 0.0
      %v2836 = vmax.f32 %v2804, 0.0
      %v2837 = vmax.f32 %v2805, 0.0
      %v2838 = vmax.f32 %v2806, 0.0
      %v2839 = vmax.f32 %v2807, 0.0
      %v2840 = vmax.f32 %v2808, 0.0
      %v2841 = vmax.f32 %v2809, 0.0
      %v2842 = vmax.f32 %v2810, 0.0
      %v2843 = vmax.f32 %v2811, 0.0
      %v2844 = vmax.f32 %v2812, 0.0
      %v2845 = vmax.f32 %v2813, 0.0
      %v2846 = vmax.f32 %v2814, 0.0
      %v2847 = vmax.f32 %v2815, 0.0
      %v2848 = vmax.f32 %v2816, 0.0
      %v2849 = vmax.f32 %v2817, 0.0
      %v2850 = vmax.f32 %v2818, 0.0
      %v2851 = vmax.f32 %v2819, 0.0
      %v2852 = vmax.f32 %v2820, 0.0
      %v2853 = vmax.f32 %v2821, 0.0
      %v2854 = vmax.f32 %v2822, 0.0
      %v2855 = vmax.f32 %v2823, 0.0
      %v2856 = vmax.f32 %v2824, 0.0
      %v2857 = vmax.f32 %v2825, 0.0
      %v2858 = vmax.f32 %v2826, 0.0
      %v2891 = vcombine.high %v2827, %v2827
      %v2893 = vunpack.c.l.s4 1983009808
      %v2894 = vunpack.c.0.s8 %v2893
      %v2895 = vlaneseq
      %v2896 = vshrl.u32 %v2895, 7
      %v2897 = vsub.s32 %v2894, %v2896
      %v2898 = vrot.slane %v2827, %v2897
      %v2900 = vunpack.c.l.s4 1983009808
      %v2901 = vunpack.c.0.s8 %v2900
      %v2902 = vlaneseq
      %v2903 = vshrl.u32 %v2902, 7
      %v2904 = vsub.s32 %v2901, %v2903
      %v2905 = vrot.slane %v2891, %v2904
      %v2906 = vcombine.high %v2898, %v2898
      %v2907 = vcombine.high %v2905, %v2905
      %v2908 = vcombine.high %v2828, %v2828
      %v2910 = vunpack.c.l.s4 1983009808
      %v2911 = vunpack.c.0.s8 %v2910
      %v2912 = vlaneseq
      %v2913 = vshrl.u32 %v2912, 7
      %v2914 = vsub.s32 %v2911, %v2913
      %v2915 = vrot.slane %v2828, %v2914
      %v2917 = vunpack.c.l.s4 1983009808
      %v2918 = vunpack.c.0.s8 %v2917
      %v2919 = vlaneseq
      %v2920 = vshrl.u32 %v2919, 7
      %v2921 = vsub.s32 %v2918, %v2920
      %v2922 = vrot.slane %v2908, %v2921
      %v2923 = vcombine.high %v2915, %v2915
      %v2924 = vcombine.high %v2922, %v2922
      %v2925 = vcombine.high %v2829, %v2829
      %v2927 = vunpack.c.l.s4 1983009808
      %v2928 = vunpack.c.0.s8 %v2927
      %v2929 = vlaneseq
      %v2930 = vshrl.u32 %v2929, 7
      %v2931 = vsub.s32 %v2928, %v2930
      %v2932 = vrot.slane %v2829, %v2931
      %v2934 = vunpack.c.l.s4 1983009808
      %v2935 = vunpack.c.0.s8 %v2934
      %v2936 = vlaneseq
      %v2937 = vshrl.u32 %v2936, 7
      %v2938 = vsub.s32 %v2935, %v2937
      %v2939 = vrot.slane %v2925, %v2938
      %v2940 = vcombine.high %v2932, %v2932
      %v2941 = vcombine.high %v2939, %v2939
      %v2942 = vcombine.high %v2830, %v2830
      %v2944 = vunpack.c.l.s4 1983009808
      %v2945 = vunpack.c.0.s8 %v2944
      %v2946 = vlaneseq
      %v2947 = vshrl.u32 %v2946, 7
      %v2948 = vsub.s32 %v2945, %v2947
      %v2949 = vrot.slane %v2830, %v2948
      %v2951 = vunpack.c.l.s4 1983009808
      %v2952 = vunpack.c.0.s8 %v2951
      %v2953 = vlaneseq
      %v2954 = vshrl.u32 %v2953, 7
      %v2955 = vsub.s32 %v2952, %v2954
      %v2956 = vrot.slane %v2942, %v2955
      %v2957 = vcombine.high %v2949, %v2949
      %v2958 = vcombine.high %v2956, %v2956
      %v2959 = vcombine.high %v2831, %v2831
      %v2961 = vunpack.c.l.s4 1983009808
      %v2962 = vunpack.c.0.s8 %v2961
      %v2963 = vlaneseq
      %v2964 = vshrl.u32 %v2963, 7
      %v2965 = vsub.s32 %v2962, %v2964
      %v2966 = vrot.slane %v2831, %v2965
      %v2968 = vunpack.c.l.s4 1983009808
      %v2969 = vunpack.c.0.s8 %v2968
      %v2970 = vlaneseq
      %v2971 = vshrl.u32 %v2970, 7
      %v2972 = vsub.s32 %v2969, %v2971
      %v2973 = vrot.slane %v2959, %v2972
      %v2974 = vcombine.high %v2966, %v2966
      %v2975 = vcombine.high %v2973, %v2973
      %v2976 = vcombine.high %v2832, %v2832
      %v2978 = vunpack.c.l.s4 1983009808
      %v2979 = vunpack.c.0.s8 %v2978
      %v2980 = vlaneseq
      %v2981 = vshrl.u32 %v2980, 7
      %v2982 = vsub.s32 %v2979, %v2981
      %v2983 = vrot.slane %v2832, %v2982
      %v2985 = vunpack.c.l.s4 1983009808
      %v2986 = vunpack.c.0.s8 %v2985
      %v2987 = vlaneseq
      %v2988 = vshrl.u32 %v2987, 7
      %v2989 = vsub.s32 %v2986, %v2988
      %v2990 = vrot.slane %v2976, %v2989
      %v2991 = vcombine.high %v2983, %v2983
      %v2992 = vcombine.high %v2990, %v2990
      %v2993 = vcombine.high %v2833, %v2833
      %v2995 = vunpack.c.l.s4 1983009808
      %v2996 = vunpack.c.0.s8 %v2995
      %v2997 = vlaneseq
      %v2998 = vshrl.u32 %v2997, 7
      %v2999 = vsub.s32 %v2996, %v2998
      %v3000 = vrot.slane %v2833, %v2999
      %v3002 = vunpack.c.l.s4 1983009808
      %v3003 = vunpack.c.0.s8 %v3002
      %v3004 = vlaneseq
      %v3005 = vshrl.u32 %v3004, 7
      %v3006 = vsub.s32 %v3003, %v3005
      %v3007 = vrot.slane %v2993, %v3006
      %v3008 = vcombine.high %v3000, %v3000
      %v3009 = vcombine.high %v3007, %v3007
      %v3010 = vcombine.high %v2834, %v2834
      %v3012 = vunpack.c.l.s4 1983009808
      %v3013 = vunpack.c.0.s8 %v3012
      %v3014 = vlaneseq
      %v3015 = vshrl.u32 %v3014, 7
      %v3016 = vsub.s32 %v3013, %v3015
      %v3017 = vrot.slane %v2834, %v3016
      %v3019 = vunpack.c.l.s4 1983009808
      %v3020 = vunpack.c.0.s8 %v3019
      %v3021 = vlaneseq
      %v3022 = vshrl.u32 %v3021, 7
      %v3023 = vsub.s32 %v3020, %v3022
      %v3024 = vrot.slane %v3010, %v3023
      %v3025 = vcombine.high %v3017, %v3017
      %v3026 = vcombine.high %v3024, %v3024
      %v3027 = vcombine.high %v2835, %v2835
      %v3029 = vunpack.c.l.s4 1983009808
      %v3030 = vunpack.c.0.s8 %v3029
      %v3031 = vlaneseq
      %v3032 = vshrl.u32 %v3031, 7
      %v3033 = vsub.s32 %v3030, %v3032
      %v3034 = vrot.slane %v2835, %v3033
      %v3036 = vunpack.c.l.s4 1983009808
      %v3037 = vunpack.c.0.s8 %v3036
      %v3038 = vlaneseq
      %v3039 = vshrl.u32 %v3038, 7
      %v3040 = vsub.s32 %v3037, %v3039
      %v3041 = vrot.slane %v3027, %v3040
      %v3042 = vcombine.high %v3034, %v3034
      %v3043 = vcombine.high %v3041, %v3041
      %v3044 = vcombine.high %v2836, %v2836
      %v3046 = vunpack.c.l.s4 1983009808
      %v3047 = vunpack.c.0.s8 %v3046
      %v3048 = vlaneseq
      %v3049 = vshrl.u32 %v3048, 7
      %v3050 = vsub.s32 %v3047, %v3049
      %v3051 = vrot.slane %v2836, %v3050
      %v3053 = vunpack.c.l.s4 1983009808
      %v3054 = vunpack.c.0.s8 %v3053
      %v3055 = vlaneseq
      %v3056 = vshrl.u32 %v3055, 7
      %v3057 = vsub.s32 %v3054, %v3056
      %v3058 = vrot.slane %v3044, %v3057
      %v3059 = vcombine.high %v3051, %v3051
      %v3060 = vcombine.high %v3058, %v3058
      %v3061 = vcombine.high %v2837, %v2837
      %v3063 = vunpack.c.l.s4 1983009808
      %v3064 = vunpack.c.0.s8 %v3063
      %v3065 = vlaneseq
      %v3066 = vshrl.u32 %v3065, 7
      %v3067 = vsub.s32 %v3064, %v3066
      %v3068 = vrot.slane %v2837, %v3067
      %v3070 = vunpack.c.l.s4 1983009808
      %v3071 = vunpack.c.0.s8 %v3070
      %v3072 = vlaneseq
      %v3073 = vshrl.u32 %v3072, 7
      %v3074 = vsub.s32 %v3071, %v3073
      %v3075 = vrot.slane %v3061, %v3074
      %v3076 = vcombine.high %v3068, %v3068
      %v3077 = vcombine.high %v3075, %v3075
      %v3078 = vcombine.high %v2838, %v2838
      %v3080 = vunpack.c.l.s4 1983009808
      %v3081 = vunpack.c.0.s8 %v3080
      %v3082 = vlaneseq
      %v3083 = vshrl.u32 %v3082, 7
      %v3084 = vsub.s32 %v3081, %v3083
      %v3085 = vrot.slane %v2838, %v3084
      %v3087 = vunpack.c.l.s4 1983009808
      %v3088 = vunpack.c.0.s8 %v3087
      %v3089 = vlaneseq
      %v3090 = vshrl.u32 %v3089, 7
      %v3091 = vsub.s32 %v3088, %v3090
      %v3092 = vrot.slane %v3078, %v3091
      %v3093 = vcombine.high %v3085, %v3085
      %v3094 = vcombine.high %v3092, %v3092
      %v3095 = vcombine.high %v2839, %v2839
      %v3097 = vunpack.c.l.s4 1983009808
      %v3098 = vunpack.c.0.s8 %v3097
      %v3099 = vlaneseq
      %v3100 = vshrl.u32 %v3099, 7
      %v3101 = vsub.s32 %v3098, %v3100
      %v3102 = vrot.slane %v2839, %v3101
      %v3104 = vunpack.c.l.s4 1983009808
      %v3105 = vunpack.c.0.s8 %v3104
      %v3106 = vlaneseq
      %v3107 = vshrl.u32 %v3106, 7
      %v3108 = vsub.s32 %v3105, %v3107
      %v3109 = vrot.slane %v3095, %v3108
      %v3110 = vcombine.high %v3102, %v3102
      %v3111 = vcombine.high %v3109, %v3109
      %v3112 = vcombine.high %v2840, %v2840
      %v3114 = vunpack.c.l.s4 1983009808
      %v3115 = vunpack.c.0.s8 %v3114
      %v3116 = vlaneseq
      %v3117 = vshrl.u32 %v3116, 7
      %v3118 = vsub.s32 %v3115, %v3117
      %v3119 = vrot.slane %v2840, %v3118
      %v3121 = vunpack.c.l.s4 1983009808
      %v3122 = vunpack.c.0.s8 %v3121
      %v3123 = vlaneseq
      %v3124 = vshrl.u32 %v3123, 7
      %v3125 = vsub.s32 %v3122, %v3124
      %v3126 = vrot.slane %v3112, %v3125
      %v3127 = vcombine.high %v3119, %v3119
      %v3128 = vcombine.high %v3126, %v3126
      %v3129 = vcombine.high %v2841, %v2841
      %v3131 = vunpack.c.l.s4 1983009808
      %v3132 = vunpack.c.0.s8 %v3131
      %v3133 = vlaneseq
      %v3134 = vshrl.u32 %v3133, 7
      %v3135 = vsub.s32 %v3132, %v3134
      %v3136 = vrot.slane %v2841, %v3135
      %v3138 = vunpack.c.l.s4 1983009808
      %v3139 = vunpack.c.0.s8 %v3138
      %v3140 = vlaneseq
      %v3141 = vshrl.u32 %v3140, 7
      %v3142 = vsub.s32 %v3139, %v3141
      %v3143 = vrot.slane %v3129, %v3142
      %v3144 = vcombine.high %v3136, %v3136
      %v3145 = vcombine.high %v3143, %v3143
      %v3146 = vcombine.high %v2842, %v2842
      %v3148 = vunpack.c.l.s4 1983009808
      %v3149 = vunpack.c.0.s8 %v3148
      %v3150 = vlaneseq
      %v3151 = vshrl.u32 %v3150, 7
      %v3152 = vsub.s32 %v3149, %v3151
      %v3153 = vrot.slane %v2842, %v3152
      %v3155 = vunpack.c.l.s4 1983009808
      %v3156 = vunpack.c.0.s8 %v3155
      %v3157 = vlaneseq
      %v3158 = vshrl.u32 %v3157, 7
      %v3159 = vsub.s32 %v3156, %v3158
      %v3160 = vrot.slane %v3146, %v3159
      %v3161 = vcombine.high %v3153, %v3153
      %v3162 = vcombine.high %v3160, %v3160
      %v3163 = vcombine.high %v2843, %v2843
      %v3165 = vunpack.c.l.s4 1983009808
      %v3166 = vunpack.c.0.s8 %v3165
      %v3167 = vlaneseq
      %v3168 = vshrl.u32 %v3167, 7
      %v3169 = vsub.s32 %v3166, %v3168
      %v3170 = vrot.slane %v2843, %v3169
      %v3172 = vunpack.c.l.s4 1983009808
      %v3173 = vunpack.c.0.s8 %v3172
      %v3174 = vlaneseq
      %v3175 = vshrl.u32 %v3174, 7
      %v3176 = vsub.s32 %v3173, %v3175
      %v3177 = vrot.slane %v3163, %v3176
      %v3178 = vcombine.high %v3170, %v3170
      %v3179 = vcombine.high %v3177, %v3177
      %v3180 = vcombine.high %v2844, %v2844
      %v3182 = vunpack.c.l.s4 1983009808
      %v3183 = vunpack.c.0.s8 %v3182
      %v3184 = vlaneseq
      %v3185 = vshrl.u32 %v3184, 7
      %v3186 = vsub.s32 %v3183, %v3185
      %v3187 = vrot.slane %v2844, %v3186
      %v3189 = vunpack.c.l.s4 1983009808
      %v3190 = vunpack.c.0.s8 %v3189
      %v3191 = vlaneseq
      %v3192 = vshrl.u32 %v3191, 7
      %v3193 = vsub.s32 %v3190, %v3192
      %v3194 = vrot.slane %v3180, %v3193
      %v3195 = vcombine.high %v3187, %v3187
      %v3196 = vcombine.high %v3194, %v3194
      %v3197 = vcombine.high %v2845, %v2845
      %v3199 = vunpack.c.l.s4 1983009808
      %v3200 = vunpack.c.0.s8 %v3199
      %v3201 = vlaneseq
      %v3202 = vshrl.u32 %v3201, 7
      %v3203 = vsub.s32 %v3200, %v3202
      %v3204 = vrot.slane %v2845, %v3203
      %v3206 = vunpack.c.l.s4 1983009808
      %v3207 = vunpack.c.0.s8 %v3206
      %v3208 = vlaneseq
      %v3209 = vshrl.u32 %v3208, 7
      %v3210 = vsub.s32 %v3207, %v3209
      %v3211 = vrot.slane %v3197, %v3210
      %v3212 = vcombine.high %v3204, %v3204
      %v3213 = vcombine.high %v3211, %v3211
      %v3214 = vcombine.high %v2846, %v2846
      %v3216 = vunpack.c.l.s4 1983009808
      %v3217 = vunpack.c.0.s8 %v3216
      %v3218 = vlaneseq
      %v3219 = vshrl.u32 %v3218, 7
      %v3220 = vsub.s32 %v3217, %v3219
      %v3221 = vrot.slane %v2846, %v3220
      %v3223 = vunpack.c.l.s4 1983009808
      %v3224 = vunpack.c.0.s8 %v3223
      %v3225 = vlaneseq
      %v3226 = vshrl.u32 %v3225, 7
      %v3227 = vsub.s32 %v3224, %v3226
      %v3228 = vrot.slane %v3214, %v3227
      %v3229 = vcombine.high %v3221, %v3221
      %v3230 = vcombine.high %v3228, %v3228
      %v3231 = vcombine.high %v2847, %v2847
      %v3233 = vunpack.c.l.s4 1983009808
      %v3234 = vunpack.c.0.s8 %v3233
      %v3235 = vlaneseq
      %v3236 = vshrl.u32 %v3235, 7
      %v3237 = vsub.s32 %v3234, %v3236
      %v3238 = vrot.slane %v2847, %v3237
      %v3240 = vunpack.c.l.s4 1983009808
      %v3241 = vunpack.c.0.s8 %v3240
      %v3242 = vlaneseq
      %v3243 = vshrl.u32 %v3242, 7
      %v3244 = vsub.s32 %v3241, %v3243
      %v3245 = vrot.slane %v3231, %v3244
      %v3246 = vcombine.high %v3238, %v3238
      %v3247 = vcombine.high %v3245, %v3245
      %v3248 = vcombine.high %v2848, %v2848
      %v3250 = vunpack.c.l.s4 1983009808
      %v3251 = vunpack.c.0.s8 %v3250
      %v3252 = vlaneseq
      %v3253 = vshrl.u32 %v3252, 7
      %v3254 = vsub.s32 %v3251, %v3253
      %v3255 = vrot.slane %v2848, %v3254
      %v3257 = vunpack.c.l.s4 1983009808
      %v3258 = vunpack.c.0.s8 %v3257
      %v3259 = vlaneseq
      %v3260 = vshrl.u32 %v3259, 7
      %v3261 = vsub.s32 %v3258, %v3260
      %v3262 = vrot.slane %v3248, %v3261
      %v3263 = vcombine.high %v3255, %v3255
      %v3264 = vcombine.high %v3262, %v3262
      %v3265 = vcombine.high %v2849, %v2849
      %v3267 = vunpack.c.l.s4 1983009808
      %v3268 = vunpack.c.0.s8 %v3267
      %v3269 = vlaneseq
      %v3270 = vshrl.u32 %v3269, 7
      %v3271 = vsub.s32 %v3268, %v3270
      %v3272 = vrot.slane %v2849, %v3271
      %v3274 = vunpack.c.l.s4 1983009808
      %v3275 = vunpack.c.0.s8 %v3274
      %v3276 = vlaneseq
      %v3277 = vshrl.u32 %v3276, 7
      %v3278 = vsub.s32 %v3275, %v3277
      %v3279 = vrot.slane %v3265, %v3278
      %v3280 = vcombine.high %v3272, %v3272
      %v3281 = vcombine.high %v3279, %v3279
      %v3282 = vcombine.high %v2850, %v2850
      %v3284 = vunpack.c.l.s4 1983009808
      %v3285 = vunpack.c.0.s8 %v3284
      %v3286 = vlaneseq
      %v3287 = vshrl.u32 %v3286, 7
      %v3288 = vsub.s32 %v3285, %v3287
      %v3289 = vrot.slane %v2850, %v3288
      %v3291 = vunpack.c.l.s4 1983009808
      %v3292 = vunpack.c.0.s8 %v3291
      %v3293 = vlaneseq
      %v3294 = vshrl.u32 %v3293, 7
      %v3295 = vsub.s32 %v3292, %v3294
      %v3296 = vrot.slane %v3282, %v3295
      %v3297 = vcombine.high %v3289, %v3289
      %v3298 = vcombine.high %v3296, %v3296
      %v3299 = vcombine.high %v2851, %v2851
      %v3301 = vunpack.c.l.s4 1983009808
      %v3302 = vunpack.c.0.s8 %v3301
      %v3303 = vlaneseq
      %v3304 = vshrl.u32 %v3303, 7
      %v3305 = vsub.s32 %v3302, %v3304
      %v3306 = vrot.slane %v2851, %v3305
      %v3308 = vunpack.c.l.s4 1983009808
      %v3309 = vunpack.c.0.s8 %v3308
      %v3310 = vlaneseq
      %v3311 = vshrl.u32 %v3310, 7
      %v3312 = vsub.s32 %v3309, %v3311
      %v3313 = vrot.slane %v3299, %v3312
      %v3314 = vcombine.high %v3306, %v3306
      %v3315 = vcombine.high %v3313, %v3313
      %v3316 = vcombine.high %v2852, %v2852
      %v3318 = vunpack.c.l.s4 1983009808
      %v3319 = vunpack.c.0.s8 %v3318
      %v3320 = vlaneseq
      %v3321 = vshrl.u32 %v3320, 7
      %v3322 = vsub.s32 %v3319, %v3321
      %v3323 = vrot.slane %v2852, %v3322
      %v3325 = vunpack.c.l.s4 1983009808
      %v3326 = vunpack.c.0.s8 %v3325
      %v3327 = vlaneseq
      %v3328 = vshrl.u32 %v3327, 7
      %v3329 = vsub.s32 %v3326, %v3328
      %v3330 = vrot.slane %v3316, %v3329
      %v3331 = vcombine.high %v3323, %v3323
      %v3332 = vcombine.high %v3330, %v3330
      %v3333 = vcombine.high %v2853, %v2853
      %v3335 = vunpack.c.l.s4 1983009808
      %v3336 = vunpack.c.0.s8 %v3335
      %v3337 = vlaneseq
      %v3338 = vshrl.u32 %v3337, 7
      %v3339 = vsub.s32 %v3336, %v3338
      %v3340 = vrot.slane %v2853, %v3339
      %v3342 = vunpack.c.l.s4 1983009808
      %v3343 = vunpack.c.0.s8 %v3342
      %v3344 = vlaneseq
      %v3345 = vshrl.u32 %v3344, 7
      %v3346 = vsub.s32 %v3343, %v3345
      %v3347 = vrot.slane %v3333, %v3346
      %v3348 = vcombine.high %v3340, %v3340
      %v3349 = vcombine.high %v3347, %v3347
      %v3350 = vcombine.high %v2854, %v2854
      %v3352 = vunpack.c.l.s4 1983009808
      %v3353 = vunpack.c.0.s8 %v3352
      %v3354 = vlaneseq
      %v3355 = vshrl.u32 %v3354, 7
      %v3356 = vsub.s32 %v3353, %v3355
      %v3357 = vrot.slane %v2854, %v3356
      %v3359 = vunpack.c.l.s4 1983009808
      %v3360 = vunpack.c.0.s8 %v3359
      %v3361 = vlaneseq
      %v3362 = vshrl.u32 %v3361, 7
      %v3363 = vsub.s32 %v3360, %v3362
      %v3364 = vrot.slane %v3350, %v3363
      %v3365 = vcombine.high %v3357, %v3357
      %v3366 = vcombine.high %v3364, %v3364
      %v3367 = vcombine.high %v2855, %v2855
      %v3369 = vunpack.c.l.s4 1983009808
      %v3370 = vunpack.c.0.s8 %v3369
      %v3371 = vlaneseq
      %v3372 = vshrl.u32 %v3371, 7
      %v3373 = vsub.s32 %v3370, %v3372
      %v3374 = vrot.slane %v2855, %v3373
      %v3376 = vunpack.c.l.s4 1983009808
      %v3377 = vunpack.c.0.s8 %v3376
      %v3378 = vlaneseq
      %v3379 = vshrl.u32 %v3378, 7
      %v3380 = vsub.s32 %v3377, %v3379
      %v3381 = vrot.slane %v3367, %v3380
      %v3382 = vcombine.high %v3374, %v3374
      %v3383 = vcombine.high %v3381, %v3381
      %v3384 = vcombine.high %v2856, %v2856
      %v3386 = vunpack.c.l.s4 1983009808
      %v3387 = vunpack.c.0.s8 %v3386
      %v3388 = vlaneseq
      %v3389 = vshrl.u32 %v3388, 7
      %v3390 = vsub.s32 %v3387, %v3389
      %v3391 = vrot.slane %v2856, %v3390
      %v3393 = vunpack.c.l.s4 1983009808
      %v3394 = vunpack.c.0.s8 %v3393
      %v3395 = vlaneseq
      %v3396 = vshrl.u32 %v3395, 7
      %v3397 = vsub.s32 %v3394, %v3396
      %v3398 = vrot.slane %v3384, %v3397
      %v3399 = vcombine.high %v3391, %v3391
      %v3400 = vcombine.high %v3398, %v3398
      %v3401 = vcombine.high %v2857, %v2857
      %v3403 = vunpack.c.l.s4 1983009808
      %v3404 = vunpack.c.0.s8 %v3403
      %v3405 = vlaneseq
      %v3406 = vshrl.u32 %v3405, 7
      %v3407 = vsub.s32 %v3404, %v3406
      %v3408 = vrot.slane %v2857, %v3407
      %v3410 = vunpack.c.l.s4 1983009808
      %v3411 = vunpack.c.0.s8 %v3410
      %v3412 = vlaneseq
      %v3413 = vshrl.u32 %v3412, 7
      %v3414 = vsub.s32 %v3411, %v3413
      %v3415 = vrot.slane %v3401, %v3414
      %v3416 = vcombine.high %v3408, %v3408
      %v3417 = vcombine.high %v3415, %v3415
      %v3418 = vcombine.high %v2858, %v2858
      %v3420 = vunpack.c.l.s4 1983009808
      %v3421 = vunpack.c.0.s8 %v3420
      %v3422 = vlaneseq
      %v3423 = vshrl.u32 %v3422, 7
      %v3424 = vsub.s32 %v3421, %v3423
      %v3425 = vrot.slane %v2858, %v3424
      %v3427 = vunpack.c.l.s4 1983009808
      %v3428 = vunpack.c.0.s8 %v3427
      %v3429 = vlaneseq
      %v3430 = vshrl.u32 %v3429, 7
      %v3431 = vsub.s32 %v3428, %v3430
      %v3432 = vrot.slane %v3418, %v3431
      %v3433 = vcombine.high %v3425, %v3425
      %v3434 = vcombine.high %v3432, %v3432
      %vm3563 = vcmask 91136
      %v3564 = vsel %vm3563, %v2898, -inf
      %v3565 = vrot.slane %v3564, 4
      %v3566 = vmax.f32 %v3564, %v3565
      %v3567 = vrot.slane %v3566, 2
      %v3568 = vmax.f32 %v3566, %v3567
      %v3569 = vrot.slane %v3568, 1
      %v3570 = vmax.f32 %v3568, %v3569
      %v3571 = vsel %vm3563, %v2906, -inf
      %v3572 = vrot.slane %v3571, 4
      %v3573 = vmax.f32 %v3571, %v3572
      %v3574 = vrot.slane %v3573, 2
      %v3575 = vmax.f32 %v3573, %v3574
      %v3576 = vrot.slane %v3575, 1
      %v3577 = vmax.f32 %v3575, %v3576
      %v3578 = vsel %vm3563, %v2905, -inf
      %v3579 = vrot.slane %v3578, 4
      %v3580 = vmax.f32 %v3578, %v3579
      %v3581 = vrot.slane %v3580, 2
      %v3582 = vmax.f32 %v3580, %v3581
      %v3583 = vrot.slane %v3582, 1
      %v3584 = vmax.f32 %v3582, %v3583
      %v3585 = vsel %vm3563, %v2907, -inf
      %v3586 = vrot.slane %v3585, 4
      %v3587 = vmax.f32 %v3585, %v3586
      %v3588 = vrot.slane %v3587, 2
      %v3589 = vmax.f32 %v3587, %v3588
      %v3590 = vrot.slane %v3589, 1
      %v3591 = vmax.f32 %v3589, %v3590
      %v3592 = vsel %vm3563, %v2915, -inf
      %v3593 = vrot.slane %v3592, 4
      %v3594 = vmax.f32 %v3592, %v3593
      %v3595 = vrot.slane %v3594, 2
      %v3596 = vmax.f32 %v3594, %v3595
      %v3597 = vrot.slane %v3596, 1
      %v3598 = vmax.f32 %v3596, %v3597
      %v3599 = vsel %vm3563, %v2923, -inf
      %v3600 = vrot.slane %v3599, 4
      %v3601 = vmax.f32 %v3599, %v3600
      %v3602 = vrot.slane %v3601, 2
      %v3603 = vmax.f32 %v3601, %v3602
      %v3604 = vrot.slane %v3603, 1
      %v3605 = vmax.f32 %v3603, %v3604
      %v3606 = vsel %vm3563, %v2922, -inf
      %v3607 = vrot.slane %v3606, 4
      %v3608 = vmax.f32 %v3606, %v3607
      %v3609 = vrot.slane %v3608, 2
      %v3610 = vmax.f32 %v3608, %v3609
      %v3611 = vrot.slane %v3610, 1
      %v3612 = vmax.f32 %v3610, %v3611
      %v3613 = vsel %vm3563, %v2924, -inf
      %v3614 = vrot.slane %v3613, 4
      %v3615 = vmax.f32 %v3613, %v3614
      %v3616 = vrot.slane %v3615, 2
      %v3617 = vmax.f32 %v3615, %v3616
      %v3618 = vrot.slane %v3617, 1
      %v3619 = vmax.f32 %v3617, %v3618
      %v3620 = vsel %vm3563, %v2932, -inf
      %v3621 = vrot.slane %v3620, 4
      %v3622 = vmax.f32 %v3620, %v3621
      %v3623 = vrot.slane %v3622, 2
      %v3624 = vmax.f32 %v3622, %v3623
      %v3625 = vrot.slane %v3624, 1
      %v3626 = vmax.f32 %v3624, %v3625
      %v3627 = vsel %vm3563, %v2940, -inf
      %v3628 = vrot.slane %v3627, 4
      %v3629 = vmax.f32 %v3627, %v3628
      %v3630 = vrot.slane %v3629, 2
      %v3631 = vmax.f32 %v3629, %v3630
      %v3632 = vrot.slane %v3631, 1
      %v3633 = vmax.f32 %v3631, %v3632
      %v3634 = vsel %vm3563, %v2939, -inf
      %v3635 = vrot.slane %v3634, 4
      %v3636 = vmax.f32 %v3634, %v3635
      %v3637 = vrot.slane %v3636, 2
      %v3638 = vmax.f32 %v3636, %v3637
      %v3639 = vrot.slane %v3638, 1
      %v3640 = vmax.f32 %v3638, %v3639
      %v3641 = vsel %vm3563, %v2941, -inf
      %v3642 = vrot.slane %v3641, 4
      %v3643 = vmax.f32 %v3641, %v3642
      %v3644 = vrot.slane %v3643, 2
      %v3645 = vmax.f32 %v3643, %v3644
      %v3646 = vrot.slane %v3645, 1
      %v3647 = vmax.f32 %v3645, %v3646
      %v3648 = vsel %vm3563, %v2949, -inf
      %v3649 = vrot.slane %v3648, 4
      %v3650 = vmax.f32 %v3648, %v3649
      %v3651 = vrot.slane %v3650, 2
      %v3652 = vmax.f32 %v3650, %v3651
      %v3653 = vrot.slane %v3652, 1
      %v3654 = vmax.f32 %v3652, %v3653
      %v3655 = vsel %vm3563, %v2957, -inf
      %v3656 = vrot.slane %v3655, 4
      %v3657 = vmax.f32 %v3655, %v3656
      %v3658 = vrot.slane %v3657, 2
      %v3659 = vmax.f32 %v3657, %v3658
      %v3660 = vrot.slane %v3659, 1
      %v3661 = vmax.f32 %v3659, %v3660
      %v3662 = vsel %vm3563, %v2956, -inf
      %v3663 = vrot.slane %v3662, 4
      %v3664 = vmax.f32 %v3662, %v3663
      %v3665 = vrot.slane %v3664, 2
      %v3666 = vmax.f32 %v3664, %v3665
      %v3667 = vrot.slane %v3666, 1
      %v3668 = vmax.f32 %v3666, %v3667
      %v3669 = vsel %vm3563, %v2958, -inf
      %v3670 = vrot.slane %v3669, 4
      %v3671 = vmax.f32 %v3669, %v3670
      %v3672 = vrot.slane %v3671, 2
      %v3673 = vmax.f32 %v3671, %v3672
      %v3674 = vrot.slane %v3673, 1
      %v3675 = vmax.f32 %v3673, %v3674
      %v3676 = vsel %vm3563, %v2966, -inf
      %v3677 = vrot.slane %v3676, 4
      %v3678 = vmax.f32 %v3676, %v3677
      %v3679 = vrot.slane %v3678, 2
      %v3680 = vmax.f32 %v3678, %v3679
      %v3681 = vrot.slane %v3680, 1
      %v3682 = vmax.f32 %v3680, %v3681
      %v3683 = vsel %vm3563, %v2974, -inf
      %v3684 = vrot.slane %v3683, 4
      %v3685 = vmax.f32 %v3683, %v3684
      %v3686 = vrot.slane %v3685, 2
      %v3687 = vmax.f32 %v3685, %v3686
      %v3688 = vrot.slane %v3687, 1
      %v3689 = vmax.f32 %v3687, %v3688
      %v3690 = vsel %vm3563, %v2973, -inf
      %v3691 = vrot.slane %v3690, 4
      %v3692 = vmax.f32 %v3690, %v3691
      %v3693 = vrot.slane %v3692, 2
      %v3694 = vmax.f32 %v3692, %v3693
      %v3695 = vrot.slane %v3694, 1
      %v3696 = vmax.f32 %v3694, %v3695
      %v3697 = vsel %vm3563, %v2975, -inf
      %v3698 = vrot.slane %v3697, 4
      %v3699 = vmax.f32 %v3697, %v3698
      %v3700 = vrot.slane %v3699, 2
      %v3701 = vmax.f32 %v3699, %v3700
      %v3702 = vrot.slane %v3701, 1
      %v3703 = vmax.f32 %v3701, %v3702
      %v3704 = vsel %vm3563, %v2983, -inf
      %v3705 = vrot.slane %v3704, 4
      %v3706 = vmax.f32 %v3704, %v3705
      %v3707 = vrot.slane %v3706, 2
      %v3708 = vmax.f32 %v3706, %v3707
      %v3709 = vrot.slane %v3708, 1
      %v3710 = vmax.f32 %v3708, %v3709
      %v3711 = vsel %vm3563, %v2991, -inf
      %v3712 = vrot.slane %v3711, 4
      %v3713 = vmax.f32 %v3711, %v3712
      %v3714 = vrot.slane %v3713, 2
      %v3715 = vmax.f32 %v3713, %v3714
      %v3716 = vrot.slane %v3715, 1
      %v3717 = vmax.f32 %v3715, %v3716
      %v3718 = vsel %vm3563, %v2990, -inf
      %v3719 = vrot.slane %v3718, 4
      %v3720 = vmax.f32 %v3718, %v3719
      %v3721 = vrot.slane %v3720, 2
      %v3722 = vmax.f32 %v3720, %v3721
      %v3723 = vrot.slane %v3722, 1
      %v3724 = vmax.f32 %v3722, %v3723
      %v3725 = vsel %vm3563, %v2992, -inf
      %v3726 = vrot.slane %v3725, 4
      %v3727 = vmax.f32 %v3725, %v3726
      %v3728 = vrot.slane %v3727, 2
      %v3729 = vmax.f32 %v3727, %v3728
      %v3730 = vrot.slane %v3729, 1
      %v3731 = vmax.f32 %v3729, %v3730
      %v3732 = vsel %vm3563, %v3000, -inf
      %v3733 = vrot.slane %v3732, 4
      %v3734 = vmax.f32 %v3732, %v3733
      %v3735 = vrot.slane %v3734, 2
      %v3736 = vmax.f32 %v3734, %v3735
      %v3737 = vrot.slane %v3736, 1
      %v3738 = vmax.f32 %v3736, %v3737
      %v3739 = vsel %vm3563, %v3008, -inf
      %v3740 = vrot.slane %v3739, 4
      %v3741 = vmax.f32 %v3739, %v3740
      %v3742 = vrot.slane %v3741, 2
      %v3743 = vmax.f32 %v3741, %v3742
      %v3744 = vrot.slane %v3743, 1
      %v3745 = vmax.f32 %v3743, %v3744
      %v3746 = vsel %vm3563, %v3007, -inf
      %v3747 = vrot.slane %v3746, 4
      %v3748 = vmax.f32 %v3746, %v3747
      %v3749 = vrot.slane %v3748, 2
      %v3750 = vmax.f32 %v3748, %v3749
      %v3751 = vrot.slane %v3750, 1
      %v3752 = vmax.f32 %v3750, %v3751
      %v3753 = vsel %vm3563, %v3009, -inf
      %v3754 = vrot.slane %v3753, 4
      %v3755 = vmax.f32 %v3753, %v3754
      %v3756 = vrot.slane %v3755, 2
      %v3757 = vmax.f32 %v3755, %v3756
      %v3758 = vrot.slane %v3757, 1
      %v3759 = vmax.f32 %v3757, %v3758
      %v3760 = vsel %vm3563, %v3017, -inf
      %v3761 = vrot.slane %v3760, 4
      %v3762 = vmax.f32 %v3760, %v3761
      %v3763 = vrot.slane %v3762, 2
      %v3764 = vmax.f32 %v3762, %v3763
      %v3765 = vrot.slane %v3764, 1
      %v3766 = vmax.f32 %v3764, %v3765
      %v3767 = vsel %vm3563, %v3025, -inf
      %v3768 = vrot.slane %v3767, 4
      %v3769 = vmax.f32 %v3767, %v3768
      %v3770 = vrot.slane %v3769, 2
      %v3771 = vmax.f32 %v3769, %v3770
      %v3772 = vrot.slane %v3771, 1
      %v3773 = vmax.f32 %v3771, %v3772
      %v3774 = vsel %vm3563, %v3024, -inf
      %v3775 = vrot.slane %v3774, 4
      %v3776 = vmax.f32 %v3774, %v3775
      %v3777 = vrot.slane %v3776, 2
      %v3778 = vmax.f32 %v3776, %v3777
      %v3779 = vrot.slane %v3778, 1
      %v3780 = vmax.f32 %v3778, %v3779
      %v3781 = vsel %vm3563, %v3026, -inf
      %v3782 = vrot.slane %v3781, 4
      %v3783 = vmax.f32 %v3781, %v3782
      %v3784 = vrot.slane %v3783, 2
      %v3785 = vmax.f32 %v3783, %v3784
      %v3786 = vrot.slane %v3785, 1
      %v3787 = vmax.f32 %v3785, %v3786
      %v3788 = vsel %vm3563, %v3034, -inf
      %v3789 = vrot.slane %v3788, 4
      %v3790 = vmax.f32 %v3788, %v3789
      %v3791 = vrot.slane %v3790, 2
      %v3792 = vmax.f32 %v3790, %v3791
      %v3793 = vrot.slane %v3792, 1
      %v3794 = vmax.f32 %v3792, %v3793
      %v3795 = vsel %vm3563, %v3042, -inf
      %v3796 = vrot.slane %v3795, 4
      %v3797 = vmax.f32 %v3795, %v3796
      %v3798 = vrot.slane %v3797, 2
      %v3799 = vmax.f32 %v3797, %v3798
      %v3800 = vrot.slane %v3799, 1
      %v3801 = vmax.f32 %v3799, %v3800
      %v3802 = vsel %vm3563, %v3041, -inf
      %v3803 = vrot.slane %v3802, 4
      %v3804 = vmax.f32 %v3802, %v3803
      %v3805 = vrot.slane %v3804, 2
      %v3806 = vmax.f32 %v3804, %v3805
      %v3807 = vrot.slane %v3806, 1
      %v3808 = vmax.f32 %v3806, %v3807
      %v3809 = vsel %vm3563, %v3043, -inf
      %v3810 = vrot.slane %v3809, 4
      %v3811 = vmax.f32 %v3809, %v3810
      %v3812 = vrot.slane %v3811, 2
      %v3813 = vmax.f32 %v3811, %v3812
      %v3814 = vrot.slane %v3813, 1
      %v3815 = vmax.f32 %v3813, %v3814
      %v3816 = vsel %vm3563, %v3051, -inf
      %v3817 = vrot.slane %v3816, 4
      %v3818 = vmax.f32 %v3816, %v3817
      %v3819 = vrot.slane %v3818, 2
      %v3820 = vmax.f32 %v3818, %v3819
      %v3821 = vrot.slane %v3820, 1
      %v3822 = vmax.f32 %v3820, %v3821
      %v3823 = vsel %vm3563, %v3059, -inf
      %v3824 = vrot.slane %v3823, 4
      %v3825 = vmax.f32 %v3823, %v3824
      %v3826 = vrot.slane %v3825, 2
      %v3827 = vmax.f32 %v3825, %v3826
      %v3828 = vrot.slane %v3827, 1
      %v3829 = vmax.f32 %v3827, %v3828
      %v3830 = vsel %vm3563, %v3058, -inf
      %v3831 = vrot.slane %v3830, 4
      %v3832 = vmax.f32 %v3830, %v3831
      %v3833 = vrot.slane %v3832, 2
      %v3834 = vmax.f32 %v3832, %v3833
      %v3835 = vrot.slane %v3834, 1
      %v3836 = vmax.f32 %v3834, %v3835
      %v3837 = vsel %vm3563, %v3060, -inf
      %v3838 = vrot.slane %v3837, 4
      %v3839 = vmax.f32 %v3837, %v3838
      %v3840 = vrot.slane %v3839, 2
      %v3841 = vmax.f32 %v3839, %v3840
      %v3842 = vrot.slane %v3841, 1
      %v3843 = vmax.f32 %v3841, %v3842
      %v3844 = vsel %vm3563, %v3068, -inf
      %v3845 = vrot.slane %v3844, 4
      %v3846 = vmax.f32 %v3844, %v3845
      %v3847 = vrot.slane %v3846, 2
      %v3848 = vmax.f32 %v3846, %v3847
      %v3849 = vrot.slane %v3848, 1
      %v3850 = vmax.f32 %v3848, %v3849
      %v3851 = vsel %vm3563, %v3076, -inf
      %v3852 = vrot.slane %v3851, 4
      %v3853 = vmax.f32 %v3851, %v3852
      %v3854 = vrot.slane %v3853, 2
      %v3855 = vmax.f32 %v3853, %v3854
      %v3856 = vrot.slane %v3855, 1
      %v3857 = vmax.f32 %v3855, %v3856
      %v3858 = vsel %vm3563, %v3075, -inf
      %v3859 = vrot.slane %v3858, 4
      %v3860 = vmax.f32 %v3858, %v3859
      %v3861 = vrot.slane %v3860, 2
      %v3862 = vmax.f32 %v3860, %v3861
      %v3863 = vrot.slane %v3862, 1
      %v3864 = vmax.f32 %v3862, %v3863
      %v3865 = vsel %vm3563, %v3077, -inf
      %v3866 = vrot.slane %v3865, 4
      %v3867 = vmax.f32 %v3865, %v3866
      %v3868 = vrot.slane %v3867, 2
      %v3869 = vmax.f32 %v3867, %v3868
      %v3870 = vrot.slane %v3869, 1
      %v3871 = vmax.f32 %v3869, %v3870
      %v3872 = vsel %vm3563, %v3085, -inf
      %v3873 = vrot.slane %v3872, 4
      %v3874 = vmax.f32 %v3872, %v3873
      %v3875 = vrot.slane %v3874, 2
      %v3876 = vmax.f32 %v3874, %v3875
      %v3877 = vrot.slane %v3876, 1
      %v3878 = vmax.f32 %v3876, %v3877
      %v3879 = vsel %vm3563, %v3093, -inf
      %v3880 = vrot.slane %v3879, 4
      %v3881 = vmax.f32 %v3879, %v3880
      %v3882 = vrot.slane %v3881, 2
      %v3883 = vmax.f32 %v3881, %v3882
      %v3884 = vrot.slane %v3883, 1
      %v3885 = vmax.f32 %v3883, %v3884
      %v3886 = vsel %vm3563, %v3092, -inf
      %v3887 = vrot.slane %v3886, 4
      %v3888 = vmax.f32 %v3886, %v3887
      %v3889 = vrot.slane %v3888, 2
      %v3890 = vmax.f32 %v3888, %v3889
      %v3891 = vrot.slane %v3890, 1
      %v3892 = vmax.f32 %v3890, %v3891
      %v3893 = vsel %vm3563, %v3094, -inf
      %v3894 = vrot.slane %v3893, 4
      %v3895 = vmax.f32 %v3893, %v3894
      %v3896 = vrot.slane %v3895, 2
      %v3897 = vmax.f32 %v3895, %v3896
      %v3898 = vrot.slane %v3897, 1
      %v3899 = vmax.f32 %v3897, %v3898
      %v3900 = vsel %vm3563, %v3102, -inf
      %v3901 = vrot.slane %v3900, 4
      %v3902 = vmax.f32 %v3900, %v3901
      %v3903 = vrot.slane %v3902, 2
      %v3904 = vmax.f32 %v3902, %v3903
      %v3905 = vrot.slane %v3904, 1
      %v3906 = vmax.f32 %v3904, %v3905
      %v3907 = vsel %vm3563, %v3110, -inf
      %v3908 = vrot.slane %v3907, 4
      %v3909 = vmax.f32 %v3907, %v3908
      %v3910 = vrot.slane %v3909, 2
      %v3911 = vmax.f32 %v3909, %v3910
      %v3912 = vrot.slane %v3911, 1
      %v3913 = vmax.f32 %v3911, %v3912
      %v3914 = vsel %vm3563, %v3109, -inf
      %v3915 = vrot.slane %v3914, 4
      %v3916 = vmax.f32 %v3914, %v3915
      %v3917 = vrot.slane %v3916, 2
      %v3918 = vmax.f32 %v3916, %v3917
      %v3919 = vrot.slane %v3918, 1
      %v3920 = vmax.f32 %v3918, %v3919
      %v3921 = vsel %vm3563, %v3111, -inf
      %v3922 = vrot.slane %v3921, 4
      %v3923 = vmax.f32 %v3921, %v3922
      %v3924 = vrot.slane %v3923, 2
      %v3925 = vmax.f32 %v3923, %v3924
      %v3926 = vrot.slane %v3925, 1
      %v3927 = vmax.f32 %v3925, %v3926
      %v3928 = vsel %vm3563, %v3119, -inf
      %v3929 = vrot.slane %v3928, 4
      %v3930 = vmax.f32 %v3928, %v3929
      %v3931 = vrot.slane %v3930, 2
      %v3932 = vmax.f32 %v3930, %v3931
      %v3933 = vrot.slane %v3932, 1
      %v3934 = vmax.f32 %v3932, %v3933
      %v3935 = vsel %vm3563, %v3127, -inf
      %v3936 = vrot.slane %v3935, 4
      %v3937 = vmax.f32 %v3935, %v3936
      %v3938 = vrot.slane %v3937, 2
      %v3939 = vmax.f32 %v3937, %v3938
      %v3940 = vrot.slane %v3939, 1
      %v3941 = vmax.f32 %v3939, %v3940
      %v3942 = vsel %vm3563, %v3126, -inf
      %v3943 = vrot.slane %v3942, 4
      %v3944 = vmax.f32 %v3942, %v3943
      %v3945 = vrot.slane %v3944, 2
      %v3946 = vmax.f32 %v3944, %v3945
      %v3947 = vrot.slane %v3946, 1
      %v3948 = vmax.f32 %v3946, %v3947
      %v3949 = vsel %vm3563, %v3128, -inf
      %v3950 = vrot.slane %v3949, 4
      %v3951 = vmax.f32 %v3949, %v3950
      %v3952 = vrot.slane %v3951, 2
      %v3953 = vmax.f32 %v3951, %v3952
      %v3954 = vrot.slane %v3953, 1
      %v3955 = vmax.f32 %v3953, %v3954
      %v3956 = vsel %vm3563, %v3136, -inf
      %v3957 = vrot.slane %v3956, 4
      %v3958 = vmax.f32 %v3956, %v3957
      %v3959 = vrot.slane %v3958, 2
      %v3960 = vmax.f32 %v3958, %v3959
      %v3961 = vrot.slane %v3960, 1
      %v3962 = vmax.f32 %v3960, %v3961
      %v3963 = vsel %vm3563, %v3144, -inf
      %v3964 = vrot.slane %v3963, 4
      %v3965 = vmax.f32 %v3963, %v3964
      %v3966 = vrot.slane %v3965, 2
      %v3967 = vmax.f32 %v3965, %v3966
      %v3968 = vrot.slane %v3967, 1
      %v3969 = vmax.f32 %v3967, %v3968
      %v3970 = vsel %vm3563, %v3143, -inf
      %v3971 = vrot.slane %v3970, 4
      %v3972 = vmax.f32 %v3970, %v3971
      %v3973 = vrot.slane %v3972, 2
      %v3974 = vmax.f32 %v3972, %v3973
      %v3975 = vrot.slane %v3974, 1
      %v3976 = vmax.f32 %v3974, %v3975
      %v3977 = vsel %vm3563, %v3145, -inf
      %v3978 = vrot.slane %v3977, 4
      %v3979 = vmax.f32 %v3977, %v3978
      %v3980 = vrot.slane %v3979, 2
      %v3981 = vmax.f32 %v3979, %v3980
      %v3982 = vrot.slane %v3981, 1
      %v3983 = vmax.f32 %v3981, %v3982
      %v3984 = vsel %vm3563, %v3153, -inf
      %v3985 = vrot.slane %v3984, 4
      %v3986 = vmax.f32 %v3984, %v3985
      %v3987 = vrot.slane %v3986, 2
      %v3988 = vmax.f32 %v3986, %v3987
      %v3989 = vrot.slane %v3988, 1
      %v3990 = vmax.f32 %v3988, %v3989
      %v3991 = vsel %vm3563, %v3161, -inf
      %v3992 = vrot.slane %v3991, 4
      %v3993 = vmax.f32 %v3991, %v3992
      %v3994 = vrot.slane %v3993, 2
      %v3995 = vmax.f32 %v3993, %v3994
      %v3996 = vrot.slane %v3995, 1
      %v3997 = vmax.f32 %v3995, %v3996
      %v3998 = vsel %vm3563, %v3160, -inf
      %v3999 = vrot.slane %v3998, 4
      %v4000 = vmax.f32 %v3998, %v3999
      %v4001 = vrot.slane %v4000, 2
      %v4002 = vmax.f32 %v4000, %v4001
      %v4003 = vrot.slane %v4002, 1
      %v4004 = vmax.f32 %v4002, %v4003
      %v4005 = vsel %vm3563, %v3162, -inf
      %v4006 = vrot.slane %v4005, 4
      %v4007 = vmax.f32 %v4005, %v4006
      %v4008 = vrot.slane %v4007, 2
      %v4009 = vmax.f32 %v4007, %v4008
      %v4010 = vrot.slane %v4009, 1
      %v4011 = vmax.f32 %v4009, %v4010
      %v4012 = vsel %vm3563, %v3170, -inf
      %v4013 = vrot.slane %v4012, 4
      %v4014 = vmax.f32 %v4012, %v4013
      %v4015 = vrot.slane %v4014, 2
      %v4016 = vmax.f32 %v4014, %v4015
      %v4017 = vrot.slane %v4016, 1
      %v4018 = vmax.f32 %v4016, %v4017
      %v4019 = vsel %vm3563, %v3178, -inf
      %v4020 = vrot.slane %v4019, 4
      %v4021 = vmax.f32 %v4019, %v4020
      %v4022 = vrot.slane %v4021, 2
      %v4023 = vmax.f32 %v4021, %v4022
      %v4024 = vrot.slane %v4023, 1
      %v4025 = vmax.f32 %v4023, %v4024
      %v4026 = vsel %vm3563, %v3177, -inf
      %v4027 = vrot.slane %v4026, 4
      %v4028 = vmax.f32 %v4026, %v4027
      %v4029 = vrot.slane %v4028, 2
      %v4030 = vmax.f32 %v4028, %v4029
      %v4031 = vrot.slane %v4030, 1
      %v4032 = vmax.f32 %v4030, %v4031
      %v4033 = vsel %vm3563, %v3179, -inf
      %v4034 = vrot.slane %v4033, 4
      %v4035 = vmax.f32 %v4033, %v4034
      %v4036 = vrot.slane %v4035, 2
      %v4037 = vmax.f32 %v4035, %v4036
      %v4038 = vrot.slane %v4037, 1
      %v4039 = vmax.f32 %v4037, %v4038
      %v4040 = vsel %vm3563, %v3187, -inf
      %v4041 = vrot.slane %v4040, 4
      %v4042 = vmax.f32 %v4040, %v4041
      %v4043 = vrot.slane %v4042, 2
      %v4044 = vmax.f32 %v4042, %v4043
      %v4045 = vrot.slane %v4044, 1
      %v4046 = vmax.f32 %v4044, %v4045
      %v4047 = vsel %vm3563, %v3195, -inf
      %v4048 = vrot.slane %v4047, 4
      %v4049 = vmax.f32 %v4047, %v4048
      %v4050 = vrot.slane %v4049, 2
      %v4051 = vmax.f32 %v4049, %v4050
      %v4052 = vrot.slane %v4051, 1
      %v4053 = vmax.f32 %v4051, %v4052
      %v4054 = vsel %vm3563, %v3194, -inf
      %v4055 = vrot.slane %v4054, 4
      %v4056 = vmax.f32 %v4054, %v4055
      %v4057 = vrot.slane %v4056, 2
      %v4058 = vmax.f32 %v4056, %v4057
      %v4059 = vrot.slane %v4058, 1
      %v4060 = vmax.f32 %v4058, %v4059
      %v4061 = vsel %vm3563, %v3196, -inf
      %v4062 = vrot.slane %v4061, 4
      %v4063 = vmax.f32 %v4061, %v4062
      %v4064 = vrot.slane %v4063, 2
      %v4065 = vmax.f32 %v4063, %v4064
      %v4066 = vrot.slane %v4065, 1
      %v4067 = vmax.f32 %v4065, %v4066
      %v4068 = vsel %vm3563, %v3204, -inf
      %v4069 = vrot.slane %v4068, 4
      %v4070 = vmax.f32 %v4068, %v4069
      %v4071 = vrot.slane %v4070, 2
      %v4072 = vmax.f32 %v4070, %v4071
      %v4073 = vrot.slane %v4072, 1
      %v4074 = vmax.f32 %v4072, %v4073
      %v4075 = vsel %vm3563, %v3212, -inf
      %v4076 = vrot.slane %v4075, 4
      %v4077 = vmax.f32 %v4075, %v4076
      %v4078 = vrot.slane %v4077, 2
      %v4079 = vmax.f32 %v4077, %v4078
      %v4080 = vrot.slane %v4079, 1
      %v4081 = vmax.f32 %v4079, %v4080
      %v4082 = vsel %vm3563, %v3211, -inf
      %v4083 = vrot.slane %v4082, 4
      %v4084 = vmax.f32 %v4082, %v4083
      %v4085 = vrot.slane %v4084, 2
      %v4086 = vmax.f32 %v4084, %v4085
      %v4087 = vrot.slane %v4086, 1
      %v4088 = vmax.f32 %v4086, %v4087
      %v4089 = vsel %vm3563, %v3213, -inf
      %v4090 = vrot.slane %v4089, 4
      %v4091 = vmax.f32 %v4089, %v4090
      %v4092 = vrot.slane %v4091, 2
      %v4093 = vmax.f32 %v4091, %v4092
      %v4094 = vrot.slane %v4093, 1
      %v4095 = vmax.f32 %v4093, %v4094
      %v4096 = vsel %vm3563, %v3221, -inf
      %v4097 = vrot.slane %v4096, 4
      %v4098 = vmax.f32 %v4096, %v4097
      %v4099 = vrot.slane %v4098, 2
      %v4100 = vmax.f32 %v4098, %v4099
      %v4101 = vrot.slane %v4100, 1
      %v4102 = vmax.f32 %v4100, %v4101
      %v4103 = vsel %vm3563, %v3229, -inf
      %v4104 = vrot.slane %v4103, 4
      %v4105 = vmax.f32 %v4103, %v4104
      %v4106 = vrot.slane %v4105, 2
      %v4107 = vmax.f32 %v4105, %v4106
      %v4108 = vrot.slane %v4107, 1
      %v4109 = vmax.f32 %v4107, %v4108
      %v4110 = vsel %vm3563, %v3228, -inf
      %v4111 = vrot.slane %v4110, 4
      %v4112 = vmax.f32 %v4110, %v4111
      %v4113 = vrot.slane %v4112, 2
      %v4114 = vmax.f32 %v4112, %v4113
      %v4115 = vrot.slane %v4114, 1
      %v4116 = vmax.f32 %v4114, %v4115
      %v4117 = vsel %vm3563, %v3230, -inf
      %v4118 = vrot.slane %v4117, 4
      %v4119 = vmax.f32 %v4117, %v4118
      %v4120 = vrot.slane %v4119, 2
      %v4121 = vmax.f32 %v4119, %v4120
      %v4122 = vrot.slane %v4121, 1
      %v4123 = vmax.f32 %v4121, %v4122
      %v4124 = vsel %vm3563, %v3238, -inf
      %v4125 = vrot.slane %v4124, 4
      %v4126 = vmax.f32 %v4124, %v4125
      %v4127 = vrot.slane %v4126, 2
      %v4128 = vmax.f32 %v4126, %v4127
      %v4129 = vrot.slane %v4128, 1
      %v4130 = vmax.f32 %v4128, %v4129
      %v4131 = vsel %vm3563, %v3246, -inf
      %v4132 = vrot.slane %v4131, 4
      %v4133 = vmax.f32 %v4131, %v4132
      %v4134 = vrot.slane %v4133, 2
      %v4135 = vmax.f32 %v4133, %v4134
      %v4136 = vrot.slane %v4135, 1
      %v4137 = vmax.f32 %v4135, %v4136
      %v4138 = vsel %vm3563, %v3245, -inf
      %v4139 = vrot.slane %v4138, 4
      %v4140 = vmax.f32 %v4138, %v4139
      %v4141 = vrot.slane %v4140, 2
      %v4142 = vmax.f32 %v4140, %v4141
      %v4143 = vrot.slane %v4142, 1
      %v4144 = vmax.f32 %v4142, %v4143
      %v4145 = vsel %vm3563, %v3247, -inf
      %v4146 = vrot.slane %v4145, 4
      %v4147 = vmax.f32 %v4145, %v4146
      %v4148 = vrot.slane %v4147, 2
      %v4149 = vmax.f32 %v4147, %v4148
      %v4150 = vrot.slane %v4149, 1
      %v4151 = vmax.f32 %v4149, %v4150
      %v4152 = vsel %vm3563, %v3255, -inf
      %v4153 = vrot.slane %v4152, 4
      %v4154 = vmax.f32 %v4152, %v4153
      %v4155 = vrot.slane %v4154, 2
      %v4156 = vmax.f32 %v4154, %v4155
      %v4157 = vrot.slane %v4156, 1
      %v4158 = vmax.f32 %v4156, %v4157
      %v4159 = vsel %vm3563, %v3263, -inf
      %v4160 = vrot.slane %v4159, 4
      %v4161 = vmax.f32 %v4159, %v4160
      %v4162 = vrot.slane %v4161, 2
      %v4163 = vmax.f32 %v4161, %v4162
      %v4164 = vrot.slane %v4163, 1
      %v4165 = vmax.f32 %v4163, %v4164
      %v4166 = vsel %vm3563, %v3262, -inf
      %v4167 = vrot.slane %v4166, 4
      %v4168 = vmax.f32 %v4166, %v4167
      %v4169 = vrot.slane %v4168, 2
      %v4170 = vmax.f32 %v4168, %v4169
      %v4171 = vrot.slane %v4170, 1
      %v4172 = vmax.f32 %v4170, %v4171
      %v4173 = vsel %vm3563, %v3264, -inf
      %v4174 = vrot.slane %v4173, 4
      %v4175 = vmax.f32 %v4173, %v4174
      %v4176 = vrot.slane %v4175, 2
      %v4177 = vmax.f32 %v4175, %v4176
      %v4178 = vrot.slane %v4177, 1
      %v4179 = vmax.f32 %v4177, %v4178
      %v4180 = vsel %vm3563, %v3272, -inf
      %v4181 = vrot.slane %v4180, 4
      %v4182 = vmax.f32 %v4180, %v4181
      %v4183 = vrot.slane %v4182, 2
      %v4184 = vmax.f32 %v4182, %v4183
      %v4185 = vrot.slane %v4184, 1
      %v4186 = vmax.f32 %v4184, %v4185
      %v4187 = vsel %vm3563, %v3280, -inf
      %v4188 = vrot.slane %v4187, 4
      %v4189 = vmax.f32 %v4187, %v4188
      %v4190 = vrot.slane %v4189, 2
      %v4191 = vmax.f32 %v4189, %v4190
      %v4192 = vrot.slane %v4191, 1
      %v4193 = vmax.f32 %v4191, %v4192
      %v4194 = vsel %vm3563, %v3279, -inf
      %v4195 = vrot.slane %v4194, 4
      %v4196 = vmax.f32 %v4194, %v4195
      %v4197 = vrot.slane %v4196, 2
      %v4198 = vmax.f32 %v4196, %v4197
      %v4199 = vrot.slane %v4198, 1
      %v4200 = vmax.f32 %v4198, %v4199
      %v4201 = vsel %vm3563, %v3281, -inf
      %v4202 = vrot.slane %v4201, 4
      %v4203 = vmax.f32 %v4201, %v4202
      %v4204 = vrot.slane %v4203, 2
      %v4205 = vmax.f32 %v4203, %v4204
      %v4206 = vrot.slane %v4205, 1
      %v4207 = vmax.f32 %v4205, %v4206
      %v4208 = vsel %vm3563, %v3289, -inf
      %v4209 = vrot.slane %v4208, 4
      %v4210 = vmax.f32 %v4208, %v4209
      %v4211 = vrot.slane %v4210, 2
      %v4212 = vmax.f32 %v4210, %v4211
      %v4213 = vrot.slane %v4212, 1
      %v4214 = vmax.f32 %v4212, %v4213
      %v4215 = vsel %vm3563, %v3297, -inf
      %v4216 = vrot.slane %v4215, 4
      %v4217 = vmax.f32 %v4215, %v4216
      %v4218 = vrot.slane %v4217, 2
      %v4219 = vmax.f32 %v4217, %v4218
      %v4220 = vrot.slane %v4219, 1
      %v4221 = vmax.f32 %v4219, %v4220
      %v4222 = vsel %vm3563, %v3296, -inf
      %v4223 = vrot.slane %v4222, 4
      %v4224 = vmax.f32 %v4222, %v4223
      %v4225 = vrot.slane %v4224, 2
      %v4226 = vmax.f32 %v4224, %v4225
      %v4227 = vrot.slane %v4226, 1
      %v4228 = vmax.f32 %v4226, %v4227
      %v4229 = vsel %vm3563, %v3298, -inf
      %v4230 = vrot.slane %v4229, 4
      %v4231 = vmax.f32 %v4229, %v4230
      %v4232 = vrot.slane %v4231, 2
      %v4233 = vmax.f32 %v4231, %v4232
      %v4234 = vrot.slane %v4233, 1
      %v4235 = vmax.f32 %v4233, %v4234
      %v4236 = vsel %vm3563, %v3306, -inf
      %v4237 = vrot.slane %v4236, 4
      %v4238 = vmax.f32 %v4236, %v4237
      %v4239 = vrot.slane %v4238, 2
      %v4240 = vmax.f32 %v4238, %v4239
      %v4241 = vrot.slane %v4240, 1
      %v4242 = vmax.f32 %v4240, %v4241
      %v4243 = vsel %vm3563, %v3314, -inf
      %v4244 = vrot.slane %v4243, 4
      %v4245 = vmax.f32 %v4243, %v4244
      %v4246 = vrot.slane %v4245, 2
      %v4247 = vmax.f32 %v4245, %v4246
      %v4248 = vrot.slane %v4247, 1
      %v4249 = vmax.f32 %v4247, %v4248
      %v4250 = vsel %vm3563, %v3313, -inf
      %v4251 = vrot.slane %v4250, 4
      %v4252 = vmax.f32 %v4250, %v4251
      %v4253 = vrot.slane %v4252, 2
      %v4254 = vmax.f32 %v4252, %v4253
      %v4255 = vrot.slane %v4254, 1
      %v4256 = vmax.f32 %v4254, %v4255
      %v4257 = vsel %vm3563, %v3315, -inf
      %v4258 = vrot.slane %v4257, 4
      %v4259 = vmax.f32 %v4257, %v4258
      %v4260 = vrot.slane %v4259, 2
      %v4261 = vmax.f32 %v4259, %v4260
      %v4262 = vrot.slane %v4261, 1
      %v4263 = vmax.f32 %v4261, %v4262
      %v4264 = vsel %vm3563, %v3323, -inf
      %v4265 = vrot.slane %v4264, 4
      %v4266 = vmax.f32 %v4264, %v4265
      %v4267 = vrot.slane %v4266, 2
      %v4268 = vmax.f32 %v4266, %v4267
      %v4269 = vrot.slane %v4268, 1
      %v4270 = vmax.f32 %v4268, %v4269
      %v4271 = vsel %vm3563, %v3331, -inf
      %v4272 = vrot.slane %v4271, 4
      %v4273 = vmax.f32 %v4271, %v4272
      %v4274 = vrot.slane %v4273, 2
      %v4275 = vmax.f32 %v4273, %v4274
      %v4276 = vrot.slane %v4275, 1
      %v4277 = vmax.f32 %v4275, %v4276
      %v4278 = vsel %vm3563, %v3330, -inf
      %v4279 = vrot.slane %v4278, 4
      %v4280 = vmax.f32 %v4278, %v4279
      %v4281 = vrot.slane %v4280, 2
      %v4282 = vmax.f32 %v4280, %v4281
      %v4283 = vrot.slane %v4282, 1
      %v4284 = vmax.f32 %v4282, %v4283
      %v4285 = vsel %vm3563, %v3332, -inf
      %v4286 = vrot.slane %v4285, 4
      %v4287 = vmax.f32 %v4285, %v4286
      %v4288 = vrot.slane %v4287, 2
      %v4289 = vmax.f32 %v4287, %v4288
      %v4290 = vrot.slane %v4289, 1
      %v4291 = vmax.f32 %v4289, %v4290
      %v4292 = vsel %vm3563, %v3340, -inf
      %v4293 = vrot.slane %v4292, 4
      %v4294 = vmax.f32 %v4292, %v4293
      %v4295 = vrot.slane %v4294, 2
      %v4296 = vmax.f32 %v4294, %v4295
      %v4297 = vrot.slane %v4296, 1
      %v4298 = vmax.f32 %v4296, %v4297
      %v4299 = vsel %vm3563, %v3348, -inf
      %v4300 = vrot.slane %v4299, 4
      %v4301 = vmax.f32 %v4299, %v4300
      %v4302 = vrot.slane %v4301, 2
      %v4303 = vmax.f32 %v4301, %v4302
      %v4304 = vrot.slane %v4303, 1
      %v4305 = vmax.f32 %v4303, %v4304
      %v4306 = vsel %vm3563, %v3347, -inf
      %v4307 = vrot.slane %v4306, 4
      %v4308 = vmax.f32 %v4306, %v4307
      %v4309 = vrot.slane %v4308, 2
      %v4310 = vmax.f32 %v4308, %v4309
      %v4311 = vrot.slane %v4310, 1
      %v4312 = vmax.f32 %v4310, %v4311
      %v4313 = vsel %vm3563, %v3349, -inf
      %v4314 = vrot.slane %v4313, 4
      %v4315 = vmax.f32 %v4313, %v4314
      %v4316 = vrot.slane %v4315, 2
      %v4317 = vmax.f32 %v4315, %v4316
      %v4318 = vrot.slane %v4317, 1
      %v4319 = vmax.f32 %v4317, %v4318
      %v4320 = vsel %vm3563, %v3357, -inf
      %v4321 = vrot.slane %v4320, 4
      %v4322 = vmax.f32 %v4320, %v4321
      %v4323 = vrot.slane %v4322, 2
      %v4324 = vmax.f32 %v4322, %v4323
      %v4325 = vrot.slane %v4324, 1
      %v4326 = vmax.f32 %v4324, %v4325
      %v4327 = vsel %vm3563, %v3365, -inf
      %v4328 = vrot.slane %v4327, 4
      %v4329 = vmax.f32 %v4327, %v4328
      %v4330 = vrot.slane %v4329, 2
      %v4331 = vmax.f32 %v4329, %v4330
      %v4332 = vrot.slane %v4331, 1
      %v4333 = vmax.f32 %v4331, %v4332
      %v4334 = vsel %vm3563, %v3364, -inf
      %v4335 = vrot.slane %v4334, 4
      %v4336 = vmax.f32 %v4334, %v4335
      %v4337 = vrot.slane %v4336, 2
      %v4338 = vmax.f32 %v4336, %v4337
      %v4339 = vrot.slane %v4338, 1
      %v4340 = vmax.f32 %v4338, %v4339
      %v4341 = vsel %vm3563, %v3366, -inf
      %v4342 = vrot.slane %v4341, 4
      %v4343 = vmax.f32 %v4341, %v4342
      %v4344 = vrot.slane %v4343, 2
      %v4345 = vmax.f32 %v4343, %v4344
      %v4346 = vrot.slane %v4345, 1
      %v4347 = vmax.f32 %v4345, %v4346
      %v4348 = vsel %vm3563, %v3374, -inf
      %v4349 = vrot.slane %v4348, 4
      %v4350 = vmax.f32 %v4348, %v4349
      %v4351 = vrot.slane %v4350, 2
      %v4352 = vmax.f32 %v4350, %v4351
      %v4353 = vrot.slane %v4352, 1
      %v4354 = vmax.f32 %v4352, %v4353
      %v4355 = vsel %vm3563, %v3382, -inf
      %v4356 = vrot.slane %v4355, 4
      %v4357 = vmax.f32 %v4355, %v4356
      %v4358 = vrot.slane %v4357, 2
      %v4359 = vmax.f32 %v4357, %v4358
      %v4360 = vrot.slane %v4359, 1
      %v4361 = vmax.f32 %v4359, %v4360
      %v4362 = vsel %vm3563, %v3381, -inf
      %v4363 = vrot.slane %v4362, 4
      %v4364 = vmax.f32 %v4362, %v4363
      %v4365 = vrot.slane %v4364, 2
      %v4366 = vmax.f32 %v4364, %v4365
      %v4367 = vrot.slane %v4366, 1
      %v4368 = vmax.f32 %v4366, %v4367
      %v4369 = vsel %vm3563, %v3383, -inf
      %v4370 = vrot.slane %v4369, 4
      %v4371 = vmax.f32 %v4369, %v4370
      %v4372 = vrot.slane %v4371, 2
      %v4373 = vmax.f32 %v4371, %v4372
      %v4374 = vrot.slane %v4373, 1
      %v4375 = vmax.f32 %v4373, %v4374
      %v4376 = vsel %vm3563, %v3391, -inf
      %v4377 = vrot.slane %v4376, 4
      %v4378 = vmax.f32 %v4376, %v4377
      %v4379 = vrot.slane %v4378, 2
      %v4380 = vmax.f32 %v4378, %v4379
      %v4381 = vrot.slane %v4380, 1
      %v4382 = vmax.f32 %v4380, %v4381
      %v4383 = vsel %vm3563, %v3399, -inf
      %v4384 = vrot.slane %v4383, 4
      %v4385 = vmax.f32 %v4383, %v4384
      %v4386 = vrot.slane %v4385, 2
      %v4387 = vmax.f32 %v4385, %v4386
      %v4388 = vrot.slane %v4387, 1
      %v4389 = vmax.f32 %v4387, %v4388
      %v4390 = vsel %vm3563, %v3398, -inf
      %v4391 = vrot.slane %v4390, 4
      %v4392 = vmax.f32 %v4390, %v4391
      %v4393 = vrot.slane %v4392, 2
      %v4394 = vmax.f32 %v4392, %v4393
      %v4395 = vrot.slane %v4394, 1
      %v4396 = vmax.f32 %v4394, %v4395
      %v4397 = vsel %vm3563, %v3400, -inf
      %v4398 = vrot.slane %v4397, 4
      %v4399 = vmax.f32 %v4397, %v4398
      %v4400 = vrot.slane %v4399, 2
      %v4401 = vmax.f32 %v4399, %v4400
      %v4402 = vrot.slane %v4401, 1
      %v4403 = vmax.f32 %v4401, %v4402
      %v4404 = vsel %vm3563, %v3408, -inf
      %v4405 = vrot.slane %v4404, 4
      %v4406 = vmax.f32 %v4404, %v4405
      %v4407 = vrot.slane %v4406, 2
      %v4408 = vmax.f32 %v4406, %v4407
      %v4409 = vrot.slane %v4408, 1
      %v4410 = vmax.f32 %v4408, %v4409
      %v4411 = vsel %vm3563, %v3416, -inf
      %v4412 = vrot.slane %v4411, 4
      %v4413 = vmax.f32 %v4411, %v4412
      %v4414 = vrot.slane %v4413, 2
      %v4415 = vmax.f32 %v4413, %v4414
      %v4416 = vrot.slane %v4415, 1
      %v4417 = vmax.f32 %v4415, %v4416
      %v4418 = vsel %vm3563, %v3415, -inf
      %v4419 = vrot.slane %v4418, 4
      %v4420 = vmax.f32 %v4418, %v4419
      %v4421 = vrot.slane %v4420, 2
      %v4422 = vmax.f32 %v4420, %v4421
      %v4423 = vrot.slane %v4422, 1
      %v4424 = vmax.f32 %v4422, %v4423
      %v4425 = vsel %vm3563, %v3417, -inf
      %v4426 = vrot.slane %v4425, 4
      %v4427 = vmax.f32 %v4425, %v4426
      %v4428 = vrot.slane %v4427, 2
      %v4429 = vmax.f32 %v4427, %v4428
      %v4430 = vrot.slane %v4429, 1
      %v4431 = vmax.f32 %v4429, %v4430
      %v4432 = vsel %vm3563, %v3425, -inf
      %v4433 = vrot.slane %v4432, 4
      %v4434 = vmax.f32 %v4432, %v4433
      %v4435 = vrot.slane %v4434, 2
      %v4436 = vmax.f32 %v4434, %v4435
      %v4437 = vrot.slane %v4436, 1
      %v4438 = vmax.f32 %v4436, %v4437
      %v4439 = vsel %vm3563, %v3433, -inf
      %v4440 = vrot.slane %v4439, 4
      %v4441 = vmax.f32 %v4439, %v4440
      %v4442 = vrot.slane %v4441, 2
      %v4443 = vmax.f32 %v4441, %v4442
      %v4444 = vrot.slane %v4443, 1
      %v4445 = vmax.f32 %v4443, %v4444
      %v4446 = vsel %vm3563, %v3432, -inf
      %v4447 = vrot.slane %v4446, 4
      %v4448 = vmax.f32 %v4446, %v4447
      %v4449 = vrot.slane %v4448, 2
      %v4450 = vmax.f32 %v4448, %v4449
      %v4451 = vrot.slane %v4450, 1
      %v4452 = vmax.f32 %v4450, %v4451
      %v4453 = vsel %vm3563, %v3434, -inf
      %v4454 = vrot.slane %v4453, 4
      %v4455 = vmax.f32 %v4453, %v4454
      %v4456 = vrot.slane %v4455, 2
      %v4457 = vmax.f32 %v4455, %v4456
      %v4458 = vrot.slane %v4457, 1
      %v4459 = vmax.f32 %v4457, %v4458
      %vm4460 = vcmask 97280
      %v4461 = vsel %vm4460, %v3570, -inf
      %v4462 = vsel %vm4460, %v3626, -inf
      %v4463 = vmax.f32 %v4461, %v4462
      %v4464 = vsel %vm4460, %v3577, -inf
      %v4465 = vsel %vm4460, %v3633, -inf
      %v4466 = vmax.f32 %v4464, %v4465
      %v4467 = vsel %vm4460, %v3584, -inf
      %v4468 = vsel %vm4460, %v3640, -inf
      %v4469 = vmax.f32 %v4467, %v4468
      %v4470 = vsel %vm4460, %v3591, -inf
      %v4471 = vsel %vm4460, %v3647, -inf
      %v4472 = vmax.f32 %v4470, %v4471
      %v4473 = vsel %vm4460, %v3598, -inf
      %v4474 = vsel %vm4460, %v3654, -inf
      %v4475 = vmax.f32 %v4473, %v4474
      %v4476 = vsel %vm4460, %v3605, -inf
      %v4477 = vsel %vm4460, %v3661, -inf
      %v4478 = vmax.f32 %v4476, %v4477
      %v4479 = vsel %vm4460, %v3612, -inf
      %v4480 = vsel %vm4460, %v3668, -inf
      %v4481 = vmax.f32 %v4479, %v4480
      %v4482 = vsel %vm4460, %v3619, -inf
      %v4483 = vsel %vm4460, %v3675, -inf
      %v4484 = vmax.f32 %v4482, %v4483
      %v4485 = vsel %vm4460, %v3682, -inf
      %v4486 = vsel %vm4460, %v3738, -inf
      %v4487 = vmax.f32 %v4485, %v4486
      %v4488 = vsel %vm4460, %v3689, -inf
      %v4489 = vsel %vm4460, %v3745, -inf
      %v4490 = vmax.f32 %v4488, %v4489
      %v4491 = vsel %vm4460, %v3696, -inf
      %v4492 = vsel %vm4460, %v3752, -inf
      %v4493 = vmax.f32 %v4491, %v4492
      %v4494 = vsel %vm4460, %v3703, -inf
      %v4495 = vsel %vm4460, %v3759, -inf
      %v4496 = vmax.f32 %v4494, %v4495
      %v4497 = vsel %vm4460, %v3710, -inf
      %v4498 = vsel %vm4460, %v3766, -inf
      %v4499 = vmax.f32 %v4497, %v4498
      %v4500 = vsel %vm4460, %v3717, -inf
      %v4501 = vsel %vm4460, %v3773, -inf
      %v4502 = vmax.f32 %v4500, %v4501
      %v4503 = vsel %vm4460, %v3724, -inf
      %v4504 = vsel %vm4460, %v3780, -inf
      %v4505 = vmax.f32 %v4503, %v4504
      %v4506 = vsel %vm4460, %v3731, -inf
      %v4507 = vsel %vm4460, %v3787, -inf
      %v4508 = vmax.f32 %v4506, %v4507
      %v4509 = vsel %vm4460, %v3794, -inf
      %v4510 = vsel %vm4460, %v3850, -inf
      %v4511 = vmax.f32 %v4509, %v4510
      %v4512 = vsel %vm4460, %v3801, -inf
      %v4513 = vsel %vm4460, %v3857, -inf
      %v4514 = vmax.f32 %v4512, %v4513
      %v4515 = vsel %vm4460, %v3808, -inf
      %v4516 = vsel %vm4460, %v3864, -inf
      %v4517 = vmax.f32 %v4515, %v4516
      %v4518 = vsel %vm4460, %v3815, -inf
      %v4519 = vsel %vm4460, %v3871, -inf
      %v4520 = vmax.f32 %v4518, %v4519
      %v4521 = vsel %vm4460, %v3822, -inf
      %v4522 = vsel %vm4460, %v3878, -inf
      %v4523 = vmax.f32 %v4521, %v4522
      %v4524 = vsel %vm4460, %v3829, -inf
      %v4525 = vsel %vm4460, %v3885, -inf
      %v4526 = vmax.f32 %v4524, %v4525
      %v4527 = vsel %vm4460, %v3836, -inf
      %v4528 = vsel %vm4460, %v3892, -inf
      %v4529 = vmax.f32 %v4527, %v4528
      %v4530 = vsel %vm4460, %v3843, -inf
      %v4531 = vsel %vm4460, %v3899, -inf
      %v4532 = vmax.f32 %v4530, %v4531
      %v4533 = vsel %vm4460, %v3906, -inf
      %v4534 = vsel %vm4460, %v3962, -inf
      %v4535 = vmax.f32 %v4533, %v4534
      %v4536 = vsel %vm4460, %v3913, -inf
      %v4537 = vsel %vm4460, %v3969, -inf
      %v4538 = vmax.f32 %v4536, %v4537
      %v4539 = vsel %vm4460, %v3920, -inf
      %v4540 = vsel %vm4460, %v3976, -inf
      %v4541 = vmax.f32 %v4539, %v4540
      %v4542 = vsel %vm4460, %v3927, -inf
      %v4543 = vsel %vm4460, %v3983, -inf
      %v4544 = vmax.f32 %v4542, %v4543
      %v4545 = vsel %vm4460, %v3934, -inf
      %v4546 = vsel %vm4460, %v3990, -inf
      %v4547 = vmax.f32 %v4545, %v4546
      %v4548 = vsel %vm4460, %v3941, -inf
      %v4549 = vsel %vm4460, %v3997, -inf
      %v4550 = vmax.f32 %v4548, %v4549
      %v4551 = vsel %vm4460, %v3948, -inf
      %v4552 = vsel %vm4460, %v4004, -inf
      %v4553 = vmax.f32 %v4551, %v4552
      %v4554 = vsel %vm4460, %v3955, -inf
      %v4555 = vsel %vm4460, %v4011, -inf
      %v4556 = vmax.f32 %v4554, %v4555
      %v4557 = vsel %vm4460, %v4018, -inf
      %v4558 = vsel %vm4460, %v4074, -inf
      %v4559 = vmax.f32 %v4557, %v4558
      %v4560 = vsel %vm4460, %v4025, -inf
      %v4561 = vsel %vm4460, %v4081, -inf
      %v4562 = vmax.f32 %v4560, %v4561
      %v4563 = vsel %vm4460, %v4032, -inf
      %v4564 = vsel %vm4460, %v4088, -inf
      %v4565 = vmax.f32 %v4563, %v4564
      %v4566 = vsel %vm4460, %v4039, -inf
      %v4567 = vsel %vm4460, %v4095, -inf
      %v4568 = vmax.f32 %v4566, %v4567
      %v4569 = vsel %vm4460, %v4046, -inf
      %v4570 = vsel %vm4460, %v4102, -inf
      %v4571 = vmax.f32 %v4569, %v4570
      %v4572 = vsel %vm4460, %v4053, -inf
      %v4573 = vsel %vm4460, %v4109, -inf
      %v4574 = vmax.f32 %v4572, %v4573
      %v4575 = vsel %vm4460, %v4060, -inf
      %v4576 = vsel %vm4460, %v4116, -inf
      %v4577 = vmax.f32 %v4575, %v4576
      %v4578 = vsel %vm4460, %v4067, -inf
      %v4579 = vsel %vm4460, %v4123, -inf
      %v4580 = vmax.f32 %v4578, %v4579
      %v4581 = vsel %vm4460, %v4130, -inf
      %v4582 = vsel %vm4460, %v4186, -inf
      %v4583 = vmax.f32 %v4581, %v4582
      %v4584 = vsel %vm4460, %v4137, -inf
      %v4585 = vsel %vm4460, %v4193, -inf
      %v4586 = vmax.f32 %v4584, %v4585
      %v4587 = vsel %vm4460, %v4144, -inf
      %v4588 = vsel %vm4460, %v4200, -inf
      %v4589 = vmax.f32 %v4587, %v4588
      %v4590 = vsel %vm4460, %v4151, -inf
      %v4591 = vsel %vm4460, %v4207, -inf
      %v4592 = vmax.f32 %v4590, %v4591
      %v4593 = vsel %vm4460, %v4158, -inf
      %v4594 = vsel %vm4460, %v4214, -inf
      %v4595 = vmax.f32 %v4593, %v4594
      %v4596 = vsel %vm4460, %v4165, -inf
      %v4597 = vsel %vm4460, %v4221, -inf
      %v4598 = vmax.f32 %v4596, %v4597
      %v4599 = vsel %vm4460, %v4172, -inf
      %v4600 = vsel %vm4460, %v4228, -inf
      %v4601 = vmax.f32 %v4599, %v4600
      %v4602 = vsel %vm4460, %v4179, -inf
      %v4603 = vsel %vm4460, %v4235, -inf
      %v4604 = vmax.f32 %v4602, %v4603
      %v4605 = vsel %vm4460, %v4242, -inf
      %v4606 = vsel %vm4460, %v4298, -inf
      %v4607 = vmax.f32 %v4605, %v4606
      %v4608 = vsel %vm4460, %v4249, -inf
      %v4609 = vsel %vm4460, %v4305, -inf
      %v4610 = vmax.f32 %v4608, %v4609
      %v4611 = vsel %vm4460, %v4256, -inf
      %v4612 = vsel %vm4460, %v4312, -inf
      %v4613 = vmax.f32 %v4611, %v4612
      %v4614 = vsel %vm4460, %v4263, -inf
      %v4615 = vsel %vm4460, %v4319, -inf
      %v4616 = vmax.f32 %v4614, %v4615
      %v4617 = vsel %vm4460, %v4270, -inf
      %v4618 = vsel %vm4460, %v4326, -inf
      %v4619 = vmax.f32 %v4617, %v4618
      %v4620 = vsel %vm4460, %v4277, -inf
      %v4621 = vsel %vm4460, %v4333, -inf
      %v4622 = vmax.f32 %v4620, %v4621
      %v4623 = vsel %vm4460, %v4284, -inf
      %v4624 = vsel %vm4460, %v4340, -inf
      %v4625 = vmax.f32 %v4623, %v4624
      %v4626 = vsel %vm4460, %v4291, -inf
      %v4627 = vsel %vm4460, %v4347, -inf
      %v4628 = vmax.f32 %v4626, %v4627
      %v4629 = vsel %vm4460, %v4354, -inf
      %v4630 = vsel %vm4460, %v4410, -inf
      %v4631 = vmax.f32 %v4629, %v4630
      %v4632 = vsel %vm4460, %v4361, -inf
      %v4633 = vsel %vm4460, %v4417, -inf
      %v4634 = vmax.f32 %v4632, %v4633
      %v4635 = vsel %vm4460, %v4368, -inf
      %v4636 = vsel %vm4460, %v4424, -inf
      %v4637 = vmax.f32 %v4635, %v4636
      %v4638 = vsel %vm4460, %v4375, -inf
      %v4639 = vsel %vm4460, %v4431, -inf
      %v4640 = vmax.f32 %v4638, %v4639
      %v4641 = vsel %vm4460, %v4382, -inf
      %v4642 = vsel %vm4460, %v4438, -inf
      %v4643 = vmax.f32 %v4641, %v4642
      %v4644 = vsel %vm4460, %v4389, -inf
      %v4645 = vsel %vm4460, %v4445, -inf
      %v4646 = vmax.f32 %v4644, %v4645
      %v4647 = vsel %vm4460, %v4396, -inf
      %v4648 = vsel %vm4460, %v4452, -inf
      %v4649 = vmax.f32 %v4647, %v4648
      %v4650 = vsel %vm4460, %v4403, -inf
      %v4651 = vsel %vm4460, %v4459, -inf
      %v4652 = vmax.f32 %v4650, %v4651
      %4653 = vst.msk [vmem:[#allocation3] sm:$0xff] %vm4460, 0.0
      %4654 = vst.msk [vmem:[#allocation3 + $0x8] sm:$0xff] %vm4460, 0.0
      %vm4655 = vcmask 90112
      %4656 = vst.msk [vmem:[#allocation3 + $0x10] sm:$0x1] %vm4655, 0.0
      %4657 = vst.msk [vmem:[#allocation3 + $0x18] sm:$0xff] %vm4460, 0.0
      %4658 = vst.msk [vmem:[#allocation3 + $0x20] sm:$0xff] %vm4460, 0.0
      %4659 = vst.msk [vmem:[#allocation3 + $0x28] sm:$0x1] %vm4655, 0.0
      %4660 = vst.msk [vmem:[#allocation3 + $0x30] sm:$0xff] %vm4460, 0.0
      %4661 = vst.msk [vmem:[#allocation3 + $0x38] sm:$0xff] %vm4460, 0.0
      %4662 = vst.msk [vmem:[#allocation3 + $0x40] sm:$0x1] %vm4655, 0.0
      %4663 = vst.msk [vmem:[#allocation3 + $0x48] sm:$0xff] %vm4460, 0.0
      %4664 = vst.msk [vmem:[#allocation3 + $0x50] sm:$0xff] %vm4460, 0.0
      %4665 = vst.msk [vmem:[#allocation3 + $0x58] sm:$0x1] %vm4655, 0.0
      %4666 = vst.msk [vmem:[#allocation3 + $0x60] sm:$0xff] %vm4460, 0.0
      %4667 = vst.msk [vmem:[#allocation3 + $0x68] sm:$0xff] %vm4460, 0.0
      %4668 = vst.msk [vmem:[#allocation3 + $0x70] sm:$0x1] %vm4655, 0.0
      %4669 = vst.msk [vmem:[#allocation3 + $0x78] sm:$0xff] %vm4460, 0.0
      %4670 = vst.msk [vmem:[#allocation3 + $0x80] sm:$0xff] %vm4460, 0.0
      %4671 = vst.msk [vmem:[#allocation3 + $0x88] sm:$0x1] %vm4655, 0.0
      %4672 = vst.msk [vmem:[#allocation3 + $0x90] sm:$0xff] %vm4460, 0.0
      %4673 = vst.msk [vmem:[#allocation3 + $0x98] sm:$0xff] %vm4460, 0.0
      %4674 = vst.msk [vmem:[#allocation3 + $0xa0] sm:$0x1] %vm4655, 0.0
      %4675 = vst.msk [vmem:[#allocation3 + $0xa8] sm:$0xff] %vm4460, 0.0
      %4676 = vst.msk [vmem:[#allocation3 + $0xb0] sm:$0xff] %vm4460, 0.0
      %4677 = vst.msk [vmem:[#allocation3 + $0xb8] sm:$0x1] %vm4655, 0.0
      %4678 = vst.msk [vmem:[#allocation3 + $0xc0] sm:$0xff] %vm4460, 0.0
      %4679 = vst.msk [vmem:[#allocation3 + $0xc8] sm:$0xff] %vm4460, 0.0
      %4680 = vst.msk [vmem:[#allocation3 + $0xd0] sm:$0x1] %vm4655, 0.0
      %4681 = vst.msk [vmem:[#allocation3 + $0xd8] sm:$0xff] %vm4460, 0.0
      %4682 = vst.msk [vmem:[#allocation3 + $0xe0] sm:$0xff] %vm4460, 0.0
      %4683 = vst.msk [vmem:[#allocation3 + $0xe8] sm:$0x1] %vm4655, 0.0
      %vm4748 = vcmask 1041409
      %v4749 = vsel %vm4748, %v4466, %v4463
      %vm4750 = vcmask 1042434
      %v4751 = vsel %vm4750, %v4469, %v4749
      %vm4752 = vcmask 1043459
      %v4753 = vsel %vm4752, %v4472, %v4751
      %vm4754 = vcmask 1044484
      %v4755 = vsel %vm4754, %v4475, %v4753
      %vm4756 = vcmask 1045509
      %v4757 = vsel %vm4756, %v4478, %v4755
      %vm4758 = vcmask 1046534
      %v4759 = vsel %vm4758, %v4481, %v4757
      %vm4760 = vcmask 1047559
      %v4761 = vsel %vm4760, %v4484, %v4759
      %v4762 = vsel %vm4748, %v4490, %v4487
      %v4763 = vsel %vm4750, %v4493, %v4762
      %v4764 = vsel %vm4752, %v4496, %v4763
      %v4765 = vsel %vm4754, %v4499, %v4764
      %v4766 = vsel %vm4756, %v4502, %v4765
      %v4767 = vsel %vm4758, %v4505, %v4766
      %v4768 = vsel %vm4760, %v4508, %v4767
      %v4769 = vsel %vm4748, %v4514, %v4511
      %v4770 = vsel %vm4750, %v4517, %v4769
      %v4771 = vsel %vm4752, %v4520, %v4770
      %v4772 = vsel %vm4754, %v4523, %v4771
      %v4773 = vsel %vm4756, %v4526, %v4772
      %v4774 = vsel %vm4758, %v4529, %v4773
      %v4775 = vsel %vm4760, %v4532, %v4774
      %v4776 = vsel %vm4748, %v4538, %v4535
      %v4777 = vsel %vm4750, %v4541, %v4776
      %v4778 = vsel %vm4752, %v4544, %v4777
      %v4779 = vsel %vm4754, %v4547, %v4778
      %v4780 = vsel %vm4756, %v4550, %v4779
      %v4781 = vsel %vm4758, %v4553, %v4780
      %v4782 = vsel %vm4760, %v4556, %v4781
      %v4783 = vsel %vm4748, %v4562, %v4559
      %v4784 = vsel %vm4750, %v4565, %v4783
      %v4785 = vsel %vm4752, %v4568, %v4784
      %v4786 = vsel %vm4754, %v4571, %v4785
      %v4787 = vsel %vm4756, %v4574, %v4786
      %v4788 = vsel %vm4758, %v4577, %v4787
      %v4789 = vsel %vm4760, %v4580, %v4788
      %v4790 = vsel %vm4748, %v4586, %v4583
      %v4791 = vsel %vm4750, %v4589, %v4790
      %v4792 = vsel %vm4752, %v4592, %v4791
      %v4793 = vsel %vm4754, %v4595, %v4792
      %v4794 = vsel %vm4756, %v4598, %v4793
      %v4795 = vsel %vm4758, %v4601, %v4794
      %v4796 = vsel %vm4760, %v4604, %v4795
      %v4797 = vsel %vm4748, %v4610, %v4607
      %v4798 = vsel %vm4750, %v4613, %v4797
      %v4799 = vsel %vm4752, %v4616, %v4798
      %v4800 = vsel %vm4754, %v4619, %v4799
      %v4801 = vsel %vm4756, %v4622, %v4800
      %v4802 = vsel %vm4758, %v4625, %v4801
      %v4803 = vsel %vm4760, %v4628, %v4802
      %v4804 = vsel %vm4748, %v4634, %v4631
      %v4805 = vsel %vm4750, %v4637, %v4804
      %v4806 = vsel %vm4752, %v4640, %v4805
      %v4807 = vsel %vm4754, %v4643, %v4806
      %v4808 = vsel %vm4756, %v4646, %v4807
      %v4809 = vsel %vm4758, %v4649, %v4808
      %v4810 = vsel %vm4760, %v4652, %v4809
      %s4819 = scalar_lea.vmem [#allocation3], 24
      %4820 = vst.msk [vmem:[%s4819 + $0x8] sm:$0xff] %vm4460, %v4761
      %4821 = vst.msk [vmem:[%s4819 + $0x20] sm:$0xff] %vm4460, %v4768
      %4822 = vst.msk [vmem:[%s4819 + $0x38] sm:$0xff] %vm4460, %v4775
      %4823 = vst.msk [vmem:[%s4819 + $0x50] sm:$0xff] %vm4460, %v4782
      %4824 = vst.msk [vmem:[%s4819 + $0x68] sm:$0xff] %vm4460, %v4789
      %4825 = vst.msk [vmem:[%s4819 + $0x80] sm:$0xff] %vm4460, %v4796
      %4826 = vst.msk [vmem:[%s4819 + $0x98] sm:$0xff] %vm4460, %v4803
      %4827 = vst.msk [vmem:[%s4819 + $0xb0] sm:$0xff] %vm4460, %v4810
      %v4828 = vld [vmem:[#allocation3] sm:$0xff]
      %v4829 = vld [vmem:[#allocation3 + $0x8] sm:$0xff]
      %v4830 = vld [vmem:[#allocation3 + $0x10] sm:$0x1]
      %v4831 = vld [vmem:[#allocation3 + $0x18] sm:$0xff]
      %v4832 = vld [vmem:[#allocation3 + $0x20] sm:$0xff]
      %v4833 = vld [vmem:[#allocation3 + $0x28] sm:$0x1]
      %v4834 = vld [vmem:[#allocation3 + $0x30] sm:$0xff]
      %v4835 = vld [vmem:[#allocation3 + $0x38] sm:$0xff]
      %v4836 = vld [vmem:[#allocation3 + $0x40] sm:$0x1]
      %v4837 = vld [vmem:[#allocation3 + $0x48] sm:$0xff]
      %v4838 = vld [vmem:[#allocation3 + $0x50] sm:$0xff]
      %v4839 = vld [vmem:[#allocation3 + $0x58] sm:$0x1]
      %v4840 = vld [vmem:[#allocation3 + $0x60] sm:$0xff]
      %v4841 = vld [vmem:[#allocation3 + $0x68] sm:$0xff]
      %v4842 = vld [vmem:[#allocation3 + $0x70] sm:$0x1]
      %v4843 = vld [vmem:[#allocation3 + $0x78] sm:$0xff]
      %v4844 = vld [vmem:[#allocation3 + $0x80] sm:$0xff]
      %v4845 = vld [vmem:[#allocation3 + $0x88] sm:$0x1]
      %v4846 = vld [vmem:[#allocation3 + $0x90] sm:$0xff]
      %v4847 = vld [vmem:[#allocation3 + $0x98] sm:$0xff]
      %v4848 = vld [vmem:[#allocation3 + $0xa0] sm:$0x1]
      %v4849 = vld [vmem:[#allocation3 + $0xa8] sm:$0xff]
      %v4850 = vld [vmem:[#allocation3 + $0xb0] sm:$0xff]
      %v4851 = vld [vmem:[#allocation3 + $0xb8] sm:$0x1]
      %v4852 = vld [vmem:[#allocation3 + $0xc0] sm:$0xff]
      %v4853 = vld [vmem:[#allocation3 + $0xc8] sm:$0xff]
      %v4854 = vld [vmem:[#allocation3 + $0xd0] sm:$0x1]
      %v4855 = vld [vmem:[#allocation3 + $0xd8] sm:$0xff]
      %v4856 = vld [vmem:[#allocation3 + $0xe0] sm:$0xff]
      %v4857 = vld [vmem:[#allocation3 + $0xe8] sm:$0x1]
      %v4874 = vrot.slane %v4828, 7
      %v4875 = vrot.slane %v4829, 7
      %v4876 = vsel %vm539, %v4874, %v4875
      %v4877 = vrot.slane %v4831, 7
      %v4878 = vrot.slane %v4832, 7
      %v4879 = vsel %vm539, %v4877, %v4878
      %v4880 = vrot.slane %v4834, 7
      %v4881 = vrot.slane %v4835, 7
      %v4882 = vsel %vm539, %v4880, %v4881
      %v4883 = vrot.slane %v4837, 7
      %v4884 = vrot.slane %v4838, 7
      %v4885 = vsel %vm539, %v4883, %v4884
      %v4886 = vrot.slane %v4840, 7
      %v4887 = vrot.slane %v4841, 7
      %v4888 = vsel %vm539, %v4886, %v4887
      %v4889 = vrot.slane %v4843, 7
      %v4890 = vrot.slane %v4844, 7
      %v4891 = vsel %vm539, %v4889, %v4890
      %v4892 = vrot.slane %v4846, 7
      %v4893 = vrot.slane %v4847, 7
      %v4894 = vsel %vm539, %v4892, %v4893
      %v4895 = vrot.slane %v4849, 7
      %v4896 = vrot.slane %v4850, 7
      %v4897 = vsel %vm539, %v4895, %v4896
      %v4906 = vpack.c.bf16 %v4879, %v4876
      %v4907 = vpack.c.bf16 %v4885, %v4882
      %v4908 = vpack.c.bf16 %v4891, %v4888
      %v4909 = vpack.c.bf16 %v4897, %v4894
      %v4910 = vld [vmem:[%s3] sm:$0xf]
      %v4911 = vld [vmem:[%s3 + $0x4] sm:$0x3]
      %v4912 = vpack.c.bf16 %v4832, %v4829
      %v4913 = vpack.c.bf16 %v4838, %v4835
      %v4914 = vpack.c.bf16 %v4844, %v4841
      %v4915 = vpack.c.bf16 %v4850, %v4847
      %s4916 = scalar_lea.vmem %s3, 8
      %v4917 = vld [vmem:[%s4916] sm:$0xf]
      %v4918 = vld [vmem:[%s4916 + $0x4] sm:$0x3]
      %v4921 = vunpack.c.l.b16 %v4917
      %v4922 = vunpack.c.l.b16 %v4918
      %v4923 = vpack.c.b16 %v4922, %v4921
      %v4925 = vsel %vm4460, %v4912, 0
      %v4928 = vsel %vm4460, %v4913, 0
      %v4931 = vsel %vm4460, %v4914, 0
      %v4934 = vsel %vm4460, %v4915, 0
      %vm4936 = vcmask 1045504
      %v4938 = vsel %vm4936, %v4923, 0
      %4940 = vmatprep.subr.bf16.mxu0 0
      %4941 = vmatpush1.bf16.msra.mxu0 %v4938
      %4942 = vmatprep.subr.bf16.mxu0 0
      %4943 = vmatpush1.bf16.msra.mxu0 0
      %4944 = vmatprep.subr.bf16.mxu0 0
      %4945 = vmatpush1.bf16.msra.mxu0 0
      %4946 = vmatprep.subr.bf16.mxu0 0
      %4947 = vmatpush1.bf16.msra.mxu0 0
      %4948 = vmatprep.subr.bf16.mxu0 0
      %4949 = vmatpush1.bf16.msra.mxu0 0
      %4950 = vmatprep.subr.bf16.mxu0 0
      %4951 = vmatpush1.bf16.msra.mxu0 0
      %4952 = vmatprep.subr.bf16.mxu0 0
      %4953 = vmatpush1.bf16.msra.mxu0 0
      %4954 = vmatprep.subr.bf16.mxu0 0
      %4955 = vmatpush1.bf16.msra.mxu0 0
      %4956 = vmatprep.subr.bf16.mxu0 0
      %4957 = vmatpush1.bf16.msra.mxu0 0
      %4958 = vmatprep.subr.bf16.mxu0 0
      %4959 = vmatpush1.bf16.msra.mxu0 0
      %4960 = vmatprep.subr.bf16.mxu0 0
      %4961 = vmatpush1.bf16.msra.mxu0 0
      %4962 = vmatprep.subr.bf16.mxu0 0
      %4963 = vmatpush1.bf16.msra.mxu0 0
      %4964 = vmatprep.subr.bf16.mxu0 0
      %4965 = vmatpush1.bf16.msra.mxu0 0
      %4966 = vmatprep.subr.bf16.mxu0 0
      %4967 = vmatpush1.bf16.msra.mxu0 0
      %4968 = vmatprep.subr.bf16.mxu0 0
      %4969 = vmatpush1.bf16.msra.mxu0 0
      %4970 = vmatprep.subr.bf16.mxu0 0
      %4971 = vmatpush1.bf16.msra.mxu0 0
      %4972 = vmatprep.mubr.bf16.mxu0 0
      %4973 = vmatmul.mubr.bf16.gmra.mrb[0].mxu0 %v4925
      %v4974 = vpop.f32.mrb[0].mxu0
      %v4975 = vadd.f32 0.0, %v4974
      %v4976 = vpop.f32.mrb[0].mxu0
      %v4977 = vpop.f32.mrb[0].mxu0
      %v4978 = vadd.f32 0.0, %v4977
      %v4979 = vpop.f32.mrb[0].mxu0
      %4980 = vmatprep.mubr.bf16.mxu0 0
      %4981 = vmatmul.mubr.bf16.gmra.mrb[0].mxu0 %v4928
      %v4982 = vpop.f32.mrb[0].mxu0
      %v4983 = vadd.f32 0.0, %v4982
      %v4984 = vpop.f32.mrb[0].mxu0
      %v4985 = vpop.f32.mrb[0].mxu0
      %v4986 = vadd.f32 0.0, %v4985
      %v4987 = vpop.f32.mrb[0].mxu0
      %4988 = vmatprep.mubr.bf16.mxu0 0
      %4989 = vmatmul.mubr.bf16.gmra.mrb[0].mxu0 %v4931
      %v4990 = vpop.f32.mrb[0].mxu0
      %v4991 = vadd.f32 0.0, %v4990
      %v4992 = vpop.f32.mrb[0].mxu0
      %v4993 = vpop.f32.mrb[0].mxu0
      %v4994 = vadd.f32 0.0, %v4993
      %v4995 = vpop.f32.mrb[0].mxu0
      %4996 = vmatprep.mubr.bf16.mxu0 0
      %4997 = vmatmul.mubr.bf16.gmra.mrb[0].mxu0 %v4934
      %v4998 = vpop.f32.mrb[0].mxu0
      %v4999 = vadd.f32 0.0, %v4998
      %v5000 = vpop.f32.mrb[0].mxu0
      %v5001 = vpop.f32.mrb[0].mxu0
      %v5002 = vadd.f32 0.0, %v5001
      %v5003 = vpop.f32.mrb[0].mxu0
      %5004 = vdwg.mxu0
      %v5007 = vunpack.c.l.b16 %v4910
      %v5008 = vunpack.c.l.b16 %v4911
      %v5009 = vpack.c.b16 %v5008, %v5007
      %v5011 = vsel %vm4460, %v4906, 0
      %v5014 = vsel %vm4460, %v4907, 0
      %v5017 = vsel %vm4460, %v4908, 0
      %v5020 = vsel %vm4460, %v4909, 0
      %v5023 = vsel %vm4936, %v5009, 0
      %5025 = vmatprep.subr.bf16.mxu0 0
      %5026 = vmatpush1.bf16.msra.mxu0 %v5023
      %5027 = vmatprep.subr.bf16.mxu0 0
      %5028 = vmatpush1.bf16.msra.mxu0 0
      %5029 = vmatprep.subr.bf16.mxu0 0
      %5030 = vmatpush1.bf16.msra.mxu0 0
      %5031 = vmatprep.subr.bf16.mxu0 0
      %5032 = vmatpush1.bf16.msra.mxu0 0
      %5033 = vmatprep.subr.bf16.mxu0 0
      %5034 = vmatpush1.bf16.msra.mxu0 0
      %5035 = vmatprep.subr.bf16.mxu0 0
      %5036 = vmatpush1.bf16.msra.mxu0 0
      %5037 = vmatprep.subr.bf16.mxu0 0
      %5038 = vmatpush1.bf16.msra.mxu0 0
      %5039 = vmatprep.subr.bf16.mxu0 0
      %5040 = vmatpush1.bf16.msra.mxu0 0
      %5041 = vmatprep.subr.bf16.mxu0 0
      %5042 = vmatpush1.bf16.msra.mxu0 0
      %5043 = vmatprep.subr.bf16.mxu0 0
      %5044 = vmatpush1.bf16.msra.mxu0 0
      %5045 = vmatprep.subr.bf16.mxu0 0
      %5046 = vmatpush1.bf16.msra.mxu0 0
      %5047 = vmatprep.subr.bf16.mxu0 0
      %5048 = vmatpush1.bf16.msra.mxu0 0
      %5049 = vmatprep.subr.bf16.mxu0 0
      %5050 = vmatpush1.bf16.msra.mxu0 0
      %5051 = vmatprep.subr.bf16.mxu0 0
      %5052 = vmatpush1.bf16.msra.mxu0 0
      %5053 = vmatprep.subr.bf16.mxu0 0
      %5054 = vmatpush1.bf16.msra.mxu0 0
      %5055 = vmatprep.subr.bf16.mxu0 0
      %5056 = vmatpush1.bf16.msra.mxu0 0
      %5057 = vmatprep.mubr.bf16.mxu0 0
      %5058 = vmatmul.mubr.bf16.gmra.mrb[0].mxu0 %v5011
      %v5059 = vpop.f32.mrb[0].mxu0
      %v5060 = vadd.f32 %v4975, %v5059
      %v5061 = vpop.f32.mrb[0].mxu0
      %v5062 = vpop.f32.mrb[0].mxu0
      %v5063 = vadd.f32 %v4978, %v5062
      %v5064 = vpop.f32.mrb[0].mxu0
      %5065 = vmatprep.mubr.bf16.mxu0 0
      %5066 = vmatmul.mubr.bf16.gmra.mrb[0].mxu0 %v5014
      %v5067 = vpop.f32.mrb[0].mxu0
      %v5068 = vadd.f32 %v4983, %v5067
      %v5069 = vpop.f32.mrb[0].mxu0
      %v5070 = vpop.f32.mrb[0].mxu0
      %v5071 = vadd.f32 %v4986, %v5070
      %v5072 = vpop.f32.mrb[0].mxu0
      %5073 = vmatprep.mubr.bf16.mxu0 0
      %5074 = vmatmul.mubr.bf16.gmra.mrb[0].mxu0 %v5017
      %v5075 = vpop.f32.mrb[0].mxu0
      %v5076 = vadd.f32 %v4991, %v5075
      %v5077 = vpop.f32.mrb[0].mxu0
      %v5078 = vpop.f32.mrb[0].mxu0
      %v5079 = vadd.f32 %v4994, %v5078
      %v5080 = vpop.f32.mrb[0].mxu0
      %5081 = vmatprep.mubr.bf16.mxu0 0
      %5082 = vmatmul.mubr.bf16.gmra.mrb[0].mxu0 %v5020
      %v5083 = vpop.f32.mrb[0].mxu0
      %v5084 = vadd.f32 %v4999, %v5083
      %v5085 = vpop.f32.mrb[0].mxu0
      %v5086 = vpop.f32.mrb[0].mxu0
      %v5087 = vadd.f32 %v5002, %v5086
      %v5088 = vpop.f32.mrb[0].mxu0
      %5089 = vdwg.mxu0
      %v5098 = vrot.slane %v4829, 1
      %v5099 = vrot.slane %v4830, 1
      %v5100 = vsel %vm1130, %v5098, %v5099
      %v5101 = vrot.slane %v4832, 1
      %v5102 = vrot.slane %v4833, 1
      %v5103 = vsel %vm1130, %v5101, %v5102
      %v5104 = vrot.slane %v4835, 1
      %v5105 = vrot.slane %v4836, 1
      %v5106 = vsel %vm1130, %v5104, %v5105
      %v5107 = vrot.slane %v4838, 1
      %v5108 = vrot.slane %v4839, 1
      %v5109 = vsel %vm1130, %v5107, %v5108
      %v5110 = vrot.slane %v4841, 1
      %v5111 = vrot.slane %v4842, 1
      %v5112 = vsel %vm1130, %v5110, %v5111
      %v5113 = vrot.slane %v4844, 1
      %v5114 = vrot.slane %v4845, 1
      %v5115 = vsel %vm1130, %v5113, %v5114
      %v5116 = vrot.slane %v4847, 1
      %v5117 = vrot.slane %v4848, 1
      %v5118 = vsel %vm1130, %v5116, %v5117
      %v5119 = vrot.slane %v4850, 1
      %v5120 = vrot.slane %v4851, 1
      %v5121 = vsel %vm1130, %v5119, %v5120
      %v5130 = vpack.c.bf16 %v5103, %v5100
      %v5131 = vpack.c.bf16 %v5109, %v5106
      %v5132 = vpack.c.bf16 %v5115, %v5112
      %v5133 = vpack.c.bf16 %v5121, %v5118
      %s5134 = scalar_lea.vmem %s3, 16
      %v5135 = vld [vmem:[%s5134] sm:$0xf]
      %v5136 = vld [vmem:[%s5134 + $0x4] sm:$0x3]
      %v5139 = vunpack.c.l.b16 %v5135
      %v5140 = vunpack.c.l.b16 %v5136
      %v5141 = vpack.c.b16 %v5140, %v5139
      %v5143 = vsel %vm4460, %v5130, 0
      %v5146 = vsel %vm4460, %v5131, 0
      %v5149 = vsel %vm4460, %v5132, 0
      %v5152 = vsel %vm4460, %v5133, 0
      %v5155 = vsel %vm4936, %v5141, 0
      %5157 = vmatprep.subr.bf16.mxu0 0
      %5158 = vmatpush1.bf16.msra.mxu0 %v5155
      %5159 = vmatprep.subr.bf16.mxu0 0
      %5160 = vmatpush1.bf16.msra.mxu0 0
      %5161 = vmatprep.subr.bf16.mxu0 0
      %5162 = vmatpush1.bf16.msra.mxu0 0
      %5163 = vmatprep.subr.bf16.mxu0 0
      %5164 = vmatpush1.bf16.msra.mxu0 0
      %5165 = vmatprep.subr.bf16.mxu0 0
      %5166 = vmatpush1.bf16.msra.mxu0 0
      %5167 = vmatprep.subr.bf16.mxu0 0
      %5168 = vmatpush1.bf16.msra.mxu0 0
      %5169 = vmatprep.subr.bf16.mxu0 0
      %5170 = vmatpush1.bf16.msra.mxu0 0
      %5171 = vmatprep.subr.bf16.mxu0 0
      %5172 = vmatpush1.bf16.msra.mxu0 0
      %5173 = vmatprep.subr.bf16.mxu0 0
      %5174 = vmatpush1.bf16.msra.mxu0 0
      %5175 = vmatprep.subr.bf16.mxu0 0
      %5176 = vmatpush1.bf16.msra.mxu0 0
      %5177 = vmatprep.subr.bf16.mxu0 0
      %5178 = vmatpush1.bf16.msra.mxu0 0
      %5179 = vmatprep.subr.bf16.mxu0 0
      %5180 = vmatpush1.bf16.msra.mxu0 0
      %5181 = vmatprep.subr.bf16.mxu0 0
      %5182 = vmatpush1.bf16.msra.mxu0 0
      %5183 = vmatprep.subr.bf16.mxu0 0
      %5184 = vmatpush1.bf16.msra.mxu0 0
      %5185 = vmatprep.subr.bf16.mxu0 0
      %5186 = vmatpush1.bf16.msra.mxu0 0
      %5187 = vmatprep.subr.bf16.mxu0 0
      %5188 = vmatpush1.bf16.msra.mxu0 0
      %5189 = vmatprep.mubr.bf16.mxu0 0
      %5190 = vmatmul.mubr.bf16.gmra.mrb[0].mxu0 %v5143
      %v5191 = vpop.f32.mrb[0].mxu0
      %v5192 = vadd.f32 0.0, %v5191
      %v5193 = vpop.f32.mrb[0].mxu0
      %v5194 = vpop.f32.mrb[0].mxu0
      %v5195 = vadd.f32 0.0, %v5194
      %v5196 = vpop.f32.mrb[0].mxu0
      %5197 = vmatprep.mubr.bf16.mxu0 0
      %5198 = vmatmul.mubr.bf16.gmra.mrb[0].mxu0 %v5146
      %v5199 = vpop.f32.mrb[0].mxu0
      %v5200 = vadd.f32 0.0, %v5199
      %v5201 = vpop.f32.mrb[0].mxu0
      %v5202 = vpop.f32.mrb[0].mxu0
      %v5203 = vadd.f32 0.0, %v5202
      %v5204 = vpop.f32.mrb[0].mxu0
      %5205 = vmatprep.mubr.bf16.mxu0 0
      %5206 = vmatmul.mubr.bf16.gmra.mrb[0].mxu0 %v5149
      %v5207 = vpop.f32.mrb[0].mxu0
      %v5208 = vadd.f32 0.0, %v5207
      %v5209 = vpop.f32.mrb[0].mxu0
      %v5210 = vpop.f32.mrb[0].mxu0
      %v5211 = vadd.f32 0.0, %v5210
      %v5212 = vpop.f32.mrb[0].mxu0
      %5213 = vmatprep.mubr.bf16.mxu0 0
      %5214 = vmatmul.mubr.bf16.gmra.mrb[0].mxu0 %v5152
      %v5215 = vpop.f32.mrb[0].mxu0
      %v5216 = vadd.f32 0.0, %v5215
      %v5217 = vpop.f32.mrb[0].mxu0
      %v5218 = vpop.f32.mrb[0].mxu0
      %v5219 = vadd.f32 0.0, %v5218
      %v5220 = vpop.f32.mrb[0].mxu0
      %5221 = vdwg.mxu0
      %v5222 = vadd.f32 %v5060, %v5192
      %v5223 = vadd.f32 %v5063, %v5195
      %v5224 = vadd.f32 %v5068, %v5200
      %v5225 = vadd.f32 %v5071, %v5203
      %v5226 = vadd.f32 %v5076, %v5208
      %v5227 = vadd.f32 %v5079, %v5211
      %v5228 = vadd.f32 %v5084, %v5216
      %v5229 = vadd.f32 %v5087, %v5219
      %v5232 = vrot.slane %v4852, 7
      %v5233 = vrot.slane %v4853, 7
      %v5234 = vsel %vm539, %v5232, %v5233
      %v5236 = vpack.c.bf16 %v4882, %v4879
      %v5237 = vpack.c.bf16 %v4888, %v4885
      %v5238 = vpack.c.bf16 %v4894, %v4891
      %v5239 = vpack.c.bf16 %v5234, %v4897
      %s5240 = scalar_lea.vmem %s3, 24
      %v5241 = vld [vmem:[%s5240] sm:$0xf]
      %v5242 = vld [vmem:[%s5240 + $0x4] sm:$0x3]
      %v5245 = vunpack.c.l.b16 %v5241
      %v5246 = vunpack.c.l.b16 %v5242
      %v5247 = vpack.c.b16 %v5246, %v5245
      %v5249 = vsel %vm4460, %v5236, 0
      %v5252 = vsel %vm4460, %v5237, 0
      %v5255 = vsel %vm4460, %v5238, 0
      %v5258 = vsel %vm4460, %v5239, 0
      %v5261 = vsel %vm4936, %v5247, 0
      %5263 = vmatprep.subr.bf16.mxu0 0
      %5264 = vmatpush1.bf16.msra.mxu0 %v5261
      %5265 = vmatprep.subr.bf16.mxu0 0
      %5266 = vmatpush1.bf16.msra.mxu0 0
      %5267 = vmatprep.subr.bf16.mxu0 0
      %5268 = vmatpush1.bf16.msra.mxu0 0
      %5269 = vmatprep.subr.bf16.mxu0 0
      %5270 = vmatpush1.bf16.msra.mxu0 0
      %5271 = vmatprep.subr.bf16.mxu0 0
      %5272 = vmatpush1.bf16.msra.mxu0 0
      %5273 = vmatprep.subr.bf16.mxu0 0
      %5274 = vmatpush1.bf16.msra.mxu0 0
      %5275 = vmatprep.subr.bf16.mxu0 0
      %5276 = vmatpush1.bf16.msra.mxu0 0
      %5277 = vmatprep.subr.bf16.mxu0 0
      %5278 = vmatpush1.bf16.msra.mxu0 0
      %5279 = vmatprep.subr.bf16.mxu0 0
      %5280 = vmatpush1.bf16.msra.mxu0 0
      %5281 = vmatprep.subr.bf16.mxu0 0
      %5282 = vmatpush1.bf16.msra.mxu0 0
      %5283 = vmatprep.subr.bf16.mxu0 0
      %5284 = vmatpush1.bf16.msra.mxu0 0
      %5285 = vmatprep.subr.bf16.mxu0 0
      %5286 = vmatpush1.bf16.msra.mxu0 0
      %5287 = vmatprep.subr.bf16.mxu0 0
      %5288 = vmatpush1.bf16.msra.mxu0 0
      %5289 = vmatprep.subr.bf16.mxu0 0
      %5290 = vmatpush1.bf16.msra.mxu0 0
      %5291 = vmatprep.subr.bf16.mxu0 0
      %5292 = vmatpush1.bf16.msra.mxu0 0
      %5293 = vmatprep.subr.bf16.mxu0 0
      %5294 = vmatpush1.bf16.msra.mxu0 0
      %5295 = vmatprep.mubr.bf16.mxu0 0
      %5296 = vmatmul.mubr.bf16.gmra.mrb[0].mxu0 %v5249
      %v5297 = vpop.f32.mrb[0].mxu0
      %v5298 = vadd.f32 0.0, %v5297
      %v5299 = vpop.f32.mrb[0].mxu0
      %v5300 = vpop.f32.mrb[0].mxu0
      %v5301 = vadd.f32 0.0, %v5300
      %v5302 = vpop.f32.mrb[0].mxu0
      %5303 = vmatprep.mubr.bf16.mxu0 0
      %5304 = vmatmul.mubr.bf16.gmra.mrb[0].mxu0 %v5252
      %v5305 = vpop.f32.mrb[0].mxu0
      %v5306 = vadd.f32 0.0, %v5305
      %v5307 = vpop.f32.mrb[0].mxu0
      %v5308 = vpop.f32.mrb[0].mxu0
      %v5309 = vadd.f32 0.0, %v5308
      %v5310 = vpop.f32.mrb[0].mxu0
      %5311 = vmatprep.mubr.bf16.mxu0 0
      %5312 = vmatmul.mubr.bf16.gmra.mrb[0].mxu0 %v5255
      %v5313 = vpop.f32.mrb[0].mxu0
      %v5314 = vadd.f32 0.0, %v5313
      %v5315 = vpop.f32.mrb[0].mxu0
      %v5316 = vpop.f32.mrb[0].mxu0
      %v5317 = vadd.f32 0.0, %v5316
      %v5318 = vpop.f32.mrb[0].mxu0
      %5319 = vmatprep.mubr.bf16.mxu0 0
      %5320 = vmatmul.mubr.bf16.gmra.mrb[0].mxu0 %v5258
      %v5321 = vpop.f32.mrb[0].mxu0
      %v5322 = vadd.f32 0.0, %v5321
      %v5323 = vpop.f32.mrb[0].mxu0
      %v5324 = vpop.f32.mrb[0].mxu0
      %v5325 = vadd.f32 0.0, %v5324
      %v5326 = vpop.f32.mrb[0].mxu0
      %5327 = vdwg.mxu0
      %v5328 = vadd.f32 %v5222, %v5298
      %v5329 = vadd.f32 %v5223, %v5301
      %v5330 = vadd.f32 %v5224, %v5306
      %v5331 = vadd.f32 %v5225, %v5309
      %v5332 = vadd.f32 %v5226, %v5314
      %v5333 = vadd.f32 %v5227, %v5317
      %v5334 = vadd.f32 %v5228, %v5322
      %v5335 = vadd.f32 %v5229, %v5325
      %v5336 = vpack.c.bf16 %v4835, %v4832
      %v5337 = vpack.c.bf16 %v4841, %v4838
      %v5338 = vpack.c.bf16 %v4847, %v4844
      %v5339 = vpack.c.bf16 %v4853, %v4850
      %s5340 = scalar_lea.vmem %s3, 32
      %v5341 = vld [vmem:[%s5340] sm:$0xf]
      %v5342 = vld [vmem:[%s5340 + $0x4] sm:$0x3]
      %v5345 = vunpack.c.l.b16 %v5341
      %v5346 = vunpack.c.l.b16 %v5342
      %v5347 = vpack.c.b16 %v5346, %v5345
      %v5349 = vsel %vm4460, %v5336, 0
      %v5352 = vsel %vm4460, %v5337, 0
      %v5355 = vsel %vm4460, %v5338, 0
      %v5358 = vsel %vm4460, %v5339, 0
      %v5361 = vsel %vm4936, %v5347, 0
      %5363 = vmatprep.subr.bf16.mxu0 0
      %5364 = vmatpush1.bf16.msra.mxu0 %v5361
      %5365 = vmatprep.subr.bf16.mxu0 0
      %5366 = vmatpush1.bf16.msra.mxu0 0
      %5367 = vmatprep.subr.bf16.mxu0 0
      %5368 = vmatpush1.bf16.msra.mxu0 0
      %5369 = vmatprep.subr.bf16.mxu0 0
      %5370 = vmatpush1.bf16.msra.mxu0 0
      %5371 = vmatprep.subr.bf16.mxu0 0
      %5372 = vmatpush1.bf16.msra.mxu0 0
      %5373 = vmatprep.subr.bf16.mxu0 0
      %5374 = vmatpush1.bf16.msra.mxu0 0
      %5375 = vmatprep.subr.bf16.mxu0 0
      %5376 = vmatpush1.bf16.msra.mxu0 0
      %5377 = vmatprep.subr.bf16.mxu0 0
      %5378 = vmatpush1.bf16.msra.mxu0 0
      %5379 = vmatprep.subr.bf16.mxu0 0
      %5380 = vmatpush1.bf16.msra.mxu0 0
      %5381 = vmatprep.subr.bf16.mxu0 0
      %5382 = vmatpush1.bf16.msra.mxu0 0
      %5383 = vmatprep.subr.bf16.mxu0 0
      %5384 = vmatpush1.bf16.msra.mxu0 0
      %5385 = vmatprep.subr.bf16.mxu0 0
      %5386 = vmatpush1.bf16.msra.mxu0 0
      %5387 = vmatprep.subr.bf16.mxu0 0
      %5388 = vmatpush1.bf16.msra.mxu0 0
      %5389 = vmatprep.subr.bf16.mxu0 0
      %5390 = vmatpush1.bf16.msra.mxu0 0
      %5391 = vmatprep.subr.bf16.mxu0 0
      %5392 = vmatpush1.bf16.msra.mxu0 0
      %5393 = vmatprep.subr.bf16.mxu0 0
      %5394 = vmatpush1.bf16.msra.mxu0 0
      %5395 = vmatprep.mubr.bf16.mxu0 0
      %5396 = vmatmul.mubr.bf16.gmra.mrb[0].mxu0 %v5349
      %v5397 = vpop.f32.mrb[0].mxu0
      %v5398 = vadd.f32 0.0, %v5397
      %v5399 = vpop.f32.mrb[0].mxu0
      %v5400 = vpop.f32.mrb[0].mxu0
      %v5401 = vadd.f32 0.0, %v5400
      %v5402 = vpop.f32.mrb[0].mxu0
      %5403 = vmatprep.mubr.bf16.mxu0 0
      %5404 = vmatmul.mubr.bf16.gmra.mrb[0].mxu0 %v5352
      %v5405 = vpop.f32.mrb[0].mxu0
      %v5406 = vadd.f32 0.0, %v5405
      %v5407 = vpop.f32.mrb[0].mxu0
      %v5408 = vpop.f32.mrb[0].mxu0
      %v5409 = vadd.f32 0.0, %v5408
      %v5410 = vpop.f32.mrb[0].mxu0
      %5411 = vmatprep.mubr.bf16.mxu0 0
      %5412 = vmatmul.mubr.bf16.gmra.mrb[0].mxu0 %v5355
      %v5413 = vpop.f32.mrb[0].mxu0
      %v5414 = vadd.f32 0.0, %v5413
      %v5415 = vpop.f32.mrb[0].mxu0
      %v5416 = vpop.f32.mrb[0].mxu0
      %v5417 = vadd.f32 0.0, %v5416
      %v5418 = vpop.f32.mrb[0].mxu0
      %5419 = vmatprep.mubr.bf16.mxu0 0
      %5420 = vmatmul.mubr.bf16.gmra.mrb[0].mxu0 %v5358
      %v5421 = vpop.f32.mrb[0].mxu0
      %v5422 = vadd.f32 0.0, %v5421
      %v5423 = vpop.f32.mrb[0].mxu0
      %v5424 = vpop.f32.mrb[0].mxu0
      %v5425 = vadd.f32 0.0, %v5424
      %v5426 = vpop.f32.mrb[0].mxu0
      %5427 = vdwg.mxu0
      %v5428 = vadd.f32 %v5328, %v5398
      %v5429 = vadd.f32 %v5329, %v5401
      %v5430 = vadd.f32 %v5330, %v5406
      %v5431 = vadd.f32 %v5331, %v5409
      %v5432 = vadd.f32 %v5332, %v5414
      %v5433 = vadd.f32 %v5333, %v5417
      %v5434 = vadd.f32 %v5334, %v5422
      %v5435 = vadd.f32 %v5335, %v5425
      %v5437 = vrot.slane %v4853, 1
      %v5438 = vrot.slane %v4854, 1
      %v5439 = vsel %vm1130, %v5437, %v5438
      %v5441 = vpack.c.bf16 %v5106, %v5103
      %v5442 = vpack.c.bf16 %v5112, %v5109
      %v5443 = vpack.c.bf16 %v5118, %v5115
      %v5444 = vpack.c.bf16 %v5439, %v5121
      %s5445 = scalar_lea.vmem %s3, 40
      %v5446 = vld [vmem:[%s5445] sm:$0xf]
      %v5447 = vld [vmem:[%s5445 + $0x4] sm:$0x3]
      %v5450 = vunpack.c.l.b16 %v5446
      %v5451 = vunpack.c.l.b16 %v5447
      %v5452 = vpack.c.b16 %v5451, %v5450
      %v5454 = vsel %vm4460, %v5441, 0
      %v5457 = vsel %vm4460, %v5442, 0
      %v5460 = vsel %vm4460, %v5443, 0
      %v5463 = vsel %vm4460, %v5444, 0
      %v5466 = vsel %vm4936, %v5452, 0
      %5468 = vmatprep.subr.bf16.mxu0 0
      %5469 = vmatpush1.bf16.msra.mxu0 %v5466
      %5470 = vmatprep.subr.bf16.mxu0 0
      %5471 = vmatpush1.bf16.msra.mxu0 0
      %5472 = vmatprep.subr.bf16.mxu0 0
      %5473 = vmatpush1.bf16.msra.mxu0 0
      %5474 = vmatprep.subr.bf16.mxu0 0
      %5475 = vmatpush1.bf16.msra.mxu0 0
      %5476 = vmatprep.subr.bf16.mxu0 0
      %5477 = vmatpush1.bf16.msra.mxu0 0
      %5478 = vmatprep.subr.bf16.mxu0 0
      %5479 = vmatpush1.bf16.msra.mxu0 0
      %5480 = vmatprep.subr.bf16.mxu0 0
      %5481 = vmatpush1.bf16.msra.mxu0 0
      %5482 = vmatprep.subr.bf16.mxu0 0
      %5483 = vmatpush1.bf16.msra.mxu0 0
      %5484 = vmatprep.subr.bf16.mxu0 0
      %5485 = vmatpush1.bf16.msra.mxu0 0
      %5486 = vmatprep.subr.bf16.mxu0 0
      %5487 = vmatpush1.bf16.msra.mxu0 0
      %5488 = vmatprep.subr.bf16.mxu0 0
      %5489 = vmatpush1.bf16.msra.mxu0 0
      %5490 = vmatprep.subr.bf16.mxu0 0
      %5491 = vmatpush1.bf16.msra.mxu0 0
      %5492 = vmatprep.subr.bf16.mxu0 0
      %5493 = vmatpush1.bf16.msra.mxu0 0
      %5494 = vmatprep.subr.bf16.mxu0 0
      %5495 = vmatpush1.bf16.msra.mxu0 0
      %5496 = vmatprep.subr.bf16.mxu0 0
      %5497 = vmatpush1.bf16.msra.mxu0 0
      %5498 = vmatprep.subr.bf16.mxu0 0
      %5499 = vmatpush1.bf16.msra.mxu0 0
      %5500 = vmatprep.mubr.bf16.mxu0 0
      %5501 = vmatmul.mubr.bf16.gmra.mrb[0].mxu0 %v5454
      %v5502 = vpop.f32.mrb[0].mxu0
      %v5503 = vadd.f32 0.0, %v5502
      %v5504 = vpop.f32.mrb[0].mxu0
      %v5505 = vpop.f32.mrb[0].mxu0
      %v5506 = vadd.f32 0.0, %v5505
      %v5507 = vpop.f32.mrb[0].mxu0
      %5508 = vmatprep.mubr.bf16.mxu0 0
      %5509 = vmatmul.mubr.bf16.gmra.mrb[0].mxu0 %v5457
      %v5510 = vpop.f32.mrb[0].mxu0
      %v5511 = vadd.f32 0.0, %v5510
      %v5512 = vpop.f32.mrb[0].mxu0
      %v5513 = vpop.f32.mrb[0].mxu0
      %v5514 = vadd.f32 0.0, %v5513
      %v5515 = vpop.f32.mrb[0].mxu0
      %5516 = vmatprep.mubr.bf16.mxu0 0
      %5517 = vmatmul.mubr.bf16.gmra.mrb[0].mxu0 %v5460
      %v5518 = vpop.f32.mrb[0].mxu0
      %v5519 = vadd.f32 0.0, %v5518
      %v5520 = vpop.f32.mrb[0].mxu0
      %v5521 = vpop.f32.mrb[0].mxu0
      %v5522 = vadd.f32 0.0, %v5521
      %v5523 = vpop.f32.mrb[0].mxu0
      %5524 = vmatprep.mubr.bf16.mxu0 0
      %5525 = vmatmul.mubr.bf16.gmra.mrb[0].mxu0 %v5463
      %v5526 = vpop.f32.mrb[0].mxu0
      %v5527 = vadd.f32 0.0, %v5526
      %v5528 = vpop.f32.mrb[0].mxu0
      %v5529 = vpop.f32.mrb[0].mxu0
      %v5530 = vadd.f32 0.0, %v5529
      %v5531 = vpop.f32.mrb[0].mxu0
      %5532 = vdwg.mxu0
      %v5533 = vadd.f32 %v5428, %v5503
      %v5534 = vadd.f32 %v5429, %v5506
      %v5535 = vadd.f32 %v5430, %v5511
      %v5536 = vadd.f32 %v5431, %v5514
      %v5537 = vadd.f32 %v5432, %v5519
      %v5538 = vadd.f32 %v5433, %v5522
      %v5539 = vadd.f32 %v5434, %v5527
      %v5540 = vadd.f32 %v5435, %v5530
      %v5543 = vrot.slane %v4855, 7
      %v5544 = vrot.slane %v4856, 7
      %v5545 = vsel %vm539, %v5543, %v5544
      %v5547 = vpack.c.bf16 %v5545, %v5234
      %s5548 = scalar_lea.vmem %s3, 48
      %v5549 = vld [vmem:[%s5548] sm:$0xf]
      %v5550 = vld [vmem:[%s5548 + $0x4] sm:$0x3]
      %v5553 = vunpack.c.l.b16 %v5549
      %v5554 = vunpack.c.l.b16 %v5550
      %v5555 = vpack.c.b16 %v5554, %v5553
      %v5557 = vsel %vm4460, %v5547, 0
      %v5560 = vsel %vm4936, %v5555, 0
      %5562 = vmatprep.subr.bf16.mxu0 0
      %5563 = vmatpush1.bf16.msra.mxu0 %v5560
      %5564 = vmatprep.subr.bf16.mxu0 0
      %5565 = vmatpush1.bf16.msra.mxu0 0
      %5566 = vmatprep.subr.bf16.mxu0 0
      %5567 = vmatpush1.bf16.msra.mxu0 0
      %5568 = vmatprep.subr.bf16.mxu0 0
      %5569 = vmatpush1.bf16.msra.mxu0 0
      %5570 = vmatprep.subr.bf16.mxu0 0
      %5571 = vmatpush1.bf16.msra.mxu0 0
      %5572 = vmatprep.subr.bf16.mxu0 0
      %5573 = vmatpush1.bf16.msra.mxu0 0
      %5574 = vmatprep.subr.bf16.mxu0 0
      %5575 = vmatpush1.bf16.msra.mxu0 0
      %5576 = vmatprep.subr.bf16.mxu0 0
      %5577 = vmatpush1.bf16.msra.mxu0 0
      %5578 = vmatprep.subr.bf16.mxu0 0
      %5579 = vmatpush1.bf16.msra.mxu0 0
      %5580 = vmatprep.subr.bf16.mxu0 0
      %5581 = vmatpush1.bf16.msra.mxu0 0
      %5582 = vmatprep.subr.bf16.mxu0 0
      %5583 = vmatpush1.bf16.msra.mxu0 0
      %5584 = vmatprep.subr.bf16.mxu0 0
      %5585 = vmatpush1.bf16.msra.mxu0 0
      %5586 = vmatprep.subr.bf16.mxu0 0
      %5587 = vmatpush1.bf16.msra.mxu0 0
      %5588 = vmatprep.subr.bf16.mxu0 0
      %5589 = vmatpush1.bf16.msra.mxu0 0
      %5590 = vmatprep.subr.bf16.mxu0 0
      %5591 = vmatpush1.bf16.msra.mxu0 0
      %5592 = vmatprep.subr.bf16.mxu0 0
      %5593 = vmatpush1.bf16.msra.mxu0 0
      %5594 = vmatprep.mubr.bf16.mxu0 0
      %5595 = vmatmul.mubr.bf16.gmra.mrb[0].mxu0 %v5014
      %v5596 = vpop.f32.mrb[0].mxu0
      %v5597 = vadd.f32 0.0, %v5596
      %v5598 = vpop.f32.mrb[0].mxu0
      %v5599 = vpop.f32.mrb[0].mxu0
      %v5600 = vadd.f32 0.0, %v5599
      %v5601 = vpop.f32.mrb[0].mxu0
      %5602 = vmatprep.mubr.bf16.mxu0 0
      %5603 = vmatmul.mubr.bf16.gmra.mrb[0].mxu0 %v5017
      %v5604 = vpop.f32.mrb[0].mxu0
      %v5605 = vadd.f32 0.0, %v5604
      %v5606 = vpop.f32.mrb[0].mxu0
      %v5607 = vpop.f32.mrb[0].mxu0
      %v5608 = vadd.f32 0.0, %v5607
      %v5609 = vpop.f32.mrb[0].mxu0
      %5610 = vmatprep.mubr.bf16.mxu0 0
      %5611 = vmatmul.mubr.bf16.gmra.mrb[0].mxu0 %v5020
      %v5612 = vpop.f32.mrb[0].mxu0
      %v5613 = vadd.f32 0.0, %v5612
      %v5614 = vpop.f32.mrb[0].mxu0
      %v5615 = vpop.f32.mrb[0].mxu0
      %v5616 = vadd.f32 0.0, %v5615
      %v5617 = vpop.f32.mrb[0].mxu0
      %5618 = vmatprep.mubr.bf16.mxu0 0
      %5619 = vmatmul.mubr.bf16.gmra.mrb[0].mxu0 %v5557
      %v5620 = vpop.f32.mrb[0].mxu0
      %v5621 = vadd.f32 0.0, %v5620
      %v5622 = vpop.f32.mrb[0].mxu0
      %v5623 = vpop.f32.mrb[0].mxu0
      %v5624 = vadd.f32 0.0, %v5623
      %v5625 = vpop.f32.mrb[0].mxu0
      %5626 = vdwg.mxu0
      %v5627 = vadd.f32 %v5533, %v5597
      %v5628 = vadd.f32 %v5534, %v5600
      %v5629 = vadd.f32 %v5535, %v5605
      %v5630 = vadd.f32 %v5536, %v5608
      %v5631 = vadd.f32 %v5537, %v5613
      %v5632 = vadd.f32 %v5538, %v5616
      %v5633 = vadd.f32 %v5539, %v5621
      %v5634 = vadd.f32 %v5540, %v5624
      %v5635 = vpack.c.bf16 %v4856, %v4853
      %s5636 = scalar_lea.vmem %s3, 56
      %v5637 = vld [vmem:[%s5636] sm:$0xf]
      %v5638 = vld [vmem:[%s5636 + $0x4] sm:$0x3]
      %v5641 = vunpack.c.l.b16 %v5637
      %v5642 = vunpack.c.l.b16 %v5638
      %v5643 = vpack.c.b16 %v5642, %v5641
      %v5645 = vsel %vm4460, %v5635, 0
      %v5648 = vsel %vm4936, %v5643, 0
      %5650 = vmatprep.subr.bf16.mxu0 0
      %5651 = vmatpush1.bf16.msra.mxu0 %v5648
      %5652 = vmatprep.subr.bf16.mxu0 0
      %5653 = vmatpush1.bf16.msra.mxu0 0
      %5654 = vmatprep.subr.bf16.mxu0 0
      %5655 = vmatpush1.bf16.msra.mxu0 0
      %5656 = vmatprep.subr.bf16.mxu0 0
      %5657 = vmatpush1.bf16.msra.mxu0 0
      %5658 = vmatprep.subr.bf16.mxu0 0
      %5659 = vmatpush1.bf16.msra.mxu0 0
      %5660 = vmatprep.subr.bf16.mxu0 0
      %5661 = vmatpush1.bf16.msra.mxu0 0
      %5662 = vmatprep.subr.bf16.mxu0 0
      %5663 = vmatpush1.bf16.msra.mxu0 0
      %5664 = vmatprep.subr.bf16.mxu0 0
      %5665 = vmatpush1.bf16.msra.mxu0 0
      %5666 = vmatprep.subr.bf16.mxu0 0
      %5667 = vmatpush1.bf16.msra.mxu0 0
      %5668 = vmatprep.subr.bf16.mxu0 0
      %5669 = vmatpush1.bf16.msra.mxu0 0
      %5670 = vmatprep.subr.bf16.mxu0 0
      %5671 = vmatpush1.bf16.msra.mxu0 0
      %5672 = vmatprep.subr.bf16.mxu0 0
      %5673 = vmatpush1.bf16.msra.mxu0 0
      %5674 = vmatprep.subr.bf16.mxu0 0
      %5675 = vmatpush1.bf16.msra.mxu0 0
      %5676 = vmatprep.subr.bf16.mxu0 0
      %5677 = vmatpush1.bf16.msra.mxu0 0
      %5678 = vmatprep.subr.bf16.mxu0 0
      %5679 = vmatpush1.bf16.msra.mxu0 0
      %5680 = vmatprep.subr.bf16.mxu0 0
      %5681 = vmatpush1.bf16.msra.mxu0 0
      %5682 = vmatprep.mubr.bf16.mxu0 0
      %5683 = vmatmul.mubr.bf16.gmra.mrb[0].mxu0 %v4928
      %v5684 = vpop.f32.mrb[0].mxu0
      %v5685 = vadd.f32 0.0, %v5684
      %v5686 = vpop.f32.mrb[0].mxu0
      %v5687 = vpop.f32.mrb[0].mxu0
      %v5688 = vadd.f32 0.0, %v5687
      %v5689 = vpop.f32.mrb[0].mxu0
      %5690 = vmatprep.mubr.bf16.mxu0 0
      %5691 = vmatmul.mubr.bf16.gmra.mrb[0].mxu0 %v4931
      %v5692 = vpop.f32.mrb[0].mxu0
      %v5693 = vadd.f32 0.0, %v5692
      %v5694 = vpop.f32.mrb[0].mxu0
      %v5695 = vpop.f32.mrb[0].mxu0
      %v5696 = vadd.f32 0.0, %v5695
      %v5697 = vpop.f32.mrb[0].mxu0
      %5698 = vmatprep.mubr.bf16.mxu0 0
      %5699 = vmatmul.mubr.bf16.gmra.mrb[0].mxu0 %v4934
      %v5700 = vpop.f32.mrb[0].mxu0
      %v5701 = vadd.f32 0.0, %v5700
      %v5702 = vpop.f32.mrb[0].mxu0
      %v5703 = vpop.f32.mrb[0].mxu0
      %v5704 = vadd.f32 0.0, %v5703
      %v5705 = vpop.f32.mrb[0].mxu0
      %5706 = vmatprep.mubr.bf16.mxu0 0
      %5707 = vmatmul.mubr.bf16.gmra.mrb[0].mxu0 %v5645
      %v5708 = vpop.f32.mrb[0].mxu0
      %v5709 = vadd.f32 0.0, %v5708
      %v5710 = vpop.f32.mrb[0].mxu0
      %v5711 = vpop.f32.mrb[0].mxu0
      %v5712 = vadd.f32 0.0, %v5711
      %v5713 = vpop.f32.mrb[0].mxu0
      %5714 = vdwg.mxu0
      %v5715 = vadd.f32 %v5627, %v5685
      %v5716 = vadd.f32 %v5628, %v5688
      %v5717 = vadd.f32 %v5629, %v5693
      %v5718 = vadd.f32 %v5630, %v5696
      %v5719 = vadd.f32 %v5631, %v5701
      %v5720 = vadd.f32 %v5632, %v5704
      %v5721 = vadd.f32 %v5633, %v5709
      %v5722 = vadd.f32 %v5634, %v5712
      %v5724 = vrot.slane %v4856, 1
      %v5725 = vrot.slane %v4857, 1
      %v5726 = vsel %vm1130, %v5724, %v5725
      %v5728 = vpack.c.bf16 %v5726, %v5439
      %s5729 = scalar_lea.vmem %s3, 64
      %v5730 = vld [vmem:[%s5729] sm:$0xf]
      %v5731 = vld [vmem:[%s5729 + $0x4] sm:$0x3]
      %v5734 = vunpack.c.l.b16 %v5730
      %v5735 = vunpack.c.l.b16 %v5731
      %v5736 = vpack.c.b16 %v5735, %v5734
      %v5738 = vsel %vm4460, %v5728, 0
      %v5741 = vsel %vm4936, %v5736, 0
      %5743 = vmatprep.subr.bf16.mxu0 0
      %5744 = vmatpush1.bf16.msra.mxu0 %v5741
      %5745 = vmatprep.subr.bf16.mxu0 0
      %5746 = vmatpush1.bf16.msra.mxu0 0
      %5747 = vmatprep.subr.bf16.mxu0 0
      %5748 = vmatpush1.bf16.msra.mxu0 0
      %5749 = vmatprep.subr.bf16.mxu0 0
      %5750 = vmatpush1.bf16.msra.mxu0 0
      %5751 = vmatprep.subr.bf16.mxu0 0
      %5752 = vmatpush1.bf16.msra.mxu0 0
      %5753 = vmatprep.subr.bf16.mxu0 0
      %5754 = vmatpush1.bf16.msra.mxu0 0
      %5755 = vmatprep.subr.bf16.mxu0 0
      %5756 = vmatpush1.bf16.msra.mxu0 0
      %5757 = vmatprep.subr.bf16.mxu0 0
      %5758 = vmatpush1.bf16.msra.mxu0 0
      %5759 = vmatprep.subr.bf16.mxu0 0
      %5760 = vmatpush1.bf16.msra.mxu0 0
      %5761 = vmatprep.subr.bf16.mxu0 0
      %5762 = vmatpush1.bf16.msra.mxu0 0
      %5763 = vmatprep.subr.bf16.mxu0 0
      %5764 = vmatpush1.bf16.msra.mxu0 0
      %5765 = vmatprep.subr.bf16.mxu0 0
      %5766 = vmatpush1.bf16.msra.mxu0 0
      %5767 = vmatprep.subr.bf16.mxu0 0
      %5768 = vmatpush1.bf16.msra.mxu0 0
      %5769 = vmatprep.subr.bf16.mxu0 0
      %5770 = vmatpush1.bf16.msra.mxu0 0
      %5771 = vmatprep.subr.bf16.mxu0 0
      %5772 = vmatpush1.bf16.msra.mxu0 0
      %5773 = vmatprep.subr.bf16.mxu0 0
      %5774 = vmatpush1.bf16.msra.mxu0 0
      %5775 = vmatprep.mubr.bf16.mxu0 0
      %5776 = vmatmul.mubr.bf16.gmra.mrb[0].mxu0 %v5146
      %v5777 = vpop.f32.mrb[0].mxu0
      %v5778 = vadd.f32 0.0, %v5777
      %v5779 = vpop.f32.mrb[0].mxu0
      %v5780 = vpop.f32.mrb[0].mxu0
      %v5781 = vadd.f32 0.0, %v5780
      %v5782 = vpop.f32.mrb[0].mxu0
      %5783 = vmatprep.mubr.bf16.mxu0 0
      %5784 = vmatmul.mubr.bf16.gmra.mrb[0].mxu0 %v5149
      %v5785 = vpop.f32.mrb[0].mxu0
      %v5786 = vadd.f32 0.0, %v5785
      %v5787 = vpop.f32.mrb[0].mxu0
      %v5788 = vpop.f32.mrb[0].mxu0
      %v5789 = vadd.f32 0.0, %v5788
      %v5790 = vpop.f32.mrb[0].mxu0
      %5791 = vmatprep.mubr.bf16.mxu0 0
      %5792 = vmatmul.mubr.bf16.gmra.mrb[0].mxu0 %v5152
      %v5793 = vpop.f32.mrb[0].mxu0
      %v5794 = vadd.f32 0.0, %v5793
      %v5795 = vpop.f32.mrb[0].mxu0
      %v5796 = vpop.f32.mrb[0].mxu0
      %v5797 = vadd.f32 0.0, %v5796
      %v5798 = vpop.f32.mrb[0].mxu0
      %5799 = vmatprep.mubr.bf16.mxu0 0
      %5800 = vmatmul.mubr.bf16.gmra.mrb[0].mxu0 %v5738
      %v5801 = vpop.f32.mrb[0].mxu0
      %v5802 = vadd.f32 0.0, %v5801
      %v5803 = vpop.f32.mrb[0].mxu0
      %v5804 = vpop.f32.mrb[0].mxu0
      %v5805 = vadd.f32 0.0, %v5804
      %v5806 = vpop.f32.mrb[0].mxu0
      %5807 = vdwg.mxu0
      %v5808 = vadd.f32 %v5715, %v5778
      %v5809 = vadd.f32 %v5716, %v5781
      %v5810 = vadd.f32 %v5717, %v5786
      %v5811 = vadd.f32 %v5718, %v5789
      %v5812 = vadd.f32 %v5719, %v5794
      %v5813 = vadd.f32 %v5720, %v5797
      %v5814 = vadd.f32 %v5721, %v5802
      %v5815 = vadd.f32 %v5722, %v5805
      %v5816 = vld [vmem:[%s4] sm:$0x1]
      %v5817 = vlaneseq
      %v5818 = vshrl.u32 %v5817, 7
      %v5819 = vsub.s32 0, %v5818
      %v5820 = vrot.slane %v5816, %v5819
      %v5821 = vmul.f32 %v5808, %v5820
      %v5822 = vmul.f32 %v5809, %v5820
      %v5823 = vmul.f32 %v5810, %v5820
      %v5824 = vmul.f32 %v5811, %v5820
      %v5825 = vmul.f32 %v5812, %v5820
      %v5826 = vmul.f32 %v5813, %v5820
      %v5827 = vmul.f32 %v5814, %v5820
      %v5828 = vmul.f32 %v5815, %v5820
      %v5829 = vld [vmem:[%s4 + $0x1] sm:$0x1]
      %v5830 = vlaneseq
      %v5831 = vshrl.u32 %v5830, 7
      %v5832 = vsub.s32 0, %v5831
      %v5833 = vrot.slane %v5829, %v5832
      %v5834 = vadd.f32 %v5821, %v5833
      %v5835 = vadd.f32 %v5822, %v5833
      %v5836 = vadd.f32 %v5823, %v5833
      %v5837 = vadd.f32 %v5824, %v5833
      %v5838 = vadd.f32 %v5825, %v5833
      %v5839 = vadd.f32 %v5826, %v5833
      %v5840 = vadd.f32 %v5827, %v5833
      %v5841 = vadd.f32 %v5828, %v5833
      %v5842 = vmax.f32 %v5834, 0.0
      %v5843 = vmax.f32 %v5835, 0.0
      %v5844 = vmax.f32 %v5836, 0.0
      %v5845 = vmax.f32 %v5837, 0.0
      %v5846 = vmax.f32 %v5838, 0.0
      %v5847 = vmax.f32 %v5839, 0.0
      %v5848 = vmax.f32 %v5840, 0.0
      %v5849 = vmax.f32 %v5841, 0.0
      %vm5850 = vcmask 162816
      %5851 = vst.msk [vmem:[#allocation4] sm:$0xff] %vm5850, 0.0
      %5852 = vst.msk [vmem:[#allocation4 + $0x8] sm:$0xff] %vm5850, 0.0
      %vm5853 = vcmask 155648
      %5854 = vst.msk [vmem:[#allocation4 + $0x10] sm:$0x1] %vm5853, 0.0
      %5855 = vst.msk [vmem:[#allocation4 + $0x18] sm:$0xff] %vm5850, 0.0
      %5856 = vst.msk [vmem:[#allocation4 + $0x20] sm:$0xff] %vm5850, 0.0
      %5857 = vst.msk [vmem:[#allocation4 + $0x28] sm:$0x1] %vm5853, 0.0
      %5858 = vst.msk [vmem:[#allocation4 + $0x30] sm:$0xff] %vm5850, 0.0
      %5859 = vst.msk [vmem:[#allocation4 + $0x38] sm:$0xff] %vm5850, 0.0
      %5860 = vst.msk [vmem:[#allocation4 + $0x40] sm:$0x1] %vm5853, 0.0
      %5861 = vst.msk [vmem:[#allocation4 + $0x48] sm:$0xff] %vm5850, 0.0
      %5862 = vst.msk [vmem:[#allocation4 + $0x50] sm:$0xff] %vm5850, 0.0
      %5863 = vst.msk [vmem:[#allocation4 + $0x58] sm:$0x1] %vm5853, 0.0
      %5864 = vst.msk [vmem:[#allocation4 + $0x60] sm:$0xff] %vm5850, 0.0
      %5865 = vst.msk [vmem:[#allocation4 + $0x68] sm:$0xff] %vm5850, 0.0
      %5866 = vst.msk [vmem:[#allocation4 + $0x70] sm:$0x1] %vm5853, 0.0
      %5867 = vst.msk [vmem:[#allocation4 + $0x78] sm:$0xff] %vm5850, 0.0
      %5868 = vst.msk [vmem:[#allocation4 + $0x80] sm:$0xff] %vm5850, 0.0
      %5869 = vst.msk [vmem:[#allocation4 + $0x88] sm:$0x1] %vm5853, 0.0
      %5870 = vst.msk [vmem:[#allocation4 + $0x90] sm:$0xff] %vm5850, 0.0
      %5871 = vst.msk [vmem:[#allocation4 + $0x98] sm:$0xff] %vm5850, 0.0
      %5872 = vst.msk [vmem:[#allocation4 + $0xa0] sm:$0x1] %vm5853, 0.0
      %5873 = vst.msk [vmem:[#allocation4 + $0xa8] sm:$0xff] %vm5850, 0.0
      %5874 = vst.msk [vmem:[#allocation4 + $0xb0] sm:$0xff] %vm5850, 0.0
      %5875 = vst.msk [vmem:[#allocation4 + $0xb8] sm:$0x1] %vm5853, 0.0
      %5876 = vst.msk [vmem:[#allocation4 + $0xc0] sm:$0xff] %vm5850, 0.0
      %5877 = vst.msk [vmem:[#allocation4 + $0xc8] sm:$0xff] %vm5850, 0.0
      %5878 = vst.msk [vmem:[#allocation4 + $0xd0] sm:$0x1] %vm5853, 0.0
      %5879 = vst.msk [vmem:[#allocation4 + $0xd8] sm:$0xff] %vm5850, 0.0
      %5880 = vst.msk [vmem:[#allocation4 + $0xe0] sm:$0xff] %vm5850, 0.0
      %5881 = vst.msk [vmem:[#allocation4 + $0xe8] sm:$0x1] %vm5853, 0.0
      %s5882 = scalar_lea.vmem [#allocation4], 24
      %5883 = vst.msk [vmem:[%s5882 + $0x8] sm:$0xff] %vm5850, %v5842
      %5884 = vst.msk [vmem:[%s5882 + $0x20] sm:$0xff] %vm5850, %v5843
      %5885 = vst.msk [vmem:[%s5882 + $0x38] sm:$0xff] %vm5850, %v5844
      %5886 = vst.msk [vmem:[%s5882 + $0x50] sm:$0xff] %vm5850, %v5845
      %5887 = vst.msk [vmem:[%s5882 + $0x68] sm:$0xff] %vm5850, %v5846
      %5888 = vst.msk [vmem:[%s5882 + $0x80] sm:$0xff] %vm5850, %v5847
      %5889 = vst.msk [vmem:[%s5882 + $0x98] sm:$0xff] %vm5850, %v5848
      %5890 = vst.msk [vmem:[%s5882 + $0xb0] sm:$0xff] %vm5850, %v5849
      %v5891 = vld [vmem:[#allocation4] sm:$0xff]
      %v5892 = vld [vmem:[#allocation4 + $0x8] sm:$0xff]
      %v5893 = vld [vmem:[#allocation4 + $0x10] sm:$0x1]
      %v5894 = vld [vmem:[#allocation4 + $0x18] sm:$0xff]
      %v5895 = vld [vmem:[#allocation4 + $0x20] sm:$0xff]
      %v5896 = vld [vmem:[#allocation4 + $0x28] sm:$0x1]
      %v5897 = vld [vmem:[#allocation4 + $0x30] sm:$0xff]
      %v5898 = vld [vmem:[#allocation4 + $0x38] sm:$0xff]
      %v5899 = vld [vmem:[#allocation4 + $0x40] sm:$0x1]
      %v5900 = vld [vmem:[#allocation4 + $0x48] sm:$0xff]
      %v5901 = vld [vmem:[#allocation4 + $0x50] sm:$0xff]
      %v5902 = vld [vmem:[#allocation4 + $0x58] sm:$0x1]
      %v5903 = vld [vmem:[#allocation4 + $0x60] sm:$0xff]
      %v5904 = vld [vmem:[#allocation4 + $0x68] sm:$0xff]
      %v5905 = vld [vmem:[#allocation4 + $0x70] sm:$0x1]
      %v5906 = vld [vmem:[#allocation4 + $0x78] sm:$0xff]
      %v5907 = vld [vmem:[#allocation4 + $0x80] sm:$0xff]
      %v5908 = vld [vmem:[#allocation4 + $0x88] sm:$0x1]
      %v5909 = vld [vmem:[#allocation4 + $0x90] sm:$0xff]
      %v5910 = vld [vmem:[#allocation4 + $0x98] sm:$0xff]
      %v5911 = vld [vmem:[#allocation4 + $0xa0] sm:$0x1]
      %v5912 = vld [vmem:[#allocation4 + $0xa8] sm:$0xff]
      %v5913 = vld [vmem:[#allocation4 + $0xb0] sm:$0xff]
      %v5914 = vld [vmem:[#allocation4 + $0xb8] sm:$0x1]
      %v5915 = vld [vmem:[#allocation4 + $0xc0] sm:$0xff]
      %v5916 = vld [vmem:[#allocation4 + $0xc8] sm:$0xff]
      %v5917 = vld [vmem:[#allocation4 + $0xd0] sm:$0x1]
      %v5918 = vld [vmem:[#allocation4 + $0xd8] sm:$0xff]
      %v5919 = vld [vmem:[#allocation4 + $0xe0] sm:$0xff]
      %v5920 = vld [vmem:[#allocation4 + $0xe8] sm:$0x1]
      %v5937 = vrot.slane %v5891, 7
      %v5938 = vrot.slane %v5892, 7
      %v5939 = vsel %vm539, %v5937, %v5938
      %v5940 = vrot.slane %v5894, 7
      %v5941 = vrot.slane %v5895, 7
      %v5942 = vsel %vm539, %v5940, %v5941
      %v5943 = vrot.slane %v5897, 7
      %v5944 = vrot.slane %v5898, 7
      %v5945 = vsel %vm539, %v5943, %v5944
      %v5946 = vrot.slane %v5900, 7
      %v5947 = vrot.slane %v5901, 7
      %v5948 = vsel %vm539, %v5946, %v5947
      %v5949 = vrot.slane %v5903, 7
      %v5950 = vrot.slane %v5904, 7
      %v5951 = vsel %vm539, %v5949, %v5950
      %v5952 = vrot.slane %v5906, 7
      %v5953 = vrot.slane %v5907, 7
      %v5954 = vsel %vm539, %v5952, %v5953
      %v5955 = vrot.slane %v5909, 7
      %v5956 = vrot.slane %v5910, 7
      %v5957 = vsel %vm539, %v5955, %v5956
      %v5958 = vrot.slane %v5912, 7
      %v5959 = vrot.slane %v5913, 7
      %v5960 = vsel %vm539, %v5958, %v5959
      %v5969 = vpack.c.bf16 %v5942, %v5939
      %v5970 = vpack.c.bf16 %v5948, %v5945
      %v5971 = vpack.c.bf16 %v5954, %v5951
      %v5972 = vpack.c.bf16 %v5960, %v5957
      %v5973 = vld [vmem:[%s5] sm:$0xf]
      %v5974 = vld [vmem:[%s5 + $0x4] sm:$0xf]
      %v5975 = vld [vmem:[%s5 + $0x8] sm:$0x3]
      %v5976 = vpack.c.bf16 %v5895, %v5892
      %v5977 = vpack.c.bf16 %v5901, %v5898
      %v5978 = vpack.c.bf16 %v5907, %v5904
      %v5979 = vpack.c.bf16 %v5913, %v5910
      %s5980 = scalar_lea.vmem %s5, 12
      %v5981 = vld [vmem:[%s5980] sm:$0xf]
      %v5982 = vld [vmem:[%s5980 + $0x4] sm:$0xf]
      %v5983 = vld [vmem:[%s5980 + $0x8] sm:$0x3]
      %v5987 = vunpack.c.l.b16 %v5981
      %v5988 = vunpack.c.l.b16 %v5982
      %v5989 = vunpack.c.l.b16 %v5983
      %v5990 = vpack.c.b16 %v5988, %v5987
      %v5991 = vpack.c.b16 %v5989, %v5989
      %v5994 = vsel %vm5850, %v5976, 0
      %v5997 = vsel %vm5850, %v5977, 0
      %v6000 = vsel %vm5850, %v5978, 0
      %v6003 = vsel %vm5850, %v5979, 0
      %v6006 = vsel %vm735, %v5991, 0
      %6008 = vmatprep.subr.bf16.mxu0 0
      %6009 = vmatpush1.bf16.msra.mxu0 %v5990
      %6010 = vmatprep.subr.bf16.mxu0 0
      %6011 = vmatpush1.bf16.msra.mxu0 %v6006
      %6012 = vmatprep.subr.bf16.mxu0 0
      %6013 = vmatpush1.bf16.msra.mxu0 0
      %6014 = vmatprep.subr.bf16.mxu0 0
      %6015 = vmatpush1.bf16.msra.mxu0 0
      %6016 = vmatprep.subr.bf16.mxu0 0
      %6017 = vmatpush1.bf16.msra.mxu0 0
      %6018 = vmatprep.subr.bf16.mxu0 0
      %6019 = vmatpush1.bf16.msra.mxu0 0
      %6020 = vmatprep.subr.bf16.mxu0 0
      %6021 = vmatpush1.bf16.msra.mxu0 0
      %6022 = vmatprep.subr.bf16.mxu0 0
      %6023 = vmatpush1.bf16.msra.mxu0 0
      %6024 = vmatprep.subr.bf16.mxu0 0
      %6025 = vmatpush1.bf16.msra.mxu0 0
      %6026 = vmatprep.subr.bf16.mxu0 0
      %6027 = vmatpush1.bf16.msra.mxu0 0
      %6028 = vmatprep.subr.bf16.mxu0 0
      %6029 = vmatpush1.bf16.msra.mxu0 0
      %6030 = vmatprep.subr.bf16.mxu0 0
      %6031 = vmatpush1.bf16.msra.mxu0 0
      %6032 = vmatprep.subr.bf16.mxu0 0
      %6033 = vmatpush1.bf16.msra.mxu0 0
      %6034 = vmatprep.subr.bf16.mxu0 0
      %6035 = vmatpush1.bf16.msra.mxu0 0
      %6036 = vmatprep.subr.bf16.mxu0 0
      %6037 = vmatpush1.bf16.msra.mxu0 0
      %6038 = vmatprep.subr.bf16.mxu0 0
      %6039 = vmatpush1.bf16.msra.mxu0 0
      %6040 = vmatprep.mubr.bf16.mxu0 0
      %6041 = vmatmul.mubr.bf16.gmra.mrb[0].mxu0 %v5994
      %v6042 = vpop.f32.mrb[0].mxu0
      %v6043 = vadd.f32 0.0, %v6042
      %v6044 = vpop.f32.mrb[0].mxu0
      %v6045 = vpop.f32.mrb[0].mxu0
      %v6046 = vadd.f32 0.0, %v6045
      %v6047 = vpop.f32.mrb[0].mxu0
      %6048 = vmatprep.mubr.bf16.mxu0 0
      %6049 = vmatmul.mubr.bf16.gmra.mrb[0].mxu0 %v5997
      %v6050 = vpop.f32.mrb[0].mxu0
      %v6051 = vadd.f32 0.0, %v6050
      %v6052 = vpop.f32.mrb[0].mxu0
      %v6053 = vpop.f32.mrb[0].mxu0
      %v6054 = vadd.f32 0.0, %v6053
      %v6055 = vpop.f32.mrb[0].mxu0
      %6056 = vmatprep.mubr.bf16.mxu0 0
      %6057 = vmatmul.mubr.bf16.gmra.mrb[0].mxu0 %v6000
      %v6058 = vpop.f32.mrb[0].mxu0
      %v6059 = vadd.f32 0.0, %v6058
      %v6060 = vpop.f32.mrb[0].mxu0
      %v6061 = vpop.f32.mrb[0].mxu0
      %v6062 = vadd.f32 0.0, %v6061
      %v6063 = vpop.f32.mrb[0].mxu0
      %6064 = vmatprep.mubr.bf16.mxu0 0
      %6065 = vmatmul.mubr.bf16.gmra.mrb[0].mxu0 %v6003
      %v6066 = vpop.f32.mrb[0].mxu0
      %v6067 = vadd.f32 0.0, %v6066
      %v6068 = vpop.f32.mrb[0].mxu0
      %v6069 = vpop.f32.mrb[0].mxu0
      %v6070 = vadd.f32 0.0, %v6069
      %v6071 = vpop.f32.mrb[0].mxu0
      %6072 = vdwg.mxu0
      %v6076 = vunpack.c.l.b16 %v5973
      %v6077 = vunpack.c.l.b16 %v5974
      %v6078 = vunpack.c.l.b16 %v5975
      %v6079 = vpack.c.b16 %v6077, %v6076
      %v6080 = vpack.c.b16 %v6078, %v6078
      %v6083 = vsel %vm5850, %v5969, 0
      %v6086 = vsel %vm5850, %v5970, 0
      %v6089 = vsel %vm5850, %v5971, 0
      %v6092 = vsel %vm5850, %v5972, 0
      %v6095 = vsel %vm735, %v6080, 0
      %6097 = vmatprep.subr.bf16.mxu0 0
      %6098 = vmatpush1.bf16.msra.mxu0 %v6079
      %6099 = vmatprep.subr.bf16.mxu0 0
      %6100 = vmatpush1.bf16.msra.mxu0 %v6095
      %6101 = vmatprep.subr.bf16.mxu0 0
      %6102 = vmatpush1.bf16.msra.mxu0 0
      %6103 = vmatprep.subr.bf16.mxu0 0
      %6104 = vmatpush1.bf16.msra.mxu0 0
      %6105 = vmatprep.subr.bf16.mxu0 0
      %6106 = vmatpush1.bf16.msra.mxu0 0
      %6107 = vmatprep.subr.bf16.mxu0 0
      %6108 = vmatpush1.bf16.msra.mxu0 0
      %6109 = vmatprep.subr.bf16.mxu0 0
      %6110 = vmatpush1.bf16.msra.mxu0 0
      %6111 = vmatprep.subr.bf16.mxu0 0
      %6112 = vmatpush1.bf16.msra.mxu0 0
      %6113 = vmatprep.subr.bf16.mxu0 0
      %6114 = vmatpush1.bf16.msra.mxu0 0
      %6115 = vmatprep.subr.bf16.mxu0 0
      %6116 = vmatpush1.bf16.msra.mxu0 0
      %6117 = vmatprep.subr.bf16.mxu0 0
      %6118 = vmatpush1.bf16.msra.mxu0 0
      %6119 = vmatprep.subr.bf16.mxu0 0
      %6120 = vmatpush1.bf16.msra.mxu0 0
      %6121 = vmatprep.subr.bf16.mxu0 0
      %6122 = vmatpush1.bf16.msra.mxu0 0
      %6123 = vmatprep.subr.bf16.mxu0 0
      %6124 = vmatpush1.bf16.msra.mxu0 0
      %6125 = vmatprep.subr.bf16.mxu0 0
      %6126 = vmatpush1.bf16.msra.mxu0 0
      %6127 = vmatprep.subr.bf16.mxu0 0
      %6128 = vmatpush1.bf16.msra.mxu0 0
      %6129 = vmatprep.mubr.bf16.mxu0 0
      %6130 = vmatmul.mubr.bf16.gmra.mrb[0].mxu0 %v6083
      %v6131 = vpop.f32.mrb[0].mxu0
      %v6132 = vadd.f32 %v6043, %v6131
      %v6133 = vpop.f32.mrb[0].mxu0
      %v6134 = vpop.f32.mrb[0].mxu0
      %v6135 = vadd.f32 %v6046, %v6134
      %v6136 = vpop.f32.mrb[0].mxu0
      %6137 = vmatprep.mubr.bf16.mxu0 0
      %6138 = vmatmul.mubr.bf16.gmra.mrb[0].mxu0 %v6086
      %v6139 = vpop.f32.mrb[0].mxu0
      %v6140 = vadd.f32 %v6051, %v6139
      %v6141 = vpop.f32.mrb[0].mxu0
      %v6142 = vpop.f32.mrb[0].mxu0
      %v6143 = vadd.f32 %v6054, %v6142
      %v6144 = vpop.f32.mrb[0].mxu0
      %6145 = vmatprep.mubr.bf16.mxu0 0
      %6146 = vmatmul.mubr.bf16.gmra.mrb[0].mxu0 %v6089
      %v6147 = vpop.f32.mrb[0].mxu0
      %v6148 = vadd.f32 %v6059, %v6147
      %v6149 = vpop.f32.mrb[0].mxu0
      %v6150 = vpop.f32.mrb[0].mxu0
      %v6151 = vadd.f32 %v6062, %v6150
      %v6152 = vpop.f32.mrb[0].mxu0
      %6153 = vmatprep.mubr.bf16.mxu0 0
      %6154 = vmatmul.mubr.bf16.gmra.mrb[0].mxu0 %v6092
      %v6155 = vpop.f32.mrb[0].mxu0
      %v6156 = vadd.f32 %v6067, %v6155
      %v6157 = vpop.f32.mrb[0].mxu0
      %v6158 = vpop.f32.mrb[0].mxu0
      %v6159 = vadd.f32 %v6070, %v6158
      %v6160 = vpop.f32.mrb[0].mxu0
      %6161 = vdwg.mxu0
      %v6170 = vrot.slane %v5892, 1
      %v6171 = vrot.slane %v5893, 1
      %v6172 = vsel %vm1130, %v6170, %v6171
      %v6173 = vrot.slane %v5895, 1
      %v6174 = vrot.slane %v5896, 1
      %v6175 = vsel %vm1130, %v6173, %v6174
      %v6176 = vrot.slane %v5898, 1
      %v6177 = vrot.slane %v5899, 1
      %v6178 = vsel %vm1130, %v6176, %v6177
      %v6179 = vrot.slane %v5901, 1
      %v6180 = vrot.slane %v5902, 1
      %v6181 = vsel %vm1130, %v6179, %v6180
      %v6182 = vrot.slane %v5904, 1
      %v6183 = vrot.slane %v5905, 1
      %v6184 = vsel %vm1130, %v6182, %v6183
      %v6185 = vrot.slane %v5907, 1
      %v6186 = vrot.slane %v5908, 1
      %v6187 = vsel %vm1130, %v6185, %v6186
      %v6188 = vrot.slane %v5910, 1
      %v6189 = vrot.slane %v5911, 1
      %v6190 = vsel %vm1130, %v6188, %v6189
      %v6191 = vrot.slane %v5913, 1
      %v6192 = vrot.slane %v5914, 1
      %v6193 = vsel %vm1130, %v6191, %v6192
      %v6202 = vpack.c.bf16 %v6175, %v6172
      %v6203 = vpack.c.bf16 %v6181, %v6178
      %v6204 = vpack.c.bf16 %v6187, %v6184
      %v6205 = vpack.c.bf16 %v6193, %v6190
      %s6206 = scalar_lea.vmem %s5, 24
      %v6207 = vld [vmem:[%s6206] sm:$0xf]
      %v6208 = vld [vmem:[%s6206 + $0x4] sm:$0xf]
      %v6209 = vld [vmem:[%s6206 + $0x8] sm:$0x3]
      %v6213 = vunpack.c.l.b16 %v6207
      %v6214 = vunpack.c.l.b16 %v6208
      %v6215 = vunpack.c.l.b16 %v6209
      %v6216 = vpack.c.b16 %v6214, %v6213
      %v6217 = vpack.c.b16 %v6215, %v6215
      %v6220 = vsel %vm5850, %v6202, 0
      %v6223 = vsel %vm5850, %v6203, 0
      %v6226 = vsel %vm5850, %v6204, 0
      %v6229 = vsel %vm5850, %v6205, 0
      %v6232 = vsel %vm735, %v6217, 0
      %6234 = vmatprep.subr.bf16.mxu0 0
      %6235 = vmatpush1.bf16.msra.mxu0 %v6216
      %6236 = vmatprep.subr.bf16.mxu0 0
      %6237 = vmatpush1.bf16.msra.mxu0 %v6232
      %6238 = vmatprep.subr.bf16.mxu0 0
      %6239 = vmatpush1.bf16.msra.mxu0 0
      %6240 = vmatprep.subr.bf16.mxu0 0
      %6241 = vmatpush1.bf16.msra.mxu0 0
      %6242 = vmatprep.subr.bf16.mxu0 0
      %6243 = vmatpush1.bf16.msra.mxu0 0
      %6244 = vmatprep.subr.bf16.mxu0 0
      %6245 = vmatpush1.bf16.msra.mxu0 0
      %6246 = vmatprep.subr.bf16.mxu0 0
      %6247 = vmatpush1.bf16.msra.mxu0 0
      %6248 = vmatprep.subr.bf16.mxu0 0
      %6249 = vmatpush1.bf16.msra.mxu0 0
      %6250 = vmatprep.subr.bf16.mxu0 0
      %6251 = vmatpush1.bf16.msra.mxu0 0
      %6252 = vmatprep.subr.bf16.mxu0 0
      %6253 = vmatpush1.bf16.msra.mxu0 0
      %6254 = vmatprep.subr.bf16.mxu0 0
      %6255 = vmatpush1.bf16.msra.mxu0 0
      %6256 = vmatprep.subr.bf16.mxu0 0
      %6257 = vmatpush1.bf16.msra.mxu0 0
      %6258 = vmatprep.subr.bf16.mxu0 0
      %6259 = vmatpush1.bf16.msra.mxu0 0
      %6260 = vmatprep.subr.bf16.mxu0 0
      %6261 = vmatpush1.bf16.msra.mxu0 0
      %6262 = vmatprep.subr.bf16.mxu0 0
      %6263 = vmatpush1.bf16.msra.mxu0 0
      %6264 = vmatprep.subr.bf16.mxu0 0
      %6265 = vmatpush1.bf16.msra.mxu0 0
      %6266 = vmatprep.mubr.bf16.mxu0 0
      %6267 = vmatmul.mubr.bf16.gmra.mrb[0].mxu0 %v6220
      %v6268 = vpop.f32.mrb[0].mxu0
      %v6269 = vadd.f32 0.0, %v6268
      %v6270 = vpop.f32.mrb[0].mxu0
      %v6271 = vpop.f32.mrb[0].mxu0
      %v6272 = vadd.f32 0.0, %v6271
      %v6273 = vpop.f32.mrb[0].mxu0
      %6274 = vmatprep.mubr.bf16.mxu0 0
      %6275 = vmatmul.mubr.bf16.gmra.mrb[0].mxu0 %v6223
      %v6276 = vpop.f32.mrb[0].mxu0
      %v6277 = vadd.f32 0.0, %v6276
      %v6278 = vpop.f32.mrb[0].mxu0
      %v6279 = vpop.f32.mrb[0].mxu0
      %v6280 = vadd.f32 0.0, %v6279
      %v6281 = vpop.f32.mrb[0].mxu0
      %6282 = vmatprep.mubr.bf16.mxu0 0
      %6283 = vmatmul.mubr.bf16.gmra.mrb[0].mxu0 %v6226
      %v6284 = vpop.f32.mrb[0].mxu0
      %v6285 = vadd.f32 0.0, %v6284
      %v6286 = vpop.f32.mrb[0].mxu0
      %v6287 = vpop.f32.mrb[0].mxu0
      %v6288 = vadd.f32 0.0, %v6287
      %v6289 = vpop.f32.mrb[0].mxu0
      %6290 = vmatprep.mubr.bf16.mxu0 0
      %6291 = vmatmul.mubr.bf16.gmra.mrb[0].mxu0 %v6229
      %v6292 = vpop.f32.mrb[0].mxu0
      %v6293 = vadd.f32 0.0, %v6292
      %v6294 = vpop.f32.mrb[0].mxu0
      %v6295 = vpop.f32.mrb[0].mxu0
      %v6296 = vadd.f32 0.0, %v6295
      %v6297 = vpop.f32.mrb[0].mxu0
      %6298 = vdwg.mxu0
      %v6299 = vadd.f32 %v6132, %v6269
      %v6300 = vadd.f32 %v6135, %v6272
      %v6301 = vadd.f32 %v6140, %v6277
      %v6302 = vadd.f32 %v6143, %v6280
      %v6303 = vadd.f32 %v6148, %v6285
      %v6304 = vadd.f32 %v6151, %v6288
      %v6305 = vadd.f32 %v6156, %v6293
      %v6306 = vadd.f32 %v6159, %v6296
      %v6309 = vrot.slane %v5915, 7
      %v6310 = vrot.slane %v5916, 7
      %v6311 = vsel %vm539, %v6309, %v6310
      %v6313 = vpack.c.bf16 %v5945, %v5942
      %v6314 = vpack.c.bf16 %v5951, %v5948
      %v6315 = vpack.c.bf16 %v5957, %v5954
      %v6316 = vpack.c.bf16 %v6311, %v5960
      %s6317 = scalar_lea.vmem %s5, 36
      %v6318 = vld [vmem:[%s6317] sm:$0xf]
      %v6319 = vld [vmem:[%s6317 + $0x4] sm:$0xf]
      %v6320 = vld [vmem:[%s6317 + $0x8] sm:$0x3]
      %v6324 = vunpack.c.l.b16 %v6318
      %v6325 = vunpack.c.l.b16 %v6319
      %v6326 = vunpack.c.l.b16 %v6320
      %v6327 = vpack.c.b16 %v6325, %v6324
      %v6328 = vpack.c.b16 %v6326, %v6326
      %v6331 = vsel %vm5850, %v6313, 0
      %v6334 = vsel %vm5850, %v6314, 0
      %v6337 = vsel %vm5850, %v6315, 0
      %v6340 = vsel %vm5850, %v6316, 0
      %v6343 = vsel %vm735, %v6328, 0
      %6345 = vmatprep.subr.bf16.mxu0 0
      %6346 = vmatpush1.bf16.msra.mxu0 %v6327
      %6347 = vmatprep.subr.bf16.mxu0 0
      %6348 = vmatpush1.bf16.msra.mxu0 %v6343
      %6349 = vmatprep.subr.bf16.mxu0 0
      %6350 = vmatpush1.bf16.msra.mxu0 0
      %6351 = vmatprep.subr.bf16.mxu0 0
      %6352 = vmatpush1.bf16.msra.mxu0 0
      %6353 = vmatprep.subr.bf16.mxu0 0
      %6354 = vmatpush1.bf16.msra.mxu0 0
      %6355 = vmatprep.subr.bf16.mxu0 0
      %6356 = vmatpush1.bf16.msra.mxu0 0
      %6357 = vmatprep.subr.bf16.mxu0 0
      %6358 = vmatpush1.bf16.msra.mxu0 0
      %6359 = vmatprep.subr.bf16.mxu0 0
      %6360 = vmatpush1.bf16.msra.mxu0 0
      %6361 = vmatprep.subr.bf16.mxu0 0
      %6362 = vmatpush1.bf16.msra.mxu0 0
      %6363 = vmatprep.subr.bf16.mxu0 0
      %6364 = vmatpush1.bf16.msra.mxu0 0
      %6365 = vmatprep.subr.bf16.mxu0 0
      %6366 = vmatpush1.bf16.msra.mxu0 0
      %6367 = vmatprep.subr.bf16.mxu0 0
      %6368 = vmatpush1.bf16.msra.mxu0 0
      %6369 = vmatprep.subr.bf16.mxu0 0
      %6370 = vmatpush1.bf16.msra.mxu0 0
      %6371 = vmatprep.subr.bf16.mxu0 0
      %6372 = vmatpush1.bf16.msra.mxu0 0
      %6373 = vmatprep.subr.bf16.mxu0 0
      %6374 = vmatpush1.bf16.msra.mxu0 0
      %6375 = vmatprep.subr.bf16.mxu0 0
      %6376 = vmatpush1.bf16.msra.mxu0 0
      %6377 = vmatprep.mubr.bf16.mxu0 0
      %6378 = vmatmul.mubr.bf16.gmra.mrb[0].mxu0 %v6331
      %v6379 = vpop.f32.mrb[0].mxu0
      %v6380 = vadd.f32 0.0, %v6379
      %v6381 = vpop.f32.mrb[0].mxu0
      %v6382 = vpop.f32.mrb[0].mxu0
      %v6383 = vadd.f32 0.0, %v6382
      %v6384 = vpop.f32.mrb[0].mxu0
      %6385 = vmatprep.mubr.bf16.mxu0 0
      %6386 = vmatmul.mubr.bf16.gmra.mrb[0].mxu0 %v6334
      %v6387 = vpop.f32.mrb[0].mxu0
      %v6388 = vadd.f32 0.0, %v6387
      %v6389 = vpop.f32.mrb[0].mxu0
      %v6390 = vpop.f32.mrb[0].mxu0
      %v6391 = vadd.f32 0.0, %v6390
      %v6392 = vpop.f32.mrb[0].mxu0
      %6393 = vmatprep.mubr.bf16.mxu0 0
      %6394 = vmatmul.mubr.bf16.gmra.mrb[0].mxu0 %v6337
      %v6395 = vpop.f32.mrb[0].mxu0
      %v6396 = vadd.f32 0.0, %v6395
      %v6397 = vpop.f32.mrb[0].mxu0
      %v6398 = vpop.f32.mrb[0].mxu0
      %v6399 = vadd.f32 0.0, %v6398
      %v6400 = vpop.f32.mrb[0].mxu0
      %6401 = vmatprep.mubr.bf16.mxu0 0
      %6402 = vmatmul.mubr.bf16.gmra.mrb[0].mxu0 %v6340
      %v6403 = vpop.f32.mrb[0].mxu0
      %v6404 = vadd.f32 0.0, %v6403
      %v6405 = vpop.f32.mrb[0].mxu0
      %v6406 = vpop.f32.mrb[0].mxu0
      %v6407 = vadd.f32 0.0, %v6406
      %v6408 = vpop.f32.mrb[0].mxu0
      %6409 = vdwg.mxu0
      %v6410 = vadd.f32 %v6299, %v6380
      %v6411 = vadd.f32 %v6300, %v6383
      %v6412 = vadd.f32 %v6301, %v6388
      %v6413 = vadd.f32 %v6302, %v6391
      %v6414 = vadd.f32 %v6303, %v6396
      %v6415 = vadd.f32 %v6304, %v6399
      %v6416 = vadd.f32 %v6305, %v6404
      %v6417 = vadd.f32 %v6306, %v6407
      %v6418 = vpack.c.bf16 %v5898, %v5895
      %v6419 = vpack.c.bf16 %v5904, %v5901
      %v6420 = vpack.c.bf16 %v5910, %v5907
      %v6421 = vpack.c.bf16 %v5916, %v5913
      %s6422 = scalar_lea.vmem %s5, 48
      %v6423 = vld [vmem:[%s6422] sm:$0xf]
      %v6424 = vld [vmem:[%s6422 + $0x4] sm:$0xf]
      %v6425 = vld [vmem:[%s6422 + $0x8] sm:$0x3]
      %v6429 = vunpack.c.l.b16 %v6423
      %v6430 = vunpack.c.l.b16 %v6424
      %v6431 = vunpack.c.l.b16 %v6425
      %v6432 = vpack.c.b16 %v6430, %v6429
      %v6433 = vpack.c.b16 %v6431, %v6431
      %v6436 = vsel %vm5850, %v6418, 0
      %v6439 = vsel %vm5850, %v6419, 0
      %v6442 = vsel %vm5850, %v6420, 0
      %v6445 = vsel %vm5850, %v6421, 0
      %v6448 = vsel %vm735, %v6433, 0
      %6450 = vmatprep.subr.bf16.mxu0 0
      %6451 = vmatpush1.bf16.msra.mxu0 %v6432
      %6452 = vmatprep.subr.bf16.mxu0 0
      %6453 = vmatpush1.bf16.msra.mxu0 %v6448
      %6454 = vmatprep.subr.bf16.mxu0 0
      %6455 = vmatpush1.bf16.msra.mxu0 0
      %6456 = vmatprep.subr.bf16.mxu0 0
      %6457 = vmatpush1.bf16.msra.mxu0 0
      %6458 = vmatprep.subr.bf16.mxu0 0
      %6459 = vmatpush1.bf16.msra.mxu0 0
      %6460 = vmatprep.subr.bf16.mxu0 0
      %6461 = vmatpush1.bf16.msra.mxu0 0
      %6462 = vmatprep.subr.bf16.mxu0 0
      %6463 = vmatpush1.bf16.msra.mxu0 0
      %6464 = vmatprep.subr.bf16.mxu0 0
      %6465 = vmatpush1.bf16.msra.mxu0 0
      %6466 = vmatprep.subr.bf16.mxu0 0
      %6467 = vmatpush1.bf16.msra.mxu0 0
      %6468 = vmatprep.subr.bf16.mxu0 0
      %6469 = vmatpush1.bf16.msra.mxu0 0
      %6470 = vmatprep.subr.bf16.mxu0 0
      %6471 = vmatpush1.bf16.msra.mxu0 0
      %6472 = vmatprep.subr.bf16.mxu0 0
      %6473 = vmatpush1.bf16.msra.mxu0 0
      %6474 = vmatprep.subr.bf16.mxu0 0
      %6475 = vmatpush1.bf16.msra.mxu0 0
      %6476 = vmatprep.subr.bf16.mxu0 0
      %6477 = vmatpush1.bf16.msra.mxu0 0
      %6478 = vmatprep.subr.bf16.mxu0 0
      %6479 = vmatpush1.bf16.msra.mxu0 0
      %6480 = vmatprep.subr.bf16.mxu0 0
      %6481 = vmatpush1.bf16.msra.mxu0 0
      %6482 = vmatprep.mubr.bf16.mxu0 0
      %6483 = vmatmul.mubr.bf16.gmra.mrb[0].mxu0 %v6436
      %v6484 = vpop.f32.mrb[0].mxu0
      %v6485 = vadd.f32 0.0, %v6484
      %v6486 = vpop.f32.mrb[0].mxu0
      %v6487 = vpop.f32.mrb[0].mxu0
      %v6488 = vadd.f32 0.0, %v6487
      %v6489 = vpop.f32.mrb[0].mxu0
      %6490 = vmatprep.mubr.bf16.mxu0 0
      %6491 = vmatmul.mubr.bf16.gmra.mrb[0].mxu0 %v6439
      %v6492 = vpop.f32.mrb[0].mxu0
      %v6493 = vadd.f32 0.0, %v6492
      %v6494 = vpop.f32.mrb[0].mxu0
      %v6495 = vpop.f32.mrb[0].mxu0
      %v6496 = vadd.f32 0.0, %v6495
      %v6497 = vpop.f32.mrb[0].mxu0
      %6498 = vmatprep.mubr.bf16.mxu0 0
      %6499 = vmatmul.mubr.bf16.gmra.mrb[0].mxu0 %v6442
      %v6500 = vpop.f32.mrb[0].mxu0
      %v6501 = vadd.f32 0.0, %v6500
      %v6502 = vpop.f32.mrb[0].mxu0
      %v6503 = vpop.f32.mrb[0].mxu0
      %v6504 = vadd.f32 0.0, %v6503
      %v6505 = vpop.f32.mrb[0].mxu0
      %6506 = vmatprep.mubr.bf16.mxu0 0
      %6507 = vmatmul.mubr.bf16.gmra.mrb[0].mxu0 %v6445
      %v6508 = vpop.f32.mrb[0].mxu0
      %v6509 = vadd.f32 0.0, %v6508
      %v6510 = vpop.f32.mrb[0].mxu0
      %v6511 = vpop.f32.mrb[0].mxu0
      %v6512 = vadd.f32 0.0, %v6511
      %v6513 = vpop.f32.mrb[0].mxu0
      %6514 = vdwg.mxu0
      %v6515 = vadd.f32 %v6410, %v6485
      %v6516 = vadd.f32 %v6411, %v6488
      %v6517 = vadd.f32 %v6412, %v6493
      %v6518 = vadd.f32 %v6413, %v6496
      %v6519 = vadd.f32 %v6414, %v6501
      %v6520 = vadd.f32 %v6415, %v6504
      %v6521 = vadd.f32 %v6416, %v6509
      %v6522 = vadd.f32 %v6417, %v6512
      %v6524 = vrot.slane %v5916, 1
      %v6525 = vrot.slane %v5917, 1
      %v6526 = vsel %vm1130, %v6524, %v6525
      %v6528 = vpack.c.bf16 %v6178, %v6175
      %v6529 = vpack.c.bf16 %v6184, %v6181
      %v6530 = vpack.c.bf16 %v6190, %v6187
      %v6531 = vpack.c.bf16 %v6526, %v6193
      %s6532 = scalar_lea.vmem %s5, 60
      %v6533 = vld [vmem:[%s6532] sm:$0xf]
      %v6534 = vld [vmem:[%s6532 + $0x4] sm:$0xf]
      %v6535 = vld [vmem:[%s6532 + $0x8] sm:$0x3]
      %v6539 = vunpack.c.l.b16 %v6533
      %v6540 = vunpack.c.l.b16 %v6534
      %v6541 = vunpack.c.l.b16 %v6535
      %v6542 = vpack.c.b16 %v6540, %v6539
      %v6543 = vpack.c.b16 %v6541, %v6541
      %v6546 = vsel %vm5850, %v6528, 0
      %v6549 = vsel %vm5850, %v6529, 0
      %v6552 = vsel %vm5850, %v6530, 0
      %v6555 = vsel %vm5850, %v6531, 0
      %v6558 = vsel %vm735, %v6543, 0
      %6560 = vmatprep.subr.bf16.mxu0 0
      %6561 = vmatpush1.bf16.msra.mxu0 %v6542
      %6562 = vmatprep.subr.bf16.mxu0 0
      %6563 = vmatpush1.bf16.msra.mxu0 %v6558
      %6564 = vmatprep.subr.bf16.mxu0 0
      %6565 = vmatpush1.bf16.msra.mxu0 0
      %6566 = vmatprep.subr.bf16.mxu0 0
      %6567 = vmatpush1.bf16.msra.mxu0 0
      %6568 = vmatprep.subr.bf16.mxu0 0
      %6569 = vmatpush1.bf16.msra.mxu0 0
      %6570 = vmatprep.subr.bf16.mxu0 0
      %6571 = vmatpush1.bf16.msra.mxu0 0
      %6572 = vmatprep.subr.bf16.mxu0 0
      %6573 = vmatpush1.bf16.msra.mxu0 0
      %6574 = vmatprep.subr.bf16.mxu0 0
      %6575 = vmatpush1.bf16.msra.mxu0 0
      %6576 = vmatprep.subr.bf16.mxu0 0
      %6577 = vmatpush1.bf16.msra.mxu0 0
      %6578 = vmatprep.subr.bf16.mxu0 0
      %6579 = vmatpush1.bf16.msra.mxu0 0
      %6580 = vmatprep.subr.bf16.mxu0 0
      %6581 = vmatpush1.bf16.msra.mxu0 0
      %6582 = vmatprep.subr.bf16.mxu0 0
      %6583 = vmatpush1.bf16.msra.mxu0 0
      %6584 = vmatprep.subr.bf16.mxu0 0
      %6585 = vmatpush1.bf16.msra.mxu0 0
      %6586 = vmatprep.subr.bf16.mxu0 0
      %6587 = vmatpush1.bf16.msra.mxu0 0
      %6588 = vmatprep.subr.bf16.mxu0 0
      %6589 = vmatpush1.bf16.msra.mxu0 0
      %6590 = vmatprep.subr.bf16.mxu0 0
      %6591 = vmatpush1.bf16.msra.mxu0 0
      %6592 = vmatprep.mubr.bf16.mxu0 0
      %6593 = vmatmul.mubr.bf16.gmra.mrb[0].mxu0 %v6546
      %v6594 = vpop.f32.mrb[0].mxu0
      %v6595 = vadd.f32 0.0, %v6594
      %v6596 = vpop.f32.mrb[0].mxu0
      %v6597 = vpop.f32.mrb[0].mxu0
      %v6598 = vadd.f32 0.0, %v6597
      %v6599 = vpop.f32.mrb[0].mxu0
      %6600 = vmatprep.mubr.bf16.mxu0 0
      %6601 = vmatmul.mubr.bf16.gmra.mrb[0].mxu0 %v6549
      %v6602 = vpop.f32.mrb[0].mxu0
      %v6603 = vadd.f32 0.0, %v6602
      %v6604 = vpop.f32.mrb[0].mxu0
      %v6605 = vpop.f32.mrb[0].mxu0
      %v6606 = vadd.f32 0.0, %v6605
      %v6607 = vpop.f32.mrb[0].mxu0
      %6608 = vmatprep.mubr.bf16.mxu0 0
      %6609 = vmatmul.mubr.bf16.gmra.mrb[0].mxu0 %v6552
      %v6610 = vpop.f32.mrb[0].mxu0
      %v6611 = vadd.f32 0.0, %v6610
      %v6612 = vpop.f32.mrb[0].mxu0
      %v6613 = vpop.f32.mrb[0].mxu0
      %v6614 = vadd.f32 0.0, %v6613
      %v6615 = vpop.f32.mrb[0].mxu0
      %6616 = vmatprep.mubr.bf16.mxu0 0
      %6617 = vmatmul.mubr.bf16.gmra.mrb[0].mxu0 %v6555
      %v6618 = vpop.f32.mrb[0].mxu0
      %v6619 = vadd.f32 0.0, %v6618
      %v6620 = vpop.f32.mrb[0].mxu0
      %v6621 = vpop.f32.mrb[0].mxu0
      %v6622 = vadd.f32 0.0, %v6621
      %v6623 = vpop.f32.mrb[0].mxu0
      %6624 = vdwg.mxu0
      %v6625 = vadd.f32 %v6515, %v6595
      %v6626 = vadd.f32 %v6516, %v6598
      %v6627 = vadd.f32 %v6517, %v6603
      %v6628 = vadd.f32 %v6518, %v6606
      %v6629 = vadd.f32 %v6519, %v6611
      %v6630 = vadd.f32 %v6520, %v6614
      %v6631 = vadd.f32 %v6521, %v6619
      %v6632 = vadd.f32 %v6522, %v6622
      %v6635 = vrot.slane %v5918, 7
      %v6636 = vrot.slane %v5919, 7
      %v6637 = vsel %vm539, %v6635, %v6636
      %v6639 = vpack.c.bf16 %v6637, %v6311
      %s6640 = scalar_lea.vmem %s5, 72
      %v6641 = vld [vmem:[%s6640] sm:$0xf]
      %v6642 = vld [vmem:[%s6640 + $0x4] sm:$0xf]
      %v6643 = vld [vmem:[%s6640 + $0x8] sm:$0x3]
      %v6647 = vunpack.c.l.b16 %v6641
      %v6648 = vunpack.c.l.b16 %v6642
      %v6649 = vunpack.c.l.b16 %v6643
      %v6650 = vpack.c.b16 %v6648, %v6647
      %v6651 = vpack.c.b16 %v6649, %v6649
      %v6654 = vsel %vm5850, %v6639, 0
      %v6657 = vsel %vm735, %v6651, 0
      %6659 = vmatprep.subr.bf16.mxu0 0
      %6660 = vmatpush1.bf16.msra.mxu0 %v6650
      %6661 = vmatprep.subr.bf16.mxu0 0
      %6662 = vmatpush1.bf16.msra.mxu0 %v6657
      %6663 = vmatprep.subr.bf16.mxu0 0
      %6664 = vmatpush1.bf16.msra.mxu0 0
      %6665 = vmatprep.subr.bf16.mxu0 0
      %6666 = vmatpush1.bf16.msra.mxu0 0
      %6667 = vmatprep.subr.bf16.mxu0 0
      %6668 = vmatpush1.bf16.msra.mxu0 0
      %6669 = vmatprep.subr.bf16.mxu0 0
      %6670 = vmatpush1.bf16.msra.mxu0 0
      %6671 = vmatprep.subr.bf16.mxu0 0
      %6672 = vmatpush1.bf16.msra.mxu0 0
      %6673 = vmatprep.subr.bf16.mxu0 0
      %6674 = vmatpush1.bf16.msra.mxu0 0
      %6675 = vmatprep.subr.bf16.mxu0 0
      %6676 = vmatpush1.bf16.msra.mxu0 0
      %6677 = vmatprep.subr.bf16.mxu0 0
      %6678 = vmatpush1.bf16.msra.mxu0 0
      %6679 = vmatprep.subr.bf16.mxu0 0
      %6680 = vmatpush1.bf16.msra.mxu0 0
      %6681 = vmatprep.subr.bf16.mxu0 0
      %6682 = vmatpush1.bf16.msra.mxu0 0
      %6683 = vmatprep.subr.bf16.mxu0 0
      %6684 = vmatpush1.bf16.msra.mxu0 0
      %6685 = vmatprep.subr.bf16.mxu0 0
      %6686 = vmatpush1.bf16.msra.mxu0 0
      %6687 = vmatprep.subr.bf16.mxu0 0
      %6688 = vmatpush1.bf16.msra.mxu0 0
      %6689 = vmatprep.subr.bf16.mxu0 0
      %6690 = vmatpush1.bf16.msra.mxu0 0
      %6691 = vmatprep.mubr.bf16.mxu0 0
      %6692 = vmatmul.mubr.bf16.gmra.mrb[0].mxu0 %v6086
      %v6693 = vpop.f32.mrb[0].mxu0
      %v6694 = vadd.f32 0.0, %v6693
      %v6695 = vpop.f32.mrb[0].mxu0
      %v6696 = vpop.f32.mrb[0].mxu0
      %v6697 = vadd.f32 0.0, %v6696
      %v6698 = vpop.f32.mrb[0].mxu0
      %6699 = vmatprep.mubr.bf16.mxu0 0
      %6700 = vmatmul.mubr.bf16.gmra.mrb[0].mxu0 %v6089
      %v6701 = vpop.f32.mrb[0].mxu0
      %v6702 = vadd.f32 0.0, %v6701
      %v6703 = vpop.f32.mrb[0].mxu0
      %v6704 = vpop.f32.mrb[0].mxu0
      %v6705 = vadd.f32 0.0, %v6704
      %v6706 = vpop.f32.mrb[0].mxu0
      %6707 = vmatprep.mubr.bf16.mxu0 0
      %6708 = vmatmul.mubr.bf16.gmra.mrb[0].mxu0 %v6092
      %v6709 = vpop.f32.mrb[0].mxu0
      %v6710 = vadd.f32 0.0, %v6709
      %v6711 = vpop.f32.mrb[0].mxu0
      %v6712 = vpop.f32.mrb[0].mxu0
      %v6713 = vadd.f32 0.0, %v6712
      %v6714 = vpop.f32.mrb[0].mxu0
      %6715 = vmatprep.mubr.bf16.mxu0 0
      %6716 = vmatmul.mubr.bf16.gmra.mrb[0].mxu0 %v6654
      %v6717 = vpop.f32.mrb[0].mxu0
      %v6718 = vadd.f32 0.0, %v6717
      %v6719 = vpop.f32.mrb[0].mxu0
      %v6720 = vpop.f32.mrb[0].mxu0
      %v6721 = vadd.f32 0.0, %v6720
      %v6722 = vpop.f32.mrb[0].mxu0
      %6723 = vdwg.mxu0
      %v6724 = vadd.f32 %v6625, %v6694
      %v6725 = vadd.f32 %v6626, %v6697
      %v6726 = vadd.f32 %v6627, %v6702
      %v6727 = vadd.f32 %v6628, %v6705
      %v6728 = vadd.f32 %v6629, %v6710
      %v6729 = vadd.f32 %v6630, %v6713
      %v6730 = vadd.f32 %v6631, %v6718
      %v6731 = vadd.f32 %v6632, %v6721
      %v6732 = vpack.c.bf16 %v5919, %v5916
      %s6733 = scalar_lea.vmem %s5, 84
      %v6734 = vld [vmem:[%s6733] sm:$0xf]
      %v6735 = vld [vmem:[%s6733 + $0x4] sm:$0xf]
      %v6736 = vld [vmem:[%s6733 + $0x8] sm:$0x3]
      %v6740 = vunpack.c.l.b16 %v6734
      %v6741 = vunpack.c.l.b16 %v6735
      %v6742 = vunpack.c.l.b16 %v6736
      %v6743 = vpack.c.b16 %v6741, %v6740
      %v6744 = vpack.c.b16 %v6742, %v6742
      %v6747 = vsel %vm5850, %v6732, 0
      %v6750 = vsel %vm735, %v6744, 0
      %6752 = vmatprep.subr.bf16.mxu0 0
      %6753 = vmatpush1.bf16.msra.mxu0 %v6743
      %6754 = vmatprep.subr.bf16.mxu0 0
      %6755 = vmatpush1.bf16.msra.mxu0 %v6750
      %6756 = vmatprep.subr.bf16.mxu0 0
      %6757 = vmatpush1.bf16.msra.mxu0 0
      %6758 = vmatprep.subr.bf16.mxu0 0
      %6759 = vmatpush1.bf16.msra.mxu0 0
      %6760 = vmatprep.subr.bf16.mxu0 0
      %6761 = vmatpush1.bf16.msra.mxu0 0
      %6762 = vmatprep.subr.bf16.mxu0 0
      %6763 = vmatpush1.bf16.msra.mxu0 0
      %6764 = vmatprep.subr.bf16.mxu0 0
      %6765 = vmatpush1.bf16.msra.mxu0 0
      %6766 = vmatprep.subr.bf16.mxu0 0
      %6767 = vmatpush1.bf16.msra.mxu0 0
      %6768 = vmatprep.subr.bf16.mxu0 0
      %6769 = vmatpush1.bf16.msra.mxu0 0
      %6770 = vmatprep.subr.bf16.mxu0 0
      %6771 = vmatpush1.bf16.msra.mxu0 0
      %6772 = vmatprep.subr.bf16.mxu0 0
      %6773 = vmatpush1.bf16.msra.mxu0 0
      %6774 = vmatprep.subr.bf16.mxu0 0
      %6775 = vmatpush1.bf16.msra.mxu0 0
      %6776 = vmatprep.subr.bf16.mxu0 0
      %6777 = vmatpush1.bf16.msra.mxu0 0
      %6778 = vmatprep.subr.bf16.mxu0 0
      %6779 = vmatpush1.bf16.msra.mxu0 0
      %6780 = vmatprep.subr.bf16.mxu0 0
      %6781 = vmatpush1.bf16.msra.mxu0 0
      %6782 = vmatprep.subr.bf16.mxu0 0
      %6783 = vmatpush1.bf16.msra.mxu0 0
      %6784 = vmatprep.mubr.bf16.mxu0 0
      %6785 = vmatmul.mubr.bf16.gmra.mrb[0].mxu0 %v5997
      %v6786 = vpop.f32.mrb[0].mxu0
      %v6787 = vadd.f32 0.0, %v6786
      %v6788 = vpop.f32.mrb[0].mxu0
      %v6789 = vpop.f32.mrb[0].mxu0
      %v6790 = vadd.f32 0.0, %v6789
      %v6791 = vpop.f32.mrb[0].mxu0
      %6792 = vmatprep.mubr.bf16.mxu0 0
      %6793 = vmatmul.mubr.bf16.gmra.mrb[0].mxu0 %v6000
      %v6794 = vpop.f32.mrb[0].mxu0
      %v6795 = vadd.f32 0.0, %v6794
      %v6796 = vpop.f32.mrb[0].mxu0
      %v6797 = vpop.f32.mrb[0].mxu0
      %v6798 = vadd.f32 0.0, %v6797
      %v6799 = vpop.f32.mrb[0].mxu0
      %6800 = vmatprep.mubr.bf16.mxu0 0
      %6801 = vmatmul.mubr.bf16.gmra.mrb[0].mxu0 %v6003
      %v6802 = vpop.f32.mrb[0].mxu0
      %v6803 = vadd.f32 0.0, %v6802
      %v6804 = vpop.f32.mrb[0].mxu0
      %v6805 = vpop.f32.mrb[0].mxu0
      %v6806 = vadd.f32 0.0, %v6805
      %v6807 = vpop.f32.mrb[0].mxu0
      %6808 = vmatprep.mubr.bf16.mxu0 0
      %6809 = vmatmul.mubr.bf16.gmra.mrb[0].mxu0 %v6747
      %v6810 = vpop.f32.mrb[0].mxu0
      %v6811 = vadd.f32 0.0, %v6810
      %v6812 = vpop.f32.mrb[0].mxu0
      %v6813 = vpop.f32.mrb[0].mxu0
      %v6814 = vadd.f32 0.0, %v6813
      %v6815 = vpop.f32.mrb[0].mxu0
      %6816 = vdwg.mxu0
      %v6817 = vadd.f32 %v6724, %v6787
      %v6818 = vadd.f32 %v6725, %v6790
      %v6819 = vadd.f32 %v6726, %v6795
      %v6820 = vadd.f32 %v6727, %v6798
      %v6821 = vadd.f32 %v6728, %v6803
      %v6822 = vadd.f32 %v6729, %v6806
      %v6823 = vadd.f32 %v6730, %v6811
      %v6824 = vadd.f32 %v6731, %v6814
      %v6826 = vrot.slane %v5919, 1
      %v6827 = vrot.slane %v5920, 1
      %v6828 = vsel %vm1130, %v6826, %v6827
      %v6830 = vpack.c.bf16 %v6828, %v6526
      %s6831 = scalar_lea.vmem %s5, 96
      %v6832 = vld [vmem:[%s6831] sm:$0xf]
      %v6833 = vld [vmem:[%s6831 + $0x4] sm:$0xf]
      %v6834 = vld [vmem:[%s6831 + $0x8] sm:$0x3]
      %v6838 = vunpack.c.l.b16 %v6832
      %v6839 = vunpack.c.l.b16 %v6833
      %v6840 = vunpack.c.l.b16 %v6834
      %v6841 = vpack.c.b16 %v6839, %v6838
      %v6842 = vpack.c.b16 %v6840, %v6840
      %v6845 = vsel %vm5850, %v6830, 0
      %v6848 = vsel %vm735, %v6842, 0
      %6850 = vmatprep.subr.bf16.mxu0 0
      %6851 = vmatpush1.bf16.msra.mxu0 %v6841
      %6852 = vmatprep.subr.bf16.mxu0 0
      %6853 = vmatpush1.bf16.msra.mxu0 %v6848
      %6854 = vmatprep.subr.bf16.mxu0 0
      %6855 = vmatpush1.bf16.msra.mxu0 0
      %6856 = vmatprep.subr.bf16.mxu0 0
      %6857 = vmatpush1.bf16.msra.mxu0 0
      %6858 = vmatprep.subr.bf16.mxu0 0
      %6859 = vmatpush1.bf16.msra.mxu0 0
      %6860 = vmatprep.subr.bf16.mxu0 0
      %6861 = vmatpush1.bf16.msra.mxu0 0
      %6862 = vmatprep.subr.bf16.mxu0 0
      %6863 = vmatpush1.bf16.msra.mxu0 0
      %6864 = vmatprep.subr.bf16.mxu0 0
      %6865 = vmatpush1.bf16.msra.mxu0 0
      %6866 = vmatprep.subr.bf16.mxu0 0
      %6867 = vmatpush1.bf16.msra.mxu0 0
      %6868 = vmatprep.subr.bf16.mxu0 0
      %6869 = vmatpush1.bf16.msra.mxu0 0
      %6870 = vmatprep.subr.bf16.mxu0 0
      %6871 = vmatpush1.bf16.msra.mxu0 0
      %6872 = vmatprep.subr.bf16.mxu0 0
      %6873 = vmatpush1.bf16.msra.mxu0 0
      %6874 = vmatprep.subr.bf16.mxu0 0
      %6875 = vmatpush1.bf16.msra.mxu0 0
      %6876 = vmatprep.subr.bf16.mxu0 0
      %6877 = vmatpush1.bf16.msra.mxu0 0
      %6878 = vmatprep.subr.bf16.mxu0 0
      %6879 = vmatpush1.bf16.msra.mxu0 0
      %6880 = vmatprep.subr.bf16.mxu0 0
      %6881 = vmatpush1.bf16.msra.mxu0 0
      %6882 = vmatprep.mubr.bf16.mxu0 0
      %6883 = vmatmul.mubr.bf16.gmra.mrb[0].mxu0 %v6223
      %v6884 = vpop.f32.mrb[0].mxu0
      %v6885 = vadd.f32 0.0, %v6884
      %v6886 = vpop.f32.mrb[0].mxu0
      %v6887 = vpop.f32.mrb[0].mxu0
      %v6888 = vadd.f32 0.0, %v6887
      %v6889 = vpop.f32.mrb[0].mxu0
      %6890 = vmatprep.mubr.bf16.mxu0 0
      %6891 = vmatmul.mubr.bf16.gmra.mrb[0].mxu0 %v6226
      %v6892 = vpop.f32.mrb[0].mxu0
      %v6893 = vadd.f32 0.0, %v6892
      %v6894 = vpop.f32.mrb[0].mxu0
      %v6895 = vpop.f32.mrb[0].mxu0
      %v6896 = vadd.f32 0.0, %v6895
      %v6897 = vpop.f32.mrb[0].mxu0
      %6898 = vmatprep.mubr.bf16.mxu0 0
      %6899 = vmatmul.mubr.bf16.gmra.mrb[0].mxu0 %v6229
      %v6900 = vpop.f32.mrb[0].mxu0
      %v6901 = vadd.f32 0.0, %v6900
      %v6902 = vpop.f32.mrb[0].mxu0
      %v6903 = vpop.f32.mrb[0].mxu0
      %v6904 = vadd.f32 0.0, %v6903
      %v6905 = vpop.f32.mrb[0].mxu0
      %6906 = vmatprep.mubr.bf16.mxu0 0
      %6907 = vmatmul.mubr.bf16.gmra.mrb[0].mxu0 %v6845
      %v6908 = vpop.f32.mrb[0].mxu0
      %v6909 = vadd.f32 0.0, %v6908
      %v6910 = vpop.f32.mrb[0].mxu0
      %v6911 = vpop.f32.mrb[0].mxu0
      %v6912 = vadd.f32 0.0, %v6911
      %v6913 = vpop.f32.mrb[0].mxu0
      %6914 = vdwg.mxu0
      %v6915 = vadd.f32 %v6817, %v6885
      %v6916 = vadd.f32 %v6818, %v6888
      %v6917 = vadd.f32 %v6819, %v6893
      %v6918 = vadd.f32 %v6820, %v6896
      %v6919 = vadd.f32 %v6821, %v6901
      %v6920 = vadd.f32 %v6822, %v6904
      %v6921 = vadd.f32 %v6823, %v6909
      %v6922 = vadd.f32 %v6824, %v6912
      %v6923 = vld [vmem:[%s6] sm:$0x1]
      %v6924 = vlaneseq
      %v6925 = vshrl.u32 %v6924, 7
      %v6926 = vsub.s32 0, %v6925
      %v6927 = vrot.slane %v6923, %v6926
      %v6928 = vmul.f32 %v6915, %v6927
      %v6929 = vmul.f32 %v6916, %v6927
      %v6930 = vmul.f32 %v6917, %v6927
      %v6931 = vmul.f32 %v6918, %v6927
      %v6932 = vmul.f32 %v6919, %v6927
      %v6933 = vmul.f32 %v6920, %v6927
      %v6934 = vmul.f32 %v6921, %v6927
      %v6935 = vmul.f32 %v6922, %v6927
      %v6936 = vld [vmem:[%s6 + $0x1] sm:$0x1]
      %v6937 = vlaneseq
      %v6938 = vshrl.u32 %v6937, 7
      %v6939 = vsub.s32 0, %v6938
      %v6940 = vrot.slane %v6936, %v6939
      %v6941 = vadd.f32 %v6928, %v6940
      %v6942 = vadd.f32 %v6929, %v6940
      %v6943 = vadd.f32 %v6930, %v6940
      %v6944 = vadd.f32 %v6931, %v6940
      %v6945 = vadd.f32 %v6932, %v6940
      %v6946 = vadd.f32 %v6933, %v6940
      %v6947 = vadd.f32 %v6934, %v6940
      %v6948 = vadd.f32 %v6935, %v6940
      %v6949 = vmax.f32 %v6941, 0.0
      %v6950 = vmax.f32 %v6942, 0.0
      %v6951 = vmax.f32 %v6943, 0.0
      %v6952 = vmax.f32 %v6944, 0.0
      %v6953 = vmax.f32 %v6945, 0.0
      %v6954 = vmax.f32 %v6946, 0.0
      %v6955 = vmax.f32 %v6947, 0.0
      %v6956 = vmax.f32 %v6948, 0.0
      %v6957 = vpack.c.bf16 %v6950, %v6949
      %v6958 = vpack.c.bf16 %v6952, %v6951
      %v6959 = vpack.c.bf16 %v6954, %v6953
      %v6960 = vpack.c.bf16 %v6956, %v6955
      %v6965 = vunpack.c.l.b16 %v6957
      %v6966 = vunpack.c.h.b16 %v6957
      %v6967 = vunpack.c.l.b16 %v6958
      %v6968 = vunpack.c.h.b16 %v6958
      %v6969 = vunpack.c.l.b16 %v6959
      %v6970 = vunpack.c.h.b16 %v6959
      %v6971 = vunpack.c.l.b16 %v6960
      %v6972 = vunpack.c.h.b16 %v6960
      %v6973 = vpack.c.b16 %v6965, %v6965
      %v6974 = vpack.c.b16 %v6966, %v6966
      %v6975 = vpack.c.b16 %v6967, %v6967
      %v6976 = vpack.c.b16 %v6968, %v6968
      %v6977 = vpack.c.b16 %v6969, %v6969
      %v6978 = vpack.c.b16 %v6970, %v6970
      %v6979 = vpack.c.b16 %v6971, %v6971
      %v6980 = vpack.c.b16 %v6972, %v6972
      %vm6989 = vcmask 257024
      %6990 = vst.msk [vmem:[%s278] sm:$0xf] %vm6989, %v6973
      %6991 = vst.msk [vmem:[%s278 + $0x4] sm:$0xf] %vm6989, %v6974
      %6992 = vst.msk [vmem:[%s278 + $0x8] sm:$0xf] %vm6989, %v6975
      %6993 = vst.msk [vmem:[%s278 + $0xc] sm:$0xf] %vm6989, %v6976
      %6994 = vst.msk [vmem:[%s278 + $0x10] sm:$0xf] %vm6989, %v6977
      %6995 = vst.msk [vmem:[%s278 + $0x14] sm:$0xf] %vm6989, %v6978
      %6996 = vst.msk [vmem:[%s278 + $0x18] sm:$0xf] %vm6989, %v6979
      %6997 = vst.msk [vmem:[%s278 + $0x1c] sm:$0xf] %vm6989, %v6980
      %p6998 = scmp.lt.s32.totalorder %s18, 1
      %s6999 = scalar_select %p6998, %s18, 1
      %s7000 = smul.addr %s6999, 8
      %s7001 = smul.addr %s7000, 4
      %s7002 = scalar_lea.vmem %s7, %s7001
      // Predicated region
      $region49: #{convnet_forward.2} parent=47 // pred_check
        %p7003 = pneg %p188
      $region50: #{convnet_forward.2} parent=47 // pred_check_branch
        %7005 = sbr.rel (%p7003) target = $region52
      $region51: #{convnet_forward.2} parent=47 // pred_region
        _
      $region52: #{convnet_forward.2} parent=47 // pred_fallthru
        _
    $region48: #{convnet_forward.2} parent=5 // pred_fallthru
      _
    %p7006 = scmp.le.s32.totalorder 2, %s13
    // Predicated region
    $region53: #{convnet_forward.2} parent=5 // pred_check
      %p7007 = pneg %p7006
    $region54: #{convnet_forward.2} parent=5 // pred_check_branch
      %7009 = sbr.rel (%p7007) target = $region56
    $region55: #{convnet_forward.2} parent=5 // pred_region
      %s7010 = ssub.s32 %s13, 2
      // Predicated region
      $region57: #{convnet_forward.2} parent=55 // pred_check
        %p7011 = pneg %p194
      $region58: #{convnet_forward.2} parent=55 // pred_check_branch
        %7013 = sbr.rel (%p7011) target = $region60
      $region59: #{convnet_forward.2} parent=55 // pred_region
        %p7014 = scmp.lt.s32.totalorder %s19, 1
        %s7015 = scalar_select %p7014, %s19, 1
        %s7016 = smul.addr %s7015, 8
        %s7017 = smul.addr %s7016, 4
        %s7018 = scalar_lea.vmem %s7, %s7017
      $region60: #{convnet_forward.2} parent=55 // pred_fallthru
        _
    $region56: #{convnet_forward.2} parent=5 // pred_fallthru
      _
  $region6: #{convnet_forward.2} parent=0 // loop_footer
    %s17 = sadd.s32 1, %s13
  $region7: #{convnet_forward.2} parent=0 // loop_footer_branch
    %12 = sbr.rel target = $region3
  $region8: #{convnet_forward.2} parent=0 // loop_exit
    _

</llo_original>
